<compile_context>
chip_gen: v6e
topology: v6e:2x2x1
jax: 0.10.0
libtpu: 0.0.40
codegen_flags: <defaults>
</compile_context>

<pallas_src>
import jax
import jax.numpy as jnp
from jax import lax
from jax.experimental import pallas as pl
from jax.experimental.pallas import tpu as pltpu

_CPARAMS = pltpu.CompilerParams(
    dimension_semantics=("parallel",),
    vmem_limit_bytes=48 * 1024 * 1024,   # above the 16/32 MiB scoped defaults,
)                                        # below v7x's 64 MiB physical VMEM.


# ----------------------------- fused level kernel ----------------------------

def _make_level_kernel(H, W, use_gap, use_residual, up_src):
  """Fused kernel body for one pyramid level.

  up_src: None | "inner" | "outer" -- which feature feeds the 1x1 up-projection
          (level 32 upsamples the *inner* feature, level 16 the *outer* one).
  The kernel handles an (NB, H*W, C) block so several batch elements can be
  processed per grid step.
  """
  HW = H * W

  def kernel(*refs):
    i = 0
    x_ref = refs[i]; i += 1
    res_ref = None
    if use_residual:
      res_ref = refs[i]; i += 1
    if use_gap:
      gw_ref, gs_ref, gb_ref = refs[i:i + 3]; i += 3
    wi_ref, si_ref, bi_ref = refs[i:i + 3]; i += 3
    wo_ref, so_ref, bo_ref = refs[i:i + 3]; i += 3
    if up_src is not None:
      uw_ref, ub_ref = refs[i:i + 2]; i += 2
    o_ref = refs[i]; i += 1
    u_ref = refs[i] if up_src is not None else None

    nb = x_ref.shape[0]

    # Hoisted once per invocation and shared by both 3x3 convs: which source
    # rows must be zeroed so dx=-1 / dx=+1 taps do not wrap across image edges.
    row = lax.broadcasted_iota(jnp.int32, (HW, 1), 0)
    wcol = (row & (W - 1)) if (W & (W - 1)) == 0 else (row % W)
    keep_m1 = (wcol != (W - 1))[None]     # (1, HW, 1): sources of dx = -1 taps
    keep_p1 = (wcol != 0)[None]           # (1, HW, 1): sources of dx = +1 taps

    def conv3x3_bn(xb, w9_ref, s_ref, b_ref):
      # xb: (nb, HW, Cin) bf16 -> (nb, HW, Cout) f32 (3x3 'same' conv + BN).
      cin = xb.shape[-1]
      zpad = jnp.zeros((nb, W + 1, cin), jnp.bfloat16)
      # Two masked copies (select, not multiply -> no 0*NaN at the borders)
      # instead of six per-tap mask multiplies.
      x_m1 = jnp.where(keep_m1, xb, jnp.bfloat16(0))
      x_p1 = jnp.where(keep_p1, xb, jnp.bfloat16(0))
      xp0 = jnp.concatenate([zpad, xb, zpad], axis=1)    # (nb, HW+2W+2, Cin)
      xpm = jnp.concatenate([zpad, x_m1, zpad], axis=1)
      xpp = jnp.concatenate([zpad, x_p1, zpad], axis=1)
      taps = []
      for dy in (-1, 0, 1):
        for dx in (-1, 0, 1):
          src = xpm if dx == -1 else (xp0 if dx == 0 else xpp)
          start = (dy + 1) * W + dx + 1                  # static, in bounds
          taps.append(src[:, start:start + HW, :])
      # im2col: one fat-K MXU matmul instead of 9 thin ones.
      col = jnp.concatenate(taps, axis=-1)               # (nb, HW, 9*Cin) bf16
      acc = jnp.dot(col.reshape(nb * HW, 9 * cin), w9_ref[...],
                    preferred_element_type=jnp.float32)
      acc = acc.reshape(nb, HW, -1)
      return acc * s_ref[...] + b_ref[...]               # f32 epilogue

    x_f = x_ref[...].astype(jnp.float32)                 # (nb, HW, Cin)
    xb = x_f.astype(jnp.bfloat16)                        # single cast to bf16
    inner = jnp.maximum(conv3x3_bn(xb, wi_ref, si_ref, bi_ref), 0.0)
    if use_gap:
      # Global average pool + 1x1 ConvBlock, broadcast-added in VMEM.
      g = jnp.mean(x_f, axis=1)                          # (nb, Cin) f32
      g = jnp.dot(g.astype(jnp.bfloat16), gw_ref[...],
                  preferred_element_type=jnp.float32)
      g = jnp.maximum(g * gs_ref[...] + gb_ref[...], 0.0)  # (nb, MID)
      inner = inner + g[:, None, :]
    if use_residual:
      inner = inner + res_ref[...].astype(jnp.float32)
    inner_b = inner.astype(jnp.bfloat16)                 # reused: outer conv + up
    outer = jnp.maximum(conv3x3_bn(inner_b, wo_ref, so_ref, bo_ref), 0.0)
    o_ref[...] = outer.astype(o_ref.dtype)
    if up_src is not None:
      src_b = inner_b if up_src == "inner" else outer.astype(jnp.bfloat16)
      u = jnp.dot(src_b.reshape(nb * HW, -1), uw_ref[...],
                  preferred_element_type=jnp.float32) + ub_ref[...]
      u_ref[...] = u.reshape(nb, HW, -1).astype(u_ref.dtype)

  return kernel


# --------------------------------- wrappers ----------------------------------

def _bcast_spec(shape):
  zeros = (0,) * len(shape)
  # TODO(synk): pipeline_mode=pl.Buffered(1) would single-buffer these
  # grid-invariant weights; left at the default for lowering robustness.
  return pl.BlockSpec(tuple(shape), lambda n: zeros)


def _batch_spec(nb, rest):
  zeros = (0,) * len(rest)
  return pl.BlockSpec((nb,) + tuple(rest), lambda n: (n,) + zeros)


def _pixel_shuffle_rows(u, H, W, C):
  """(N, H*W, 4*C) with column index i*2C + j*C + c (see prepare_kernel_params)
     -> (N, 4*H*W, C) row-major over (2H, 2W).  The permutation keeps the lane
     (channel) axis fixed, so it is a cheap sublane-only shuffle."""
  N = u.shape[0]
  u = u.reshape(N, H, W, 2, 2, C)
  u = jnp.transpose(u, (0, 1, 3, 2, 4, 5))
  return u.reshape(N, 4 * H * W, C)


def pyramid_forward(kp, feat32, feat16, feat8):
  N, H32, W32, C32 = feat32.shape
  _, H16, W16, C16 = feat16.shape
  _, H8, W8, C8 = feat8.shape
  MID = kp["gap_s"].shape[-1]
  dt = feat32.dtype
  up_dt = jnp.bfloat16         # up-projection tensors round-trip HBM in bf16

  x32 = feat32.reshape(N, H32 * W32, C32)
  x16 = feat16.reshape(N, H16 * W16, C16)
  x8 = feat8.reshape(N, H8 * W8, C8)

  # Level-32 planes are tiny: pack several batch elements per grid step so the
  # MXU sees a useful M and the per-step overhead is amortized.
  nb32 = min(N, max(1, 256 // max(1, H32 * W32)))
  while N % nb32:
    nb32 -= 1

  # ---- level 32: GAP + conv32_inner(+gap) + conv32_outer + up32 projection
  k32 = _make_level_kernel(H32, W32, use_gap=True, use_residual=False,
                           up_src="inner")
  o32, u32 = pl.pallas_call(
      k32,
      grid=(N // nb32,),
      in_specs=[
          _batch_spec(nb32, (H32 * W32, C32)),
          _bcast_spec(kp["gap_w"].shape), _bcast_spec(kp["gap_s"].shape),
          _bcast_spec(kp["gap_b"].shape),
          _bcast_spec(kp["w32i"].shape), _bcast_spec(kp["s32i"].shape),
          _bcast_spec(kp["b32i"].shape),
          _bcast_spec(kp["w32o"].shape), _bcast_spec(kp["s32o"].shape),
          _bcast_spec(kp["b32o"].shape),
          _bcast_spec(kp["up32_w"].shape), _bcast_spec(kp["up32_b"].shape),
      ],
      out_shape=(jax.ShapeDtypeStruct((N, H32 * W32, MID), dt),
                 jax.ShapeDtypeStruct((N, H32 * W32, 4 * MID), up_dt)),
      out_specs=(_batch_spec(nb32, (H32 * W32, MID)),
                 _batch_spec(nb32, (H32 * W32, 4 * MID))),
      compiler_params=_CPARAMS,
  )(x32, kp["gap_w"], kp["gap_s"], kp["gap_b"],
    kp["w32i"], kp["s32i"], kp["b32i"],
    kp["w32o"], kp["s32o"], kp["b32o"],
    kp["up32_w"], kp["up32_b"])

  up32 = _pixel_shuffle_rows(u32, H32, W32, MID)       # (N, H16*W16, MID) bf16

  # ---- level 16: conv16_inner(+up32) + conv16_outer + up16 projection
  k16 = _make_level_kernel(H16, W16, use_gap=False, use_residual=True,
                           up_src="outer")
  o16, u16 = pl.pallas_call(
      k16,
      grid=(N,),
      in_specs=[
          _batch_spec(1, (H16 * W16, C16)),
          _batch_spec(1, (H16 * W16, MID)),
          _bcast_spec(kp["w16i"].shape), _bcast_spec(kp["s16i"].shape),
          _bcast_spec(kp["b16i"].shape),
          _bcast_spec(kp["w16o"].shape), _bcast_spec(kp["s16o"].shape),
          _bcast_spec(kp["b16o"].shape),
          _bcast_spec(kp["up16_w"].shape), _bcast_spec(kp["up16_b"].shape),
      ],
      out_shape=(jax.ShapeDtypeStruct((N, H16 * W16, MID), dt),
                 jax.ShapeDtypeStruct((N, H16 * W16, 4 * MID), up_dt)),
      out_specs=(_batch_spec(1, (H16 * W16, MID)),
                 _batch_spec(1, (H16 * W16, 4 * MID))),
      compiler_params=_CPARAMS,
  )(x16, up32, kp["w16i"], kp["s16i"], kp["b16i"],
    kp["w16o"], kp["s16o"], kp["b16o"],
    kp["up16_w"], kp["up16_b"])

  up16 = _pixel_shuffle_rows(u16, H16, W16, MID)       # (N, H8*W8, MID) bf16

  # ---- level 8: conv8_inner(+up16) + conv8_outer
  k8 = _make_level_kernel(H8, W8, use_gap=False, use_residual=True,
                          up_src=None)
  o8 = pl.pallas_call(
      k8,
      grid=(N,),
      in_specs=[
          _batch_spec(1, (H8 * W8, C8)),
          _batch_spec(1, (H8 * W8, MID)),
          _bcast_spec(kp["w8i"].shape), _bcast_spec(kp["s8i"].shape),
          _bcast_spec(kp["b8i"].shape),
          _bcast_spec(kp["w8o"].shape), _bcast_spec(kp["s8o"].shape),
          _bcast_spec(kp["b8o"].shape),
      ],
      out_shape=jax.ShapeDtypeStruct((N, H8 * W8, MID), dt),
      out_specs=_batch_spec(1, (H8 * W8, MID)),
      compiler_params=_CPARAMS,
  )(x8, up16, kp["w8i"], kp["s8i"], kp["b8i"],
    kp["w8o"], kp["s8o"], kp["b8o"])

  return (o8.reshape(N, H8, W8, MID),
          o16.reshape(N, H16, W16, MID),
          o32.reshape(N, H32, W32, MID))


# ----------------------- pure-JAX reference (f32, exact) ---------------------

HIGHEST = lax.Precision.HIGHEST


def _ref_convblock(x, w_hwio, scale, shift):
  y = lax.conv_general_dilated(x, w_hwio, (1, 1), "SAME",
                               dimension_numbers=("NHWC", "HWIO", "NHWC"),
                               precision=HIGHEST)
  y = y * scale.reshape(1, 1, 1, -1) + shift.reshape(1, 1, 1, -1)
  return jnp.maximum(y, 0.0)


def _ref_conv1x1_bias(x, w, b):
  y = lax.conv_general_dilated(x, w.reshape(1, 1, *w.shape), (1, 1), "VALID",
                               dimension_numbers=("NHWC", "HWIO", "NHWC"),
                               precision=HIGHEST)
  return y + b.reshape(1, 1, 1, -1)


def pixel_shuffle_nhwc(x, r=2):
  N, H, W, C4 = x.shape
  C = C4 // (r * r)
  x = x.reshape(N, H, W, C, r, r)
  x = jnp.transpose(x, (0, 1, 4, 2, 5, 3))
  return x.reshape(N, H * r, W * r, C)


def pyramid_forward_ref(p, feat32, feat16, feat8):
  gap = jnp.mean(feat32, axis=(1, 2), keepdims=True)
  gap = _ref_convblock(gap, p["gap_w"].reshape(1, 1, *p["gap_w"].shape),
                       p["gap_s"], p["gap_b"])
  f32_inner = _ref_convblock(feat32, p["c32i_w"], p["c32i_s"], p["c32i_b"]) + gap
  f32_outer = _ref_convblock(f32_inner, p["c32o_w"], p["c32o_s"], p["c32o_b"])
  f32_up = pixel_shuffle_nhwc(_ref_conv1x1_bias(f32_inner, p["up32_w"], p["up32_b"]))
  f16_inner = _ref_convblock(feat16, p["c16i_w"], p["c16i_s"], p["c16i_b"]) + f32_up
  f16_outer = _ref_convblock(f16_inner, p["c16o_w"], p["c16o_s"], p["c16o_b"])
  f8_up = pixel_shuffle_nhwc(_ref_conv1x1_bias(f16_outer, p["up16_w"], p["up16_b"]))
  f8_inner = _ref_convblock(feat8, p["c8i_w"], p["c8i_s"], p["c8i_b"]) + f8_up
  f8_outer = _ref_convblock(f8_inner, p["c8o_w"], p["c8o_s"], p["c8o_b"])
  return f8_outer, f16_outer, f32_outer


# ---------------------------- deterministic params ---------------------------

def _make_conv_bn(key, cin, cout, k, eps=1e-5):
  k1, k2, k3, k4, k5 = jax.random.split(key, 5)
  fan_in = k * k * cin
  w = jax.random.normal(k1, (k, k, cin, cout), jnp.float32) * (0.5 / fan_in ** 0.5)
  gamma = 1.0 + 0.1 * jax.random.normal(k2, (cout,), jnp.float32)
  beta = 0.1 * jax.random.normal(k3, (cout,), jnp.float32)
  mean = 0.1 * jax.random.normal(k4, (cout,), jnp.float32)
  var = 1.0 + 0.2 * jax.random.uniform(k5, (cout,), jnp.float32)
  scale = gamma / jnp.sqrt(var + eps)
  shift = beta - mean * scale
  return w, scale.reshape(1, cout), shift.reshape(1, cout)


def make_params(key, c32, c16, c8, mid):
  ks = jax.random.split(key, 10)
  p = {}
  w, s, b = _make_conv_bn(ks[0], c32, mid, 1)
  p["gap_w"], p["gap_s"], p["gap_b"] = w.reshape(c32, mid), s, b
  p["c32i_w"], p["c32i_s"], p["c32i_b"] = _make_conv_bn(ks[1], c32, mid, 3)
  p["c32o_w"], p["c32o_s"], p["c32o_b"] = _make_conv_bn(ks[2], mid, mid, 3)
  p["c16i_w"], p["c16i_s"], p["c16i_b"] = _make_conv_bn(ks[3], c16, mid, 3)
  p["c16o_w"], p["c16o_s"], p["c16o_b"] = _make_conv_bn(ks[4], mid, mid, 3)
  p["c8i_w"], p["c8i_s"], p["c8i_b"] = _make_conv_bn(ks[5], c8, mid, 3)
  p["c8o_w"], p["c8o_s"], p["c8o_b"] = _make_conv_bn(ks[6], mid, mid, 3)
  p["up32_w"] = jax.random.normal(ks[7], (mid, mid * 4), jnp.float32) * (0.5 / mid ** 0.5)
  p["up32_b"] = 0.1 * jax.random.normal(ks[8], (1, mid * 4), jnp.float32)
  p["up16_w"] = jax.random.normal(ks[9], (mid, mid * 4), jnp.float32) * (0.5 / mid ** 0.5)
  p["up16_b"] = 0.05 * jnp.ones((1, mid * 4), jnp.float32)
  return p


def prepare_kernel_params(p):
  """Kernel-side parameter packing:
     * 3x3 conv weights reshaped to im2col form (9*Cin, Cout) and cast to bf16.
     * Up-projection weight/bias columns permuted from PyTorch PixelShuffle
       order (c*4 + i*2 + j) to (i, j, c)-major so the inter-level pixel
       shuffle is a lane-invariant sublane permutation; cast to bf16.
     * BN scale/shift and biases stay f32 (f32 epilogue / accumulation)."""
  def im2col_w(w):
    kh, kw, cin, cout = w.shape
    return w.reshape(kh * kw * cin, cout).astype(jnp.bfloat16)

  def reorder_up(w, b):
    cin, c4 = w.shape
    mid = c4 // 4
    w = w.reshape(cin, mid, 2, 2).transpose(0, 2, 3, 1).reshape(cin, c4)
    b = b.reshape(1, mid, 2, 2).transpose(0, 2, 3, 1).reshape(1, c4)
    return w.astype(jnp.bfloat16), b

  up32_w, up32_b = reorder_up(p["up32_w"], p["up32_b"])
  up16_w, up16_b = reorder_up(p["up16_w"], p["up16_b"])
  return {
      "gap_w": p["gap_w"].astype(jnp.bfloat16),
      "gap_s": p["gap_s"], "gap_b": p["gap_b"],
      "w32i": im2col_w(p["c32i_w"]), "s32i": p["c32i_s"], "b32i": p["c32i_b"],
      "w32o": im2col_w(p["c32o_w"]), "s32o": p["c32o_s"], "b32o": p["c32o_b"],
      "w16i": im2col_w(p["c16i_w"]), "s16i": p["c16i_s"], "b16i": p["c16i_b"],
      "w16o": im2col_w(p["c16o_w"]), "s16o": p["c16o_s"], "b16o": p["c16o_b"],
      "w8i": im2col_w(p["c8i_w"]), "s8i": p["c8i_s"], "b8i": p["c8i_b"],
      "w8o": im2col_w(p["c8o_w"]), "s8o": p["c8o_s"], "b8o": p["c8o_b"],
      "up32_w": up32_w, "up32_b": up32_b,
      "up16_w": up16_w, "up16_b": up16_b,
  }


# ------------------------------------ main -----------------------------------

if __name__ == "__main__":
  key = jax.random.PRNGKey(0)
  kparam, k32, k16, k8 = jax.random.split(key, 4)

  # Small shapes consistent with PyramidModule (strides 32 / 16 / 8).
  N = 2
  C32, C16, C8, MID = 16, 12, 8, 32
  H32 = W32 = 4
  H16 = W16 = 8
  H8 = W8 = 16

  params = make_params(kparam, C32, C16, C8, MID)
  kparams = prepare_kernel_params(params)

  feat32 = jax.random.normal(k32, (N, H32, W32, C32), jnp.float32)
  feat16 = jax.random.normal(k16, (N, H16, W16, C16), jnp.float32)
  feat8 = jax.random.normal(k8, (N, H8, W8, C8), jnp.float32)

  fwd = jax.jit(pyramid_forward)
  f8_out, f16_out, f32_out = fwd(kparams, feat32, feat16, feat8)
  jax.block_until_ready((f8_out, f16_out, f32_out))

  # Verify against a pure-f32 (HIGHEST) reference.  Kernel uses bf16 MXU
  # operands + bf16 inter-level up tensors with f32 accumulation, so check at
  # bf16-level tolerance.
  r8, r16, r32 = pyramid_forward_ref(params, feat32, feat16, feat8)
  for got, want, name in ((f8_out, r8, "feat8_outer"),
                          (f16_out, r16, "feat16_outer"),
                          (f32_out, r32, "feat32_outer")):
    assert got.shape == want.shape, (name, got.shape, want.shape)
    err = float(jnp.max(jnp.abs(got - want)))
    assert jnp.allclose(got, want, rtol=2e-2, atol=2e-2), (name, err)

  print("KERNEL_OK")
</pallas_src>

<mosaic_0001>
module attributes {stable_mosaic.version = 11 : i64} {
  func.func @kernel(%arg0: i32, %arg1: memref<2x16x16xf32, #tpu.memory_space<vmem>>, %arg2: memref<16x32xbf16, #tpu.memory_space<vmem>>, %arg3: memref<1x32xf32, #tpu.memory_space<vmem>>, %arg4: memref<1x32xf32, #tpu.memory_space<vmem>>, %arg5: memref<144x32xbf16, #tpu.memory_space<vmem>>, %arg6: memref<1x32xf32, #tpu.memory_space<vmem>>, %arg7: memref<1x32xf32, #tpu.memory_space<vmem>>, %arg8: memref<288x32xbf16, #tpu.memory_space<vmem>>, %arg9: memref<1x32xf32, #tpu.memory_space<vmem>>, %arg10: memref<1x32xf32, #tpu.memory_space<vmem>>, %arg11: memref<32x128xbf16, #tpu.memory_space<vmem>>, %arg12: memref<1x128xf32, #tpu.memory_space<vmem>>, %arg13: memref<2x16x32xf32, #tpu.memory_space<vmem>>, %arg14: memref<2x16x128xbf16, #tpu.memory_space<vmem>>) attributes {dimension_semantics = [#tpu.dimension_semantics<parallel>], iteration_bounds = array<i64: 1>, scalar_prefetch = 0 : i64, scratch_operands = 0 : i64, tpu.core_type = #tpu.core_type<tc>, window_params = [{transform_indices = @transform_0, window_bounds = array<i64: 2, 16, 16>}, {pipeline_mode = #tpu.pipeline_mode<synchronous>, transform_indices = @transform_1, window_bounds = array<i64: 16, 32>}, {pipeline_mode = #tpu.pipeline_mode<synchronous>, transform_indices = @transform_2, window_bounds = array<i64: 1, 32>}, {pipeline_mode = #tpu.pipeline_mode<synchronous>, transform_indices = @transform_3, window_bounds = array<i64: 1, 32>}, {pipeline_mode = #tpu.pipeline_mode<synchronous>, transform_indices = @transform_4, window_bounds = array<i64: 144, 32>}, {pipeline_mode = #tpu.pipeline_mode<synchronous>, transform_indices = @transform_5, window_bounds = array<i64: 1, 32>}, {pipeline_mode = #tpu.pipeline_mode<synchronous>, transform_indices = @transform_6, window_bounds = array<i64: 1, 32>}, {pipeline_mode = #tpu.pipeline_mode<synchronous>, transform_indices = @transform_7, window_bounds = array<i64: 288, 32>}, {pipeline_mode = #tpu.pipeline_mode<synchronous>, transform_indices = @transform_8, window_bounds = array<i64: 1, 32>}, {pipeline_mode = #tpu.pipeline_mode<synchronous>, transform_indices = @transform_9, window_bounds = array<i64: 1, 32>}, {pipeline_mode = #tpu.pipeline_mode<synchronous>, transform_indices = @transform_10, window_bounds = array<i64: 32, 128>}, {pipeline_mode = #tpu.pipeline_mode<synchronous>, transform_indices = @transform_11, window_bounds = array<i64: 1, 128>}, {transform_indices = @transform_12, window_bounds = array<i64: 2, 16, 32>}, {transform_indices = @transform_13, window_bounds = array<i64: 2, 16, 128>}]} {
    %0 = tpu.iota {dimensions = array<i32: 0>} : vector<16x1xi32>
    %c3_i32 = arith.constant 3 : i32
    %1 = vector.broadcast %c3_i32 : i32 to vector<16x1xi32>
    %2 = arith.andi %0, %1 : vector<16x1xi32>
    %c3_i32_0 = arith.constant 3 : i32
    %3 = vector.broadcast %c3_i32_0 : i32 to vector<16x1xi32>
    %4 = arith.cmpi ne, %2, %3 : vector<16x1xi32>
    %5 = vector.shape_cast %4 : vector<16x1xi1> to vector<1x16x1xi1>
    %c0_i32 = arith.constant 0 : i32
    %6 = vector.broadcast %c0_i32 : i32 to vector<16x1xi32>
    %7 = arith.cmpi ne, %2, %6 : vector<16x1xi32>
    %8 = vector.shape_cast %7 : vector<16x1xi1> to vector<1x16x1xi1>
    %c0 = arith.constant 0 : index
    %c0_1 = arith.constant 0 : index
    %c0_2 = arith.constant 0 : index
    %9 = vector.load %arg1[%c0, %c0_1, %c0_2] : memref<2x16x16xf32, #tpu.memory_space<vmem>>, vector<2x16x16xf32>
    %10 = arith.truncf %9 : vector<2x16x16xf32> to vector<2x16x16xbf16>
    %cst = arith.constant 0.000000e+00 : bf16
    %11 = vector.broadcast %cst : bf16 to vector<2x5x16xbf16>
    %cst_3 = arith.constant 0.000000e+00 : bf16
    %12 = vector.shape_cast %5 : vector<1x16x1xi1> to vector<1x16x1xi1>
    %13 = vector.broadcast %12 : vector<1x16x1xi1> to vector<2x16x16xi1>
    %14 = vector.broadcast %cst_3 : bf16 to vector<2x16x16xbf16>
    %15 = arith.select %13, %10, %14 : vector<2x16x16xi1>, vector<2x16x16xbf16>
    %cst_4 = arith.constant 0.000000e+00 : bf16
    %16 = vector.shape_cast %8 : vector<1x16x1xi1> to vector<1x16x1xi1>
    %17 = vector.broadcast %16 : vector<1x16x1xi1> to vector<2x16x16xi1>
    %18 = vector.broadcast %cst_4 : bf16 to vector<2x16x16xbf16>
    %19 = arith.select %17, %10, %18 : vector<2x16x16xi1>, vector<2x16x16xbf16>
    %20 = tpu.concatenate %11, %10, %11 in 1 : vector<2x5x16xbf16>, vector<2x16x16xbf16>, vector<2x5x16xbf16> -> vector<2x26x16xbf16>
    %21 = tpu.concatenate %11, %15, %11 in 1 : vector<2x5x16xbf16>, vector<2x16x16xbf16>, vector<2x5x16xbf16> -> vector<2x26x16xbf16>
    %22 = tpu.concatenate %11, %19, %11 in 1 : vector<2x5x16xbf16>, vector<2x16x16xbf16>, vector<2x5x16xbf16> -> vector<2x26x16xbf16>
    %23 = vector.extract_strided_slice %21 {offsets = [0, 0, 0], sizes = [2, 16, 16], strides = [1, 1, 1]} : vector<2x26x16xbf16> to vector<2x16x16xbf16>
    %24 = vector.extract_strided_slice %20 {offsets = [0, 1, 0], sizes = [2, 16, 16], strides = [1, 1, 1]} : vector<2x26x16xbf16> to vector<2x16x16xbf16>
    %25 = vector.extract_strided_slice %22 {offsets = [0, 2, 0], sizes = [2, 16, 16], strides = [1, 1, 1]} : vector<2x26x16xbf16> to vector<2x16x16xbf16>
    %26 = vector.extract_strided_slice %21 {offsets = [0, 4, 0], sizes = [2, 16, 16], strides = [1, 1, 1]} : vector<2x26x16xbf16> to vector<2x16x16xbf16>
    %27 = vector.extract_strided_slice %20 {offsets = [0, 5, 0], sizes = [2, 16, 16], strides = [1, 1, 1]} : vector<2x26x16xbf16> to vector<2x16x16xbf16>
    %28 = vector.extract_strided_slice %22 {offsets = [0, 6, 0], sizes = [2, 16, 16], strides = [1, 1, 1]} : vector<2x26x16xbf16> to vector<2x16x16xbf16>
    %29 = vector.extract_strided_slice %21 {offsets = [0, 8, 0], sizes = [2, 16, 16], strides = [1, 1, 1]} : vector<2x26x16xbf16> to vector<2x16x16xbf16>
    %30 = vector.extract_strided_slice %20 {offsets = [0, 9, 0], sizes = [2, 16, 16], strides = [1, 1, 1]} : vector<2x26x16xbf16> to vector<2x16x16xbf16>
    %31 = vector.extract_strided_slice %22 {offsets = [0, 10, 0], sizes = [2, 16, 16], strides = [1, 1, 1]} : vector<2x26x16xbf16> to vector<2x16x16xbf16>
    %32 = tpu.concatenate %23, %24, %25, %26, %27, %28, %29, %30, %31 in 2 : vector<2x16x16xbf16>, vector<2x16x16xbf16>, vector<2x16x16xbf16>, vector<2x16x16xbf16>, vector<2x16x16xbf16>, vector<2x16x16xbf16>, vector<2x16x16xbf16>, vector<2x16x16xbf16>, vector<2x16x16xbf16> -> vector<2x16x144xbf16>
    %33 = vector.shape_cast %32 : vector<2x16x144xbf16> to vector<32x144xbf16>
    %c0_5 = arith.constant 0 : index
    %c0_6 = arith.constant 0 : index
    %34 = vector.load %arg5[%c0_5, %c0_6] : memref<144x32xbf16, #tpu.memory_space<vmem>>, vector<144x32xbf16>
    %cst_7 = arith.constant dense<0.000000e+00> : vector<32x32xf32>
    %35 = tpu.matmul %33, %34, %cst_7 {dimension_numbers = #tpu.dot_dimension_numbers<[1], [0], [0], [1], [0, 0, 1, 1], [], []>} : vector<32x144xbf16>, vector<144x32xbf16>, vector<32x32xf32> -> vector<32x32xf32>
    %36 = vector.shape_cast %35 : vector<32x32xf32> to vector<2x16x32xf32>
    %c0_8 = arith.constant 0 : index
    %c0_9 = arith.constant 0 : index
    %37 = vector.load %arg6[%c0_8, %c0_9] : memref<1x32xf32, #tpu.memory_space<vmem>>, vector<1x32xf32>
    %38 = vector.shape_cast %37 : vector<1x32xf32> to vector<1x1x32xf32>
    %39 = vector.broadcast %38 : vector<1x1x32xf32> to vector<2x16x32xf32>
    %40 = arith.mulf %36, %39 : vector<2x16x32xf32>
    %c0_10 = arith.constant 0 : index
    %c0_11 = arith.constant 0 : index
    %41 = vector.load %arg7[%c0_10, %c0_11] : memref<1x32xf32, #tpu.memory_space<vmem>>, vector<1x32xf32>
    %42 = vector.shape_cast %41 : vector<1x32xf32> to vector<1x1x32xf32>
    %43 = vector.broadcast %42 : vector<1x1x32xf32> to vector<2x16x32xf32>
    %44 = arith.addf %40, %43 : vector<2x16x32xf32>
    %cst_12 = arith.constant 0.000000e+00 : f32
    %45 = vector.broadcast %cst_12 : f32 to vector<2x16x32xf32>
    %46 = arith.maximumf %44, %45 : vector<2x16x32xf32>
    %cst_13 = arith.constant dense<0.000000e+00> : vector<2x16xf32>
    %47 = vector.multi_reduction <add>, %9, %cst_13 [1] : vector<2x16x16xf32> to vector<2x16xf32>
    %cst_14 = arith.constant 1.600000e+01 : f32
    %48 = vector.broadcast %cst_14 : f32 to vector<2x16xf32>
    %49 = arith.divf %47, %48 : vector<2x16xf32>
    %50 = arith.truncf %49 : vector<2x16xf32> to vector<2x16xbf16>
    %c0_15 = arith.constant 0 : index
    %c0_16 = arith.constant 0 : index
    %51 = vector.load %arg2[%c0_15, %c0_16] : memref<16x32xbf16, #tpu.memory_space<vmem>>, vector<16x32xbf16>
    %cst_17 = arith.constant dense<0.000000e+00> : vector<2x32xf32>
    %52 = tpu.matmul %50, %51, %cst_17 {dimension_numbers = #tpu.dot_dimension_numbers<[1], [0], [0], [1], [0, 0, 1, 1], [], []>} : vector<2x16xbf16>, vector<16x32xbf16>, vector<2x32xf32> -> vector<2x32xf32>
    %c0_18 = arith.constant 0 : index
    %c0_19 = arith.constant 0 : index
    %53 = vector.load %arg3[%c0_18, %c0_19] : memref<1x32xf32, #tpu.memory_space<vmem>>, vector<1x32xf32>
    %54 = vector.broadcast %53 : vector<1x32xf32> to vector<2x32xf32>
    %55 = arith.mulf %52, %54 : vector<2x32xf32>
    %c0_20 = arith.constant 0 : index
    %c0_21 = arith.constant 0 : index
    %56 = vector.load %arg4[%c0_20, %c0_21] : memref<1x32xf32, #tpu.memory_space<vmem>>, vector<1x32xf32>
    %57 = vector.broadcast %56 : vector<1x32xf32> to vector<2x32xf32>
    %58 = arith.addf %55, %57 : vector<2x32xf32>
    %cst_22 = arith.constant 0.000000e+00 : f32
    %59 = vector.broadcast %cst_22 : f32 to vector<2x32xf32>
    %60 = arith.maximumf %58, %59 : vector<2x32xf32>
    %61 = vector.shape_cast %60 : vector<2x32xf32> to vector<2x1x32xf32>
    %62 = vector.broadcast %61 : vector<2x1x32xf32> to vector<2x16x32xf32>
    %63 = arith.addf %46, %62 : vector<2x16x32xf32>
    %64 = arith.truncf %63 : vector<2x16x32xf32> to vector<2x16x32xbf16>
    %cst_23 = arith.constant 0.000000e+00 : bf16
    %65 = vector.broadcast %cst_23 : bf16 to vector<2x5x32xbf16>
    %cst_24 = arith.constant 0.000000e+00 : bf16
    %66 = vector.shape_cast %5 : vector<1x16x1xi1> to vector<1x16x1xi1>
    %67 = vector.broadcast %66 : vector<1x16x1xi1> to vector<2x16x32xi1>
    %68 = vector.broadcast %cst_24 : bf16 to vector<2x16x32xbf16>
    %69 = arith.select %67, %64, %68 : vector<2x16x32xi1>, vector<2x16x32xbf16>
    %cst_25 = arith.constant 0.000000e+00 : bf16
    %70 = vector.shape_cast %8 : vector<1x16x1xi1> to vector<1x16x1xi1>
    %71 = vector.broadcast %70 : vector<1x16x1xi1> to vector<2x16x32xi1>
    %72 = vector.broadcast %cst_25 : bf16 to vector<2x16x32xbf16>
    %73 = arith.select %71, %64, %72 : vector<2x16x32xi1>, vector<2x16x32xbf16>
    %74 = tpu.concatenate %65, %64, %65 in 1 : vector<2x5x32xbf16>, vector<2x16x32xbf16>, vector<2x5x32xbf16> -> vector<2x26x32xbf16>
    %75 = tpu.concatenate %65, %69, %65 in 1 : vector<2x5x32xbf16>, vector<2x16x32xbf16>, vector<2x5x32xbf16> -> vector<2x26x32xbf16>
    %76 = tpu.concatenate %65, %73, %65 in 1 : vector<2x5x32xbf16>, vector<2x16x32xbf16>, vector<2x5x32xbf16> -> vector<2x26x32xbf16>
    %77 = vector.extract_strided_slice %75 {offsets = [0, 0, 0], sizes = [2, 16, 32], strides = [1, 1, 1]} : vector<2x26x32xbf16> to vector<2x16x32xbf16>
    %78 = vector.extract_strided_slice %74 {offsets = [0, 1, 0], sizes = [2, 16, 32], strides = [1, 1, 1]} : vector<2x26x32xbf16> to vector<2x16x32xbf16>
    %79 = vector.extract_strided_slice %76 {offsets = [0, 2, 0], sizes = [2, 16, 32], strides = [1, 1, 1]} : vector<2x26x32xbf16> to vector<2x16x32xbf16>
    %80 = vector.extract_strided_slice %75 {offsets = [0, 4, 0], sizes = [2, 16, 32], strides = [1, 1, 1]} : vector<2x26x32xbf16> to vector<2x16x32xbf16>
    %81 = vector.extract_strided_slice %74 {offsets = [0, 5, 0], sizes = [2, 16, 32], strides = [1, 1, 1]} : vector<2x26x32xbf16> to vector<2x16x32xbf16>
    %82 = vector.extract_strided_slice %76 {offsets = [0, 6, 0], sizes = [2, 16, 32], strides = [1, 1, 1]} : vector<2x26x32xbf16> to vector<2x16x32xbf16>
    %83 = vector.extract_strided_slice %75 {offsets = [0, 8, 0], sizes = [2, 16, 32], strides = [1, 1, 1]} : vector<2x26x32xbf16> to vector<2x16x32xbf16>
    %84 = vector.extract_strided_slice %74 {offsets = [0, 9, 0], sizes = [2, 16, 32], strides = [1, 1, 1]} : vector<2x26x32xbf16> to vector<2x16x32xbf16>
    %85 = vector.extract_strided_slice %76 {offsets = [0, 10, 0], sizes = [2, 16, 32], strides = [1, 1, 1]} : vector<2x26x32xbf16> to vector<2x16x32xbf16>
    %86 = tpu.concatenate %77, %78, %79, %80, %81, %82, %83, %84, %85 in 2 : vector<2x16x32xbf16>, vector<2x16x32xbf16>, vector<2x16x32xbf16>, vector<2x16x32xbf16>, vector<2x16x32xbf16>, vector<2x16x32xbf16>, vector<2x16x32xbf16>, vector<2x16x32xbf16>, vector<2x16x32xbf16> -> vector<2x16x288xbf16>
    %87 = vector.shape_cast %86 : vector<2x16x288xbf16> to vector<32x288xbf16>
    %c0_26 = arith.constant 0 : index
    %c0_27 = arith.constant 0 : index
    %88 = vector.load %arg8[%c0_26, %c0_27] : memref<288x32xbf16, #tpu.memory_space<vmem>>, vector<288x32xbf16>
    %cst_28 = arith.constant dense<0.000000e+00> : vector<32x32xf32>
    %89 = tpu.matmul %87, %88, %cst_28 {dimension_numbers = #tpu.dot_dimension_numbers<[1], [0], [0], [1], [0, 0, 1, 1], [], []>} : vector<32x288xbf16>, vector<288x32xbf16>, vector<32x32xf32> -> vector<32x32xf32>
    %90 = vector.shape_cast %89 : vector<32x32xf32> to vector<2x16x32xf32>
    %c0_29 = arith.constant 0 : index
    %c0_30 = arith.constant 0 : index
    %91 = vector.load %arg9[%c0_29, %c0_30] : memref<1x32xf32, #tpu.memory_space<vmem>>, vector<1x32xf32>
    %92 = vector.shape_cast %91 : vector<1x32xf32> to vector<1x1x32xf32>
    %93 = vector.broadcast %92 : vector<1x1x32xf32> to vector<2x16x32xf32>
    %94 = arith.mulf %90, %93 : vector<2x16x32xf32>
    %c0_31 = arith.constant 0 : index
    %c0_32 = arith.constant 0 : index
    %95 = vector.load %arg10[%c0_31, %c0_32] : memref<1x32xf32, #tpu.memory_space<vmem>>, vector<1x32xf32>
    %96 = vector.shape_cast %95 : vector<1x32xf32> to vector<1x1x32xf32>
    %97 = vector.broadcast %96 : vector<1x1x32xf32> to vector<2x16x32xf32>
    %98 = arith.addf %94, %97 : vector<2x16x32xf32>
    %cst_33 = arith.constant 0.000000e+00 : f32
    %99 = vector.broadcast %cst_33 : f32 to vector<2x16x32xf32>
    %100 = arith.maximumf %98, %99 : vector<2x16x32xf32>
    %c0_34 = arith.constant 0 : index
    %c0_35 = arith.constant 0 : index
    %c0_36 = arith.constant 0 : index
    %101 = vector.load %arg13[%c0_34, %c0_35, %c0_36] : memref<2x16x32xf32, #tpu.memory_space<vmem>>, vector<2x16x32xf32>
    tpu.vector_store %arg13[%c0_34, %c0_35, %c0_36], %100 {strides = array<i32>} : memref<2x16x32xf32, #tpu.memory_space<vmem>>, vector<2x16x32xf32>,
    %102 = vector.shape_cast %64 : vector<2x16x32xbf16> to vector<32x32xbf16>
    %c0_37 = arith.constant 0 : index
    %c0_38 = arith.constant 0 : index
    %103 = vector.load %arg11[%c0_37, %c0_38] : memref<32x128xbf16, #tpu.memory_space<vmem>>, vector<32x128xbf16>
    %cst_39 = arith.constant dense<0.000000e+00> : vector<32x128xf32>
    %104 = tpu.matmul %102, %103, %cst_39 {dimension_numbers = #tpu.dot_dimension_numbers<[1], [0], [0], [1], [0, 0, 1, 1], [], []>} : vector<32x32xbf16>, vector<32x128xbf16>, vector<32x128xf32> -> vector<32x128xf32>
    %c0_40 = arith.constant 0 : index
    %c0_41 = arith.constant 0 : index
    %105 = vector.load %arg12[%c0_40, %c0_41] : memref<1x128xf32, #tpu.memory_space<vmem>>, vector<1x128xf32>
    %106 = vector.broadcast %105 : vector<1x128xf32> to vector<32x128xf32>
    %107 = arith.addf %104, %106 : vector<32x128xf32>
    %108 = vector.shape_cast %107 : vector<32x128xf32> to vector<2x16x128xf32>
    %109 = arith.truncf %108 : vector<2x16x128xf32> to vector<2x16x128xbf16>
    %c0_42 = arith.constant 0 : index
    %c0_43 = arith.constant 0 : index
    %c0_44 = arith.constant 0 : index
    %110 = vector.load %arg14[%c0_42, %c0_43, %c0_44] : memref<2x16x128xbf16, #tpu.memory_space<vmem>>, vector<2x16x128xbf16>
    tpu.vector_store %arg14[%c0_42, %c0_43, %c0_44], %109 {strides = array<i32>} : memref<2x16x128xbf16, #tpu.memory_space<vmem>>, vector<2x16x128xbf16>,
    return
  }
  func.func @transform_0(%arg0: i32) -> (i32, i32, i32) {
    %c0_i32 = arith.constant 0 : i32
    %c0_i32_0 = arith.constant 0 : i32
    %c0_i32_1 = arith.constant 0 : i32
    return %arg0, %c0_i32, %c0_i32_0 : i32, i32, i32
  }
  func.func @transform_1(%arg0: i32) -> (i32, i32) {
    %c0_i32 = arith.constant 0 : i32
    %c0_i32_0 = arith.constant 0 : i32
    %c0_i32_1 = arith.constant 0 : i32
    return %c0_i32, %c0_i32_0 : i32, i32
  }
  func.func @transform_2(%arg0: i32) -> (i32, i32) {
    %c0_i32 = arith.constant 0 : i32
    %c0_i32_0 = arith.constant 0 : i32
    %c0_i32_1 = arith.constant 0 : i32
    return %c0_i32, %c0_i32_0 : i32, i32
  }
  func.func @transform_3(%arg0: i32) -> (i32, i32) {
    %c0_i32 = arith.constant 0 : i32
    %c0_i32_0 = arith.constant 0 : i32
    %c0_i32_1 = arith.constant 0 : i32
    return %c0_i32, %c0_i32_0 : i32, i32
  }
  func.func @transform_4(%arg0: i32) -> (i32, i32) {
    %c0_i32 = arith.constant 0 : i32
    %c0_i32_0 = arith.constant 0 : i32
    %c0_i32_1 = arith.constant 0 : i32
    return %c0_i32, %c0_i32_0 : i32, i32
  }
  func.func @transform_5(%arg0: i32) -> (i32, i32) {
    %c0_i32 = arith.constant 0 : i32
    %c0_i32_0 = arith.constant 0 : i32
    %c0_i32_1 = arith.constant 0 : i32
    return %c0_i32, %c0_i32_0 : i32, i32
  }
  func.func @transform_6(%arg0: i32) -> (i32, i32) {
    %c0_i32 = arith.constant 0 : i32
    %c0_i32_0 = arith.constant 0 : i32
    %c0_i32_1 = arith.constant 0 : i32
    return %c0_i32, %c0_i32_0 : i32, i32
  }
  func.func @transform_7(%arg0: i32) -> (i32, i32) {
    %c0_i32 = arith.constant 0 : i32
    %c0_i32_0 = arith.constant 0 : i32
    %c0_i32_1 = arith.constant 0 : i32
    return %c0_i32, %c0_i32_0 : i32, i32
  }
  func.func @transform_8(%arg0: i32) -> (i32, i32) {
    %c0_i32 = arith.constant 0 : i32
    %c0_i32_0 = arith.constant 0 : i32
    %c0_i32_1 = arith.constant 0 : i32
    return %c0_i32, %c0_i32_0 : i32, i32
  }
  func.func @transform_9(%arg0: i32) -> (i32, i32) {
    %c0_i32 = arith.constant 0 : i32
    %c0_i32_0 = arith.constant 0 : i32
    %c0_i32_1 = arith.constant 0 : i32
    return %c0_i32, %c0_i32_0 : i32, i32
  }
  func.func @transform_10(%arg0: i32) -> (i32, i32) {
    %c0_i32 = arith.constant 0 : i32
    %c0_i32_0 = arith.constant 0 : i32
    %c0_i32_1 = arith.constant 0 : i32
    return %c0_i32, %c0_i32_0 : i32, i32
  }
  func.func @transform_11(%arg0: i32) -> (i32, i32) {
    %c0_i32 = arith.constant 0 : i32
    %c0_i32_0 = arith.constant 0 : i32
    %c0_i32_1 = arith.constant 0 : i32
    return %c0_i32, %c0_i32_0 : i32, i32
  }
  func.func @transform_12(%arg0: i32) -> (i32, i32, i32) {
    %c0_i32 = arith.constant 0 : i32
    %c0_i32_0 = arith.constant 0 : i32
    %c0_i32_1 = arith.constant 0 : i32
    return %arg0, %c0_i32, %c0_i32_0 : i32, i32, i32
  }
  func.func @transform_13(%arg0: i32) -> (i32, i32, i32) {
    %c0_i32 = arith.constant 0 : i32
    %c0_i32_0 = arith.constant 0 : i32
    %c0_i32_1 = arith.constant 0 : i32
    return %arg0, %c0_i32, %c0_i32_0 : i32, i32, i32
  }
}

module attributes {stable_mosaic.version = 11 : i64} {
  func.func @kernel(%arg0: i32, %arg1: memref<1x64x12xf32, #tpu.memory_space<vmem>>, %arg2: memref<1x64x32xbf16, #tpu.memory_space<vmem>>, %arg3: memref<108x32xbf16, #tpu.memory_space<vmem>>, %arg4: memref<1x32xf32, #tpu.memory_space<vmem>>, %arg5: memref<1x32xf32, #tpu.memory_space<vmem>>, %arg6: memref<288x32xbf16, #tpu.memory_space<vmem>>, %arg7: memref<1x32xf32, #tpu.memory_space<vmem>>, %arg8: memref<1x32xf32, #tpu.memory_space<vmem>>, %arg9: memref<32x128xbf16, #tpu.memory_space<vmem>>, %arg10: memref<1x128xf32, #tpu.memory_space<vmem>>, %arg11: memref<1x64x32xf32, #tpu.memory_space<vmem>>, %arg12: memref<1x64x128xbf16, #tpu.memory_space<vmem>>) attributes {dimension_semantics = [#tpu.dimension_semantics<parallel>], iteration_bounds = array<i64: 2>, scalar_prefetch = 0 : i64, scratch_operands = 0 : i64, tpu.core_type = #tpu.core_type<tc>, window_params = [{transform_indices = @transform_0, window_bounds = array<i64: 1, 64, 12>}, {transform_indices = @transform_1, window_bounds = array<i64: 1, 64, 32>}, {pipeline_mode = #tpu.pipeline_mode<synchronous>, transform_indices = @transform_2, window_bounds = array<i64: 108, 32>}, {pipeline_mode = #tpu.pipeline_mode<synchronous>, transform_indices = @transform_3, window_bounds = array<i64: 1, 32>}, {pipeline_mode = #tpu.pipeline_mode<synchronous>, transform_indices = @transform_4, window_bounds = array<i64: 1, 32>}, {pipeline_mode = #tpu.pipeline_mode<synchronous>, transform_indices = @transform_5, window_bounds = array<i64: 288, 32>}, {pipeline_mode = #tpu.pipeline_mode<synchronous>, transform_indices = @transform_6, window_bounds = array<i64: 1, 32>}, {pipeline_mode = #tpu.pipeline_mode<synchronous>, transform_indices = @transform_7, window_bounds = array<i64: 1, 32>}, {pipeline_mode = #tpu.pipeline_mode<synchronous>, transform_indices = @transform_8, window_bounds = array<i64: 32, 128>}, {pipeline_mode = #tpu.pipeline_mode<synchronous>, transform_indices = @transform_9, window_bounds = array<i64: 1, 128>}, {transform_indices = @transform_10, window_bounds = array<i64: 1, 64, 32>}, {transform_indices = @transform_11, window_bounds = array<i64: 1, 64, 128>}]} {
    %0 = tpu.iota {dimensions = array<i32: 0>} : vector<64x1xi32>
    %c7_i32 = arith.constant 7 : i32
    %1 = vector.broadcast %c7_i32 : i32 to vector<64x1xi32>
    %2 = arith.andi %0, %1 : vector<64x1xi32>
    %c7_i32_0 = arith.constant 7 : i32
    %3 = vector.broadcast %c7_i32_0 : i32 to vector<64x1xi32>
    %4 = arith.cmpi ne, %2, %3 : vector<64x1xi32>
    %5 = vector.shape_cast %4 : vector<64x1xi1> to vector<1x64x1xi1>
    %c0_i32 = arith.constant 0 : i32
    %6 = vector.broadcast %c0_i32 : i32 to vector<64x1xi32>
    %7 = arith.cmpi ne, %2, %6 : vector<64x1xi32>
    %8 = vector.shape_cast %7 : vector<64x1xi1> to vector<1x64x1xi1>
    %c0 = arith.constant 0 : index
    %c0_1 = arith.constant 0 : index
    %c0_2 = arith.constant 0 : index
    %9 = vector.load %arg1[%c0, %c0_1, %c0_2] : memref<1x64x12xf32, #tpu.memory_space<vmem>>, vector<1x64x12xf32>
    %10 = arith.truncf %9 : vector<1x64x12xf32> to vector<1x64x12xbf16>
    %cst = arith.constant 0.000000e+00 : bf16
    %11 = vector.broadcast %cst : bf16 to vector<1x9x12xbf16>
    %cst_3 = arith.constant 0.000000e+00 : bf16
    %12 = vector.shape_cast %5 : vector<1x64x1xi1> to vector<1x64x1xi1>
    %13 = vector.broadcast %12 : vector<1x64x1xi1> to vector<1x64x12xi1>
    %14 = vector.broadcast %cst_3 : bf16 to vector<1x64x12xbf16>
    %15 = arith.select %13, %10, %14 : vector<1x64x12xi1>, vector<1x64x12xbf16>
    %cst_4 = arith.constant 0.000000e+00 : bf16
    %16 = vector.shape_cast %8 : vector<1x64x1xi1> to vector<1x64x1xi1>
    %17 = vector.broadcast %16 : vector<1x64x1xi1> to vector<1x64x12xi1>
    %18 = vector.broadcast %cst_4 : bf16 to vector<1x64x12xbf16>
    %19 = arith.select %17, %10, %18 : vector<1x64x12xi1>, vector<1x64x12xbf16>
    %20 = tpu.concatenate %11, %10, %11 in 1 : vector<1x9x12xbf16>, vector<1x64x12xbf16>, vector<1x9x12xbf16> -> vector<1x82x12xbf16>
    %21 = tpu.concatenate %11, %15, %11 in 1 : vector<1x9x12xbf16>, vector<1x64x12xbf16>, vector<1x9x12xbf16> -> vector<1x82x12xbf16>
    %22 = tpu.concatenate %11, %19, %11 in 1 : vector<1x9x12xbf16>, vector<1x64x12xbf16>, vector<1x9x12xbf16> -> vector<1x82x12xbf16>
    %23 = vector.extract_strided_slice %21 {offsets = [0, 0, 0], sizes = [1, 64, 12], strides = [1, 1, 1]} : vector<1x82x12xbf16> to vector<1x64x12xbf16>
    %24 = vector.extract_strided_slice %20 {offsets = [0, 1, 0], sizes = [1, 64, 12], strides = [1, 1, 1]} : vector<1x82x12xbf16> to vector<1x64x12xbf16>
    %25 = vector.extract_strided_slice %22 {offsets = [0, 2, 0], sizes = [1, 64, 12], strides = [1, 1, 1]} : vector<1x82x12xbf16> to vector<1x64x12xbf16>
    %26 = vector.extract_strided_slice %21 {offsets = [0, 8, 0], sizes = [1, 64, 12], strides = [1, 1, 1]} : vector<1x82x12xbf16> to vector<1x64x12xbf16>
    %27 = vector.extract_strided_slice %20 {offsets = [0, 9, 0], sizes = [1, 64, 12], strides = [1, 1, 1]} : vector<1x82x12xbf16> to vector<1x64x12xbf16>
    %28 = vector.extract_strided_slice %22 {offsets = [0, 10, 0], sizes = [1, 64, 12], strides = [1, 1, 1]} : vector<1x82x12xbf16> to vector<1x64x12xbf16>
    %29 = vector.extract_strided_slice %21 {offsets = [0, 16, 0], sizes = [1, 64, 12], strides = [1, 1, 1]} : vector<1x82x12xbf16> to vector<1x64x12xbf16>
    %30 = vector.extract_strided_slice %20 {offsets = [0, 17, 0], sizes = [1, 64, 12], strides = [1, 1, 1]} : vector<1x82x12xbf16> to vector<1x64x12xbf16>
    %31 = vector.extract_strided_slice %22 {offsets = [0, 18, 0], sizes = [1, 64, 12], strides = [1, 1, 1]} : vector<1x82x12xbf16> to vector<1x64x12xbf16>
    %32 = tpu.concatenate %23, %24, %25, %26, %27, %28, %29, %30, %31 in 2 : vector<1x64x12xbf16>, vector<1x64x12xbf16>, vector<1x64x12xbf16>, vector<1x64x12xbf16>, vector<1x64x12xbf16>, vector<1x64x12xbf16>, vector<1x64x12xbf16>, vector<1x64x12xbf16>, vector<1x64x12xbf16> -> vector<1x64x108xbf16>
    %33 = vector.shape_cast %32 : vector<1x64x108xbf16> to vector<64x108xbf16>
    %c0_5 = arith.constant 0 : index
    %c0_6 = arith.constant 0 : index
    %34 = vector.load %arg3[%c0_5, %c0_6] : memref<108x32xbf16, #tpu.memory_space<vmem>>, vector<108x32xbf16>
    %cst_7 = arith.constant dense<0.000000e+00> : vector<64x32xf32>
    %35 = tpu.matmul %33, %34, %cst_7 {dimension_numbers = #tpu.dot_dimension_numbers<[1], [0], [0], [1], [0, 0, 1, 1], [], []>} : vector<64x108xbf16>, vector<108x32xbf16>, vector<64x32xf32> -> vector<64x32xf32>
    %36 = vector.shape_cast %35 : vector<64x32xf32> to vector<1x64x32xf32>
    %c0_8 = arith.constant 0 : index
    %c0_9 = arith.constant 0 : index
    %37 = vector.load %arg4[%c0_8, %c0_9] : memref<1x32xf32, #tpu.memory_space<vmem>>, vector<1x32xf32>
    %38 = vector.shape_cast %37 : vector<1x32xf32> to vector<1x1x32xf32>
    %39 = vector.broadcast %38 : vector<1x1x32xf32> to vector<1x64x32xf32>
    %40 = arith.mulf %36, %39 : vector<1x64x32xf32>
    %c0_10 = arith.constant 0 : index
    %c0_11 = arith.constant 0 : index
    %41 = vector.load %arg5[%c0_10, %c0_11] : memref<1x32xf32, #tpu.memory_space<vmem>>, vector<1x32xf32>
    %42 = vector.shape_cast %41 : vector<1x32xf32> to vector<1x1x32xf32>
    %43 = vector.broadcast %42 : vector<1x1x32xf32> to vector<1x64x32xf32>
    %44 = arith.addf %40, %43 : vector<1x64x32xf32>
    %cst_12 = arith.constant 0.000000e+00 : f32
    %45 = vector.broadcast %cst_12 : f32 to vector<1x64x32xf32>
    %46 = arith.maximumf %44, %45 : vector<1x64x32xf32>
    %c0_13 = arith.constant 0 : index
    %c0_14 = arith.constant 0 : index
    %c0_15 = arith.constant 0 : index
    %47 = vector.load %arg2[%c0_13, %c0_14, %c0_15] : memref<1x64x32xbf16, #tpu.memory_space<vmem>>, vector<1x64x32xbf16>
    %48 = arith.extf %47 : vector<1x64x32xbf16> to vector<1x64x32xf32>
    %49 = arith.addf %46, %48 : vector<1x64x32xf32>
    %50 = arith.truncf %49 : vector<1x64x32xf32> to vector<1x64x32xbf16>
    %cst_16 = arith.constant 0.000000e+00 : bf16
    %51 = vector.broadcast %cst_16 : bf16 to vector<1x9x32xbf16>
    %cst_17 = arith.constant 0.000000e+00 : bf16
    %52 = vector.shape_cast %5 : vector<1x64x1xi1> to vector<1x64x1xi1>
    %53 = vector.broadcast %52 : vector<1x64x1xi1> to vector<1x64x32xi1>
    %54 = vector.broadcast %cst_17 : bf16 to vector<1x64x32xbf16>
    %55 = arith.select %53, %50, %54 : vector<1x64x32xi1>, vector<1x64x32xbf16>
    %cst_18 = arith.constant 0.000000e+00 : bf16
    %56 = vector.shape_cast %8 : vector<1x64x1xi1> to vector<1x64x1xi1>
    %57 = vector.broadcast %56 : vector<1x64x1xi1> to vector<1x64x32xi1>
    %58 = vector.broadcast %cst_18 : bf16 to vector<1x64x32xbf16>
    %59 = arith.select %57, %50, %58 : vector<1x64x32xi1>, vector<1x64x32xbf16>
    %60 = tpu.concatenate %51, %50, %51 in 1 : vector<1x9x32xbf16>, vector<1x64x32xbf16>, vector<1x9x32xbf16> -> vector<1x82x32xbf16>
    %61 = tpu.concatenate %51, %55, %51 in 1 : vector<1x9x32xbf16>, vector<1x64x32xbf16>, vector<1x9x32xbf16> -> vector<1x82x32xbf16>
    %62 = tpu.concatenate %51, %59, %51 in 1 : vector<1x9x32xbf16>, vector<1x64x32xbf16>, vector<1x9x32xbf16> -> vector<1x82x32xbf16>
    %63 = vector.extract_strided_slice %61 {offsets = [0, 0, 0], sizes = [1, 64, 32], strides = [1, 1, 1]} : vector<1x82x32xbf16> to vector<1x64x32xbf16>
    %64 = vector.extract_strided_slice %60 {offsets = [0, 1, 0], sizes = [1, 64, 32], strides = [1, 1, 1]} : vector<1x82x32xbf16> to vector<1x64x32xbf16>
    %65 = vector.extract_strided_slice %62 {offsets = [0, 2, 0], sizes = [1, 64, 32], strides = [1, 1, 1]} : vector<1x82x32xbf16> to vector<1x64x32xbf16>
    %66 = vector.extract_strided_slice %61 {offsets = [0, 8, 0], sizes = [1, 64, 32], strides = [1, 1, 1]} : vector<1x82x32xbf16> to vector<1x64x32xbf16>
    %67 = vector.extract_strided_slice %60 {offsets = [0, 9, 0], sizes = [1, 64, 32], strides = [1, 1, 1]} : vector<1x82x32xbf16> to vector<1x64x32xbf16>
    %68 = vector.extract_strided_slice %62 {offsets = [0, 10, 0], sizes = [1, 64, 32], strides = [1, 1, 1]} : vector<1x82x32xbf16> to vector<1x64x32xbf16>
    %69 = vector.extract_strided_slice %61 {offsets = [0, 16, 0], sizes = [1, 64, 32], strides = [1, 1, 1]} : vector<1x82x32xbf16> to vector<1x64x32xbf16>
    %70 = vector.extract_strided_slice %60 {offsets = [0, 17, 0], sizes = [1, 64, 32], strides = [1, 1, 1]} : vector<1x82x32xbf16> to vector<1x64x32xbf16>
    %71 = vector.extract_strided_slice %62 {offsets = [0, 18, 0], sizes = [1, 64, 32], strides = [1, 1, 1]} : vector<1x82x32xbf16> to vector<1x64x32xbf16>
    %72 = tpu.concatenate %63, %64, %65, %66, %67, %68, %69, %70, %71 in 2 : vector<1x64x32xbf16>, vector<1x64x32xbf16>, vector<1x64x32xbf16>, vector<1x64x32xbf16>, vector<1x64x32xbf16>, vector<1x64x32xbf16>, vector<1x64x32xbf16>, vector<1x64x32xbf16>, vector<1x64x32xbf16> -> vector<1x64x288xbf16>
    %73 = vector.shape_cast %72 : vector<1x64x288xbf16> to vector<64x288xbf16>
    %c0_19 = arith.constant 0 : index
    %c0_20 = arith.constant 0 : index
    %74 = vector.load %arg6[%c0_19, %c0_20] : memref<288x32xbf16, #tpu.memory_space<vmem>>, vector<288x32xbf16>
    %cst_21 = arith.constant dense<0.000000e+00> : vector<64x32xf32>
    %75 = tpu.matmul %73, %74, %cst_21 {dimension_numbers = #tpu.dot_dimension_numbers<[1], [0], [0], [1], [0, 0, 1, 1], [], []>} : vector<64x288xbf16>, vector<288x32xbf16>, vector<64x32xf32> -> vector<64x32xf32>
    %76 = vector.shape_cast %75 : vector<64x32xf32> to vector<1x64x32xf32>
    %c0_22 = arith.constant 0 : index
    %c0_23 = arith.constant 0 : index
    %77 = vector.load %arg7[%c0_22, %c0_23] : memref<1x32xf32, #tpu.memory_space<vmem>>, vector<1x32xf32>
    %78 = vector.shape_cast %77 : vector<1x32xf32> to vector<1x1x32xf32>
    %79 = vector.broadcast %78 : vector<1x1x32xf32> to vector<1x64x32xf32>
    %80 = arith.mulf %76, %79 : vector<1x64x32xf32>
    %c0_24 = arith.constant 0 : index
    %c0_25 = arith.constant 0 : index
    %81 = vector.load %arg8[%c0_24, %c0_25] : memref<1x32xf32, #tpu.memory_space<vmem>>, vector<1x32xf32>
    %82 = vector.shape_cast %81 : vector<1x32xf32> to vector<1x1x32xf32>
    %83 = vector.broadcast %82 : vector<1x1x32xf32> to vector<1x64x32xf32>
    %84 = arith.addf %80, %83 : vector<1x64x32xf32>
    %cst_26 = arith.constant 0.000000e+00 : f32
    %85 = vector.broadcast %cst_26 : f32 to vector<1x64x32xf32>
    %86 = arith.maximumf %84, %85 : vector<1x64x32xf32>
    %c0_27 = arith.constant 0 : index
    %c0_28 = arith.constant 0 : index
    %c0_29 = arith.constant 0 : index
    %87 = vector.load %arg11[%c0_27, %c0_28, %c0_29] : memref<1x64x32xf32, #tpu.memory_space<vmem>>, vector<1x64x32xf32>
    tpu.vector_store %arg11[%c0_27, %c0_28, %c0_29], %86 {strides = array<i32>} : memref<1x64x32xf32, #tpu.memory_space<vmem>>, vector<1x64x32xf32>,
    %88 = arith.truncf %86 : vector<1x64x32xf32> to vector<1x64x32xbf16>
    %89 = vector.shape_cast %88 : vector<1x64x32xbf16> to vector<64x32xbf16>
    %c0_30 = arith.constant 0 : index
    %c0_31 = arith.constant 0 : index
    %90 = vector.load %arg9[%c0_30, %c0_31] : memref<32x128xbf16, #tpu.memory_space<vmem>>, vector<32x128xbf16>
    %cst_32 = arith.constant dense<0.000000e+00> : vector<64x128xf32>
    %91 = tpu.matmul %89, %90, %cst_32 {dimension_numbers = #tpu.dot_dimension_numbers<[1], [0], [0], [1], [0, 0, 1, 1], [], []>} : vector<64x32xbf16>, vector<32x128xbf16>, vector<64x128xf32> -> vector<64x128xf32>
    %c0_33 = arith.constant 0 : index
    %c0_34 = arith.constant 0 : index
    %92 = vector.load %arg10[%c0_33, %c0_34] : memref<1x128xf32, #tpu.memory_space<vmem>>, vector<1x128xf32>
    %93 = vector.broadcast %92 : vector<1x128xf32> to vector<64x128xf32>
    %94 = arith.addf %91, %93 : vector<64x128xf32>
    %95 = vector.shape_cast %94 : vector<64x128xf32> to vector<1x64x128xf32>
    %96 = arith.truncf %95 : vector<1x64x128xf32> to vector<1x64x128xbf16>
    %c0_35 = arith.constant 0 : index
    %c0_36 = arith.constant 0 : index
    %c0_37 = arith.constant 0 : index
    %97 = vector.load %arg12[%c0_35, %c0_36, %c0_37] : memref<1x64x128xbf16, #tpu.memory_space<vmem>>, vector<1x64x128xbf16>
    tpu.vector_store %arg12[%c0_35, %c0_36, %c0_37], %96 {strides = array<i32>} : memref<1x64x128xbf16, #tpu.memory_space<vmem>>, vector<1x64x128xbf16>,
    return
  }
  func.func @transform_0(%arg0: i32) -> (i32, i32, i32) {
    %c0_i32 = arith.constant 0 : i32
    %c0_i32_0 = arith.constant 0 : i32
    %c0_i32_1 = arith.constant 0 : i32
    return %arg0, %c0_i32, %c0_i32_0 : i32, i32, i32
  }
  func.func @transform_1(%arg0: i32) -> (i32, i32, i32) {
    %c0_i32 = arith.constant 0 : i32
    %c0_i32_0 = arith.constant 0 : i32
    %c0_i32_1 = arith.constant 0 : i32
    return %arg0, %c0_i32, %c0_i32_0 : i32, i32, i32
  }
  func.func @transform_2(%arg0: i32) -> (i32, i32) {
    %c0_i32 = arith.constant 0 : i32
    %c0_i32_0 = arith.constant 0 : i32
    %c0_i32_1 = arith.constant 0 : i32
    return %c0_i32, %c0_i32_0 : i32, i32
  }
  func.func @transform_3(%arg0: i32) -> (i32, i32) {
    %c0_i32 = arith.constant 0 : i32
    %c0_i32_0 = arith.constant 0 : i32
    %c0_i32_1 = arith.constant 0 : i32
    return %c0_i32, %c0_i32_0 : i32, i32
  }
  func.func @transform_4(%arg0: i32) -> (i32, i32) {
    %c0_i32 = arith.constant 0 : i32
    %c0_i32_0 = arith.constant 0 : i32
    %c0_i32_1 = arith.constant 0 : i32
    return %c0_i32, %c0_i32_0 : i32, i32
  }
  func.func @transform_5(%arg0: i32) -> (i32, i32) {
    %c0_i32 = arith.constant 0 : i32
    %c0_i32_0 = arith.constant 0 : i32
    %c0_i32_1 = arith.constant 0 : i32
    return %c0_i32, %c0_i32_0 : i32, i32
  }
  func.func @transform_6(%arg0: i32) -> (i32, i32) {
    %c0_i32 = arith.constant 0 : i32
    %c0_i32_0 = arith.constant 0 : i32
    %c0_i32_1 = arith.constant 0 : i32
    return %c0_i32, %c0_i32_0 : i32, i32
  }
  func.func @transform_7(%arg0: i32) -> (i32, i32) {
    %c0_i32 = arith.constant 0 : i32
    %c0_i32_0 = arith.constant 0 : i32
    %c0_i32_1 = arith.constant 0 : i32
    return %c0_i32, %c0_i32_0 : i32, i32
  }
  func.func @transform_8(%arg0: i32) -> (i32, i32) {
    %c0_i32 = arith.constant 0 : i32
    %c0_i32_0 = arith.constant 0 : i32
    %c0_i32_1 = arith.constant 0 : i32
    return %c0_i32, %c0_i32_0 : i32, i32
  }
  func.func @transform_9(%arg0: i32) -> (i32, i32) {
    %c0_i32 = arith.constant 0 : i32
    %c0_i32_0 = arith.constant 0 : i32
    %c0_i32_1 = arith.constant 0 : i32
    return %c0_i32, %c0_i32_0 : i32, i32
  }
  func.func @transform_10(%arg0: i32) -> (i32, i32, i32) {
    %c0_i32 = arith.constant 0 : i32
    %c0_i32_0 = arith.constant 0 : i32
    %c0_i32_1 = arith.constant 0 : i32
    return %arg0, %c0_i32, %c0_i32_0 : i32, i32, i32
  }
  func.func @transform_11(%arg0: i32) -> (i32, i32, i32) {
    %c0_i32 = arith.constant 0 : i32
    %c0_i32_0 = arith.constant 0 : i32
    %c0_i32_1 = arith.constant 0 : i32
    return %arg0, %c0_i32, %c0_i32_0 : i32, i32, i32
  }
}

module attributes {stable_mosaic.version = 11 : i64} {
  func.func @kernel(%arg0: i32, %arg1: memref<1x256x8xf32, #tpu.memory_space<vmem>>, %arg2: memref<1x256x32xbf16, #tpu.memory_space<vmem>>, %arg3: memref<72x32xbf16, #tpu.memory_space<vmem>>, %arg4: memref<1x32xf32, #tpu.memory_space<vmem>>, %arg5: memref<1x32xf32, #tpu.memory_space<vmem>>, %arg6: memref<288x32xbf16, #tpu.memory_space<vmem>>, %arg7: memref<1x32xf32, #tpu.memory_space<vmem>>, %arg8: memref<1x32xf32, #tpu.memory_space<vmem>>, %arg9: memref<1x256x32xf32, #tpu.memory_space<vmem>>) attributes {dimension_semantics = [#tpu.dimension_semantics<parallel>], iteration_bounds = array<i64: 2>, scalar_prefetch = 0 : i64, scratch_operands = 0 : i64, tpu.core_type = #tpu.core_type<tc>, window_params = [{transform_indices = @transform_0, window_bounds = array<i64: 1, 256, 8>}, {transform_indices = @transform_1, window_bounds = array<i64: 1, 256, 32>}, {pipeline_mode = #tpu.pipeline_mode<synchronous>, transform_indices = @transform_2, window_bounds = array<i64: 72, 32>}, {pipeline_mode = #tpu.pipeline_mode<synchronous>, transform_indices = @transform_3, window_bounds = array<i64: 1, 32>}, {pipeline_mode = #tpu.pipeline_mode<synchronous>, transform_indices = @transform_4, window_bounds = array<i64: 1, 32>}, {pipeline_mode = #tpu.pipeline_mode<synchronous>, transform_indices = @transform_5, window_bounds = array<i64: 288, 32>}, {pipeline_mode = #tpu.pipeline_mode<synchronous>, transform_indices = @transform_6, window_bounds = array<i64: 1, 32>}, {pipeline_mode = #tpu.pipeline_mode<synchronous>, transform_indices = @transform_7, window_bounds = array<i64: 1, 32>}, {transform_indices = @transform_8, window_bounds = array<i64: 1, 256, 32>}]} {
    %0 = tpu.iota {dimensions = array<i32: 0>} : vector<256x1xi32>
    %c15_i32 = arith.constant 15 : i32
    %1 = vector.broadcast %c15_i32 : i32 to vector<256x1xi32>
    %2 = arith.andi %0, %1 : vector<256x1xi32>
    %c15_i32_0 = arith.constant 15 : i32
    %3 = vector.broadcast %c15_i32_0 : i32 to vector<256x1xi32>
    %4 = arith.cmpi ne, %2, %3 : vector<256x1xi32>
    %5 = vector.shape_cast %4 : vector<256x1xi1> to vector<1x256x1xi1>
    %c0_i32 = arith.constant 0 : i32
    %6 = vector.broadcast %c0_i32 : i32 to vector<256x1xi32>
    %7 = arith.cmpi ne, %2, %6 : vector<256x1xi32>
    %8 = vector.shape_cast %7 : vector<256x1xi1> to vector<1x256x1xi1>
    %c0 = arith.constant 0 : index
    %c0_1 = arith.constant 0 : index
    %c0_2 = arith.constant 0 : index
    %9 = vector.load %arg1[%c0, %c0_1, %c0_2] : memref<1x256x8xf32, #tpu.memory_space<vmem>>, vector<1x256x8xf32>
    %10 = arith.truncf %9 : vector<1x256x8xf32> to vector<1x256x8xbf16>
    %cst = arith.constant 0.000000e+00 : bf16
    %11 = vector.broadcast %cst : bf16 to vector<1x17x8xbf16>
    %cst_3 = arith.constant 0.000000e+00 : bf16
    %12 = vector.shape_cast %5 : vector<1x256x1xi1> to vector<1x256x1xi1>
    %13 = vector.broadcast %12 : vector<1x256x1xi1> to vector<1x256x8xi1>
    %14 = vector.broadcast %cst_3 : bf16 to vector<1x256x8xbf16>
    %15 = arith.select %13, %10, %14 : vector<1x256x8xi1>, vector<1x256x8xbf16>
    %cst_4 = arith.constant 0.000000e+00 : bf16
    %16 = vector.shape_cast %8 : vector<1x256x1xi1> to vector<1x256x1xi1>
    %17 = vector.broadcast %16 : vector<1x256x1xi1> to vector<1x256x8xi1>
    %18 = vector.broadcast %cst_4 : bf16 to vector<1x256x8xbf16>
    %19 = arith.select %17, %10, %18 : vector<1x256x8xi1>, vector<1x256x8xbf16>
    %20 = tpu.concatenate %11, %10, %11 in 1 : vector<1x17x8xbf16>, vector<1x256x8xbf16>, vector<1x17x8xbf16> -> vector<1x290x8xbf16>
    %21 = tpu.concatenate %11, %15, %11 in 1 : vector<1x17x8xbf16>, vector<1x256x8xbf16>, vector<1x17x8xbf16> -> vector<1x290x8xbf16>
    %22 = tpu.concatenate %11, %19, %11 in 1 : vector<1x17x8xbf16>, vector<1x256x8xbf16>, vector<1x17x8xbf16> -> vector<1x290x8xbf16>
    %23 = vector.extract_strided_slice %21 {offsets = [0, 0, 0], sizes = [1, 256, 8], strides = [1, 1, 1]} : vector<1x290x8xbf16> to vector<1x256x8xbf16>
    %24 = vector.extract_strided_slice %20 {offsets = [0, 1, 0], sizes = [1, 256, 8], strides = [1, 1, 1]} : vector<1x290x8xbf16> to vector<1x256x8xbf16>
    %25 = vector.extract_strided_slice %22 {offsets = [0, 2, 0], sizes = [1, 256, 8], strides = [1, 1, 1]} : vector<1x290x8xbf16> to vector<1x256x8xbf16>
    %26 = vector.extract_strided_slice %21 {offsets = [0, 16, 0], sizes = [1, 256, 8], strides = [1, 1, 1]} : vector<1x290x8xbf16> to vector<1x256x8xbf16>
    %27 = vector.extract_strided_slice %20 {offsets = [0, 17, 0], sizes = [1, 256, 8], strides = [1, 1, 1]} : vector<1x290x8xbf16> to vector<1x256x8xbf16>
    %28 = vector.extract_strided_slice %22 {offsets = [0, 18, 0], sizes = [1, 256, 8], strides = [1, 1, 1]} : vector<1x290x8xbf16> to vector<1x256x8xbf16>
    %29 = vector.extract_strided_slice %21 {offsets = [0, 32, 0], sizes = [1, 256, 8], strides = [1, 1, 1]} : vector<1x290x8xbf16> to vector<1x256x8xbf16>
    %30 = vector.extract_strided_slice %20 {offsets = [0, 33, 0], sizes = [1, 256, 8], strides = [1, 1, 1]} : vector<1x290x8xbf16> to vector<1x256x8xbf16>
    %31 = vector.extract_strided_slice %22 {offsets = [0, 34, 0], sizes = [1, 256, 8], strides = [1, 1, 1]} : vector<1x290x8xbf16> to vector<1x256x8xbf16>
    %32 = tpu.concatenate %23, %24, %25, %26, %27, %28, %29, %30, %31 in 2 : vector<1x256x8xbf16>, vector<1x256x8xbf16>, vector<1x256x8xbf16>, vector<1x256x8xbf16>, vector<1x256x8xbf16>, vector<1x256x8xbf16>, vector<1x256x8xbf16>, vector<1x256x8xbf16>, vector<1x256x8xbf16> -> vector<1x256x72xbf16>
    %33 = vector.shape_cast %32 : vector<1x256x72xbf16> to vector<256x72xbf16>
    %c0_5 = arith.constant 0 : index
    %c0_6 = arith.constant 0 : index
    %34 = vector.load %arg3[%c0_5, %c0_6] : memref<72x32xbf16, #tpu.memory_space<vmem>>, vector<72x32xbf16>
    %cst_7 = arith.constant dense<0.000000e+00> : vector<256x32xf32>
    %35 = tpu.matmul %33, %34, %cst_7 {dimension_numbers = #tpu.dot_dimension_numbers<[1], [0], [0], [1], [0, 0, 1, 1], [], []>} : vector<256x72xbf16>, vector<72x32xbf16>, vector<256x32xf32> -> vector<256x32xf32>
    %36 = vector.shape_cast %35 : vector<256x32xf32> to vector<1x256x32xf32>
    %c0_8 = arith.constant 0 : index
    %c0_9 = arith.constant 0 : index
    %37 = vector.load %arg4[%c0_8, %c0_9] : memref<1x32xf32, #tpu.memory_space<vmem>>, vector<1x32xf32>
    %38 = vector.shape_cast %37 : vector<1x32xf32> to vector<1x1x32xf32>
    %39 = vector.broadcast %38 : vector<1x1x32xf32> to vector<1x256x32xf32>
    %40 = arith.mulf %36, %39 : vector<1x256x32xf32>
    %c0_10 = arith.constant 0 : index
    %c0_11 = arith.constant 0 : index
    %41 = vector.load %arg5[%c0_10, %c0_11] : memref<1x32xf32, #tpu.memory_space<vmem>>, vector<1x32xf32>
    %42 = vector.shape_cast %41 : vector<1x32xf32> to vector<1x1x32xf32>
    %43 = vector.broadcast %42 : vector<1x1x32xf32> to vector<1x256x32xf32>
    %44 = arith.addf %40, %43 : vector<1x256x32xf32>
    %cst_12 = arith.constant 0.000000e+00 : f32
    %45 = vector.broadcast %cst_12 : f32 to vector<1x256x32xf32>
    %46 = arith.maximumf %44, %45 : vector<1x256x32xf32>
    %c0_13 = arith.constant 0 : index
    %c0_14 = arith.constant 0 : index
    %c0_15 = arith.constant 0 : index
    %47 = vector.load %arg2[%c0_13, %c0_14, %c0_15] : memref<1x256x32xbf16, #tpu.memory_space<vmem>>, vector<1x256x32xbf16>
    %48 = arith.extf %47 : vector<1x256x32xbf16> to vector<1x256x32xf32>
    %49 = arith.addf %46, %48 : vector<1x256x32xf32>
    %50 = arith.truncf %49 : vector<1x256x32xf32> to vector<1x256x32xbf16>
    %cst_16 = arith.constant 0.000000e+00 : bf16
    %51 = vector.broadcast %cst_16 : bf16 to vector<1x17x32xbf16>
    %cst_17 = arith.constant 0.000000e+00 : bf16
    %52 = vector.shape_cast %5 : vector<1x256x1xi1> to vector<1x256x1xi1>
    %53 = vector.broadcast %52 : vector<1x256x1xi1> to vector<1x256x32xi1>
    %54 = vector.broadcast %cst_17 : bf16 to vector<1x256x32xbf16>
    %55 = arith.select %53, %50, %54 : vector<1x256x32xi1>, vector<1x256x32xbf16>
    %cst_18 = arith.constant 0.000000e+00 : bf16
    %56 = vector.shape_cast %8 : vector<1x256x1xi1> to vector<1x256x1xi1>
    %57 = vector.broadcast %56 : vector<1x256x1xi1> to vector<1x256x32xi1>
    %58 = vector.broadcast %cst_18 : bf16 to vector<1x256x32xbf16>
    %59 = arith.select %57, %50, %58 : vector<1x256x32xi1>, vector<1x256x32xbf16>
    %60 = tpu.concatenate %51, %50, %51 in 1 : vector<1x17x32xbf16>, vector<1x256x32xbf16>, vector<1x17x32xbf16> -> vector<1x290x32xbf16>
    %61 = tpu.concatenate %51, %55, %51 in 1 : vector<1x17x32xbf16>, vector<1x256x32xbf16>, vector<1x17x32xbf16> -> vector<1x290x32xbf16>
    %62 = tpu.concatenate %51, %59, %51 in 1 : vector<1x17x32xbf16>, vector<1x256x32xbf16>, vector<1x17x32xbf16> -> vector<1x290x32xbf16>
    %63 = vector.extract_strided_slice %61 {offsets = [0, 0, 0], sizes = [1, 256, 32], strides = [1, 1, 1]} : vector<1x290x32xbf16> to vector<1x256x32xbf16>
    %64 = vector.extract_strided_slice %60 {offsets = [0, 1, 0], sizes = [1, 256, 32], strides = [1, 1, 1]} : vector<1x290x32xbf16> to vector<1x256x32xbf16>
    %65 = vector.extract_strided_slice %62 {offsets = [0, 2, 0], sizes = [1, 256, 32], strides = [1, 1, 1]} : vector<1x290x32xbf16> to vector<1x256x32xbf16>
    %66 = vector.extract_strided_slice %61 {offsets = [0, 16, 0], sizes = [1, 256, 32], strides = [1, 1, 1]} : vector<1x290x32xbf16> to vector<1x256x32xbf16>
    %67 = vector.extract_strided_slice %60 {offsets = [0, 17, 0], sizes = [1, 256, 32], strides = [1, 1, 1]} : vector<1x290x32xbf16> to vector<1x256x32xbf16>
    %68 = vector.extract_strided_slice %62 {offsets = [0, 18, 0], sizes = [1, 256, 32], strides = [1, 1, 1]} : vector<1x290x32xbf16> to vector<1x256x32xbf16>
    %69 = vector.extract_strided_slice %61 {offsets = [0, 32, 0], sizes = [1, 256, 32], strides = [1, 1, 1]} : vector<1x290x32xbf16> to vector<1x256x32xbf16>
    %70 = vector.extract_strided_slice %60 {offsets = [0, 33, 0], sizes = [1, 256, 32], strides = [1, 1, 1]} : vector<1x290x32xbf16> to vector<1x256x32xbf16>
    %71 = vector.extract_strided_slice %62 {offsets = [0, 34, 0], sizes = [1, 256, 32], strides = [1, 1, 1]} : vector<1x290x32xbf16> to vector<1x256x32xbf16>
    %72 = tpu.concatenate %63, %64, %65, %66, %67, %68, %69, %70, %71 in 2 : vector<1x256x32xbf16>, vector<1x256x32xbf16>, vector<1x256x32xbf16>, vector<1x256x32xbf16>, vector<1x256x32xbf16>, vector<1x256x32xbf16>, vector<1x256x32xbf16>, vector<1x256x32xbf16>, vector<1x256x32xbf16> -> vector<1x256x288xbf16>
    %73 = vector.shape_cast %72 : vector<1x256x288xbf16> to vector<256x288xbf16>
    %c0_19 = arith.constant 0 : index
    %c0_20 = arith.constant 0 : index
    %74 = vector.load %arg6[%c0_19, %c0_20] : memref<288x32xbf16, #tpu.memory_space<vmem>>, vector<288x32xbf16>
    %cst_21 = arith.constant dense<0.000000e+00> : vector<256x32xf32>
    %75 = tpu.matmul %73, %74, %cst_21 {dimension_numbers = #tpu.dot_dimension_numbers<[1], [0], [0], [1], [0, 0, 1, 1], [], []>} : vector<256x288xbf16>, vector<288x32xbf16>, vector<256x32xf32> -> vector<256x32xf32>
    %76 = vector.shape_cast %75 : vector<256x32xf32> to vector<1x256x32xf32>
    %c0_22 = arith.constant 0 : index
    %c0_23 = arith.constant 0 : index
    %77 = vector.load %arg7[%c0_22, %c0_23] : memref<1x32xf32, #tpu.memory_space<vmem>>, vector<1x32xf32>
    %78 = vector.shape_cast %77 : vector<1x32xf32> to vector<1x1x32xf32>
    %79 = vector.broadcast %78 : vector<1x1x32xf32> to vector<1x256x32xf32>
    %80 = arith.mulf %76, %79 : vector<1x256x32xf32>
    %c0_24 = arith.constant 0 : index
    %c0_25 = arith.constant 0 : index
    %81 = vector.load %arg8[%c0_24, %c0_25] : memref<1x32xf32, #tpu.memory_space<vmem>>, vector<1x32xf32>
    %82 = vector.shape_cast %81 : vector<1x32xf32> to vector<1x1x32xf32>
    %83 = vector.broadcast %82 : vector<1x1x32xf32> to vector<1x256x32xf32>
    %84 = arith.addf %80, %83 : vector<1x256x32xf32>
    %cst_26 = arith.constant 0.000000e+00 : f32
    %85 = vector.broadcast %cst_26 : f32 to vector<1x256x32xf32>
    %86 = arith.maximumf %84, %85 : vector<1x256x32xf32>
    %c0_27 = arith.constant 0 : index
    %c0_28 = arith.constant 0 : index
    %c0_29 = arith.constant 0 : index
    %87 = vector.load %arg9[%c0_27, %c0_28, %c0_29] : memref<1x256x32xf32, #tpu.memory_space<vmem>>, vector<1x256x32xf32>
    tpu.vector_store %arg9[%c0_27, %c0_28, %c0_29], %86 {strides = array<i32>} : memref<1x256x32xf32, #tpu.memory_space<vmem>>, vector<1x256x32xf32>,
    return
  }
  func.func @transform_0(%arg0: i32) -> (i32, i32, i32) {
    %c0_i32 = arith.constant 0 : i32
    %c0_i32_0 = arith.constant 0 : i32
    %c0_i32_1 = arith.constant 0 : i32
    return %arg0, %c0_i32, %c0_i32_0 : i32, i32, i32
  }
  func.func @transform_1(%arg0: i32) -> (i32, i32, i32) {
    %c0_i32 = arith.constant 0 : i32
    %c0_i32_0 = arith.constant 0 : i32
    %c0_i32_1 = arith.constant 0 : i32
    return %arg0, %c0_i32, %c0_i32_0 : i32, i32, i32
  }
  func.func @transform_2(%arg0: i32) -> (i32, i32) {
    %c0_i32 = arith.constant 0 : i32
    %c0_i32_0 = arith.constant 0 : i32
    %c0_i32_1 = arith.constant 0 : i32
    return %c0_i32, %c0_i32_0 : i32, i32
  }
  func.func @transform_3(%arg0: i32) -> (i32, i32) {
    %c0_i32 = arith.constant 0 : i32
    %c0_i32_0 = arith.constant 0 : i32
    %c0_i32_1 = arith.constant 0 : i32
    return %c0_i32, %c0_i32_0 : i32, i32
  }
  func.func @transform_4(%arg0: i32) -> (i32, i32) {
    %c0_i32 = arith.constant 0 : i32
    %c0_i32_0 = arith.constant 0 : i32
    %c0_i32_1 = arith.constant 0 : i32
    return %c0_i32, %c0_i32_0 : i32, i32
  }
  func.func @transform_5(%arg0: i32) -> (i32, i32) {
    %c0_i32 = arith.constant 0 : i32
    %c0_i32_0 = arith.constant 0 : i32
    %c0_i32_1 = arith.constant 0 : i32
    return %c0_i32, %c0_i32_0 : i32, i32
  }
  func.func @transform_6(%arg0: i32) -> (i32, i32) {
    %c0_i32 = arith.constant 0 : i32
    %c0_i32_0 = arith.constant 0 : i32
    %c0_i32_1 = arith.constant 0 : i32
    return %c0_i32, %c0_i32_0 : i32, i32
  }
  func.func @transform_7(%arg0: i32) -> (i32, i32) {
    %c0_i32 = arith.constant 0 : i32
    %c0_i32_0 = arith.constant 0 : i32
    %c0_i32_1 = arith.constant 0 : i32
    return %c0_i32, %c0_i32_0 : i32, i32
  }
  func.func @transform_8(%arg0: i32) -> (i32, i32, i32) {
    %c0_i32 = arith.constant 0 : i32
    %c0_i32_0 = arith.constant 0 : i32
    %c0_i32_1 = arith.constant 0 : i32
    return %arg0, %c0_i32, %c0_i32_0 : i32, i32, i32
  }
}

</mosaic_0001>

<llo_original>
// kernel: pyramid_forward.4
$region0: #{pyramid_forward.4}
  #allocation0 [shape = 'u32[]', space=smem, size = 0x4, offset = 0x4, fixed_abs, tag = 'smem constant byte address 0x4 - core index']
  #allocation1 [shape = 'u32[144,128]{1,0:T(1,128)}', space=vmem, size = 0x12000, scoped, tag = 'internal scratch']
  %s0 = inlined_call_operand.vmem [shape: f32[2,64,12], index: 0, kind: input, shape index: {}]
  %s1 = inlined_call_operand.vmem [shape: bf16[2,64,32], index: 1, kind: input, shape index: {}]
  %s2 = inlined_call_operand.vmem [shape: bf16[108,32], index: 2, kind: input, shape index: {}]
  %s3 = inlined_call_operand.vmem [shape: f32[1,32], index: 3, kind: input, shape index: {}]
  %s4 = inlined_call_operand.vmem [shape: f32[1,32], index: 4, kind: input, shape index: {}]
  %s5 = inlined_call_operand.vmem [shape: bf16[288,32], index: 5, kind: input, shape index: {}]
  %s6 = inlined_call_operand.vmem [shape: f32[1,32], index: 6, kind: input, shape index: {}]
  %s7 = inlined_call_operand.vmem [shape: f32[1,32], index: 7, kind: input, shape index: {}]
  %s8 = inlined_call_operand.vmem [shape: bf16[32,128], index: 8, kind: input, shape index: {}]
  %s9 = inlined_call_operand.vmem [shape: f32[1,128], index: 9, kind: input, shape index: {}]
  %s10 = inlined_call_operand.hbm [shape: f32[2,64,32], index: 10, kind: output, shape index: {0}]
  %s11 = inlined_call_operand.vmem [shape: bf16[2,64,128], index: 11, kind: output, shape index: {1}]
  %12 = xla_tuple %s10, %s11
  %s13 = sld [smem:[#allocation0]]
  $region81: #{pyramid_forward.4} parent=0
    _
  %s15 = ssub.s32 1, %s13
  %s16 = scalar_select 0, %s15, %s13
  $region1: #{pyramid_forward.4} parent=0
    #allocation2 [shape = 'u8[65536]{0}', space=vmem, size = 0x10000, scoped, tag = 'output window, operand 0']
    #allocation3 [shape = 's32[2]{0}', space=sflag, size = 0x8, scoped, tag = 'scoped memory for pyramid_forward.4']
    %17 = vsyncpa [#allocation3], 0
    %s18 = scalar_lea.sflag [#allocation3], 1
    %19 = vsyncpa %s18, 0
    loop: start=0, step=1, limit=4
    $region2: #{pyramid_forward.4} parent=1 // loop_pre_header
      _
    $region3: #{pyramid_forward.4} parent=1 // loop_header
      %s21 = sphi 0, %s25
      %p22 = scmp.ge.s32.totalorder %s21, 4
      %s31 = sphi 0, %s33
      %s34 = sphi 0, %s31
      %s35 = sphi 0, %s34
      %s51 = sphi 0, %s35
      %s57 = sphi 0, %s59
      %s60 = sphi 0, %s57
      %s61 = sphi 0, %s60
      %s77 = sphi 0, %s61
      %s81 = sphi 0, %s81
      %s83 = sphi 0, %s81
      %s84 = sphi 0, %s83
      %s98 = sphi 0, %s84
      %s102 = sphi 0, %s102
      %s104 = sphi 0, %s102
      %s105 = sphi 0, %s104
      %s119 = sphi 0, %s105
      %s123 = sphi 0, %s123
      %s125 = sphi 0, %s123
      %s126 = sphi 0, %s125
      %s140 = sphi 0, %s126
      %s144 = sphi 0, %s144
      %s146 = sphi 0, %s144
      %s147 = sphi 0, %s146
      %s161 = sphi 0, %s147
      %s165 = sphi 0, %s165
      %s167 = sphi 0, %s165
      %s168 = sphi 0, %s167
      %s182 = sphi 0, %s168
      %s186 = sphi 0, %s186
      %s188 = sphi 0, %s186
      %s189 = sphi 0, %s188
      %s203 = sphi 0, %s189
      %s207 = sphi 0, %s207
      %s209 = sphi 0, %s207
      %s210 = sphi 0, %s209
      %s224 = sphi 0, %s210
      %s228 = sphi 0, %s228
      %s230 = sphi 0, %s228
      %s231 = sphi 0, %s230
      %s245 = sphi 0, %s231
      %s251 = sphi 0, %s253
      %s254 = sphi 0, %s251
      %s255 = sphi 0, %s254
      %s271 = sphi 0, %s255
      %s277 = sphi 0, %s279
      %s280 = sphi 0, %s277
      %s281 = sphi 0, %s280
      %s297 = sphi 0, %s281
    $region4: #{pyramid_forward.4} parent=1 // loop_header_branch
      %24 = sbr.rel (%p22) target = $region8
    $region5: #{pyramid_forward.4} parent=1 // loop_body
      %s26 = ssub.s32 %s21, 1
      %s27 = ssub.s32 %s21, 2
      %s28 = sadd.s32 %s21, 1
      %s29 = ssub.s32 %s21, %s28
      %p30 = scmp.eq.s32.totalorder %s29, 0
      %s32 = sadd.s32 %s31, 1
      %s33 = scalar_select %p30, %s31, %s32
      %p36 = pneg %p30
      %p37 = scmp.eq.s32.totalorder %s21, 1
      %p38 = por %p36, %p37
      %p39 = scmp.ne.s32.totalorder %s31, %s34
      %p40 = scmp.eq.s32.totalorder %s21, 0
      %p41 = por %p39, %p40
      %p42 = scmp.ne.s32.totalorder %s31, %s34
      %p43 = scmp.eq.s32.totalorder %s26, 1
      %p44 = por %p42, %p43
      %p45 = scmp.ne.s32.totalorder %s34, %s35
      %p46 = scmp.eq.s32.totalorder %s26, 0
      %p47 = por %p45, %p46
      %p48 = scmp.ne.s32.totalorder %s34, %s35
      %p49 = scmp.eq.s32.totalorder %s27, 1
      %p50 = por %p48, %p49
      %p52 = scmp.ne.s32.totalorder %s35, %s51
      %p53 = scmp.eq.s32.totalorder %s27, 0
      %p54 = por %p52, %p53
      %s55 = ssub.s32 %s21, %s28
      %p56 = scmp.eq.s32.totalorder %s55, 0
      %s58 = sadd.s32 %s57, 1
      %s59 = scalar_select %p56, %s57, %s58
      %p62 = pneg %p56
      %p63 = scmp.eq.s32.totalorder %s21, 1
      %p64 = por %p62, %p63
      %p65 = scmp.ne.s32.totalorder %s57, %s60
      %p66 = scmp.eq.s32.totalorder %s21, 0
      %p67 = por %p65, %p66
      %p68 = scmp.ne.s32.totalorder %s57, %s60
      %p69 = scmp.eq.s32.totalorder %s26, 1
      %p70 = por %p68, %p69
      %p71 = scmp.ne.s32.totalorder %s60, %s61
      %p72 = scmp.eq.s32.totalorder %s26, 0
      %p73 = por %p71, %p72
      %p74 = scmp.ne.s32.totalorder %s60, %s61
      %p75 = scmp.eq.s32.totalorder %s27, 1
      %p76 = por %p74, %p75
      %p78 = scmp.ne.s32.totalorder %s61, %s77
      %p79 = scmp.eq.s32.totalorder %s27, 0
      %p80 = por %p78, %p79
      %s82 = sadd.s32 %s81, 1
      %p85 = scmp.eq.s32.totalorder %s21, 1
      %p86 = scmp.ne.s32.totalorder %s81, %s83
      %p87 = scmp.eq.s32.totalorder %s21, 0
      %p88 = por %p86, %p87
      %p89 = scmp.ne.s32.totalorder %s81, %s83
      %p90 = scmp.eq.s32.totalorder %s26, 1
      %p91 = por %p89, %p90
      %p92 = scmp.ne.s32.totalorder %s83, %s84
      %p93 = scmp.eq.s32.totalorder %s26, 0
      %p94 = por %p92, %p93
      %p95 = scmp.ne.s32.totalorder %s83, %s84
      %p96 = scmp.eq.s32.totalorder %s27, 1
      %p97 = por %p95, %p96
      %p99 = scmp.ne.s32.totalorder %s84, %s98
      %p100 = scmp.eq.s32.totalorder %s27, 0
      %p101 = por %p99, %p100
      %s103 = sadd.s32 %s102, 1
      %p106 = scmp.eq.s32.totalorder %s21, 1
      %p107 = scmp.ne.s32.totalorder %s102, %s104
      %p108 = scmp.eq.s32.totalorder %s21, 0
      %p109 = por %p107, %p108
      %p110 = scmp.ne.s32.totalorder %s102, %s104
      %p111 = scmp.eq.s32.totalorder %s26, 1
      %p112 = por %p110, %p111
      %p113 = scmp.ne.s32.totalorder %s104, %s105
      %p114 = scmp.eq.s32.totalorder %s26, 0
      %p115 = por %p113, %p114
      %p116 = scmp.ne.s32.totalorder %s104, %s105
      %p117 = scmp.eq.s32.totalorder %s27, 1
      %p118 = por %p116, %p117
      %p120 = scmp.ne.s32.totalorder %s105, %s119
      %p121 = scmp.eq.s32.totalorder %s27, 0
      %p122 = por %p120, %p121
      %s124 = sadd.s32 %s123, 1
      %p127 = scmp.eq.s32.totalorder %s21, 1
      %p128 = scmp.ne.s32.totalorder %s123, %s125
      %p129 = scmp.eq.s32.totalorder %s21, 0
      %p130 = por %p128, %p129
      %p131 = scmp.ne.s32.totalorder %s123, %s125
      %p132 = scmp.eq.s32.totalorder %s26, 1
      %p133 = por %p131, %p132
      %p134 = scmp.ne.s32.totalorder %s125, %s126
      %p135 = scmp.eq.s32.totalorder %s26, 0
      %p136 = por %p134, %p135
      %p137 = scmp.ne.s32.totalorder %s125, %s126
      %p138 = scmp.eq.s32.totalorder %s27, 1
      %p139 = por %p137, %p138
      %p141 = scmp.ne.s32.totalorder %s126, %s140
      %p142 = scmp.eq.s32.totalorder %s27, 0
      %p143 = por %p141, %p142
      %s145 = sadd.s32 %s144, 1
      %p148 = scmp.eq.s32.totalorder %s21, 1
      %p149 = scmp.ne.s32.totalorder %s144, %s146
      %p150 = scmp.eq.s32.totalorder %s21, 0
      %p151 = por %p149, %p150
      %p152 = scmp.ne.s32.totalorder %s144, %s146
      %p153 = scmp.eq.s32.totalorder %s26, 1
      %p154 = por %p152, %p153
      %p155 = scmp.ne.s32.totalorder %s146, %s147
      %p156 = scmp.eq.s32.totalorder %s26, 0
      %p157 = por %p155, %p156
      %p158 = scmp.ne.s32.totalorder %s146, %s147
      %p159 = scmp.eq.s32.totalorder %s27, 1
      %p160 = por %p158, %p159
      %p162 = scmp.ne.s32.totalorder %s147, %s161
      %p163 = scmp.eq.s32.totalorder %s27, 0
      %p164 = por %p162, %p163
      %s166 = sadd.s32 %s165, 1
      %p169 = scmp.eq.s32.totalorder %s21, 1
      %p170 = scmp.ne.s32.totalorder %s165, %s167
      %p171 = scmp.eq.s32.totalorder %s21, 0
      %p172 = por %p170, %p171
      %p173 = scmp.ne.s32.totalorder %s165, %s167
      %p174 = scmp.eq.s32.totalorder %s26, 1
      %p175 = por %p173, %p174
      %p176 = scmp.ne.s32.totalorder %s167, %s168
      %p177 = scmp.eq.s32.totalorder %s26, 0
      %p178 = por %p176, %p177
      %p179 = scmp.ne.s32.totalorder %s167, %s168
      %p180 = scmp.eq.s32.totalorder %s27, 1
      %p181 = por %p179, %p180
      %p183 = scmp.ne.s32.totalorder %s168, %s182
      %p184 = scmp.eq.s32.totalorder %s27, 0
      %p185 = por %p183, %p184
      %s187 = sadd.s32 %s186, 1
      %p190 = scmp.eq.s32.totalorder %s21, 1
      %p191 = scmp.ne.s32.totalorder %s186, %s188
      %p192 = scmp.eq.s32.totalorder %s21, 0
      %p193 = por %p191, %p192
      %p194 = scmp.ne.s32.totalorder %s186, %s188
      %p195 = scmp.eq.s32.totalorder %s26, 1
      %p196 = por %p194, %p195
      %p197 = scmp.ne.s32.totalorder %s188, %s189
      %p198 = scmp.eq.s32.totalorder %s26, 0
      %p199 = por %p197, %p198
      %p200 = scmp.ne.s32.totalorder %s188, %s189
      %p201 = scmp.eq.s32.totalorder %s27, 1
      %p202 = por %p200, %p201
      %p204 = scmp.ne.s32.totalorder %s189, %s203
      %p205 = scmp.eq.s32.totalorder %s27, 0
      %p206 = por %p204, %p205
      %s208 = sadd.s32 %s207, 1
      %p211 = scmp.eq.s32.totalorder %s21, 1
      %p212 = scmp.ne.s32.totalorder %s207, %s209
      %p213 = scmp.eq.s32.totalorder %s21, 0
      %p214 = por %p212, %p213
      %p215 = scmp.ne.s32.totalorder %s207, %s209
      %p216 = scmp.eq.s32.totalorder %s26, 1
      %p217 = por %p215, %p216
      %p218 = scmp.ne.s32.totalorder %s209, %s210
      %p219 = scmp.eq.s32.totalorder %s26, 0
      %p220 = por %p218, %p219
      %p221 = scmp.ne.s32.totalorder %s209, %s210
      %p222 = scmp.eq.s32.totalorder %s27, 1
      %p223 = por %p221, %p222
      %p225 = scmp.ne.s32.totalorder %s210, %s224
      %p226 = scmp.eq.s32.totalorder %s27, 0
      %p227 = por %p225, %p226
      %s229 = sadd.s32 %s228, 1
      %p232 = scmp.eq.s32.totalorder %s21, 1
      %p233 = scmp.ne.s32.totalorder %s228, %s230
      %p234 = scmp.eq.s32.totalorder %s21, 0
      %p235 = por %p233, %p234
      %p236 = scmp.ne.s32.totalorder %s228, %s230
      %p237 = scmp.eq.s32.totalorder %s26, 1
      %p238 = por %p236, %p237
      %p239 = scmp.ne.s32.totalorder %s230, %s231
      %p240 = scmp.eq.s32.totalorder %s26, 0
      %p241 = por %p239, %p240
      %p242 = scmp.ne.s32.totalorder %s230, %s231
      %p243 = scmp.eq.s32.totalorder %s27, 1
      %p244 = por %p242, %p243
      %p246 = scmp.ne.s32.totalorder %s231, %s245
      %p247 = scmp.eq.s32.totalorder %s27, 0
      %p248 = por %p246, %p247
      %s249 = ssub.s32 %s21, %s28
      %p250 = scmp.eq.s32.totalorder %s249, 0
      %s252 = sadd.s32 %s251, 1
      %s253 = scalar_select %p250, %s251, %s252
      %p256 = pneg %p250
      %p257 = scmp.eq.s32.totalorder %s21, 1
      %p258 = por %p256, %p257
      %p259 = scmp.ne.s32.totalorder %s251, %s254
      %p260 = scmp.eq.s32.totalorder %s21, 0
      %p261 = por %p259, %p260
      %p262 = scmp.ne.s32.totalorder %s251, %s254
      %p263 = scmp.eq.s32.totalorder %s26, 1
      %p264 = por %p262, %p263
      %p265 = scmp.ne.s32.totalorder %s254, %s255
      %p266 = scmp.eq.s32.totalorder %s26, 0
      %p267 = por %p265, %p266
      %p268 = scmp.ne.s32.totalorder %s254, %s255
      %p269 = scmp.eq.s32.totalorder %s27, 1
      %p270 = por %p268, %p269
      %p272 = scmp.ne.s32.totalorder %s255, %s271
      %p273 = scmp.eq.s32.totalorder %s27, 0
      %p274 = por %p272, %p273
      %s275 = ssub.s32 %s21, %s28
      %p276 = scmp.eq.s32.totalorder %s275, 0
      %s278 = sadd.s32 %s277, 1
      %s279 = scalar_select %p276, %s277, %s278
      %p282 = pneg %p276
      %p283 = scmp.eq.s32.totalorder %s21, 1
      %p284 = por %p282, %p283
      %p285 = scmp.ne.s32.totalorder %s277, %s280
      %p286 = scmp.eq.s32.totalorder %s21, 0
      %p287 = por %p285, %p286
      %p288 = scmp.ne.s32.totalorder %s277, %s280
      %p289 = scmp.eq.s32.totalorder %s26, 1
      %p290 = por %p288, %p289
      %p291 = scmp.ne.s32.totalorder %s280, %s281
      %p292 = scmp.eq.s32.totalorder %s26, 0
      %p293 = por %p291, %p292
      %p294 = scmp.ne.s32.totalorder %s280, %s281
      %p295 = scmp.eq.s32.totalorder %s27, 1
      %p296 = por %p294, %p295
      %p298 = scmp.ne.s32.totalorder %s281, %s297
      %p299 = scmp.eq.s32.totalorder %s27, 0
      %p300 = por %p298, %p299
      %p301 = scmp.le.s32.totalorder 1, %s21
      %p302 = scmp.lt.s32.totalorder %s21, 3
      %p303 = pnand %p301, %p302
      %p304 = pneg %p303
      // Predicated region
      $region9: #{pyramid_forward.4} parent=5 // pred_check
        _
      $region10: #{pyramid_forward.4} parent=5 // pred_check_branch
        %306 = sbr.rel (%p303) target = $region12
      $region11: #{pyramid_forward.4} parent=5 // pred_region
        %s307 = ssub.s32 %s21, 1
        // Predicated region
        $region13: #{pyramid_forward.4} parent=11 // pred_check
          %p308 = pneg %p94
        $region14: #{pyramid_forward.4} parent=11 // pred_check_branch
          %310 = sbr.rel (%p308) target = $region16
        $region15: #{pyramid_forward.4} parent=11 // pred_region
          _
        $region16: #{pyramid_forward.4} parent=11 // pred_fallthru
          _
        // Predicated region
        $region17: #{pyramid_forward.4} parent=11 // pred_check
          %p311 = pneg %p115
        $region18: #{pyramid_forward.4} parent=11 // pred_check_branch
          %313 = sbr.rel (%p311) target = $region20
        $region19: #{pyramid_forward.4} parent=11 // pred_region
          _
        $region20: #{pyramid_forward.4} parent=11 // pred_fallthru
          _
        // Predicated region
        $region21: #{pyramid_forward.4} parent=11 // pred_check
          %p314 = pneg %p136
        $region22: #{pyramid_forward.4} parent=11 // pred_check_branch
          %316 = sbr.rel (%p314) target = $region24
        $region23: #{pyramid_forward.4} parent=11 // pred_region
          _
        $region24: #{pyramid_forward.4} parent=11 // pred_fallthru
          _
        // Predicated region
        $region25: #{pyramid_forward.4} parent=11 // pred_check
          %p317 = pneg %p157
        $region26: #{pyramid_forward.4} parent=11 // pred_check_branch
          %319 = sbr.rel (%p317) target = $region28
        $region27: #{pyramid_forward.4} parent=11 // pred_region
          _
        $region28: #{pyramid_forward.4} parent=11 // pred_fallthru
          _
        // Predicated region
        $region29: #{pyramid_forward.4} parent=11 // pred_check
          %p320 = pneg %p178
        $region30: #{pyramid_forward.4} parent=11 // pred_check_branch
          %322 = sbr.rel (%p320) target = $region32
        $region31: #{pyramid_forward.4} parent=11 // pred_region
          _
        $region32: #{pyramid_forward.4} parent=11 // pred_fallthru
          _
        // Predicated region
        $region33: #{pyramid_forward.4} parent=11 // pred_check
          %p323 = pneg %p199
        $region34: #{pyramid_forward.4} parent=11 // pred_check_branch
          %325 = sbr.rel (%p323) target = $region36
        $region35: #{pyramid_forward.4} parent=11 // pred_region
          _
        $region36: #{pyramid_forward.4} parent=11 // pred_fallthru
          _
        // Predicated region
        $region37: #{pyramid_forward.4} parent=11 // pred_check
          %p326 = pneg %p220
        $region38: #{pyramid_forward.4} parent=11 // pred_check_branch
          %328 = sbr.rel (%p326) target = $region40
        $region39: #{pyramid_forward.4} parent=11 // pred_region
          _
        $region40: #{pyramid_forward.4} parent=11 // pred_fallthru
          _
        // Predicated region
        $region41: #{pyramid_forward.4} parent=11 // pred_check
          %p329 = pneg %p241
        $region42: #{pyramid_forward.4} parent=11 // pred_check_branch
          %331 = sbr.rel (%p329) target = $region44
        $region43: #{pyramid_forward.4} parent=11 // pred_region
          _
        $region44: #{pyramid_forward.4} parent=11 // pred_fallthru
          _
      $region12: #{pyramid_forward.4} parent=5 // pred_fallthru
        _
      %p332 = scmp.lt.s32.totalorder %s21, 2
      // Predicated region
      $region45: #{pyramid_forward.4} parent=5 // pred_check
        %p333 = pneg %p332
      $region46: #{pyramid_forward.4} parent=5 // pred_check_branch
        %335 = sbr.rel (%p333) target = $region48
      $region47: #{pyramid_forward.4} parent=5 // pred_region
        // Predicated region
        $region49: #{pyramid_forward.4} parent=47 // pred_check
          %p336 = pneg %p41
        $region50: #{pyramid_forward.4} parent=47 // pred_check_branch
          %338 = sbr.rel (%p336) target = $region52
        $region51: #{pyramid_forward.4} parent=47 // pred_region
          %p339 = scmp.lt.s32.totalorder %s21, 1
          %s340 = scalar_select %p339, %s21, 1
          %s341 = smul.addr %s340, 8
          %s342 = smul.addr %s341, 8
          %s343 = scalar_lea.vmem %s0, %s342
        $region52: #{pyramid_forward.4} parent=47 // pred_fallthru
          _
        // Predicated region
        $region53: #{pyramid_forward.4} parent=47 // pred_check
          %p344 = pneg %p67
        $region54: #{pyramid_forward.4} parent=47 // pred_check_branch
          %346 = sbr.rel (%p344) target = $region56
        $region55: #{pyramid_forward.4} parent=47 // pred_region
          %p347 = scmp.lt.s32.totalorder %s21, 1
          %s348 = scalar_select %p347, %s21, 1
          %s349 = smul.addr %s348, 8
          %s350 = smul.addr %s349, 4
          %s351 = scalar_lea.vmem %s1, %s350
        $region56: #{pyramid_forward.4} parent=47 // pred_fallthru
          _
      $region48: #{pyramid_forward.4} parent=5 // pred_fallthru
        _
      %p352 = scmp.le.s32.totalorder 1, %s21
      %p353 = scmp.lt.s32.totalorder %s21, 3
      %p354 = pnand %p352, %p353
      %p355 = pneg %p354
      // Predicated region
      $region57: #{pyramid_forward.4} parent=5 // pred_check
        _
      $region58: #{pyramid_forward.4} parent=5 // pred_check_branch
        %357 = sbr.rel (%p354) target = $region60
      $region59: #{pyramid_forward.4} parent=5 // pred_region
        %s358 = ssub.s32 %s21, 1
        %p359 = scmp.lt.s32.totalorder %s26, 1
        %s360 = scalar_select %p359, %s26, 1
        %s361 = smul.addr %s360, 8
        %s362 = smul.addr %s361, 8
        %s363 = scalar_lea.vmem %s0, %s362
        %p364 = pneg %p47
        %p365 = pneg %p44
        %p366 = scmp.lt.s32.totalorder %s26, 1
        %s367 = scalar_select %p366, %s26, 1
        %s368 = smul.addr %s367, 8
        %s369 = smul.addr %s368, 4
        %s370 = scalar_lea.vmem %s1, %s369
        %p371 = pneg %p73
        %p372 = pneg %p70
        %p373 = pneg %p94
        %p374 = pneg %p91
        %p375 = pneg %p115
        %p376 = pneg %p112
        %p377 = pneg %p136
        %p378 = pneg %p133
        %p379 = pneg %p157
        %p380 = pneg %p154
        %p381 = pneg %p178
        %p382 = pneg %p175
        %p383 = pneg %p199
        %p384 = pneg %p196
        %p385 = pneg %p220
        %p386 = pneg %p217
        %p387 = pneg %p241
        %p388 = pneg %p238
        %p389 = pneg %p267
        %p390 = pneg %p264
        %s391 = sand.u32 %s254, 1
        %s392 = scalar_lea.sflag [#allocation3], %s391
        %s393 = sand.u32 %s254, 1
        %s394 = smul.addr %s393, 64
        %s395 = scalar_lea.vmem [#allocation2], %s394
        %p396 = pneg %p293
        %p397 = pneg %p290
        %p398 = scmp.lt.s32.totalorder %s26, 1
        %s399 = scalar_select %p398, %s26, 1
        %s400 = smul.addr %s399, 8
        %s401 = smul.addr %s400, 4
        %s402 = scalar_lea.vmem %s11, %s401
        %p403 = scmp.lt.s32.totalorder %s26, 1
        %s404 = scalar_select %p403, %s26, 1
        %s405 = smul.addr %s404, 8
        %s406 = smul.addr %s405, 8
        %s407 = scalar_lea.vmem %s0, %s406
        %p408 = scmp.lt.s32.totalorder %s26, 1
        %s409 = scalar_select %p408, %s26, 1
        %s410 = smul.addr %s409, 8
        %s411 = smul.addr %s410, 4
        %s412 = scalar_lea.vmem %s1, %s411
        %p413 = scmp.lt.s32.totalorder %s26, 1
        %s414 = scalar_select %p413, %s26, 1
        %s415 = smul.addr %s414, 8
        %s416 = smul.addr %s415, 4
        %s417 = scalar_lea.vmem %s11, %s416
        %v421 = vlaneseq
        %v422 = vshrl.u32 %v421, 7
        %v423 = vadd.s32 %v422, 8
        %v424 = vadd.s32 %v422, 16
        %v425 = vadd.s32 %v422, 24
        %v426 = vadd.s32 %v422, 32
        %v427 = vadd.s32 %v422, 40
        %v428 = vadd.s32 %v422, 48
        %v429 = vadd.s32 %v422, 56
        %v430 = vand.u32 %v422, 7
        %v431 = vand.u32 %v423, 7
        %v432 = vand.u32 %v424, 7
        %v433 = vand.u32 %v425, 7
        %v434 = vand.u32 %v426, 7
        %v435 = vand.u32 %v427, 7
        %v436 = vand.u32 %v428, 7
        %v437 = vand.u32 %v429, 7
        %vm438 = vcmp.ne.s32.totalorder %v430, 7
        %vm439 = vcmp.ne.s32.totalorder %v431, 7
        %vm440 = vcmp.ne.s32.totalorder %v432, 7
        %vm441 = vcmp.ne.s32.totalorder %v433, 7
        %vm442 = vcmp.ne.s32.totalorder %v434, 7
        %vm443 = vcmp.ne.s32.totalorder %v435, 7
        %vm444 = vcmp.ne.s32.totalorder %v436, 7
        %vm445 = vcmp.ne.s32.totalorder %v437, 7
        %vm446 = vcmp.ne.s32.totalorder %v430, 0
        %vm447 = vcmp.ne.s32.totalorder %v431, 0
        %vm448 = vcmp.ne.s32.totalorder %v432, 0
        %vm449 = vcmp.ne.s32.totalorder %v433, 0
        %vm450 = vcmp.ne.s32.totalorder %v434, 0
        %vm451 = vcmp.ne.s32.totalorder %v435, 0
        %vm452 = vcmp.ne.s32.totalorder %v436, 0
        %vm453 = vcmp.ne.s32.totalorder %v437, 0
        %v454 = vld [vmem:[%s407] sm:$0xff]
        %v455 = vld [vmem:[%s407 + $0x8] sm:$0xff]
        %v456 = vld [vmem:[%s407 + $0x10] sm:$0xff]
        %v457 = vld [vmem:[%s407 + $0x18] sm:$0xff]
        %v458 = vld [vmem:[%s407 + $0x20] sm:$0xff]
        %v459 = vld [vmem:[%s407 + $0x28] sm:$0xff]
        %v460 = vld [vmem:[%s407 + $0x30] sm:$0xff]
        %v461 = vld [vmem:[%s407 + $0x38] sm:$0xff]
        %v462 = vpack.c.bf16 %v455, %v454
        %v463 = vpack.c.bf16 %v457, %v456
        %v464 = vpack.c.bf16 %v459, %v458
        %v465 = vpack.c.bf16 %v461, %v460
        %v466 = vsel %vm438, 1, 0
        %v467 = vsel %vm439, 1, 0
        %v468 = vsel %vm440, 1, 0
        %v469 = vsel %vm441, 1, 0
        %v470 = vsel %vm442, 1, 0
        %v471 = vsel %vm443, 1, 0
        %v472 = vsel %vm444, 1, 0
        %v473 = vsel %vm445, 1, 0
        %vm474 = vcmp.eq.s32.totalorder %v466, 1
        %vm475 = vcmp.eq.s32.totalorder %v467, 1
        %vm476 = vcmp.eq.s32.totalorder %v468, 1
        %vm477 = vcmp.eq.s32.totalorder %v469, 1
        %vm478 = vcmp.eq.s32.totalorder %v470, 1
        %vm479 = vcmp.eq.s32.totalorder %v471, 1
        %vm480 = vcmp.eq.s32.totalorder %v472, 1
        %vm481 = vcmp.eq.s32.totalorder %v473, 1
        %vm482 = vmpackc.low %vm474, %vm474
        %vm483 = vmpackc.low %vm475, %vm475
        %vm484 = vmpackc.low %vm476, %vm476
        %vm485 = vmpackc.low %vm477, %vm477
        %vm486 = vmpackc.low %vm478, %vm478
        %vm487 = vmpackc.low %vm479, %vm479
        %vm488 = vmpackc.low %vm480, %vm480
        %vm489 = vmpackc.low %vm481, %vm481
        %v490 = vsel %vm482, 65537, 0
        %v491 = vsel %vm483, 65537, 0
        %v492 = vsel %vm484, 65537, 0
        %v493 = vsel %vm485, 65537, 0
        %v494 = vsel %vm486, 65537, 0
        %v495 = vsel %vm487, 65537, 0
        %v496 = vsel %vm488, 65537, 0
        %v497 = vsel %vm489, 65537, 0
        %v498 = vunpack.c.l.b16 %v490
        %v499 = vunpack.c.l.b16 %v491
        %v500 = vunpack.c.l.b16 %v492
        %v501 = vunpack.c.l.b16 %v493
        %v502 = vunpack.c.l.b16 %v494
        %v503 = vunpack.c.l.b16 %v495
        %v504 = vunpack.c.l.b16 %v496
        %v505 = vunpack.c.l.b16 %v497
        %v506 = vpack.c.b16 %v499, %v498
        %v507 = vpack.c.b16 %v501, %v500
        %v508 = vpack.c.b16 %v503, %v502
        %v509 = vpack.c.b16 %v505, %v504
        %vm510 = vcmp.ne.s16.totalorder %v506, 0
        %vm511 = vcmp.ne.s16.totalorder %v507, 0
        %vm512 = vcmp.ne.s16.totalorder %v508, 0
        %vm513 = vcmp.ne.s16.totalorder %v509, 0
        %v514 = vsel %vm510, %v462, 0
        %v515 = vsel %vm511, %v463, 0
        %v516 = vsel %vm512, %v464, 0
        %v517 = vsel %vm513, %v465, 0
        %v518 = vsel %vm446, 1, 0
        %v519 = vsel %vm447, 1, 0
        %v520 = vsel %vm448, 1, 0
        %v521 = vsel %vm449, 1, 0
        %v522 = vsel %vm450, 1, 0
        %v523 = vsel %vm451, 1, 0
        %v524 = vsel %vm452, 1, 0
        %v525 = vsel %vm453, 1, 0
        %vm526 = vcmp.eq.s32.totalorder %v518, 1
        %vm527 = vcmp.eq.s32.totalorder %v519, 1
        %vm528 = vcmp.eq.s32.totalorder %v520, 1
        %vm529 = vcmp.eq.s32.totalorder %v521, 1
        %vm530 = vcmp.eq.s32.totalorder %v522, 1
        %vm531 = vcmp.eq.s32.totalorder %v523, 1
        %vm532 = vcmp.eq.s32.totalorder %v524, 1
        %vm533 = vcmp.eq.s32.totalorder %v525, 1
        %vm534 = vmpackc.low %vm526, %vm526
        %vm535 = vmpackc.low %vm527, %vm527
        %vm536 = vmpackc.low %vm528, %vm528
        %vm537 = vmpackc.low %vm529, %vm529
        %vm538 = vmpackc.low %vm530, %vm530
        %vm539 = vmpackc.low %vm531, %vm531
        %vm540 = vmpackc.low %vm532, %vm532
        %vm541 = vmpackc.low %vm533, %vm533
        %v542 = vsel %vm534, 65537, 0
        %v543 = vsel %vm535, 65537, 0
        %v544 = vsel %vm536, 65537, 0
        %v545 = vsel %vm537, 65537, 0
        %v546 = vsel %vm538, 65537, 0
        %v547 = vsel %vm539, 65537, 0
        %v548 = vsel %vm540, 65537, 0
        %v549 = vsel %vm541, 65537, 0
        %v550 = vunpack.c.l.b16 %v542
        %v551 = vunpack.c.l.b16 %v543
        %v552 = vunpack.c.l.b16 %v544
        %v553 = vunpack.c.l.b16 %v545
        %v554 = vunpack.c.l.b16 %v546
        %v555 = vunpack.c.l.b16 %v547
        %v556 = vunpack.c.l.b16 %v548
        %v557 = vunpack.c.l.b16 %v549
        %v558 = vpack.c.b16 %v551, %v550
        %v559 = vpack.c.b16 %v553, %v552
        %v560 = vpack.c.b16 %v555, %v554
        %v561 = vpack.c.b16 %v557, %v556
        %vm562 = vcmp.ne.s16.totalorder %v558, 0
        %vm563 = vcmp.ne.s16.totalorder %v559, 0
        %vm564 = vcmp.ne.s16.totalorder %v560, 0
        %vm565 = vcmp.ne.s16.totalorder %v561, 0
        %v566 = vsel %vm562, %v462, 0
        %v567 = vsel %vm563, %v463, 0
        %v568 = vsel %vm564, %v464, 0
        %v569 = vsel %vm565, %v465, 0
        %vm570 = vsmask.f32 4352
        %v572 = vshrl.u32 %v462, 16
        %v574 = vrot.slane %v572, 3
        %v575 = vshll.u32 %v462, 16
        %v577 = vrot.slane %v575, 4
        %v578 = vor.u32 %v574, %v577
        %v580 = vshrl.u32 %v463, 16
        %v582 = vrot.slane %v580, 3
        %v583 = vshll.u32 %v463, 16
        %v585 = vrot.slane %v583, 4
        %v586 = vor.u32 %v582, %v585
        %v587 = vsel %vm570, %v578, %v586
        %v589 = vshrl.u32 %v464, 16
        %v591 = vrot.slane %v589, 3
        %v592 = vshll.u32 %v464, 16
        %v594 = vrot.slane %v592, 4
        %v595 = vor.u32 %v591, %v594
        %v596 = vsel %vm570, %v586, %v595
        %v598 = vshrl.u32 %v465, 16
        %v600 = vrot.slane %v598, 3
        %v601 = vshll.u32 %v465, 16
        %v603 = vrot.slane %v601, 4
        %v604 = vor.u32 %v600, %v603
        %v605 = vsel %vm570, %v595, %v604
        %vm608 = vcmask 1044480
        %vm609 = vmand %vm608, %vm570
        %v610 = vsel %vm609, 0, %v578
        %v611 = vsel %vm609, %v604, 0
        %v613 = vshrl.u32 %v514, 16
        %v615 = vrot.slane %v613, 3
        %v616 = vshll.u32 %v514, 16
        %v618 = vrot.slane %v616, 4
        %v619 = vor.u32 %v615, %v618
        %v621 = vshrl.u32 %v515, 16
        %v623 = vrot.slane %v621, 3
        %v624 = vshll.u32 %v515, 16
        %v626 = vrot.slane %v624, 4
        %v627 = vor.u32 %v623, %v626
        %v628 = vsel %vm570, %v619, %v627
        %v630 = vshrl.u32 %v516, 16
        %v632 = vrot.slane %v630, 3
        %v633 = vshll.u32 %v516, 16
        %v635 = vrot.slane %v633, 4
        %v636 = vor.u32 %v632, %v635
        %v637 = vsel %vm570, %v627, %v636
        %v639 = vshrl.u32 %v517, 16
        %v641 = vrot.slane %v639, 3
        %v642 = vshll.u32 %v517, 16
        %v644 = vrot.slane %v642, 4
        %v645 = vor.u32 %v641, %v644
        %v646 = vsel %vm570, %v636, %v645
        %v649 = vsel %vm609, 0, %v619
        %v650 = vsel %vm609, %v645, 0
        %v652 = vshrl.u32 %v566, 16
        %v654 = vrot.slane %v652, 3
        %v655 = vshll.u32 %v566, 16
        %v657 = vrot.slane %v655, 4
        %v658 = vor.u32 %v654, %v657
        %v660 = vshrl.u32 %v567, 16
        %v662 = vrot.slane %v660, 3
        %v663 = vshll.u32 %v567, 16
        %v665 = vrot.slane %v663, 4
        %v666 = vor.u32 %v662, %v665
        %v667 = vsel %vm570, %v658, %v666
        %v669 = vshrl.u32 %v568, 16
        %v671 = vrot.slane %v669, 3
        %v672 = vshll.u32 %v568, 16
        %v674 = vrot.slane %v672, 4
        %v675 = vor.u32 %v671, %v674
        %v676 = vsel %vm570, %v666, %v675
        %v678 = vshrl.u32 %v569, 16
        %v680 = vrot.slane %v678, 3
        %v681 = vshll.u32 %v569, 16
        %v683 = vrot.slane %v681, 4
        %v684 = vor.u32 %v680, %v683
        %v685 = vsel %vm570, %v675, %v684
        %v688 = vsel %vm609, 0, %v658
        %v689 = vsel %vm609, %v684, 0
        %vm690 = vsmask.f32 7424
        %v692 = vshrl.u32 %v610, 16
        %v694 = vshll.u32 %v610, 16
        %v696 = vrot.slane %v694, 1
        %v697 = vor.u32 %v692, %v696
        %v699 = vshll.u32 %v587, 16
        %v701 = vrot.slane %v699, 1
        %v702 = vsel %vm690, %v697, %v701
        %v703 = vshrl.u32 %v587, 16
        %v705 = vor.u32 %v703, %v701
        %v707 = vshll.u32 %v596, 16
        %v709 = vrot.slane %v707, 1
        %v710 = vsel %vm690, %v705, %v709
        %v711 = vshrl.u32 %v596, 16
        %v713 = vor.u32 %v711, %v709
        %v715 = vshll.u32 %v605, 16
        %v717 = vrot.slane %v715, 1
        %v718 = vsel %vm690, %v713, %v717
        %v719 = vshrl.u32 %v605, 16
        %v721 = vor.u32 %v719, %v717
        %v723 = vshll.u32 %v611, 16
        %v725 = vrot.slane %v723, 1
        %v726 = vsel %vm690, %v721, %v725
        %727 = vrot.lane.b32.xlu0 %v702, 12
        %v728 = vpop.permute.xlu0 %727
        %729 = vrot.lane.b32.xlu0 %v710, 12
        %v730 = vpop.permute.xlu0 %729
        %731 = vrot.lane.b32.xlu0 %v718, 12
        %v732 = vpop.permute.xlu0 %731
        %733 = vrot.lane.b32.xlu0 %v726, 12
        %v734 = vpop.permute.xlu0 %733
        %vm737 = vcmask 1046528
        %v738 = vrot.slane %v688, 1
        %v739 = vrot.slane %v667, 1
        %v740 = vsel %vm737, %v738, %v739
        %v741 = vrot.slane %v676, 1
        %v742 = vsel %vm737, %v739, %v741
        %v743 = vrot.slane %v685, 1
        %v744 = vsel %vm737, %v741, %v743
        %v745 = vrot.slane %v689, 1
        %v746 = vsel %vm737, %v743, %v745
        %747 = vrot.lane.b32.xlu0 %v740, 24
        %v748 = vpop.permute.xlu0 %747
        %749 = vrot.lane.b32.xlu0 %v742, 24
        %v750 = vpop.permute.xlu0 %749
        %751 = vrot.lane.b32.xlu0 %v744, 24
        %v752 = vpop.permute.xlu0 %751
        %753 = vrot.lane.b32.xlu0 %v746, 24
        %v754 = vpop.permute.xlu0 %753
        %vm757 = vcmask 1043456
        %v758 = vrot.slane %v649, 4
        %v759 = vrot.slane %v628, 4
        %v760 = vsel %vm757, %v758, %v759
        %v761 = vrot.slane %v637, 4
        %v762 = vsel %vm757, %v759, %v761
        %v763 = vrot.slane %v646, 4
        %v764 = vsel %vm757, %v761, %v763
        %v765 = vrot.slane %v650, 4
        %v766 = vsel %vm757, %v763, %v765
        %767 = vrot.lane.b32.xlu0 %v760, 36
        %v768 = vpop.permute.xlu0 %767
        %769 = vrot.lane.b32.xlu0 %v762, 36
        %v770 = vpop.permute.xlu0 %769
        %771 = vrot.lane.b32.xlu0 %v764, 36
        %v772 = vpop.permute.xlu0 %771
        %773 = vrot.lane.b32.xlu0 %v766, 36
        %v774 = vpop.permute.xlu0 %773
        %vm775 = vsmask.f32 3328
        %v776 = vrot.slane %v692, 4
        %v777 = vrot.slane %v694, 5
        %v778 = vor.u32 %v776, %v777
        %v779 = vrot.slane %v703, 4
        %v780 = vrot.slane %v699, 5
        %v781 = vor.u32 %v779, %v780
        %v782 = vsel %vm775, %v778, %v781
        %v783 = vrot.slane %v711, 4
        %v784 = vrot.slane %v707, 5
        %v785 = vor.u32 %v783, %v784
        %v786 = vsel %vm775, %v781, %v785
        %v787 = vrot.slane %v719, 4
        %v788 = vrot.slane %v715, 5
        %v789 = vor.u32 %v787, %v788
        %v790 = vsel %vm775, %v785, %v789
        %v791 = vshrl.u32 %v611, 16
        %v793 = vrot.slane %v791, 4
        %v794 = vrot.slane %v723, 5
        %v795 = vor.u32 %v793, %v794
        %v796 = vsel %vm775, %v789, %v795
        %797 = vrot.lane.b32.xlu0 %v782, 48
        %v798 = vpop.permute.xlu0 %797
        %799 = vrot.lane.b32.xlu0 %v786, 48
        %v800 = vpop.permute.xlu0 %799
        %801 = vrot.lane.b32.xlu0 %v790, 48
        %v802 = vpop.permute.xlu0 %801
        %803 = vrot.lane.b32.xlu0 %v796, 48
        %v804 = vpop.permute.xlu0 %803
        %vm805 = vcmask 1042432
        %v806 = vrot.slane %v688, 5
        %v807 = vrot.slane %v667, 5
        %v808 = vsel %vm805, %v806, %v807
        %v809 = vrot.slane %v676, 5
        %v810 = vsel %vm805, %v807, %v809
        %v811 = vrot.slane %v685, 5
        %v812 = vsel %vm805, %v809, %v811
        %v813 = vrot.slane %v689, 5
        %v814 = vsel %vm805, %v811, %v813
        %815 = vrot.lane.b32.xlu0 %v808, 60
        %v816 = vpop.permute.xlu0 %815
        %817 = vrot.lane.b32.xlu0 %v810, 60
        %v818 = vpop.permute.xlu0 %817
        %819 = vrot.lane.b32.xlu0 %v812, 60
        %v820 = vpop.permute.xlu0 %819
        %821 = vrot.lane.b32.xlu0 %v814, 60
        %v822 = vpop.permute.xlu0 %821
        %823 = vrot.lane.b32.xlu0 %v628, 72
        %v824 = vpop.permute.xlu0 %823
        %825 = vrot.lane.b32.xlu0 %v637, 72
        %v826 = vpop.permute.xlu0 %825
        %827 = vrot.lane.b32.xlu0 %v646, 72
        %v828 = vpop.permute.xlu0 %827
        %829 = vrot.lane.b32.xlu0 %v650, 72
        %v830 = vpop.permute.xlu0 %829
        %v831 = vor.u32 %v791, %v725
        %v833 = vshll.u32 0, 16
        %v835 = vrot.slane %v833, 1
        %v836 = vsel %vm690, %v831, %v835
        %837 = vrot.lane.b32.xlu0 %v710, 84
        %v838 = vpop.permute.xlu0 %837
        %839 = vrot.lane.b32.xlu0 %v718, 84
        %v840 = vpop.permute.xlu0 %839
        %841 = vrot.lane.b32.xlu0 %v726, 84
        %v842 = vpop.permute.xlu0 %841
        %843 = vrot.lane.b32.xlu0 %v836, 84
        %v844 = vpop.permute.xlu0 %843
        %v846 = vrot.slane 0, 1
        %v847 = vsel %vm737, %v745, %v846
        %848 = vrot.lane.b32.xlu0 %v742, 96
        %v849 = vpop.permute.xlu0 %848
        %850 = vrot.lane.b32.xlu0 %v744, 96
        %v851 = vpop.permute.xlu0 %850
        %852 = vrot.lane.b32.xlu0 %v746, 96
        %v853 = vpop.permute.xlu0 %852
        %854 = vrot.lane.b32.xlu0 %v847, 96
        %v855 = vpop.permute.xlu0 %854
        %vm856 = vcmask 97280
        %v859 = vsel %vm856, %v649, %v728
        %v862 = vsel %vm856, %v628, %v730
        %v865 = vsel %vm856, %v637, %v732
        %v868 = vsel %vm856, %v646, %v734
        %vm869 = vcmask 195584
        %v871 = vsel %vm869, %v859, %v748
        %v873 = vsel %vm869, %v862, %v750
        %v875 = vsel %vm869, %v865, %v752
        %v877 = vsel %vm869, %v868, %v754
        %vm878 = vcmask 293888
        %v880 = vsel %vm878, %v871, %v768
        %v882 = vsel %vm878, %v873, %v770
        %v884 = vsel %vm878, %v875, %v772
        %v886 = vsel %vm878, %v877, %v774
        %vm887 = vcmask 392192
        %v889 = vsel %vm887, %v880, %v798
        %v891 = vsel %vm887, %v882, %v800
        %v893 = vsel %vm887, %v884, %v802
        %v895 = vsel %vm887, %v886, %v804
        %vm896 = vcmask 490496
        %v898 = vsel %vm896, %v889, %v816
        %v900 = vsel %vm896, %v891, %v818
        %v902 = vsel %vm896, %v893, %v820
        %v904 = vsel %vm896, %v895, %v822
        %vm905 = vcmask 588800
        %v907 = vsel %vm905, %v898, %v824
        %v909 = vsel %vm905, %v900, %v826
        %v911 = vsel %vm905, %v902, %v828
        %v913 = vsel %vm905, %v904, %v830
        %vm914 = vcmask 687104
        %v916 = vsel %vm914, %v907, %v838
        %v918 = vsel %vm914, %v909, %v840
        %v920 = vsel %vm914, %v911, %v842
        %v922 = vsel %vm914, %v913, %v844
        %vm923 = vcmask 785408
        %v925 = vsel %vm923, %v916, %v849
        %v927 = vsel %vm923, %v918, %v851
        %v929 = vsel %vm923, %v920, %v853
        %v931 = vsel %vm923, %v922, %v855
        %v932 = vld [vmem:[%s2] sm:$0xf]
        %v933 = vld [vmem:[%s2 + $0x4] sm:$0xf]
        %v934 = vld [vmem:[%s2 + $0x8] sm:$0xf]
        %v935 = vld [vmem:[%s2 + $0xc] sm:$0xf]
        %v936 = vld [vmem:[%s2 + $0x10] sm:$0xf]
        %v937 = vld [vmem:[%s2 + $0x14] sm:$0xf]
        %v938 = vld [vmem:[%s2 + $0x18] sm:$0xf]
        %v939 = vld [vmem:[%s2 + $0x1c] sm:$0xf]
        %v940 = vld [vmem:[%s2 + $0x20] sm:$0xf]
        %v941 = vld [vmem:[%s2 + $0x24] sm:$0xf]
        %v942 = vld [vmem:[%s2 + $0x28] sm:$0xf]
        %v943 = vld [vmem:[%s2 + $0x2c] sm:$0xf]
        %v944 = vld [vmem:[%s2 + $0x30] sm:$0xf]
        %v945 = vld [vmem:[%s2 + $0x34] sm:$0x3]
        %v960 = vunpack.c.l.b16 %v932
        %v961 = vunpack.c.l.b16 %v933
        %v962 = vunpack.c.l.b16 %v934
        %v963 = vunpack.c.l.b16 %v935
        %v964 = vunpack.c.l.b16 %v936
        %v965 = vunpack.c.l.b16 %v937
        %v966 = vunpack.c.l.b16 %v938
        %v967 = vunpack.c.l.b16 %v939
        %v968 = vunpack.c.l.b16 %v940
        %v969 = vunpack.c.l.b16 %v941
        %v970 = vunpack.c.l.b16 %v942
        %v971 = vunpack.c.l.b16 %v943
        %v972 = vunpack.c.l.b16 %v944
        %v973 = vunpack.c.l.b16 %v945
        %v974 = vpack.c.b16 %v961, %v960
        %v975 = vpack.c.b16 %v963, %v962
        %v976 = vpack.c.b16 %v965, %v964
        %v977 = vpack.c.b16 %v967, %v966
        %v978 = vpack.c.b16 %v969, %v968
        %v979 = vpack.c.b16 %v971, %v970
        %v980 = vpack.c.b16 %v973, %v972
        %vm987 = vcmask 883712
        %v988 = vsel %vm987, %v925, 0
        %v990 = vsel %vm987, %v927, 0
        %v992 = vsel %vm987, %v929, 0
        %v994 = vsel %vm987, %v931, 0
        %vm996 = vcmask 1045504
        %v998 = vsel %vm996, %v980, 0
        %1000 = vmatprep.subr.bf16.mxu0 0
        %1001 = vmatpush1.bf16.msra.mxu0 0
        %1002 = vmatprep.subr.bf16.mxu0 0
        %1003 = vmatpush1.bf16.msra.mxu0 %v998
        %1004 = vmatprep.subr.bf16.mxu0 0
        %1005 = vmatpush1.bf16.msra.mxu0 %v979
        %1006 = vmatprep.subr.bf16.mxu0 0
        %1007 = vmatpush1.bf16.msra.mxu0 %v978
        %1008 = vmatprep.subr.bf16.mxu0 0
        %1009 = vmatpush1.bf16.msra.mxu0 %v977
        %1010 = vmatprep.subr.bf16.mxu0 0
        %1011 = vmatpush1.bf16.msra.mxu0 %v976
        %1012 = vmatprep.subr.bf16.mxu0 0
        %1013 = vmatpush1.bf16.msra.mxu0 %v975
        %1014 = vmatprep.subr.bf16.mxu0 0
        %1015 = vmatpush1.bf16.msra.mxu0 %v974
        %1016 = vmatprep.subr.bf16.mxu0 0
        %1017 = vmatpush2.bf16.msra.mxu0 0
        %1018 = vmatprep.subr.bf16.mxu0 0
        %1019 = vmatpush2.bf16.msra.mxu0 0
        %1020 = vmatprep.subr.bf16.mxu0 0
        %1021 = vmatpush2.bf16.msra.mxu0 0
        %1022 = vmatprep.subr.bf16.mxu0 0
        %1023 = vmatpush2.bf16.msra.mxu0 0
        %1024 = vmatprep.subr.bf16.mxu0 0
        %1025 = vmatpush2.bf16.msra.mxu0 0
        %1026 = vmatprep.subr.bf16.mxu0 0
        %1027 = vmatpush2.bf16.msra.mxu0 0
        %1028 = vmatprep.subr.bf16.mxu0 0
        %1029 = vmatpush2.bf16.msra.mxu0 0
        %1030 = vmatprep.subr.bf16.mxu0 0
        %1031 = vmatpush2.bf16.msra.mxu0 0
        %1032 = vmatprep.mubr.bf16.mxu0 0
        %1033 = vmatmul.mubr.bf16.gmra.mxu0 %v988
        %v1034 = vpop.f32.mrf.mxu0
        %v1035 = vadd.f32 0.0, %v1034
        %v1036 = vpop.f32.mrf.mxu0
        %v1037 = vpop.f32.mrf.mxu0
        %v1038 = vadd.f32 0.0, %v1037
        %v1039 = vpop.f32.mrf.mxu0
        %1040 = vmatprep.mubr.bf16.mxu0 0
        %1041 = vmatmul.mubr.bf16.gmra.mxu0 %v990
        %v1042 = vpop.f32.mrf.mxu0
        %v1043 = vadd.f32 0.0, %v1042
        %v1044 = vpop.f32.mrf.mxu0
        %v1045 = vpop.f32.mrf.mxu0
        %v1046 = vadd.f32 0.0, %v1045
        %v1047 = vpop.f32.mrf.mxu0
        %1048 = vmatprep.mubr.bf16.mxu0 0
        %1049 = vmatmul.mubr.bf16.gmra.mxu0 %v992
        %v1050 = vpop.f32.mrf.mxu0
        %v1051 = vadd.f32 0.0, %v1050
        %v1052 = vpop.f32.mrf.mxu0
        %v1053 = vpop.f32.mrf.mxu0
        %v1054 = vadd.f32 0.0, %v1053
        %v1055 = vpop.f32.mrf.mxu0
        %1056 = vmatprep.mubr.bf16.mxu0 0
        %1057 = vmatmul.mubr.bf16.gmra.mxu0 %v994
        %v1058 = vpop.f32.mrf.mxu0
        %v1059 = vadd.f32 0.0, %v1058
        %v1060 = vpop.f32.mrf.mxu0
        %v1061 = vpop.f32.mrf.mxu0
        %v1062 = vadd.f32 0.0, %v1061
        %v1063 = vpop.f32.mrf.mxu0
        %1064 = vdwg.mxu0
        %v1065 = vld [vmem:[%s3] sm:$0x1]
        %v1067 = vlaneseq
        %v1068 = vshrl.u32 %v1067, 7
        %v1069 = vsub.s32 0, %v1068
        %v1070 = vrot.slane %v1065, %v1069
        %v1072 = vmul.f32 %v1035, %v1070
        %v1073 = vmul.f32 %v1038, %v1070
        %v1074 = vmul.f32 %v1043, %v1070
        %v1075 = vmul.f32 %v1046, %v1070
        %v1076 = vmul.f32 %v1051, %v1070
        %v1077 = vmul.f32 %v1054, %v1070
        %v1078 = vmul.f32 %v1059, %v1070
        %v1079 = vmul.f32 %v1062, %v1070
        %v1080 = vld [vmem:[%s4] sm:$0x1]
        %v1082 = vlaneseq
        %v1083 = vshrl.u32 %v1082, 7
        %v1084 = vsub.s32 0, %v1083
        %v1085 = vrot.slane %v1080, %v1084
        %v1087 = vadd.f32 %v1072, %v1085
        %v1088 = vadd.f32 %v1073, %v1085
        %v1089 = vadd.f32 %v1074, %v1085
        %v1090 = vadd.f32 %v1075, %v1085
        %v1091 = vadd.f32 %v1076, %v1085
        %v1092 = vadd.f32 %v1077, %v1085
        %v1093 = vadd.f32 %v1078, %v1085
        %v1094 = vadd.f32 %v1079, %v1085
        %v1095 = vmax.f32 %v1087, 0.0
        %v1096 = vmax.f32 %v1088, 0.0
        %v1097 = vmax.f32 %v1089, 0.0
        %v1098 = vmax.f32 %v1090, 0.0
        %v1099 = vmax.f32 %v1091, 0.0
        %v1100 = vmax.f32 %v1092, 0.0
        %v1101 = vmax.f32 %v1093, 0.0
        %v1102 = vmax.f32 %v1094, 0.0
        %v1103 = vld [vmem:[%s412] sm:$0xf]
        %v1104 = vld [vmem:[%s412 + $0x4] sm:$0xf]
        %v1105 = vld [vmem:[%s412 + $0x8] sm:$0xf]
        %v1106 = vld [vmem:[%s412 + $0xc] sm:$0xf]
        %v1107 = vld [vmem:[%s412 + $0x10] sm:$0xf]
        %v1108 = vld [vmem:[%s412 + $0x14] sm:$0xf]
        %v1109 = vld [vmem:[%s412 + $0x18] sm:$0xf]
        %v1110 = vld [vmem:[%s412 + $0x1c] sm:$0xf]
        %v1111 = vunpack.c.l.bf16 %v1103
        %v1112 = vunpack.c.l.bf16 %v1104
        %v1113 = vunpack.c.l.bf16 %v1105
        %v1114 = vunpack.c.l.bf16 %v1106
        %v1115 = vunpack.c.l.bf16 %v1107
        %v1116 = vunpack.c.l.bf16 %v1108
        %v1117 = vunpack.c.l.bf16 %v1109
        %v1118 = vunpack.c.l.bf16 %v1110
        %v1119 = vadd.f32 %v1095, %v1111
        %v1120 = vadd.f32 %v1096, %v1112
        %v1121 = vadd.f32 %v1097, %v1113
        %v1122 = vadd.f32 %v1098, %v1114
        %v1123 = vadd.f32 %v1099, %v1115
        %v1124 = vadd.f32 %v1100, %v1116
        %v1125 = vadd.f32 %v1101, %v1117
        %v1126 = vadd.f32 %v1102, %v1118
        %v1127 = vpack.c.bf16 %v1120, %v1119
        %v1128 = vpack.c.bf16 %v1122, %v1121
        %v1129 = vpack.c.bf16 %v1124, %v1123
        %v1130 = vpack.c.bf16 %v1126, %v1125
        %v1131 = vsel %vm510, %v1127, 0
        %v1132 = vsel %vm511, %v1128, 0
        %v1133 = vsel %vm512, %v1129, 0
        %v1134 = vsel %vm513, %v1130, 0
        %v1135 = vsel %vm562, %v1127, 0
        %v1136 = vsel %vm563, %v1128, 0
        %v1137 = vsel %vm564, %v1129, 0
        %v1138 = vsel %vm565, %v1130, 0
        %v1140 = vshrl.u32 %v1127, 16
        %v1142 = vrot.slane %v1140, 3
        %v1143 = vshll.u32 %v1127, 16
        %v1145 = vrot.slane %v1143, 4
        %v1146 = vor.u32 %v1142, %v1145
        %v1148 = vshrl.u32 %v1128, 16
        %v1150 = vrot.slane %v1148, 3
        %v1151 = vshll.u32 %v1128, 16
        %v1153 = vrot.slane %v1151, 4
        %v1154 = vor.u32 %v1150, %v1153
        %v1155 = vsel %vm570, %v1146, %v1154
        %v1157 = vshrl.u32 %v1129, 16
        %v1159 = vrot.slane %v1157, 3
        %v1160 = vshll.u32 %v1129, 16
        %v1162 = vrot.slane %v1160, 4
        %v1163 = vor.u32 %v1159, %v1162
        %v1164 = vsel %vm570, %v1154, %v1163
        %v1166 = vshrl.u32 %v1130, 16
        %v1168 = vrot.slane %v1166, 3
        %v1169 = vshll.u32 %v1130, 16
        %v1171 = vrot.slane %v1169, 4
        %v1172 = vor.u32 %v1168, %v1171
        %v1173 = vsel %vm570, %v1163, %v1172
        %v1176 = vsel %vm609, 0, %v1146
        %v1177 = vsel %vm609, %v1172, 0
        %v1179 = vshrl.u32 %v1131, 16
        %v1181 = vrot.slane %v1179, 3
        %v1182 = vshll.u32 %v1131, 16
        %v1184 = vrot.slane %v1182, 4
        %v1185 = vor.u32 %v1181, %v1184
        %v1187 = vshrl.u32 %v1132, 16
        %v1189 = vrot.slane %v1187, 3
        %v1190 = vshll.u32 %v1132, 16
        %v1192 = vrot.slane %v1190, 4
        %v1193 = vor.u32 %v1189, %v1192
        %v1194 = vsel %vm570, %v1185, %v1193
        %v1196 = vshrl.u32 %v1133, 16
        %v1198 = vrot.slane %v1196, 3
        %v1199 = vshll.u32 %v1133, 16
        %v1201 = vrot.slane %v1199, 4
        %v1202 = vor.u32 %v1198, %v1201
        %v1203 = vsel %vm570, %v1193, %v1202
        %v1205 = vshrl.u32 %v1134, 16
        %v1207 = vrot.slane %v1205, 3
        %v1208 = vshll.u32 %v1134, 16
        %v1210 = vrot.slane %v1208, 4
        %v1211 = vor.u32 %v1207, %v1210
        %v1212 = vsel %vm570, %v1202, %v1211
        %v1215 = vsel %vm609, 0, %v1185
        %v1216 = vsel %vm609, %v1211, 0
        %v1218 = vshrl.u32 %v1135, 16
        %v1220 = vrot.slane %v1218, 3
        %v1221 = vshll.u32 %v1135, 16
        %v1223 = vrot.slane %v1221, 4
        %v1224 = vor.u32 %v1220, %v1223
        %v1226 = vshrl.u32 %v1136, 16
        %v1228 = vrot.slane %v1226, 3
        %v1229 = vshll.u32 %v1136, 16
        %v1231 = vrot.slane %v1229, 4
        %v1232 = vor.u32 %v1228, %v1231
        %v1233 = vsel %vm570, %v1224, %v1232
        %v1235 = vshrl.u32 %v1137, 16
        %v1237 = vrot.slane %v1235, 3
        %v1238 = vshll.u32 %v1137, 16
        %v1240 = vrot.slane %v1238, 4
        %v1241 = vor.u32 %v1237, %v1240
        %v1242 = vsel %vm570, %v1232, %v1241
        %v1244 = vshrl.u32 %v1138, 16
        %v1246 = vrot.slane %v1244, 3
        %v1247 = vshll.u32 %v1138, 16
        %v1249 = vrot.slane %v1247, 4
        %v1250 = vor.u32 %v1246, %v1249
        %v1251 = vsel %vm570, %v1241, %v1250
        %v1254 = vsel %vm609, 0, %v1224
        %v1255 = vsel %vm609, %v1250, 0
        %v1257 = vshrl.u32 %v1176, 16
        %v1259 = vshll.u32 %v1176, 16
        %v1261 = vrot.slane %v1259, 1
        %v1262 = vor.u32 %v1257, %v1261
        %v1264 = vshll.u32 %v1155, 16
        %v1266 = vrot.slane %v1264, 1
        %v1267 = vsel %vm690, %v1262, %v1266
        %v1268 = vshrl.u32 %v1155, 16
        %v1270 = vor.u32 %v1268, %v1266
        %v1272 = vshll.u32 %v1164, 16
        %v1274 = vrot.slane %v1272, 1
        %v1275 = vsel %vm690, %v1270, %v1274
        %v1276 = vshrl.u32 %v1164, 16
        %v1278 = vor.u32 %v1276, %v1274
        %v1280 = vshll.u32 %v1173, 16
        %v1282 = vrot.slane %v1280, 1
        %v1283 = vsel %vm690, %v1278, %v1282
        %v1284 = vshrl.u32 %v1173, 16
        %v1286 = vor.u32 %v1284, %v1282
        %v1288 = vshll.u32 %v1177, 16
        %v1290 = vrot.slane %v1288, 1
        %v1291 = vsel %vm690, %v1286, %v1290
        %1292 = vrot.lane.b32.xlu0 %v1267, 32
        %v1293 = vpop.permute.xlu0 %1292
        %1294 = vrot.lane.b32.xlu0 %v1275, 32
        %v1295 = vpop.permute.xlu0 %1294
        %1296 = vrot.lane.b32.xlu0 %v1283, 32
        %v1297 = vpop.permute.xlu0 %1296
        %1298 = vrot.lane.b32.xlu0 %v1291, 32
        %v1299 = vpop.permute.xlu0 %1298
        %v1302 = vrot.slane %v1254, 1
        %v1303 = vrot.slane %v1233, 1
        %v1304 = vsel %vm737, %v1302, %v1303
        %v1305 = vrot.slane %v1242, 1
        %v1306 = vsel %vm737, %v1303, %v1305
        %v1307 = vrot.slane %v1251, 1
        %v1308 = vsel %vm737, %v1305, %v1307
        %v1309 = vrot.slane %v1255, 1
        %v1310 = vsel %vm737, %v1307, %v1309
        %1311 = vrot.lane.b32.xlu0 %v1304, 64
        %v1312 = vpop.permute.xlu0 %1311
        %1313 = vrot.lane.b32.xlu0 %v1306, 64
        %v1314 = vpop.permute.xlu0 %1313
        %1315 = vrot.lane.b32.xlu0 %v1308, 64
        %v1316 = vpop.permute.xlu0 %1315
        %1317 = vrot.lane.b32.xlu0 %v1310, 64
        %v1318 = vpop.permute.xlu0 %1317
        %v1321 = vrot.slane %v1215, 4
        %v1322 = vrot.slane %v1194, 4
        %v1323 = vsel %vm757, %v1321, %v1322
        %v1324 = vrot.slane %v1203, 4
        %v1325 = vsel %vm757, %v1322, %v1324
        %v1326 = vrot.slane %v1212, 4
        %v1327 = vsel %vm757, %v1324, %v1326
        %v1328 = vrot.slane %v1216, 4
        %v1329 = vsel %vm757, %v1326, %v1328
        %1330 = vrot.lane.b32.xlu0 %v1323, 96
        %v1331 = vpop.permute.xlu0 %1330
        %1332 = vrot.lane.b32.xlu0 %v1325, 96
        %v1333 = vpop.permute.xlu0 %1332
        %1334 = vrot.lane.b32.xlu0 %v1327, 96
        %v1335 = vpop.permute.xlu0 %1334
        %1336 = vrot.lane.b32.xlu0 %v1329, 96
        %v1337 = vpop.permute.xlu0 %1336
        %v1338 = vrot.slane %v1257, 4
        %v1339 = vrot.slane %v1259, 5
        %v1340 = vor.u32 %v1338, %v1339
        %v1341 = vrot.slane %v1268, 4
        %v1342 = vrot.slane %v1264, 5
        %v1343 = vor.u32 %v1341, %v1342
        %v1344 = vsel %vm775, %v1340, %v1343
        %v1345 = vrot.slane %v1276, 4
        %v1346 = vrot.slane %v1272, 5
        %v1347 = vor.u32 %v1345, %v1346
        %v1348 = vsel %vm775, %v1343, %v1347
        %v1349 = vrot.slane %v1284, 4
        %v1350 = vrot.slane %v1280, 5
        %v1351 = vor.u32 %v1349, %v1350
        %v1352 = vsel %vm775, %v1347, %v1351
        %v1353 = vshrl.u32 %v1177, 16
        %v1355 = vrot.slane %v1353, 4
        %v1356 = vrot.slane %v1288, 5
        %v1357 = vor.u32 %v1355, %v1356
        %v1358 = vsel %vm775, %v1351, %v1357
        %v1359 = vrot.slane %v1254, 5
        %v1360 = vrot.slane %v1233, 5
        %v1361 = vsel %vm805, %v1359, %v1360
        %v1362 = vrot.slane %v1242, 5
        %v1363 = vsel %vm805, %v1360, %v1362
        %v1364 = vrot.slane %v1251, 5
        %v1365 = vsel %vm805, %v1362, %v1364
        %v1366 = vrot.slane %v1255, 5
        %v1367 = vsel %vm805, %v1364, %v1366
        %1368 = vrot.lane.b32.xlu0 %v1361, 32
        %v1369 = vpop.permute.xlu0 %1368
        %1370 = vrot.lane.b32.xlu0 %v1363, 32
        %v1371 = vpop.permute.xlu0 %1370
        %1372 = vrot.lane.b32.xlu0 %v1365, 32
        %v1373 = vpop.permute.xlu0 %1372
        %1374 = vrot.lane.b32.xlu0 %v1367, 32
        %v1375 = vpop.permute.xlu0 %1374
        %1376 = vrot.lane.b32.xlu0 %v1194, 64
        %v1377 = vpop.permute.xlu0 %1376
        %1378 = vrot.lane.b32.xlu0 %v1203, 64
        %v1379 = vpop.permute.xlu0 %1378
        %1380 = vrot.lane.b32.xlu0 %v1212, 64
        %v1381 = vpop.permute.xlu0 %1380
        %1382 = vrot.lane.b32.xlu0 %v1216, 64
        %v1383 = vpop.permute.xlu0 %1382
        %v1384 = vor.u32 %v1353, %v1290
        %v1385 = vsel %vm690, %v1384, %v835
        %1386 = vrot.lane.b32.xlu0 %v1275, 96
        %v1387 = vpop.permute.xlu0 %1386
        %1388 = vrot.lane.b32.xlu0 %v1283, 96
        %v1389 = vpop.permute.xlu0 %1388
        %1390 = vrot.lane.b32.xlu0 %v1291, 96
        %v1391 = vpop.permute.xlu0 %1390
        %1392 = vrot.lane.b32.xlu0 %v1385, 96
        %v1393 = vpop.permute.xlu0 %1392
        %v1394 = vsel %vm737, %v1309, %v846
        %vm1395 = vcmask 261120
        %v1398 = vsel %vm1395, %v1215, %v1293
        %v1401 = vsel %vm1395, %v1194, %v1295
        %v1404 = vsel %vm1395, %v1203, %v1297
        %v1407 = vsel %vm1395, %v1212, %v1299
        %vm1408 = vcmask 523264
        %v1410 = vsel %vm1408, %v1398, %v1312
        %v1412 = vsel %vm1408, %v1401, %v1314
        %v1414 = vsel %vm1408, %v1404, %v1316
        %v1416 = vsel %vm1408, %v1407, %v1318
        %v1418 = vsel %vm923, %v1410, %v1331
        %v1421 = vsel %vm923, %v1412, %v1333
        %v1424 = vsel %vm923, %v1414, %v1335
        %v1427 = vsel %vm923, %v1416, %v1337
        %v1431 = vsel %vm1395, %v1344, %v1369
        %v1434 = vsel %vm1395, %v1348, %v1371
        %v1437 = vsel %vm1395, %v1352, %v1373
        %v1440 = vsel %vm1395, %v1358, %v1375
        %v1442 = vsel %vm1408, %v1431, %v1377
        %v1444 = vsel %vm1408, %v1434, %v1379
        %v1446 = vsel %vm1408, %v1437, %v1381
        %v1448 = vsel %vm1408, %v1440, %v1383
        %v1450 = vsel %vm923, %v1442, %v1387
        %v1453 = vsel %vm923, %v1444, %v1389
        %v1456 = vsel %vm923, %v1446, %v1391
        %v1459 = vsel %vm923, %v1448, %v1393
        %v1461 = vld [vmem:[%s5] sm:$0xf]
        %v1462 = vld [vmem:[%s5 + $0x4] sm:$0xf]
        %v1463 = vld [vmem:[%s5 + $0x8] sm:$0xf]
        %v1464 = vld [vmem:[%s5 + $0xc] sm:$0xf]
        %v1465 = vld [vmem:[%s5 + $0x10] sm:$0xf]
        %v1466 = vld [vmem:[%s5 + $0x14] sm:$0xf]
        %v1467 = vld [vmem:[%s5 + $0x18] sm:$0xf]
        %v1468 = vld [vmem:[%s5 + $0x1c] sm:$0xf]
        %v1469 = vld [vmem:[%s5 + $0x20] sm:$0xf]
        %v1470 = vld [vmem:[%s5 + $0x24] sm:$0xf]
        %v1471 = vld [vmem:[%s5 + $0x28] sm:$0xf]
        %v1472 = vld [vmem:[%s5 + $0x2c] sm:$0xf]
        %v1473 = vld [vmem:[%s5 + $0x30] sm:$0xf]
        %v1474 = vld [vmem:[%s5 + $0x34] sm:$0xf]
        %v1475 = vld [vmem:[%s5 + $0x38] sm:$0xf]
        %v1476 = vld [vmem:[%s5 + $0x3c] sm:$0xf]
        %v1477 = vld [vmem:[%s5 + $0x40] sm:$0xf]
        %v1478 = vld [vmem:[%s5 + $0x44] sm:$0xf]
        %v1479 = vld [vmem:[%s5 + $0x48] sm:$0xf]
        %v1480 = vld [vmem:[%s5 + $0x4c] sm:$0xf]
        %v1481 = vld [vmem:[%s5 + $0x50] sm:$0xf]
        %v1482 = vld [vmem:[%s5 + $0x54] sm:$0xf]
        %v1483 = vld [vmem:[%s5 + $0x58] sm:$0xf]
        %v1484 = vld [vmem:[%s5 + $0x5c] sm:$0xf]
        %v1485 = vld [vmem:[%s5 + $0x60] sm:$0xf]
        %v1486 = vld [vmem:[%s5 + $0x64] sm:$0xf]
        %v1487 = vld [vmem:[%s5 + $0x68] sm:$0xf]
        %v1488 = vld [vmem:[%s5 + $0x6c] sm:$0xf]
        %v1489 = vld [vmem:[%s5 + $0x70] sm:$0xf]
        %v1490 = vld [vmem:[%s5 + $0x74] sm:$0xf]
        %v1491 = vld [vmem:[%s5 + $0x78] sm:$0xf]
        %v1492 = vld [vmem:[%s5 + $0x7c] sm:$0xf]
        %v1493 = vld [vmem:[%s5 + $0x80] sm:$0xf]
        %v1494 = vld [vmem:[%s5 + $0x84] sm:$0xf]
        %v1495 = vld [vmem:[%s5 + $0x88] sm:$0xf]
        %v1496 = vld [vmem:[%s5 + $0x8c] sm:$0xf]
        %v1533 = vunpack.c.l.b16 %v1461
        %v1534 = vunpack.c.l.b16 %v1462
        %v1535 = vunpack.c.l.b16 %v1463
        %v1536 = vunpack.c.l.b16 %v1464
        %v1537 = vunpack.c.l.b16 %v1465
        %v1538 = vunpack.c.l.b16 %v1466
        %v1539 = vunpack.c.l.b16 %v1467
        %v1540 = vunpack.c.l.b16 %v1468
        %v1541 = vunpack.c.l.b16 %v1469
        %v1542 = vunpack.c.l.b16 %v1470
        %v1543 = vunpack.c.l.b16 %v1471
        %v1544 = vunpack.c.l.b16 %v1472
        %v1545 = vunpack.c.l.b16 %v1473
        %v1546 = vunpack.c.l.b16 %v1474
        %v1547 = vunpack.c.l.b16 %v1475
        %v1548 = vunpack.c.l.b16 %v1476
        %v1549 = vunpack.c.l.b16 %v1477
        %v1550 = vunpack.c.l.b16 %v1478
        %v1551 = vunpack.c.l.b16 %v1479
        %v1552 = vunpack.c.l.b16 %v1480
        %v1553 = vunpack.c.l.b16 %v1481
        %v1554 = vunpack.c.l.b16 %v1482
        %v1555 = vunpack.c.l.b16 %v1483
        %v1556 = vunpack.c.l.b16 %v1484
        %v1557 = vunpack.c.l.b16 %v1485
        %v1558 = vunpack.c.l.b16 %v1486
        %v1559 = vunpack.c.l.b16 %v1487
        %v1560 = vunpack.c.l.b16 %v1488
        %v1561 = vunpack.c.l.b16 %v1489
        %v1562 = vunpack.c.l.b16 %v1490
        %v1563 = vunpack.c.l.b16 %v1491
        %v1564 = vunpack.c.l.b16 %v1492
        %v1565 = vunpack.c.l.b16 %v1493
        %v1566 = vunpack.c.l.b16 %v1494
        %v1567 = vunpack.c.l.b16 %v1495
        %v1568 = vunpack.c.l.b16 %v1496
        %v1569 = vpack.c.b16 %v1534, %v1533
        %v1570 = vpack.c.b16 %v1536, %v1535
        %v1571 = vpack.c.b16 %v1538, %v1537
        %v1572 = vpack.c.b16 %v1540, %v1539
        %v1573 = vpack.c.b16 %v1542, %v1541
        %v1574 = vpack.c.b16 %v1544, %v1543
        %v1575 = vpack.c.b16 %v1546, %v1545
        %v1576 = vpack.c.b16 %v1548, %v1547
        %v1577 = vpack.c.b16 %v1550, %v1549
        %v1578 = vpack.c.b16 %v1552, %v1551
        %v1579 = vpack.c.b16 %v1554, %v1553
        %v1580 = vpack.c.b16 %v1556, %v1555
        %v1581 = vpack.c.b16 %v1558, %v1557
        %v1582 = vpack.c.b16 %v1560, %v1559
        %v1583 = vpack.c.b16 %v1562, %v1561
        %v1584 = vpack.c.b16 %v1564, %v1563
        %v1585 = vpack.c.b16 %v1566, %v1565
        %v1586 = vpack.c.b16 %v1568, %v1567
        %v1606 = vsel %vm1395, %v1306, 0
        %v1609 = vsel %vm1395, %v1308, 0
        %v1612 = vsel %vm1395, %v1310, 0
        %v1615 = vsel %vm1395, %v1394, 0
        %1617 = vmatprep.subr.bf16.mxu0 0
        %1618 = vmatpush1.bf16.msra.mxu0 %v1576
        %1619 = vmatprep.subr.bf16.mxu0 0
        %1620 = vmatpush1.bf16.msra.mxu0 %v1575
        %1621 = vmatprep.subr.bf16.mxu0 0
        %1622 = vmatpush1.bf16.msra.mxu0 %v1574
        %1623 = vmatprep.subr.bf16.mxu0 0
        %1624 = vmatpush1.bf16.msra.mxu0 %v1573
        %1625 = vmatprep.subr.bf16.mxu0 0
        %1626 = vmatpush1.bf16.msra.mxu0 %v1572
        %1627 = vmatprep.subr.bf16.mxu0 0
        %1628 = vmatpush1.bf16.msra.mxu0 %v1571
        %1629 = vmatprep.subr.bf16.mxu0 0
        %1630 = vmatpush1.bf16.msra.mxu0 %v1570
        %1631 = vmatprep.subr.bf16.mxu0 0
        %1632 = vmatpush1.bf16.msra.mxu0 %v1569
        %1633 = vmatprep.subr.bf16.mxu0 0
        %1634 = vmatpush2.bf16.msra.mxu0 %v1584
        %1635 = vmatprep.subr.bf16.mxu0 0
        %1636 = vmatpush2.bf16.msra.mxu0 %v1583
        %1637 = vmatprep.subr.bf16.mxu0 0
        %1638 = vmatpush2.bf16.msra.mxu0 %v1582
        %1639 = vmatprep.subr.bf16.mxu0 0
        %1640 = vmatpush2.bf16.msra.mxu0 %v1581
        %1641 = vmatprep.subr.bf16.mxu0 0
        %1642 = vmatpush2.bf16.msra.mxu0 %v1580
        %1643 = vmatprep.subr.bf16.mxu0 0
        %1644 = vmatpush2.bf16.msra.mxu0 %v1579
        %1645 = vmatprep.subr.bf16.mxu0 0
        %1646 = vmatpush2.bf16.msra.mxu0 %v1578
        %1647 = vmatprep.subr.bf16.mxu0 0
        %1648 = vmatpush2.bf16.msra.mxu0 %v1577
        %1649 = vmatprep.mubr.bf16.mxu0 %v1450
        %1650 = vmatmul.mubr.bf16.gmra.mxu0 %v1418
        %v1651 = vpop.f32.mrf.mxu0
        %v1652 = vadd.f32 0.0, %v1651
        %v1653 = vpop.f32.mrf.mxu0
        %v1654 = vpop.f32.mrf.mxu0
        %v1655 = vadd.f32 0.0, %v1654
        %v1656 = vpop.f32.mrf.mxu0
        %1657 = vmatprep.mubr.bf16.mxu0 %v1453
        %1658 = vmatmul.mubr.bf16.gmra.mxu0 %v1421
        %v1659 = vpop.f32.mrf.mxu0
        %v1660 = vadd.f32 0.0, %v1659
        %v1661 = vpop.f32.mrf.mxu0
        %v1662 = vpop.f32.mrf.mxu0
        %v1663 = vadd.f32 0.0, %v1662
        %v1664 = vpop.f32.mrf.mxu0
        %1665 = vmatprep.mubr.bf16.mxu0 %v1456
        %1666 = vmatmul.mubr.bf16.gmra.mxu0 %v1424
        %v1667 = vpop.f32.mrf.mxu0
        %v1668 = vadd.f32 0.0, %v1667
        %v1669 = vpop.f32.mrf.mxu0
        %v1670 = vpop.f32.mrf.mxu0
        %v1671 = vadd.f32 0.0, %v1670
        %v1672 = vpop.f32.mrf.mxu0
        %1673 = vmatprep.mubr.bf16.mxu0 %v1459
        %1674 = vmatmul.mubr.bf16.gmra.mxu0 %v1427
        %v1675 = vpop.f32.mrf.mxu0
        %v1676 = vadd.f32 0.0, %v1675
        %v1677 = vpop.f32.mrf.mxu0
        %v1678 = vpop.f32.mrf.mxu0
        %v1679 = vadd.f32 0.0, %v1678
        %v1680 = vpop.f32.mrf.mxu0
        %1681 = vdwg.mxu0
        %1682 = vmatprep.subr.bf16.mxu0 0
        %1683 = vmatpush1.bf16.msra.mxu0 0
        %1684 = vmatprep.subr.bf16.mxu0 0
        %1685 = vmatpush1.bf16.msra.mxu0 0
        %1686 = vmatprep.subr.bf16.mxu0 0
        %1687 = vmatpush1.bf16.msra.mxu0 0
        %1688 = vmatprep.subr.bf16.mxu0 0
        %1689 = vmatpush1.bf16.msra.mxu0 0
        %1690 = vmatprep.subr.bf16.mxu0 0
        %1691 = vmatpush1.bf16.msra.mxu0 0
        %1692 = vmatprep.subr.bf16.mxu0 0
        %1693 = vmatpush1.bf16.msra.mxu0 0
        %1694 = vmatprep.subr.bf16.mxu0 0
        %1695 = vmatpush1.bf16.msra.mxu0 %v1586
        %1696 = vmatprep.subr.bf16.mxu0 0
        %1697 = vmatpush1.bf16.msra.mxu0 %v1585
        %1698 = vmatprep.subr.bf16.mxu0 0
        %1699 = vmatpush2.bf16.msra.mxu0 0
        %1700 = vmatprep.subr.bf16.mxu0 0
        %1701 = vmatpush2.bf16.msra.mxu0 0
        %1702 = vmatprep.subr.bf16.mxu0 0
        %1703 = vmatpush2.bf16.msra.mxu0 0
        %1704 = vmatprep.subr.bf16.mxu0 0
        %1705 = vmatpush2.bf16.msra.mxu0 0
        %1706 = vmatprep.subr.bf16.mxu0 0
        %1707 = vmatpush2.bf16.msra.mxu0 0
        %1708 = vmatprep.subr.bf16.mxu0 0
        %1709 = vmatpush2.bf16.msra.mxu0 0
        %1710 = vmatprep.subr.bf16.mxu0 0
        %1711 = vmatpush2.bf16.msra.mxu0 0
        %1712 = vmatprep.subr.bf16.mxu0 0
        %1713 = vmatpush2.bf16.msra.mxu0 0
        %1714 = vmatprep.mubr.bf16.mxu0 0
        %1715 = vmatmul.mubr.bf16.gmra.mxu0 %v1606
        %v1716 = vpop.f32.mrf.mxu0
        %v1717 = vadd.f32 %v1652, %v1716
        %v1718 = vpop.f32.mrf.mxu0
        %v1719 = vpop.f32.mrf.mxu0
        %v1720 = vadd.f32 %v1655, %v1719
        %v1721 = vpop.f32.mrf.mxu0
        %1722 = vmatprep.mubr.bf16.mxu0 0
        %1723 = vmatmul.mubr.bf16.gmra.mxu0 %v1609
        %v1724 = vpop.f32.mrf.mxu0
        %v1725 = vadd.f32 %v1660, %v1724
        %v1726 = vpop.f32.mrf.mxu0
        %v1727 = vpop.f32.mrf.mxu0
        %v1728 = vadd.f32 %v1663, %v1727
        %v1729 = vpop.f32.mrf.mxu0
        %1730 = vmatprep.mubr.bf16.mxu0 0
        %1731 = vmatmul.mubr.bf16.gmra.mxu0 %v1612
        %v1732 = vpop.f32.mrf.mxu0
        %v1733 = vadd.f32 %v1668, %v1732
        %v1734 = vpop.f32.mrf.mxu0
        %v1735 = vpop.f32.mrf.mxu0
        %v1736 = vadd.f32 %v1671, %v1735
        %v1737 = vpop.f32.mrf.mxu0
        %1738 = vmatprep.mubr.bf16.mxu0 0
        %1739 = vmatmul.mubr.bf16.gmra.mxu0 %v1615
        %v1740 = vpop.f32.mrf.mxu0
        %v1741 = vadd.f32 %v1676, %v1740
        %v1742 = vpop.f32.mrf.mxu0
        %v1743 = vpop.f32.mrf.mxu0
        %v1744 = vadd.f32 %v1679, %v1743
        %v1745 = vpop.f32.mrf.mxu0
        %1746 = vdwg.mxu0
        %v1747 = vld [vmem:[%s6] sm:$0x1]
        %v1749 = vlaneseq
        %v1750 = vshrl.u32 %v1749, 7
        %v1751 = vsub.s32 0, %v1750
        %v1752 = vrot.slane %v1747, %v1751
        %v1754 = vmul.f32 %v1717, %v1752
        %v1755 = vmul.f32 %v1720, %v1752
        %v1756 = vmul.f32 %v1725, %v1752
        %v1757 = vmul.f32 %v1728, %v1752
        %v1758 = vmul.f32 %v1733, %v1752
        %v1759 = vmul.f32 %v1736, %v1752
        %v1760 = vmul.f32 %v1741, %v1752
        %v1761 = vmul.f32 %v1744, %v1752
        %v1762 = vld [vmem:[%s7] sm:$0x1]
        %v1764 = vlaneseq
        %v1765 = vshrl.u32 %v1764, 7
        %v1766 = vsub.s32 0, %v1765
        %v1767 = vrot.slane %v1762, %v1766
        %v1769 = vadd.f32 %v1754, %v1767
        %v1770 = vadd.f32 %v1755, %v1767
        %v1771 = vadd.f32 %v1756, %v1767
        %v1772 = vadd.f32 %v1757, %v1767
        %v1773 = vadd.f32 %v1758, %v1767
        %v1774 = vadd.f32 %v1759, %v1767
        %v1775 = vadd.f32 %v1760, %v1767
        %v1776 = vadd.f32 %v1761, %v1767
        %v1777 = vmax.f32 %v1769, 0.0
        %v1778 = vmax.f32 %v1770, 0.0
        %v1779 = vmax.f32 %v1771, 0.0
        %v1780 = vmax.f32 %v1772, 0.0
        %v1781 = vmax.f32 %v1773, 0.0
        %v1782 = vmax.f32 %v1774, 0.0
        %v1783 = vmax.f32 %v1775, 0.0
        %v1784 = vmax.f32 %v1776, 0.0
        %1785 = vst.msk [vmem:[%s395] sm:$0xff] %vm1395, %v1777
        %1786 = vst.msk [vmem:[%s395 + $0x8] sm:$0xff] %vm1395, %v1778
        %1787 = vst.msk [vmem:[%s395 + $0x10] sm:$0xff] %vm1395, %v1779
        %1788 = vst.msk [vmem:[%s395 + $0x18] sm:$0xff] %vm1395, %v1780
        %1789 = vst.msk [vmem:[%s395 + $0x20] sm:$0xff] %vm1395, %v1781
        %1790 = vst.msk [vmem:[%s395 + $0x28] sm:$0xff] %vm1395, %v1782
        %1791 = vst.msk [vmem:[%s395 + $0x30] sm:$0xff] %vm1395, %v1783
        %1792 = vst.msk [vmem:[%s395 + $0x38] sm:$0xff] %vm1395, %v1784
        %v1793 = vpack.c.bf16 %v1778, %v1777
        %v1794 = vpack.c.bf16 %v1780, %v1779
        %v1795 = vpack.c.bf16 %v1782, %v1781
        %v1796 = vpack.c.bf16 %v1784, %v1783
        %v1797 = vld [vmem:[%s8] sm:$0xf]
        %v1798 = vld [vmem:[%s8 + $0x4] sm:$0xf]
        %v1799 = vld [vmem:[%s8 + $0x8] sm:$0xf]
        %v1800 = vld [vmem:[%s8 + $0xc] sm:$0xf]
        %v1801 = vld [vmem:[%s9] sm:$0x1]
        %v1803 = vlaneseq
        %v1804 = vshrl.u32 %v1803, 7
        %v1805 = vsub.s32 0, %v1804
        %v1806 = vrot.slane %v1801, %v1805
        %v1812 = vunpack.c.l.b16 %v1797
        %v1813 = vunpack.c.l.b16 %v1798
        %v1814 = vunpack.c.l.b16 %v1799
        %v1815 = vunpack.c.l.b16 %v1800
        %v1816 = vpack.c.b16 %v1813, %v1812
        %v1817 = vpack.c.b16 %v1815, %v1814
        %v1821 = vsel %vm1395, %v1793, 0
        %v1824 = vsel %vm1395, %v1794, 0
        %v1827 = vsel %vm1395, %v1795, 0
        %v1830 = vsel %vm1395, %v1796, 0
        %1832 = vmatprep.subr.bf16.mxu0 0
        %1833 = vmatpush1.bf16.msra.mxu0 0
        %1834 = vmatprep.subr.bf16.mxu0 0
        %1835 = vmatpush1.bf16.msra.mxu0 0
        %1836 = vmatprep.subr.bf16.mxu0 0
        %1837 = vmatpush1.bf16.msra.mxu0 0
        %1838 = vmatprep.subr.bf16.mxu0 0
        %1839 = vmatpush1.bf16.msra.mxu0 0
        %1840 = vmatprep.subr.bf16.mxu0 0
        %1841 = vmatpush1.bf16.msra.mxu0 0
        %1842 = vmatprep.subr.bf16.mxu0 0
        %1843 = vmatpush1.bf16.msra.mxu0 0
        %1844 = vmatprep.subr.bf16.mxu0 0
        %1845 = vmatpush1.bf16.msra.mxu0 %v1817
        %1846 = vmatprep.subr.bf16.mxu0 0
        %1847 = vmatpush1.bf16.msra.mxu0 %v1816
        %1848 = vmatprep.subr.bf16.mxu0 0
        %1849 = vmatpush2.bf16.msra.mxu0 0
        %1850 = vmatprep.subr.bf16.mxu0 0
        %1851 = vmatpush2.bf16.msra.mxu0 0
        %1852 = vmatprep.subr.bf16.mxu0 0
        %1853 = vmatpush2.bf16.msra.mxu0 0
        %1854 = vmatprep.subr.bf16.mxu0 0
        %1855 = vmatpush2.bf16.msra.mxu0 0
        %1856 = vmatprep.subr.bf16.mxu0 0
        %1857 = vmatpush2.bf16.msra.mxu0 0
        %1858 = vmatprep.subr.bf16.mxu0 0
        %1859 = vmatpush2.bf16.msra.mxu0 0
        %1860 = vmatprep.subr.bf16.mxu0 0
        %1861 = vmatpush2.bf16.msra.mxu0 0
        %1862 = vmatprep.subr.bf16.mxu0 0
        %1863 = vmatpush2.bf16.msra.mxu0 0
        %1864 = vmatprep.mubr.bf16.mxu0 0
        %1865 = vmatmul.mubr.bf16.gmra.mxu0 %v1821
        %v1866 = vpop.f32.mrf.mxu0
        %v1867 = vadd.f32 %v1806, %v1866
        %v1868 = vpop.f32.mrf.mxu0
        %v1869 = vpop.f32.mrf.mxu0
        %v1870 = vadd.f32 %v1806, %v1869
        %v1871 = vpop.f32.mrf.mxu0
        %1872 = vmatprep.mubr.bf16.mxu0 0
        %1873 = vmatmul.mubr.bf16.gmra.mxu0 %v1824
        %v1874 = vpop.f32.mrf.mxu0
        %v1875 = vadd.f32 %v1806, %v1874
        %v1876 = vpop.f32.mrf.mxu0
        %v1877 = vpop.f32.mrf.mxu0
        %v1878 = vadd.f32 %v1806, %v1877
        %v1879 = vpop.f32.mrf.mxu0
        %1880 = vmatprep.mubr.bf16.mxu0 0
        %1881 = vmatmul.mubr.bf16.gmra.mxu0 %v1827
        %v1882 = vpop.f32.mrf.mxu0
        %v1883 = vadd.f32 %v1806, %v1882
        %v1884 = vpop.f32.mrf.mxu0
        %v1885 = vpop.f32.mrf.mxu0
        %v1886 = vadd.f32 %v1806, %v1885
        %v1887 = vpop.f32.mrf.mxu0
        %1888 = vmatprep.mubr.bf16.mxu0 0
        %1889 = vmatmul.mubr.bf16.gmra.mxu0 %v1830
        %v1890 = vpop.f32.mrf.mxu0
        %v1891 = vadd.f32 %v1806, %v1890
        %v1892 = vpop.f32.mrf.mxu0
        %v1893 = vpop.f32.mrf.mxu0
        %v1894 = vadd.f32 %v1806, %v1893
        %v1895 = vpop.f32.mrf.mxu0
        %1896 = vdwg.mxu0
        %v1897 = vpack.c.bf16 %v1870, %v1867
        %v1898 = vpack.c.bf16 %v1878, %v1875
        %v1899 = vpack.c.bf16 %v1886, %v1883
        %v1900 = vpack.c.bf16 %v1894, %v1891
        %v1905 = vunpack.c.l.b16 %v1897
        %v1906 = vunpack.c.h.b16 %v1897
        %v1907 = vunpack.c.l.b16 %v1898
        %v1908 = vunpack.c.h.b16 %v1898
        %v1909 = vunpack.c.l.b16 %v1899
        %v1910 = vunpack.c.h.b16 %v1899
        %v1911 = vunpack.c.l.b16 %v1900
        %v1912 = vunpack.c.h.b16 %v1900
        %v1913 = vpack.c.b16 %v1905, %v1905
        %v1914 = vpack.c.b16 %v1906, %v1906
        %v1915 = vpack.c.b16 %v1907, %v1907
        %v1916 = vpack.c.b16 %v1908, %v1908
        %v1917 = vpack.c.b16 %v1909, %v1909
        %v1918 = vpack.c.b16 %v1910, %v1910
        %v1919 = vpack.c.b16 %v1911, %v1911
        %v1920 = vpack.c.b16 %v1912, %v1912
        %1929 = vst [vmem:[%s417] sm:$0xf] %v1913
        %1930 = vst [vmem:[%s417 + $0x4] sm:$0xf] %v1914
        %1931 = vst [vmem:[%s417 + $0x8] sm:$0xf] %v1915
        %1932 = vst [vmem:[%s417 + $0xc] sm:$0xf] %v1916
        %1933 = vst [vmem:[%s417 + $0x10] sm:$0xf] %v1917
        %1934 = vst [vmem:[%s417 + $0x14] sm:$0xf] %v1918
        %1935 = vst [vmem:[%s417 + $0x18] sm:$0xf] %v1919
        %1936 = vst [vmem:[%s417 + $0x1c] sm:$0xf] %v1920
        %s1937 = sand.u32 %s254, 1
        %s1938 = scalar_lea.sflag [#allocation3], %s1937
        %s1939 = sand.u32 %s254, 1
        %s1940 = smul.addr %s1939, 64
        %s1941 = scalar_lea.vmem [#allocation2], %s1940
        %p1942 = scmp.lt.s32.totalorder %s26, 1
        %s1943 = scalar_select %p1942, %s26, 1
        %s1944 = smul.addr %s1943, 8
        %s1945 = smul.addr %s1944, 4
        %s1946 = scalar_lea.vmem %s11, %s1945
        // Predicated region
        $region61: #{pyramid_forward.4} parent=59 // pred_check
          %p1947 = pneg %p264
        $region62: #{pyramid_forward.4} parent=59 // pred_check_branch
          %1949 = sbr.rel (%p1947) target = $region64
        $region63: #{pyramid_forward.4} parent=59 // pred_region
          %s1951 = ssub.s32 1024, 1024
          %1952 = vsyncadd %s1938, %s1951
          %s1953 = smul.addr %s26, 8
          %s1954 = smul.addr %s1953, 128
          %s1955 = scalar_lea.hbm %s10, %s1954
          %s1956 = sshll.u32 %s1941, 4
          %s1957 = int_to_ptr.vmem [resolvable:$true] %s1956
          %1962 = dma.vmem_to_hbm [thread:$0]  %s1957, 1024, %s1955, %s1938, 128, 128, 8
        $region64: #{pyramid_forward.4} parent=59 // pred_fallthru
          _
        // Predicated region
        $region65: #{pyramid_forward.4} parent=59 // pred_check
          %p1963 = pneg %p290
        $region66: #{pyramid_forward.4} parent=59 // pred_check_branch
          %1965 = sbr.rel (%p1963) target = $region68
        $region67: #{pyramid_forward.4} parent=59 // pred_region
          _
        $region68: #{pyramid_forward.4} parent=59 // pred_fallthru
          _
      $region60: #{pyramid_forward.4} parent=5 // pred_fallthru
        _
      %p1966 = scmp.le.s32.totalorder 2, %s21
      // Predicated region
      $region69: #{pyramid_forward.4} parent=5 // pred_check
        %p1967 = pneg %p1966
      $region70: #{pyramid_forward.4} parent=5 // pred_check_branch
        %1969 = sbr.rel (%p1967) target = $region72
      $region71: #{pyramid_forward.4} parent=5 // pred_region
        %s1970 = ssub.s32 %s21, 2
        // Predicated region
        $region73: #{pyramid_forward.4} parent=71 // pred_check
          %p1971 = pneg %p270
        $region74: #{pyramid_forward.4} parent=71 // pred_check_branch
          %1973 = sbr.rel (%p1971) target = $region76
        $region75: #{pyramid_forward.4} parent=71 // pred_region
          %s1974 = sand.u32 %s255, 1
          %s1975 = scalar_lea.sflag [#allocation3], %s1974
          %s1976 = sand.u32 %s255, 1
          %s1977 = smul.addr %s1976, 64
          %s1978 = scalar_lea.vmem [#allocation2], %s1977
          %1979 = dma.done %s1975, 1024
        $region76: #{pyramid_forward.4} parent=71 // pred_fallthru
          _
        // Predicated region
        $region77: #{pyramid_forward.4} parent=71 // pred_check
          %p1980 = pneg %p296
        $region78: #{pyramid_forward.4} parent=71 // pred_check_branch
          %1982 = sbr.rel (%p1980) target = $region80
        $region79: #{pyramid_forward.4} parent=71 // pred_region
          %p1983 = scmp.lt.s32.totalorder %s27, 1
          %s1984 = scalar_select %p1983, %s27, 1
          %s1985 = smul.addr %s1984, 8
          %s1986 = smul.addr %s1985, 4
          %s1987 = scalar_lea.vmem %s11, %s1986
        $region80: #{pyramid_forward.4} parent=71 // pred_fallthru
          _
      $region72: #{pyramid_forward.4} parent=5 // pred_fallthru
        _
    $region6: #{pyramid_forward.4} parent=1 // loop_footer
      %s25 = sadd.s32 1, %s21
    $region7: #{pyramid_forward.4} parent=1 // loop_footer_branch
      %20 = sbr.rel target = $region3
    $region8: #{pyramid_forward.4} parent=1 // loop_exit
      _
    %1988 = vsyncpa [#allocation3], 1
    %s1989 = scalar_lea.sflag [#allocation3], 1
    %1990 = vsyncpa %s1989, 1

// kernel: pyramid_forward.3
$region0: #{pyramid_forward.3}
  #allocation0 [shape = 'u32[]', space=smem, size = 0x4, offset = 0x4, fixed_abs, tag = 'smem constant byte address 0x4 - core index']
  #allocation1 [shape = 'u32[144,128]{1,0:T(1,128)}', space=vmem, size = 0x12000, scoped, tag = 'internal scratch']
  %s0 = inlined_call_operand.vmem [shape: f32[2,16,16], index: 0, kind: input, shape index: {}]
  %s1 = inlined_call_operand.vmem [shape: bf16[16,32], index: 1, kind: input, shape index: {}]
  %s2 = inlined_call_operand.vmem [shape: f32[1,32], index: 2, kind: input, shape index: {}]
  %s3 = inlined_call_operand.vmem [shape: f32[1,32], index: 3, kind: input, shape index: {}]
  %s4 = inlined_call_operand.vmem [shape: bf16[144,32], index: 4, kind: input, shape index: {}]
  %s5 = inlined_call_operand.vmem [shape: f32[1,32], index: 5, kind: input, shape index: {}]
  %s6 = inlined_call_operand.vmem [shape: f32[1,32], index: 6, kind: input, shape index: {}]
  %s7 = inlined_call_operand.vmem [shape: bf16[288,32], index: 7, kind: input, shape index: {}]
  %s8 = inlined_call_operand.vmem [shape: f32[1,32], index: 8, kind: input, shape index: {}]
  %s9 = inlined_call_operand.vmem [shape: f32[1,32], index: 9, kind: input, shape index: {}]
  %s10 = inlined_call_operand.vmem [shape: bf16[32,128], index: 10, kind: input, shape index: {}]
  %s11 = inlined_call_operand.vmem [shape: f32[1,128], index: 11, kind: input, shape index: {}]
  %s12 = inlined_call_operand.hbm [shape: f32[2,16,32], index: 12, kind: output, shape index: {0}]
  %s13 = inlined_call_operand.vmem [shape: bf16[2,16,128], index: 13, kind: output, shape index: {1}]
  %14 = xla_tuple %s12, %s13
  %s15 = sld [smem:[#allocation0]]
  $region66: #{pyramid_forward.3} parent=0
    _
  %s17 = ssub.s32 1, %s15
  %s18 = scalar_select 0, %s17, %s15
  $region1: #{pyramid_forward.3} parent=0
    #allocation2 [shape = 'u8[16384]{0}', space=vmem, size = 0x4000, scoped, tag = 'output window, operand 0, single buffered']
    #allocation3 [shape = 's32[1]{0}', space=sflag, size = 0x4, scoped, tag = 'scoped memory for pyramid_forward.3']
    %19 = vsyncpa [#allocation3], 0
    // Predicated region
    $region2: #{pyramid_forward.3} parent=1 // pred_check
      _
    $region3: #{pyramid_forward.3} parent=1 // pred_check_branch
      %21 = sbr.rel (0) target = $region5
    $region4: #{pyramid_forward.3} parent=1 // pred_region
      _
    $region5: #{pyramid_forward.3} parent=1 // pred_fallthru
      _
    // Predicated region
    $region6: #{pyramid_forward.3} parent=1 // pred_check
      _
    $region7: #{pyramid_forward.3} parent=1 // pred_check_branch
      %23 = sbr.rel (0) target = $region9
    $region8: #{pyramid_forward.3} parent=1 // pred_region
      _
    $region9: #{pyramid_forward.3} parent=1 // pred_fallthru
      _
    // Predicated region
    $region10: #{pyramid_forward.3} parent=1 // pred_check
      _
    $region11: #{pyramid_forward.3} parent=1 // pred_check_branch
      %25 = sbr.rel (0) target = $region13
    $region12: #{pyramid_forward.3} parent=1 // pred_region
      _
    $region13: #{pyramid_forward.3} parent=1 // pred_fallthru
      _
    // Predicated region
    $region14: #{pyramid_forward.3} parent=1 // pred_check
      _
    $region15: #{pyramid_forward.3} parent=1 // pred_check_branch
      %27 = sbr.rel (0) target = $region17
    $region16: #{pyramid_forward.3} parent=1 // pred_region
      _
    $region17: #{pyramid_forward.3} parent=1 // pred_fallthru
      _
    // Predicated region
    $region18: #{pyramid_forward.3} parent=1 // pred_check
      _
    $region19: #{pyramid_forward.3} parent=1 // pred_check_branch
      %29 = sbr.rel (0) target = $region21
    $region20: #{pyramid_forward.3} parent=1 // pred_region
      _
    $region21: #{pyramid_forward.3} parent=1 // pred_fallthru
      _
    // Predicated region
    $region22: #{pyramid_forward.3} parent=1 // pred_check
      _
    $region23: #{pyramid_forward.3} parent=1 // pred_check_branch
      %31 = sbr.rel (0) target = $region25
    $region24: #{pyramid_forward.3} parent=1 // pred_region
      _
    $region25: #{pyramid_forward.3} parent=1 // pred_fallthru
      _
    // Predicated region
    $region26: #{pyramid_forward.3} parent=1 // pred_check
      _
    $region27: #{pyramid_forward.3} parent=1 // pred_check_branch
      %33 = sbr.rel (0) target = $region29
    $region28: #{pyramid_forward.3} parent=1 // pred_region
      _
    $region29: #{pyramid_forward.3} parent=1 // pred_fallthru
      _
    // Predicated region
    $region30: #{pyramid_forward.3} parent=1 // pred_check
      _
    $region31: #{pyramid_forward.3} parent=1 // pred_check_branch
      %35 = sbr.rel (0) target = $region33
    $region32: #{pyramid_forward.3} parent=1 // pred_region
      _
    $region33: #{pyramid_forward.3} parent=1 // pred_fallthru
      _
    // Predicated region
    $region34: #{pyramid_forward.3} parent=1 // pred_check
      _
    $region35: #{pyramid_forward.3} parent=1 // pred_check_branch
      %37 = sbr.rel (0) target = $region37
    $region36: #{pyramid_forward.3} parent=1 // pred_region
      _
    $region37: #{pyramid_forward.3} parent=1 // pred_fallthru
      _
    // Predicated region
    $region38: #{pyramid_forward.3} parent=1 // pred_check
      _
    $region39: #{pyramid_forward.3} parent=1 // pred_check_branch
      %39 = sbr.rel (0) target = $region41
    $region40: #{pyramid_forward.3} parent=1 // pred_region
      _
    $region41: #{pyramid_forward.3} parent=1 // pred_fallthru
      _
    // Predicated region
    $region42: #{pyramid_forward.3} parent=1 // pred_check
      _
    $region43: #{pyramid_forward.3} parent=1 // pred_check_branch
      %41 = sbr.rel (0) target = $region45
    $region44: #{pyramid_forward.3} parent=1 // pred_region
      _
    $region45: #{pyramid_forward.3} parent=1 // pred_fallthru
      _
    // Predicated region
    $region46: #{pyramid_forward.3} parent=1 // pred_check
      _
    $region47: #{pyramid_forward.3} parent=1 // pred_check_branch
      %43 = sbr.rel (0) target = $region49
    $region48: #{pyramid_forward.3} parent=1 // pred_region
      _
    $region49: #{pyramid_forward.3} parent=1 // pred_fallthru
      _
    %v47 = vlaneseq
    %v48 = vshrl.u32 %v47, 7
    %v49 = vadd.s32 %v48, 8
    %v50 = vand.u32 %v48, 3
    %v51 = vand.u32 %v49, 3
    %vm52 = vcmp.ne.s32.totalorder %v50, 3
    %vm53 = vcmp.ne.s32.totalorder %v51, 3
    %vm54 = vcmp.ne.s32.totalorder %v50, 0
    %vm55 = vcmp.ne.s32.totalorder %v51, 0
    %v56 = vld [vmem:[%s0] sm:$0xff]
    %v57 = vld [vmem:[%s0 + $0x8] sm:$0xff]
    %v58 = vld [vmem:[%s0 + $0x10] sm:$0xff]
    %v59 = vld [vmem:[%s0 + $0x18] sm:$0xff]
    %v60 = vpack.c.bf16 %v57, %v56
    %v61 = vpack.c.bf16 %v59, %v58
    %v62 = vsel %vm52, 1, 0
    %v63 = vsel %vm53, 1, 0
    %vm64 = vcmp.eq.s32.totalorder %v62, 1
    %vm65 = vcmp.eq.s32.totalorder %v63, 1
    %vm66 = vmpackc.low %vm64, %vm64
    %vm67 = vmpackc.low %vm65, %vm65
    %v68 = vsel %vm66, 65537, 0
    %v69 = vsel %vm67, 65537, 0
    %v70 = vunpack.c.l.b16 %v68
    %v71 = vunpack.c.l.b16 %v69
    %v72 = vpack.c.b16 %v71, %v70
    %vm73 = vcmp.ne.s16.totalorder %v72, 0
    %v74 = vsel %vm73, %v60, 0
    %v75 = vsel %vm73, %v61, 0
    %v76 = vsel %vm54, 1, 0
    %v77 = vsel %vm55, 1, 0
    %vm78 = vcmp.eq.s32.totalorder %v76, 1
    %vm79 = vcmp.eq.s32.totalorder %v77, 1
    %vm80 = vmpackc.low %vm78, %vm78
    %vm81 = vmpackc.low %vm79, %vm79
    %v82 = vsel %vm80, 65537, 0
    %v83 = vsel %vm81, 65537, 0
    %v84 = vunpack.c.l.b16 %v82
    %v85 = vunpack.c.l.b16 %v83
    %v86 = vpack.c.b16 %v85, %v84
    %vm87 = vcmp.ne.s16.totalorder %v86, 0
    %v88 = vsel %vm87, %v60, 0
    %v89 = vsel %vm87, %v61, 0
    %v91 = vshrl.u32 %v60, 16
    %v93 = vrot.slane %v91, 5
    %v94 = vshll.u32 %v60, 16
    %v96 = vrot.slane %v94, 6
    %v97 = vor.u32 %v93, %v96
    %v99 = vshrl.u32 %v61, 16
    %v101 = vrot.slane %v99, 5
    %v102 = vshll.u32 %v61, 16
    %v104 = vrot.slane %v102, 6
    %v105 = vor.u32 %v101, %v104
    %vm108 = vcmask 1042432
    %vm109 = vsmask.f32 2304
    %vm110 = vmand %vm108, %vm109
    %v111 = vsel %vm110, 0, %v97
    %v112 = vsel %vm110, 0, %v105
    %v113 = vsel %vm110, %v97, 0
    %v114 = vsel %vm110, %v105, 0
    %v116 = vshrl.u32 %v74, 16
    %v118 = vrot.slane %v116, 5
    %v119 = vshll.u32 %v74, 16
    %v121 = vrot.slane %v119, 6
    %v122 = vor.u32 %v118, %v121
    %v124 = vshrl.u32 %v75, 16
    %v126 = vrot.slane %v124, 5
    %v127 = vshll.u32 %v75, 16
    %v129 = vrot.slane %v127, 6
    %v130 = vor.u32 %v126, %v129
    %v133 = vsel %vm110, 0, %v122
    %v134 = vsel %vm110, 0, %v130
    %v135 = vsel %vm110, %v122, 0
    %v136 = vsel %vm110, %v130, 0
    %v138 = vshrl.u32 %v88, 16
    %v140 = vrot.slane %v138, 5
    %v141 = vshll.u32 %v88, 16
    %v143 = vrot.slane %v141, 6
    %v144 = vor.u32 %v140, %v143
    %v146 = vshrl.u32 %v89, 16
    %v148 = vrot.slane %v146, 5
    %v149 = vshll.u32 %v89, 16
    %v151 = vrot.slane %v149, 6
    %v152 = vor.u32 %v148, %v151
    %v155 = vsel %vm110, 0, %v144
    %v156 = vsel %vm110, 0, %v152
    %v157 = vsel %vm110, %v144, 0
    %v158 = vsel %vm110, %v152, 0
    %vm159 = vsmask.f32 7424
    %v161 = vshrl.u32 %v111, 16
    %v163 = vshll.u32 %v111, 16
    %v165 = vrot.slane %v163, 1
    %v166 = vor.u32 %v161, %v165
    %v168 = vshll.u32 %v113, 16
    %v170 = vrot.slane %v168, 1
    %v171 = vsel %vm159, %v166, %v170
    %v173 = vshrl.u32 %v112, 16
    %v175 = vshll.u32 %v112, 16
    %v177 = vrot.slane %v175, 1
    %v178 = vor.u32 %v173, %v177
    %v180 = vshll.u32 %v114, 16
    %v182 = vrot.slane %v180, 1
    %v183 = vsel %vm159, %v178, %v182
    %184 = vrot.lane.b32.xlu0 %v171, 16
    %v185 = vpop.permute.xlu0 %184
    %186 = vrot.lane.b32.xlu0 %v183, 16
    %v187 = vpop.permute.xlu0 %186
    %vm192 = vcmask 1046528
    %v193 = vrot.slane %v155, 1
    %v194 = vrot.slane %v157, 1
    %v195 = vsel %vm192, %v193, %v194
    %v196 = vrot.slane %v156, 1
    %v197 = vrot.slane %v158, 1
    %v198 = vsel %vm192, %v196, %v197
    %199 = vrot.lane.b32.xlu0 %v195, 32
    %v200 = vpop.permute.xlu0 %199
    %201 = vrot.lane.b32.xlu0 %v198, 32
    %v202 = vpop.permute.xlu0 %201
    %vm207 = vcmask 1045504
    %v208 = vrot.slane %v133, 2
    %v209 = vrot.slane %v135, 2
    %v210 = vsel %vm207, %v208, %v209
    %v211 = vrot.slane %v134, 2
    %v212 = vrot.slane %v136, 2
    %v213 = vsel %vm207, %v211, %v212
    %214 = vrot.lane.b32.xlu0 %v210, 48
    %v215 = vpop.permute.xlu0 %214
    %216 = vrot.lane.b32.xlu0 %v213, 48
    %v217 = vpop.permute.xlu0 %216
    %vm218 = vsmask.f32 5376
    %v219 = vrot.slane %v161, 2
    %v220 = vrot.slane %v163, 3
    %v221 = vor.u32 %v219, %v220
    %v222 = vshrl.u32 %v113, 16
    %v224 = vrot.slane %v222, 2
    %v225 = vrot.slane %v168, 3
    %v226 = vor.u32 %v224, %v225
    %v227 = vsel %vm218, %v221, %v226
    %v228 = vrot.slane %v173, 2
    %v229 = vrot.slane %v175, 3
    %v230 = vor.u32 %v228, %v229
    %v231 = vshrl.u32 %v114, 16
    %v233 = vrot.slane %v231, 2
    %v234 = vrot.slane %v180, 3
    %v235 = vor.u32 %v233, %v234
    %v236 = vsel %vm218, %v230, %v235
    %237 = vrot.lane.b32.xlu0 %v227, 64
    %v238 = vpop.permute.xlu0 %237
    %239 = vrot.lane.b32.xlu0 %v236, 64
    %v240 = vpop.permute.xlu0 %239
    %vm241 = vcmask 1044480
    %v242 = vrot.slane %v155, 3
    %v243 = vrot.slane %v157, 3
    %v244 = vsel %vm241, %v242, %v243
    %v245 = vrot.slane %v156, 3
    %v246 = vrot.slane %v158, 3
    %v247 = vsel %vm241, %v245, %v246
    %248 = vrot.lane.b32.xlu0 %v244, 80
    %v249 = vpop.permute.xlu0 %248
    %250 = vrot.lane.b32.xlu0 %v247, 80
    %v251 = vpop.permute.xlu0 %250
    %vm252 = vcmask 1043456
    %v253 = vrot.slane %v133, 4
    %v254 = vrot.slane %v135, 4
    %v255 = vsel %vm252, %v253, %v254
    %v256 = vrot.slane %v134, 4
    %v257 = vrot.slane %v136, 4
    %v258 = vsel %vm252, %v256, %v257
    %259 = vrot.lane.b32.xlu0 %v255, 96
    %v260 = vpop.permute.xlu0 %259
    %261 = vrot.lane.b32.xlu0 %v258, 96
    %v262 = vpop.permute.xlu0 %261
    %vm263 = vsmask.f32 3328
    %v264 = vrot.slane %v161, 4
    %v265 = vrot.slane %v163, 5
    %v266 = vor.u32 %v264, %v265
    %v267 = vrot.slane %v222, 4
    %v268 = vrot.slane %v168, 5
    %v269 = vor.u32 %v267, %v268
    %v270 = vsel %vm263, %v266, %v269
    %v271 = vrot.slane %v173, 4
    %v272 = vrot.slane %v175, 5
    %v273 = vor.u32 %v271, %v272
    %v274 = vrot.slane %v231, 4
    %v275 = vrot.slane %v180, 5
    %v276 = vor.u32 %v274, %v275
    %v277 = vsel %vm263, %v273, %v276
    %278 = vrot.lane.b32.xlu0 %v270, 112
    %v279 = vpop.permute.xlu0 %278
    %280 = vrot.lane.b32.xlu0 %v277, 112
    %v281 = vpop.permute.xlu0 %280
    %v282 = vrot.slane %v155, 5
    %v283 = vrot.slane %v157, 5
    %v284 = vsel %vm108, %v282, %v283
    %v285 = vrot.slane %v156, 5
    %v286 = vrot.slane %v158, 5
    %v287 = vsel %vm108, %v285, %v286
    %vm288 = vcmask 130048
    %v291 = vsel %vm288, %v133, %v185
    %v294 = vsel %vm288, %v134, %v187
    %vm295 = vcmask 261120
    %v297 = vsel %vm295, %v291, %v200
    %v299 = vsel %vm295, %v294, %v202
    %vm300 = vcmask 392192
    %v302 = vsel %vm300, %v297, %v215
    %v304 = vsel %vm300, %v299, %v217
    %vm305 = vcmask 523264
    %v307 = vsel %vm305, %v302, %v238
    %v309 = vsel %vm305, %v304, %v240
    %vm310 = vcmask 654336
    %v312 = vsel %vm310, %v307, %v249
    %v314 = vsel %vm310, %v309, %v251
    %vm315 = vcmask 785408
    %v317 = vsel %vm315, %v312, %v260
    %v319 = vsel %vm315, %v314, %v262
    %vm320 = vcmask 916480
    %v322 = vsel %vm320, %v317, %v279
    %v325 = vsel %vm320, %v319, %v281
    %v327 = vld [vmem:[%s4] sm:$0xf]
    %v328 = vld [vmem:[%s4 + $0x4] sm:$0xf]
    %v329 = vld [vmem:[%s4 + $0x8] sm:$0xf]
    %v330 = vld [vmem:[%s4 + $0xc] sm:$0xf]
    %v331 = vld [vmem:[%s4 + $0x10] sm:$0xf]
    %v332 = vld [vmem:[%s4 + $0x14] sm:$0xf]
    %v333 = vld [vmem:[%s4 + $0x18] sm:$0xf]
    %v334 = vld [vmem:[%s4 + $0x1c] sm:$0xf]
    %v335 = vld [vmem:[%s4 + $0x20] sm:$0xf]
    %v336 = vld [vmem:[%s4 + $0x24] sm:$0xf]
    %v337 = vld [vmem:[%s4 + $0x28] sm:$0xf]
    %v338 = vld [vmem:[%s4 + $0x2c] sm:$0xf]
    %v339 = vld [vmem:[%s4 + $0x30] sm:$0xf]
    %v340 = vld [vmem:[%s4 + $0x34] sm:$0xf]
    %v341 = vld [vmem:[%s4 + $0x38] sm:$0xf]
    %v342 = vld [vmem:[%s4 + $0x3c] sm:$0xf]
    %v343 = vld [vmem:[%s4 + $0x40] sm:$0xf]
    %v344 = vld [vmem:[%s4 + $0x44] sm:$0xf]
    %v363 = vunpack.c.l.b16 %v327
    %v364 = vunpack.c.l.b16 %v328
    %v365 = vunpack.c.l.b16 %v329
    %v366 = vunpack.c.l.b16 %v330
    %v367 = vunpack.c.l.b16 %v331
    %v368 = vunpack.c.l.b16 %v332
    %v369 = vunpack.c.l.b16 %v333
    %v370 = vunpack.c.l.b16 %v334
    %v371 = vunpack.c.l.b16 %v335
    %v372 = vunpack.c.l.b16 %v336
    %v373 = vunpack.c.l.b16 %v337
    %v374 = vunpack.c.l.b16 %v338
    %v375 = vunpack.c.l.b16 %v339
    %v376 = vunpack.c.l.b16 %v340
    %v377 = vunpack.c.l.b16 %v341
    %v378 = vunpack.c.l.b16 %v342
    %v379 = vunpack.c.l.b16 %v343
    %v380 = vunpack.c.l.b16 %v344
    %v381 = vpack.c.b16 %v364, %v363
    %v382 = vpack.c.b16 %v366, %v365
    %v383 = vpack.c.b16 %v368, %v367
    %v384 = vpack.c.b16 %v370, %v369
    %v385 = vpack.c.b16 %v372, %v371
    %v386 = vpack.c.b16 %v374, %v373
    %v387 = vpack.c.b16 %v376, %v375
    %v388 = vpack.c.b16 %v378, %v377
    %v389 = vpack.c.b16 %v380, %v379
    %v400 = vsel %vm288, %v284, 0
    %v403 = vsel %vm288, %v287, 0
    %405 = vmatprep.subr.bf16.mxu0 0
    %406 = vmatpush1.bf16.msra.mxu0 %v388
    %407 = vmatprep.subr.bf16.mxu0 0
    %408 = vmatpush1.bf16.msra.mxu0 %v387
    %409 = vmatprep.subr.bf16.mxu0 0
    %410 = vmatpush1.bf16.msra.mxu0 %v386
    %411 = vmatprep.subr.bf16.mxu0 0
    %412 = vmatpush1.bf16.msra.mxu0 %v385
    %413 = vmatprep.subr.bf16.mxu0 0
    %414 = vmatpush1.bf16.msra.mxu0 %v384
    %415 = vmatprep.subr.bf16.mxu0 0
    %416 = vmatpush1.bf16.msra.mxu0 %v383
    %417 = vmatprep.subr.bf16.mxu0 0
    %418 = vmatpush1.bf16.msra.mxu0 %v382
    %419 = vmatprep.subr.bf16.mxu0 0
    %420 = vmatpush1.bf16.msra.mxu0 %v381
    %421 = vmatprep.subr.bf16.mxu0 0
    %422 = vmatpush2.bf16.msra.mxu0 0
    %423 = vmatprep.subr.bf16.mxu0 0
    %424 = vmatpush2.bf16.msra.mxu0 0
    %425 = vmatprep.subr.bf16.mxu0 0
    %426 = vmatpush2.bf16.msra.mxu0 0
    %427 = vmatprep.subr.bf16.mxu0 0
    %428 = vmatpush2.bf16.msra.mxu0 0
    %429 = vmatprep.subr.bf16.mxu0 0
    %430 = vmatpush2.bf16.msra.mxu0 0
    %431 = vmatprep.subr.bf16.mxu0 0
    %432 = vmatpush2.bf16.msra.mxu0 0
    %433 = vmatprep.subr.bf16.mxu0 0
    %434 = vmatpush2.bf16.msra.mxu0 0
    %435 = vmatprep.subr.bf16.mxu0 0
    %436 = vmatpush2.bf16.msra.mxu0 %v389
    %437 = vmatprep.mubr.bf16.mxu0 %v400
    %438 = vmatmul.mubr.bf16.gmra.mxu0 %v322
    %v439 = vpop.f32.mrf.mxu0
    %v440 = vadd.f32 0.0, %v439
    %v441 = vpop.f32.mrf.mxu0
    %v442 = vpop.f32.mrf.mxu0
    %v443 = vadd.f32 0.0, %v442
    %v444 = vpop.f32.mrf.mxu0
    %445 = vmatprep.mubr.bf16.mxu0 %v403
    %446 = vmatmul.mubr.bf16.gmra.mxu0 %v325
    %v447 = vpop.f32.mrf.mxu0
    %v448 = vadd.f32 0.0, %v447
    %v449 = vpop.f32.mrf.mxu0
    %v450 = vpop.f32.mrf.mxu0
    %v451 = vadd.f32 0.0, %v450
    %v452 = vpop.f32.mrf.mxu0
    %453 = vdwg.mxu0
    %v454 = vld [vmem:[%s5] sm:$0x1]
    %v456 = vlaneseq
    %v457 = vshrl.u32 %v456, 7
    %v458 = vsub.s32 0, %v457
    %v459 = vrot.slane %v454, %v458
    %v461 = vmul.f32 %v440, %v459
    %v462 = vmul.f32 %v443, %v459
    %v463 = vmul.f32 %v448, %v459
    %v464 = vmul.f32 %v451, %v459
    %v465 = vld [vmem:[%s6] sm:$0x1]
    %v467 = vlaneseq
    %v468 = vshrl.u32 %v467, 7
    %v469 = vsub.s32 0, %v468
    %v470 = vrot.slane %v465, %v469
    %v472 = vadd.f32 %v461, %v470
    %v473 = vadd.f32 %v462, %v470
    %v474 = vadd.f32 %v463, %v470
    %v475 = vadd.f32 %v464, %v470
    %v476 = vmax.f32 %v472, 0.0
    %v477 = vmax.f32 %v473, 0.0
    %v478 = vmax.f32 %v474, 0.0
    %v479 = vmax.f32 %v475, 0.0
    %v480 = vsel %vm288, %v56, 0.0
    %v481 = vsel %vm288, %v57, 0.0
    %v482 = vadd.f32 %v480, %v481
    %v483 = vrot.slane %v482, 4
    %v484 = vadd.f32 %v482, %v483
    %v485 = vrot.slane %v484, 2
    %v486 = vadd.f32 %v484, %v485
    %v487 = vrot.slane %v486, 1
    %v488 = vadd.f32 %v486, %v487
    %v489 = vsel %vm288, %v58, 0.0
    %v490 = vsel %vm288, %v59, 0.0
    %v491 = vadd.f32 %v489, %v490
    %v492 = vrot.slane %v491, 4
    %v493 = vadd.f32 %v491, %v492
    %v494 = vrot.slane %v493, 2
    %v495 = vadd.f32 %v493, %v494
    %v496 = vrot.slane %v495, 1
    %v497 = vadd.f32 %v495, %v496
    %v498 = vrcp.pop 16.0
    %v499 = vmul.f32 %v488, %v498
    %v500 = vmul.f32 %v497, %v498
    %v501 = vpack.c.bf16 %v499, %v499
    %v502 = vpack.c.bf16 %v500, %v500
    %v503 = vld [vmem:[%s1] sm:$0xf]
    %v504 = vld [vmem:[%s1 + $0x4] sm:$0xf]
    %v507 = vunpack.c.l.b16 %v501
    %v508 = vunpack.c.l.b16 %v502
    %vm509 = vcmask 1041409
    %v510 = vsel %vm509, %v508, %v507
    %v511 = vpack.c.b16 %v510, %v510
    %v514 = vunpack.c.l.b16 %v503
    %v515 = vunpack.c.l.b16 %v504
    %v516 = vpack.c.b16 %v515, %v514
    %v519 = vsel %vm288, %v511, 0
    %521 = vmatprep.subr.bf16.mxu0 0
    %522 = vmatpush1.bf16.msra.mxu0 0
    %523 = vmatprep.subr.bf16.mxu0 0
    %524 = vmatpush1.bf16.msra.mxu0 0
    %525 = vmatprep.subr.bf16.mxu0 0
    %526 = vmatpush1.bf16.msra.mxu0 0
    %527 = vmatprep.subr.bf16.mxu0 0
    %528 = vmatpush1.bf16.msra.mxu0 0
    %529 = vmatprep.subr.bf16.mxu0 0
    %530 = vmatpush1.bf16.msra.mxu0 0
    %531 = vmatprep.subr.bf16.mxu0 0
    %532 = vmatpush1.bf16.msra.mxu0 0
    %533 = vmatprep.subr.bf16.mxu0 0
    %534 = vmatpush1.bf16.msra.mxu0 0
    %535 = vmatprep.subr.bf16.mxu0 0
    %536 = vmatpush1.bf16.msra.mxu0 %v516
    %537 = vmatprep.subr.bf16.mxu0 0
    %538 = vmatpush2.bf16.msra.mxu0 0
    %539 = vmatprep.subr.bf16.mxu0 0
    %540 = vmatpush2.bf16.msra.mxu0 0
    %541 = vmatprep.subr.bf16.mxu0 0
    %542 = vmatpush2.bf16.msra.mxu0 0
    %543 = vmatprep.subr.bf16.mxu0 0
    %544 = vmatpush2.bf16.msra.mxu0 0
    %545 = vmatprep.subr.bf16.mxu0 0
    %546 = vmatpush2.bf16.msra.mxu0 0
    %547 = vmatprep.subr.bf16.mxu0 0
    %548 = vmatpush2.bf16.msra.mxu0 0
    %549 = vmatprep.subr.bf16.mxu0 0
    %550 = vmatpush2.bf16.msra.mxu0 0
    %551 = vmatprep.subr.bf16.mxu0 0
    %552 = vmatpush2.bf16.msra.mxu0 0
    %553 = vmatprep.mubr.bf16.mxu0 0
    %554 = vmatmul.mubr.bf16.gmra.mxu0 %v519
    %v555 = vpop.f32.mrf.mxu0
    %v556 = vadd.f32 0.0, %v555
    %v557 = vpop.f32.mrf.mxu0
    %v558 = vpop.f32.mrf.mxu0
    %v559 = vpop.f32.mrf.mxu0
    %560 = vdwg.mxu0
    %v561 = vld [vmem:[%s2] sm:$0x1]
    %v563 = vlaneseq
    %v564 = vshrl.u32 %v563, 7
    %v565 = vsub.s32 0, %v564
    %v566 = vrot.slane %v561, %v565
    %v568 = vmul.f32 %v556, %v566
    %v569 = vld [vmem:[%s3] sm:$0x1]
    %v571 = vlaneseq
    %v572 = vshrl.u32 %v571, 7
    %v573 = vsub.s32 0, %v572
    %v574 = vrot.slane %v569, %v573
    %v576 = vadd.f32 %v568, %v574
    %v577 = vmax.f32 %v576, 0.0
    %v580 = vunpack.c.l.s4 1966171168
    %v581 = vunpack.c.0.s8 %v580
    %v582 = vlaneseq
    %v583 = vshrl.u32 %v582, 7
    %v584 = vsub.s32 %v581, %v583
    %v585 = vrot.slane %v577, %v584
    %v586 = vcombine.high %v585, %v585
    %v588 = vunpack.c.l.s4 1966171168
    %v589 = vunpack.c.0.s8 %v588
    %v590 = vlaneseq
    %v591 = vshrl.u32 %v590, 7
    %v592 = vsub.s32 %v589, %v591
    %v593 = vrot.slane %v585, %v592
    %v595 = vunpack.c.l.s4 1966171168
    %v596 = vunpack.c.0.s8 %v595
    %v597 = vlaneseq
    %v598 = vshrl.u32 %v597, 7
    %v599 = vsub.s32 %v596, %v598
    %v600 = vrot.slane %v586, %v599
    %v601 = vlaneseq
    %v602 = vshrl.u32 %v601, 7
    %v603 = vsub.s32 0, %v602
    %v604 = vrot.slane %v593, %v603
    %v605 = vlaneseq
    %v606 = vshrl.u32 %v605, 7
    %v607 = vsub.s32 0, %v606
    %v608 = vrot.slane %v600, %v607
    %v611 = vadd.f32 %v476, %v604
    %v612 = vadd.f32 %v477, %v604
    %v613 = vadd.f32 %v478, %v608
    %v614 = vadd.f32 %v479, %v608
    %v615 = vpack.c.bf16 %v612, %v611
    %v616 = vpack.c.bf16 %v614, %v613
    %v617 = vsel %vm73, %v615, 0
    %v618 = vsel %vm73, %v616, 0
    %v619 = vsel %vm87, %v615, 0
    %v620 = vsel %vm87, %v616, 0
    %v622 = vshrl.u32 %v615, 16
    %v624 = vrot.slane %v622, 5
    %v625 = vshll.u32 %v615, 16
    %v627 = vrot.slane %v625, 6
    %v628 = vor.u32 %v624, %v627
    %v630 = vshrl.u32 %v616, 16
    %v632 = vrot.slane %v630, 5
    %v633 = vshll.u32 %v616, 16
    %v635 = vrot.slane %v633, 6
    %v636 = vor.u32 %v632, %v635
    %v639 = vsel %vm110, 0, %v628
    %v640 = vsel %vm110, 0, %v636
    %v641 = vsel %vm110, %v628, 0
    %v642 = vsel %vm110, %v636, 0
    %v644 = vshrl.u32 %v617, 16
    %v646 = vrot.slane %v644, 5
    %v647 = vshll.u32 %v617, 16
    %v649 = vrot.slane %v647, 6
    %v650 = vor.u32 %v646, %v649
    %v652 = vshrl.u32 %v618, 16
    %v654 = vrot.slane %v652, 5
    %v655 = vshll.u32 %v618, 16
    %v657 = vrot.slane %v655, 6
    %v658 = vor.u32 %v654, %v657
    %v661 = vsel %vm110, 0, %v650
    %v662 = vsel %vm110, 0, %v658
    %v663 = vsel %vm110, %v650, 0
    %v664 = vsel %vm110, %v658, 0
    %v666 = vshrl.u32 %v619, 16
    %v668 = vrot.slane %v666, 5
    %v669 = vshll.u32 %v619, 16
    %v671 = vrot.slane %v669, 6
    %v672 = vor.u32 %v668, %v671
    %v674 = vshrl.u32 %v620, 16
    %v676 = vrot.slane %v674, 5
    %v677 = vshll.u32 %v620, 16
    %v679 = vrot.slane %v677, 6
    %v680 = vor.u32 %v676, %v679
    %v683 = vsel %vm110, 0, %v672
    %v684 = vsel %vm110, 0, %v680
    %v685 = vsel %vm110, %v672, 0
    %v686 = vsel %vm110, %v680, 0
    %v688 = vshrl.u32 %v639, 16
    %v690 = vshll.u32 %v639, 16
    %v692 = vrot.slane %v690, 1
    %v693 = vor.u32 %v688, %v692
    %v695 = vshll.u32 %v641, 16
    %v697 = vrot.slane %v695, 1
    %v698 = vsel %vm159, %v693, %v697
    %v700 = vshrl.u32 %v640, 16
    %v702 = vshll.u32 %v640, 16
    %v704 = vrot.slane %v702, 1
    %v705 = vor.u32 %v700, %v704
    %v707 = vshll.u32 %v642, 16
    %v709 = vrot.slane %v707, 1
    %v710 = vsel %vm159, %v705, %v709
    %711 = vrot.lane.b32.xlu0 %v698, 32
    %v712 = vpop.permute.xlu0 %711
    %713 = vrot.lane.b32.xlu0 %v710, 32
    %v714 = vpop.permute.xlu0 %713
    %v719 = vrot.slane %v683, 1
    %v720 = vrot.slane %v685, 1
    %v721 = vsel %vm192, %v719, %v720
    %v722 = vrot.slane %v684, 1
    %v723 = vrot.slane %v686, 1
    %v724 = vsel %vm192, %v722, %v723
    %725 = vrot.lane.b32.xlu0 %v721, 64
    %v726 = vpop.permute.xlu0 %725
    %727 = vrot.lane.b32.xlu0 %v724, 64
    %v728 = vpop.permute.xlu0 %727
    %v733 = vrot.slane %v661, 2
    %v734 = vrot.slane %v663, 2
    %v735 = vsel %vm207, %v733, %v734
    %v736 = vrot.slane %v662, 2
    %v737 = vrot.slane %v664, 2
    %v738 = vsel %vm207, %v736, %v737
    %739 = vrot.lane.b32.xlu0 %v735, 96
    %v740 = vpop.permute.xlu0 %739
    %741 = vrot.lane.b32.xlu0 %v738, 96
    %v742 = vpop.permute.xlu0 %741
    %v743 = vrot.slane %v688, 2
    %v744 = vrot.slane %v690, 3
    %v745 = vor.u32 %v743, %v744
    %v746 = vshrl.u32 %v641, 16
    %v748 = vrot.slane %v746, 2
    %v749 = vrot.slane %v695, 3
    %v750 = vor.u32 %v748, %v749
    %v751 = vsel %vm218, %v745, %v750
    %v752 = vrot.slane %v700, 2
    %v753 = vrot.slane %v702, 3
    %v754 = vor.u32 %v752, %v753
    %v755 = vshrl.u32 %v642, 16
    %v757 = vrot.slane %v755, 2
    %v758 = vrot.slane %v707, 3
    %v759 = vor.u32 %v757, %v758
    %v760 = vsel %vm218, %v754, %v759
    %v761 = vrot.slane %v683, 3
    %v762 = vrot.slane %v685, 3
    %v763 = vsel %vm241, %v761, %v762
    %v764 = vrot.slane %v684, 3
    %v765 = vrot.slane %v686, 3
    %v766 = vsel %vm241, %v764, %v765
    %767 = vrot.lane.b32.xlu0 %v763, 32
    %v768 = vpop.permute.xlu0 %767
    %769 = vrot.lane.b32.xlu0 %v766, 32
    %v770 = vpop.permute.xlu0 %769
    %v771 = vrot.slane %v661, 4
    %v772 = vrot.slane %v663, 4
    %v773 = vsel %vm252, %v771, %v772
    %v774 = vrot.slane %v662, 4
    %v775 = vrot.slane %v664, 4
    %v776 = vsel %vm252, %v774, %v775
    %777 = vrot.lane.b32.xlu0 %v773, 64
    %v778 = vpop.permute.xlu0 %777
    %779 = vrot.lane.b32.xlu0 %v776, 64
    %v780 = vpop.permute.xlu0 %779
    %v781 = vrot.slane %v688, 4
    %v782 = vrot.slane %v690, 5
    %v783 = vor.u32 %v781, %v782
    %v784 = vrot.slane %v746, 4
    %v785 = vrot.slane %v695, 5
    %v786 = vor.u32 %v784, %v785
    %v787 = vsel %vm263, %v783, %v786
    %v788 = vrot.slane %v700, 4
    %v789 = vrot.slane %v702, 5
    %v790 = vor.u32 %v788, %v789
    %v791 = vrot.slane %v755, 4
    %v792 = vrot.slane %v707, 5
    %v793 = vor.u32 %v791, %v792
    %v794 = vsel %vm263, %v790, %v793
    %795 = vrot.lane.b32.xlu0 %v787, 96
    %v796 = vpop.permute.xlu0 %795
    %797 = vrot.lane.b32.xlu0 %v794, 96
    %v798 = vpop.permute.xlu0 %797
    %v799 = vrot.slane %v683, 5
    %v800 = vrot.slane %v685, 5
    %v801 = vsel %vm108, %v799, %v800
    %v802 = vrot.slane %v684, 5
    %v803 = vrot.slane %v686, 5
    %v804 = vsel %vm108, %v802, %v803
    %v807 = vsel %vm295, %v661, %v712
    %v810 = vsel %vm295, %v662, %v714
    %v812 = vsel %vm305, %v807, %v726
    %v814 = vsel %vm305, %v810, %v728
    %v816 = vsel %vm315, %v812, %v740
    %v819 = vsel %vm315, %v814, %v742
    %v823 = vsel %vm295, %v751, %v768
    %v826 = vsel %vm295, %v760, %v770
    %v828 = vsel %vm305, %v823, %v778
    %v830 = vsel %vm305, %v826, %v780
    %v832 = vsel %vm315, %v828, %v796
    %v835 = vsel %vm315, %v830, %v798
    %v837 = vld [vmem:[%s7] sm:$0xf]
    %v838 = vld [vmem:[%s7 + $0x4] sm:$0xf]
    %v839 = vld [vmem:[%s7 + $0x8] sm:$0xf]
    %v840 = vld [vmem:[%s7 + $0xc] sm:$0xf]
    %v841 = vld [vmem:[%s7 + $0x10] sm:$0xf]
    %v842 = vld [vmem:[%s7 + $0x14] sm:$0xf]
    %v843 = vld [vmem:[%s7 + $0x18] sm:$0xf]
    %v844 = vld [vmem:[%s7 + $0x1c] sm:$0xf]
    %v845 = vld [vmem:[%s7 + $0x20] sm:$0xf]
    %v846 = vld [vmem:[%s7 + $0x24] sm:$0xf]
    %v847 = vld [vmem:[%s7 + $0x28] sm:$0xf]
    %v848 = vld [vmem:[%s7 + $0x2c] sm:$0xf]
    %v849 = vld [vmem:[%s7 + $0x30] sm:$0xf]
    %v850 = vld [vmem:[%s7 + $0x34] sm:$0xf]
    %v851 = vld [vmem:[%s7 + $0x38] sm:$0xf]
    %v852 = vld [vmem:[%s7 + $0x3c] sm:$0xf]
    %v853 = vld [vmem:[%s7 + $0x40] sm:$0xf]
    %v854 = vld [vmem:[%s7 + $0x44] sm:$0xf]
    %v855 = vld [vmem:[%s7 + $0x48] sm:$0xf]
    %v856 = vld [vmem:[%s7 + $0x4c] sm:$0xf]
    %v857 = vld [vmem:[%s7 + $0x50] sm:$0xf]
    %v858 = vld [vmem:[%s7 + $0x54] sm:$0xf]
    %v859 = vld [vmem:[%s7 + $0x58] sm:$0xf]
    %v860 = vld [vmem:[%s7 + $0x5c] sm:$0xf]
    %v861 = vld [vmem:[%s7 + $0x60] sm:$0xf]
    %v862 = vld [vmem:[%s7 + $0x64] sm:$0xf]
    %v863 = vld [vmem:[%s7 + $0x68] sm:$0xf]
    %v864 = vld [vmem:[%s7 + $0x6c] sm:$0xf]
    %v865 = vld [vmem:[%s7 + $0x70] sm:$0xf]
    %v866 = vld [vmem:[%s7 + $0x74] sm:$0xf]
    %v867 = vld [vmem:[%s7 + $0x78] sm:$0xf]
    %v868 = vld [vmem:[%s7 + $0x7c] sm:$0xf]
    %v869 = vld [vmem:[%s7 + $0x80] sm:$0xf]
    %v870 = vld [vmem:[%s7 + $0x84] sm:$0xf]
    %v871 = vld [vmem:[%s7 + $0x88] sm:$0xf]
    %v872 = vld [vmem:[%s7 + $0x8c] sm:$0xf]
    %v909 = vunpack.c.l.b16 %v837
    %v910 = vunpack.c.l.b16 %v838
    %v911 = vunpack.c.l.b16 %v839
    %v912 = vunpack.c.l.b16 %v840
    %v913 = vunpack.c.l.b16 %v841
    %v914 = vunpack.c.l.b16 %v842
    %v915 = vunpack.c.l.b16 %v843
    %v916 = vunpack.c.l.b16 %v844
    %v917 = vunpack.c.l.b16 %v845
    %v918 = vunpack.c.l.b16 %v846
    %v919 = vunpack.c.l.b16 %v847
    %v920 = vunpack.c.l.b16 %v848
    %v921 = vunpack.c.l.b16 %v849
    %v922 = vunpack.c.l.b16 %v850
    %v923 = vunpack.c.l.b16 %v851
    %v924 = vunpack.c.l.b16 %v852
    %v925 = vunpack.c.l.b16 %v853
    %v926 = vunpack.c.l.b16 %v854
    %v927 = vunpack.c.l.b16 %v855
    %v928 = vunpack.c.l.b16 %v856
    %v929 = vunpack.c.l.b16 %v857
    %v930 = vunpack.c.l.b16 %v858
    %v931 = vunpack.c.l.b16 %v859
    %v932 = vunpack.c.l.b16 %v860
    %v933 = vunpack.c.l.b16 %v861
    %v934 = vunpack.c.l.b16 %v862
    %v935 = vunpack.c.l.b16 %v863
    %v936 = vunpack.c.l.b16 %v864
    %v937 = vunpack.c.l.b16 %v865
    %v938 = vunpack.c.l.b16 %v866
    %v939 = vunpack.c.l.b16 %v867
    %v940 = vunpack.c.l.b16 %v868
    %v941 = vunpack.c.l.b16 %v869
    %v942 = vunpack.c.l.b16 %v870
    %v943 = vunpack.c.l.b16 %v871
    %v944 = vunpack.c.l.b16 %v872
    %v945 = vpack.c.b16 %v910, %v909
    %v946 = vpack.c.b16 %v912, %v911
    %v947 = vpack.c.b16 %v914, %v913
    %v948 = vpack.c.b16 %v916, %v915
    %v949 = vpack.c.b16 %v918, %v917
    %v950 = vpack.c.b16 %v920, %v919
    %v951 = vpack.c.b16 %v922, %v921
    %v952 = vpack.c.b16 %v924, %v923
    %v953 = vpack.c.b16 %v926, %v925
    %v954 = vpack.c.b16 %v928, %v927
    %v955 = vpack.c.b16 %v930, %v929
    %v956 = vpack.c.b16 %v932, %v931
    %v957 = vpack.c.b16 %v934, %v933
    %v958 = vpack.c.b16 %v936, %v935
    %v959 = vpack.c.b16 %v938, %v937
    %v960 = vpack.c.b16 %v940, %v939
    %v961 = vpack.c.b16 %v942, %v941
    %v962 = vpack.c.b16 %v944, %v943
    %v982 = vsel %vm295, %v801, 0
    %v985 = vsel %vm295, %v804, 0
    %987 = vmatprep.subr.bf16.mxu0 0
    %988 = vmatpush1.bf16.msra.mxu0 %v952
    %989 = vmatprep.subr.bf16.mxu0 0
    %990 = vmatpush1.bf16.msra.mxu0 %v951
    %991 = vmatprep.subr.bf16.mxu0 0
    %992 = vmatpush1.bf16.msra.mxu0 %v950
    %993 = vmatprep.subr.bf16.mxu0 0
    %994 = vmatpush1.bf16.msra.mxu0 %v949
    %995 = vmatprep.subr.bf16.mxu0 0
    %996 = vmatpush1.bf16.msra.mxu0 %v948
    %997 = vmatprep.subr.bf16.mxu0 0
    %998 = vmatpush1.bf16.msra.mxu0 %v947
    %999 = vmatprep.subr.bf16.mxu0 0
    %1000 = vmatpush1.bf16.msra.mxu0 %v946
    %1001 = vmatprep.subr.bf16.mxu0 0
    %1002 = vmatpush1.bf16.msra.mxu0 %v945
    %1003 = vmatprep.subr.bf16.mxu0 0
    %1004 = vmatpush2.bf16.msra.mxu0 %v960
    %1005 = vmatprep.subr.bf16.mxu0 0
    %1006 = vmatpush2.bf16.msra.mxu0 %v959
    %1007 = vmatprep.subr.bf16.mxu0 0
    %1008 = vmatpush2.bf16.msra.mxu0 %v958
    %1009 = vmatprep.subr.bf16.mxu0 0
    %1010 = vmatpush2.bf16.msra.mxu0 %v957
    %1011 = vmatprep.subr.bf16.mxu0 0
    %1012 = vmatpush2.bf16.msra.mxu0 %v956
    %1013 = vmatprep.subr.bf16.mxu0 0
    %1014 = vmatpush2.bf16.msra.mxu0 %v955
    %1015 = vmatprep.subr.bf16.mxu0 0
    %1016 = vmatpush2.bf16.msra.mxu0 %v954
    %1017 = vmatprep.subr.bf16.mxu0 0
    %1018 = vmatpush2.bf16.msra.mxu0 %v953
    %1019 = vmatprep.mubr.bf16.mxu0 %v832
    %1020 = vmatmul.mubr.bf16.gmra.mxu0 %v816
    %v1021 = vpop.f32.mrf.mxu0
    %v1022 = vadd.f32 0.0, %v1021
    %v1023 = vpop.f32.mrf.mxu0
    %v1024 = vpop.f32.mrf.mxu0
    %v1025 = vadd.f32 0.0, %v1024
    %v1026 = vpop.f32.mrf.mxu0
    %1027 = vmatprep.mubr.bf16.mxu0 %v835
    %1028 = vmatmul.mubr.bf16.gmra.mxu0 %v819
    %v1029 = vpop.f32.mrf.mxu0
    %v1030 = vadd.f32 0.0, %v1029
    %v1031 = vpop.f32.mrf.mxu0
    %v1032 = vpop.f32.mrf.mxu0
    %v1033 = vadd.f32 0.0, %v1032
    %v1034 = vpop.f32.mrf.mxu0
    %1035 = vdwg.mxu0
    %1036 = vmatprep.subr.bf16.mxu0 0
    %1037 = vmatpush1.bf16.msra.mxu0 0
    %1038 = vmatprep.subr.bf16.mxu0 0
    %1039 = vmatpush1.bf16.msra.mxu0 0
    %1040 = vmatprep.subr.bf16.mxu0 0
    %1041 = vmatpush1.bf16.msra.mxu0 0
    %1042 = vmatprep.subr.bf16.mxu0 0
    %1043 = vmatpush1.bf16.msra.mxu0 0
    %1044 = vmatprep.subr.bf16.mxu0 0
    %1045 = vmatpush1.bf16.msra.mxu0 0
    %1046 = vmatprep.subr.bf16.mxu0 0
    %1047 = vmatpush1.bf16.msra.mxu0 0
    %1048 = vmatprep.subr.bf16.mxu0 0
    %1049 = vmatpush1.bf16.msra.mxu0 %v962
    %1050 = vmatprep.subr.bf16.mxu0 0
    %1051 = vmatpush1.bf16.msra.mxu0 %v961
    %1052 = vmatprep.subr.bf16.mxu0 0
    %1053 = vmatpush2.bf16.msra.mxu0 0
    %1054 = vmatprep.subr.bf16.mxu0 0
    %1055 = vmatpush2.bf16.msra.mxu0 0
    %1056 = vmatprep.subr.bf16.mxu0 0
    %1057 = vmatpush2.bf16.msra.mxu0 0
    %1058 = vmatprep.subr.bf16.mxu0 0
    %1059 = vmatpush2.bf16.msra.mxu0 0
    %1060 = vmatprep.subr.bf16.mxu0 0
    %1061 = vmatpush2.bf16.msra.mxu0 0
    %1062 = vmatprep.subr.bf16.mxu0 0
    %1063 = vmatpush2.bf16.msra.mxu0 0
    %1064 = vmatprep.subr.bf16.mxu0 0
    %1065 = vmatpush2.bf16.msra.mxu0 0
    %1066 = vmatprep.subr.bf16.mxu0 0
    %1067 = vmatpush2.bf16.msra.mxu0 0
    %1068 = vmatprep.mubr.bf16.mxu0 0
    %1069 = vmatmul.mubr.bf16.gmra.mxu0 %v982
    %v1070 = vpop.f32.mrf.mxu0
    %v1071 = vadd.f32 %v1022, %v1070
    %v1072 = vpop.f32.mrf.mxu0
    %v1073 = vpop.f32.mrf.mxu0
    %v1074 = vadd.f32 %v1025, %v1073
    %v1075 = vpop.f32.mrf.mxu0
    %1076 = vmatprep.mubr.bf16.mxu0 0
    %1077 = vmatmul.mubr.bf16.gmra.mxu0 %v985
    %v1078 = vpop.f32.mrf.mxu0
    %v1079 = vadd.f32 %v1030, %v1078
    %v1080 = vpop.f32.mrf.mxu0
    %v1081 = vpop.f32.mrf.mxu0
    %v1082 = vadd.f32 %v1033, %v1081
    %v1083 = vpop.f32.mrf.mxu0
    %1084 = vdwg.mxu0
    %v1085 = vld [vmem:[%s8] sm:$0x1]
    %v1087 = vlaneseq
    %v1088 = vshrl.u32 %v1087, 7
    %v1089 = vsub.s32 0, %v1088
    %v1090 = vrot.slane %v1085, %v1089
    %v1092 = vmul.f32 %v1071, %v1090
    %v1093 = vmul.f32 %v1074, %v1090
    %v1094 = vmul.f32 %v1079, %v1090
    %v1095 = vmul.f32 %v1082, %v1090
    %v1096 = vld [vmem:[%s9] sm:$0x1]
    %v1098 = vlaneseq
    %v1099 = vshrl.u32 %v1098, 7
    %v1100 = vsub.s32 0, %v1099
    %v1101 = vrot.slane %v1096, %v1100
    %v1103 = vadd.f32 %v1092, %v1101
    %v1104 = vadd.f32 %v1093, %v1101
    %v1105 = vadd.f32 %v1094, %v1101
    %v1106 = vadd.f32 %v1095, %v1101
    %v1107 = vmax.f32 %v1103, 0.0
    %v1108 = vmax.f32 %v1104, 0.0
    %v1109 = vmax.f32 %v1105, 0.0
    %v1110 = vmax.f32 %v1106, 0.0
    %1111 = vst.msk [vmem:[#allocation2] sm:$0xff] %vm295, %v1107
    %1112 = vst.msk [vmem:[#allocation2 + $0x8] sm:$0xff] %vm295, %v1108
    %1113 = vst.msk [vmem:[#allocation2 + $0x10] sm:$0xff] %vm295, %v1109
    %1114 = vst.msk [vmem:[#allocation2 + $0x18] sm:$0xff] %vm295, %v1110
    %v1115 = vld [vmem:[%s10] sm:$0xf]
    %v1116 = vld [vmem:[%s10 + $0x4] sm:$0xf]
    %v1117 = vld [vmem:[%s10 + $0x8] sm:$0xf]
    %v1118 = vld [vmem:[%s10 + $0xc] sm:$0xf]
    %v1119 = vld [vmem:[%s11] sm:$0x1]
    %v1121 = vlaneseq
    %v1122 = vshrl.u32 %v1121, 7
    %v1123 = vsub.s32 0, %v1122
    %v1124 = vrot.slane %v1119, %v1123
    %v1130 = vunpack.c.l.b16 %v1115
    %v1131 = vunpack.c.l.b16 %v1116
    %v1132 = vunpack.c.l.b16 %v1117
    %v1133 = vunpack.c.l.b16 %v1118
    %v1134 = vpack.c.b16 %v1131, %v1130
    %v1135 = vpack.c.b16 %v1133, %v1132
    %v1138 = vsel %vm295, %v615, 0
    %v1140 = vsel %vm295, %v616, 0
    %1142 = vmatprep.subr.bf16.mxu0 0
    %1143 = vmatpush1.bf16.msra.mxu0 0
    %1144 = vmatprep.subr.bf16.mxu0 0
    %1145 = vmatpush1.bf16.msra.mxu0 0
    %1146 = vmatprep.subr.bf16.mxu0 0
    %1147 = vmatpush1.bf16.msra.mxu0 0
    %1148 = vmatprep.subr.bf16.mxu0 0
    %1149 = vmatpush1.bf16.msra.mxu0 0
    %1150 = vmatprep.subr.bf16.mxu0 0
    %1151 = vmatpush1.bf16.msra.mxu0 0
    %1152 = vmatprep.subr.bf16.mxu0 0
    %1153 = vmatpush1.bf16.msra.mxu0 0
    %1154 = vmatprep.subr.bf16.mxu0 0
    %1155 = vmatpush1.bf16.msra.mxu0 %v1135
    %1156 = vmatprep.subr.bf16.mxu0 0
    %1157 = vmatpush1.bf16.msra.mxu0 %v1134
    %1158 = vmatprep.subr.bf16.mxu0 0
    %1159 = vmatpush2.bf16.msra.mxu0 0
    %1160 = vmatprep.subr.bf16.mxu0 0
    %1161 = vmatpush2.bf16.msra.mxu0 0
    %1162 = vmatprep.subr.bf16.mxu0 0
    %1163 = vmatpush2.bf16.msra.mxu0 0
    %1164 = vmatprep.subr.bf16.mxu0 0
    %1165 = vmatpush2.bf16.msra.mxu0 0
    %1166 = vmatprep.subr.bf16.mxu0 0
    %1167 = vmatpush2.bf16.msra.mxu0 0
    %1168 = vmatprep.subr.bf16.mxu0 0
    %1169 = vmatpush2.bf16.msra.mxu0 0
    %1170 = vmatprep.subr.bf16.mxu0 0
    %1171 = vmatpush2.bf16.msra.mxu0 0
    %1172 = vmatprep.subr.bf16.mxu0 0
    %1173 = vmatpush2.bf16.msra.mxu0 0
    %1174 = vmatprep.mubr.bf16.mxu0 0
    %1175 = vmatmul.mubr.bf16.gmra.mxu0 %v1138
    %v1176 = vpop.f32.mrf.mxu0
    %v1177 = vadd.f32 %v1124, %v1176
    %v1178 = vpop.f32.mrf.mxu0
    %v1179 = vpop.f32.mrf.mxu0
    %v1180 = vadd.f32 %v1124, %v1179
    %v1181 = vpop.f32.mrf.mxu0
    %1182 = vmatprep.mubr.bf16.mxu0 0
    %1183 = vmatmul.mubr.bf16.gmra.mxu0 %v1140
    %v1184 = vpop.f32.mrf.mxu0
    %v1185 = vadd.f32 %v1124, %v1184
    %v1186 = vpop.f32.mrf.mxu0
    %v1187 = vpop.f32.mrf.mxu0
    %v1188 = vadd.f32 %v1124, %v1187
    %v1189 = vpop.f32.mrf.mxu0
    %1190 = vdwg.mxu0
    %v1191 = vpack.c.bf16 %v1180, %v1177
    %v1192 = vpack.c.bf16 %v1188, %v1185
    %v1195 = vunpack.c.l.b16 %v1191
    %v1196 = vunpack.c.h.b16 %v1191
    %v1197 = vunpack.c.l.b16 %v1192
    %v1198 = vunpack.c.h.b16 %v1192
    %v1199 = vpack.c.b16 %v1195, %v1195
    %v1200 = vpack.c.b16 %v1196, %v1196
    %v1201 = vpack.c.b16 %v1197, %v1197
    %v1202 = vpack.c.b16 %v1198, %v1198
    %1207 = vst [vmem:[%s13] sm:$0xf] %v1199
    %1208 = vst [vmem:[%s13 + $0x4] sm:$0xf] %v1200
    %1209 = vst [vmem:[%s13 + $0x8] sm:$0xf] %v1201
    %1210 = vst [vmem:[%s13 + $0xc] sm:$0xf] %v1202
    // Predicated region
    $region50: #{pyramid_forward.3} parent=1 // pred_check
      _
    $region51: #{pyramid_forward.3} parent=1 // pred_check_branch
      %1212 = sbr.rel (0) target = $region53
    $region52: #{pyramid_forward.3} parent=1 // pred_region
      %s1214 = ssub.s32 512, 512
      %1215 = vsyncadd [#allocation3], %s1214
      %s1216 = sshll.u32 [#allocation2], 4
      %s1217 = int_to_ptr.vmem [resolvable:$true] %s1216
      %1222 = dma.vmem_to_hbm [thread:$0]  %s1217, 512, %s12, [#allocation3], 128, 128, 8
    $region53: #{pyramid_forward.3} parent=1 // pred_fallthru
      _
    // Predicated region
    $region54: #{pyramid_forward.3} parent=1 // pred_check
      _
    $region55: #{pyramid_forward.3} parent=1 // pred_check_branch
      %1224 = sbr.rel (0) target = $region57
    $region56: #{pyramid_forward.3} parent=1 // pred_region
      _
    $region57: #{pyramid_forward.3} parent=1 // pred_fallthru
      _
    // Predicated region
    $region58: #{pyramid_forward.3} parent=1 // pred_check
      _
    $region59: #{pyramid_forward.3} parent=1 // pred_check_branch
      %1226 = sbr.rel (0) target = $region61
    $region60: #{pyramid_forward.3} parent=1 // pred_region
      %1227 = dma.done [#allocation3], 512
    $region61: #{pyramid_forward.3} parent=1 // pred_fallthru
      _
    // Predicated region
    $region62: #{pyramid_forward.3} parent=1 // pred_check
      _
    $region63: #{pyramid_forward.3} parent=1 // pred_check_branch
      %1229 = sbr.rel (0) target = $region65
    $region64: #{pyramid_forward.3} parent=1 // pred_region
      _
    $region65: #{pyramid_forward.3} parent=1 // pred_fallthru
      _
    %1230 = vsyncpa [#allocation3], 1

// kernel: pyramid_forward.5
$region0: #{pyramid_forward.5}
  #allocation0 [shape = 'u32[]', space=smem, size = 0x4, offset = 0x4, fixed_abs, tag = 'smem constant byte address 0x4 - core index']
  #allocation1 [shape = 'u32[144,128]{1,0:T(1,128)}', space=vmem, size = 0x12000, scoped, tag = 'internal scratch']
  %s0 = inlined_call_operand.vmem [shape: f32[2,256,8], index: 0, kind: input, shape index: {}]
  %s1 = inlined_call_operand.vmem [shape: bf16[2,256,32], index: 1, kind: input, shape index: {}]
  %s2 = inlined_call_operand.vmem [shape: bf16[72,32], index: 2, kind: input, shape index: {}]
  %s3 = inlined_call_operand.vmem [shape: f32[1,32], index: 3, kind: input, shape index: {}]
  %s4 = inlined_call_operand.vmem [shape: f32[1,32], index: 4, kind: input, shape index: {}]
  %s5 = inlined_call_operand.vmem [shape: bf16[288,32], index: 5, kind: input, shape index: {}]
  %s6 = inlined_call_operand.vmem [shape: f32[1,32], index: 6, kind: input, shape index: {}]
  %s7 = inlined_call_operand.vmem [shape: f32[1,32], index: 7, kind: input, shape index: {}]
  %s8 = inlined_call_operand.hbm [shape: f32[2,256,32], index: 8, kind: output, shape index: {}]
  %s9 = sld [smem:[#allocation0]]
  $region65: #{pyramid_forward.5} parent=0
    _
  %s11 = ssub.s32 1, %s9
  %s12 = scalar_select 0, %s11, %s9
  $region1: #{pyramid_forward.5} parent=0
    #allocation2 [shape = 'u8[262144]{0}', space=vmem, size = 0x40000, scoped, tag = 'output window, operand 0']
    #allocation3 [shape = 's32[2]{0}', space=sflag, size = 0x8, scoped, tag = 'scoped memory for pyramid_forward.5']
    %13 = vsyncpa [#allocation3], 0
    %s14 = scalar_lea.sflag [#allocation3], 1
    %15 = vsyncpa %s14, 0
    loop: start=0, step=1, limit=4
    $region2: #{pyramid_forward.5} parent=1 // loop_pre_header
      _
    $region3: #{pyramid_forward.5} parent=1 // loop_header
      %s17 = sphi 0, %s21
      %p18 = scmp.ge.s32.totalorder %s17, 4
      %s27 = sphi 0, %s29
      %s30 = sphi 0, %s27
      %s31 = sphi 0, %s30
      %s47 = sphi 0, %s31
      %s53 = sphi 0, %s55
      %s56 = sphi 0, %s53
      %s57 = sphi 0, %s56
      %s73 = sphi 0, %s57
      %s77 = sphi 0, %s77
      %s79 = sphi 0, %s77
      %s80 = sphi 0, %s79
      %s94 = sphi 0, %s80
      %s98 = sphi 0, %s98
      %s100 = sphi 0, %s98
      %s101 = sphi 0, %s100
      %s115 = sphi 0, %s101
      %s119 = sphi 0, %s119
      %s121 = sphi 0, %s119
      %s122 = sphi 0, %s121
      %s136 = sphi 0, %s122
      %s140 = sphi 0, %s140
      %s142 = sphi 0, %s140
      %s143 = sphi 0, %s142
      %s157 = sphi 0, %s143
      %s161 = sphi 0, %s161
      %s163 = sphi 0, %s161
      %s164 = sphi 0, %s163
      %s178 = sphi 0, %s164
      %s182 = sphi 0, %s182
      %s184 = sphi 0, %s182
      %s185 = sphi 0, %s184
      %s199 = sphi 0, %s185
      %s205 = sphi 0, %s207
      %s208 = sphi 0, %s205
      %s209 = sphi 0, %s208
      %s225 = sphi 0, %s209
    $region4: #{pyramid_forward.5} parent=1 // loop_header_branch
      %20 = sbr.rel (%p18) target = $region8
    $region5: #{pyramid_forward.5} parent=1 // loop_body
      %s22 = ssub.s32 %s17, 1
      %s23 = ssub.s32 %s17, 2
      %s24 = sadd.s32 %s17, 1
      %s25 = ssub.s32 %s17, %s24
      %p26 = scmp.eq.s32.totalorder %s25, 0
      %s28 = sadd.s32 %s27, 1
      %s29 = scalar_select %p26, %s27, %s28
      %p32 = pneg %p26
      %p33 = scmp.eq.s32.totalorder %s17, 1
      %p34 = por %p32, %p33
      %p35 = scmp.ne.s32.totalorder %s27, %s30
      %p36 = scmp.eq.s32.totalorder %s17, 0
      %p37 = por %p35, %p36
      %p38 = scmp.ne.s32.totalorder %s27, %s30
      %p39 = scmp.eq.s32.totalorder %s22, 1
      %p40 = por %p38, %p39
      %p41 = scmp.ne.s32.totalorder %s30, %s31
      %p42 = scmp.eq.s32.totalorder %s22, 0
      %p43 = por %p41, %p42
      %p44 = scmp.ne.s32.totalorder %s30, %s31
      %p45 = scmp.eq.s32.totalorder %s23, 1
      %p46 = por %p44, %p45
      %p48 = scmp.ne.s32.totalorder %s31, %s47
      %p49 = scmp.eq.s32.totalorder %s23, 0
      %p50 = por %p48, %p49
      %s51 = ssub.s32 %s17, %s24
      %p52 = scmp.eq.s32.totalorder %s51, 0
      %s54 = sadd.s32 %s53, 1
      %s55 = scalar_select %p52, %s53, %s54
      %p58 = pneg %p52
      %p59 = scmp.eq.s32.totalorder %s17, 1
      %p60 = por %p58, %p59
      %p61 = scmp.ne.s32.totalorder %s53, %s56
      %p62 = scmp.eq.s32.totalorder %s17, 0
      %p63 = por %p61, %p62
      %p64 = scmp.ne.s32.totalorder %s53, %s56
      %p65 = scmp.eq.s32.totalorder %s22, 1
      %p66 = por %p64, %p65
      %p67 = scmp.ne.s32.totalorder %s56, %s57
      %p68 = scmp.eq.s32.totalorder %s22, 0
      %p69 = por %p67, %p68
      %p70 = scmp.ne.s32.totalorder %s56, %s57
      %p71 = scmp.eq.s32.totalorder %s23, 1
      %p72 = por %p70, %p71
      %p74 = scmp.ne.s32.totalorder %s57, %s73
      %p75 = scmp.eq.s32.totalorder %s23, 0
      %p76 = por %p74, %p75
      %s78 = sadd.s32 %s77, 1
      %p81 = scmp.eq.s32.totalorder %s17, 1
      %p82 = scmp.ne.s32.totalorder %s77, %s79
      %p83 = scmp.eq.s32.totalorder %s17, 0
      %p84 = por %p82, %p83
      %p85 = scmp.ne.s32.totalorder %s77, %s79
      %p86 = scmp.eq.s32.totalorder %s22, 1
      %p87 = por %p85, %p86
      %p88 = scmp.ne.s32.totalorder %s79, %s80
      %p89 = scmp.eq.s32.totalorder %s22, 0
      %p90 = por %p88, %p89
      %p91 = scmp.ne.s32.totalorder %s79, %s80
      %p92 = scmp.eq.s32.totalorder %s23, 1
      %p93 = por %p91, %p92
      %p95 = scmp.ne.s32.totalorder %s80, %s94
      %p96 = scmp.eq.s32.totalorder %s23, 0
      %p97 = por %p95, %p96
      %s99 = sadd.s32 %s98, 1
      %p102 = scmp.eq.s32.totalorder %s17, 1
      %p103 = scmp.ne.s32.totalorder %s98, %s100
      %p104 = scmp.eq.s32.totalorder %s17, 0
      %p105 = por %p103, %p104
      %p106 = scmp.ne.s32.totalorder %s98, %s100
      %p107 = scmp.eq.s32.totalorder %s22, 1
      %p108 = por %p106, %p107
      %p109 = scmp.ne.s32.totalorder %s100, %s101
      %p110 = scmp.eq.s32.totalorder %s22, 0
      %p111 = por %p109, %p110
      %p112 = scmp.ne.s32.totalorder %s100, %s101
      %p113 = scmp.eq.s32.totalorder %s23, 1
      %p114 = por %p112, %p113
      %p116 = scmp.ne.s32.totalorder %s101, %s115
      %p117 = scmp.eq.s32.totalorder %s23, 0
      %p118 = por %p116, %p117
      %s120 = sadd.s32 %s119, 1
      %p123 = scmp.eq.s32.totalorder %s17, 1
      %p124 = scmp.ne.s32.totalorder %s119, %s121
      %p125 = scmp.eq.s32.totalorder %s17, 0
      %p126 = por %p124, %p125
      %p127 = scmp.ne.s32.totalorder %s119, %s121
      %p128 = scmp.eq.s32.totalorder %s22, 1
      %p129 = por %p127, %p128
      %p130 = scmp.ne.s32.totalorder %s121, %s122
      %p131 = scmp.eq.s32.totalorder %s22, 0
      %p132 = por %p130, %p131
      %p133 = scmp.ne.s32.totalorder %s121, %s122
      %p134 = scmp.eq.s32.totalorder %s23, 1
      %p135 = por %p133, %p134
      %p137 = scmp.ne.s32.totalorder %s122, %s136
      %p138 = scmp.eq.s32.totalorder %s23, 0
      %p139 = por %p137, %p138
      %s141 = sadd.s32 %s140, 1
      %p144 = scmp.eq.s32.totalorder %s17, 1
      %p145 = scmp.ne.s32.totalorder %s140, %s142
      %p146 = scmp.eq.s32.totalorder %s17, 0
      %p147 = por %p145, %p146
      %p148 = scmp.ne.s32.totalorder %s140, %s142
      %p149 = scmp.eq.s32.totalorder %s22, 1
      %p150 = por %p148, %p149
      %p151 = scmp.ne.s32.totalorder %s142, %s143
      %p152 = scmp.eq.s32.totalorder %s22, 0
      %p153 = por %p151, %p152
      %p154 = scmp.ne.s32.totalorder %s142, %s143
      %p155 = scmp.eq.s32.totalorder %s23, 1
      %p156 = por %p154, %p155
      %p158 = scmp.ne.s32.totalorder %s143, %s157
      %p159 = scmp.eq.s32.totalorder %s23, 0
      %p160 = por %p158, %p159
      %s162 = sadd.s32 %s161, 1
      %p165 = scmp.eq.s32.totalorder %s17, 1
      %p166 = scmp.ne.s32.totalorder %s161, %s163
      %p167 = scmp.eq.s32.totalorder %s17, 0
      %p168 = por %p166, %p167
      %p169 = scmp.ne.s32.totalorder %s161, %s163
      %p170 = scmp.eq.s32.totalorder %s22, 1
      %p171 = por %p169, %p170
      %p172 = scmp.ne.s32.totalorder %s163, %s164
      %p173 = scmp.eq.s32.totalorder %s22, 0
      %p174 = por %p172, %p173
      %p175 = scmp.ne.s32.totalorder %s163, %s164
      %p176 = scmp.eq.s32.totalorder %s23, 1
      %p177 = por %p175, %p176
      %p179 = scmp.ne.s32.totalorder %s164, %s178
      %p180 = scmp.eq.s32.totalorder %s23, 0
      %p181 = por %p179, %p180
      %s183 = sadd.s32 %s182, 1
      %p186 = scmp.eq.s32.totalorder %s17, 1
      %p187 = scmp.ne.s32.totalorder %s182, %s184
      %p188 = scmp.eq.s32.totalorder %s17, 0
      %p189 = por %p187, %p188
      %p190 = scmp.ne.s32.totalorder %s182, %s184
      %p191 = scmp.eq.s32.totalorder %s22, 1
      %p192 = por %p190, %p191
      %p193 = scmp.ne.s32.totalorder %s184, %s185
      %p194 = scmp.eq.s32.totalorder %s22, 0
      %p195 = por %p193, %p194
      %p196 = scmp.ne.s32.totalorder %s184, %s185
      %p197 = scmp.eq.s32.totalorder %s23, 1
      %p198 = por %p196, %p197
      %p200 = scmp.ne.s32.totalorder %s185, %s199
      %p201 = scmp.eq.s32.totalorder %s23, 0
      %p202 = por %p200, %p201
      %s203 = ssub.s32 %s17, %s24
      %p204 = scmp.eq.s32.totalorder %s203, 0
      %s206 = sadd.s32 %s205, 1
      %s207 = scalar_select %p204, %s205, %s206
      %p210 = pneg %p204
      %p211 = scmp.eq.s32.totalorder %s17, 1
      %p212 = por %p210, %p211
      %p213 = scmp.ne.s32.totalorder %s205, %s208
      %p214 = scmp.eq.s32.totalorder %s17, 0
      %p215 = por %p213, %p214
      %p216 = scmp.ne.s32.totalorder %s205, %s208
      %p217 = scmp.eq.s32.totalorder %s22, 1
      %p218 = por %p216, %p217
      %p219 = scmp.ne.s32.totalorder %s208, %s209
      %p220 = scmp.eq.s32.totalorder %s22, 0
      %p221 = por %p219, %p220
      %p222 = scmp.ne.s32.totalorder %s208, %s209
      %p223 = scmp.eq.s32.totalorder %s23, 1
      %p224 = por %p222, %p223
      %p226 = scmp.ne.s32.totalorder %s209, %s225
      %p227 = scmp.eq.s32.totalorder %s23, 0
      %p228 = por %p226, %p227
      %p229 = scmp.le.s32.totalorder 1, %s17
      %p230 = scmp.lt.s32.totalorder %s17, 3
      %p231 = pnand %p229, %p230
      %p232 = pneg %p231
      // Predicated region
      $region9: #{pyramid_forward.5} parent=5 // pred_check
        _
      $region10: #{pyramid_forward.5} parent=5 // pred_check_branch
        %234 = sbr.rel (%p231) target = $region12
      $region11: #{pyramid_forward.5} parent=5 // pred_region
        %s235 = ssub.s32 %s17, 1
        // Predicated region
        $region13: #{pyramid_forward.5} parent=11 // pred_check
          %p236 = pneg %p90
        $region14: #{pyramid_forward.5} parent=11 // pred_check_branch
          %238 = sbr.rel (%p236) target = $region16
        $region15: #{pyramid_forward.5} parent=11 // pred_region
          _
        $region16: #{pyramid_forward.5} parent=11 // pred_fallthru
          _
        // Predicated region
        $region17: #{pyramid_forward.5} parent=11 // pred_check
          %p239 = pneg %p111
        $region18: #{pyramid_forward.5} parent=11 // pred_check_branch
          %241 = sbr.rel (%p239) target = $region20
        $region19: #{pyramid_forward.5} parent=11 // pred_region
          _
        $region20: #{pyramid_forward.5} parent=11 // pred_fallthru
          _
        // Predicated region
        $region21: #{pyramid_forward.5} parent=11 // pred_check
          %p242 = pneg %p132
        $region22: #{pyramid_forward.5} parent=11 // pred_check_branch
          %244 = sbr.rel (%p242) target = $region24
        $region23: #{pyramid_forward.5} parent=11 // pred_region
          _
        $region24: #{pyramid_forward.5} parent=11 // pred_fallthru
          _
        // Predicated region
        $region25: #{pyramid_forward.5} parent=11 // pred_check
          %p245 = pneg %p153
        $region26: #{pyramid_forward.5} parent=11 // pred_check_branch
          %247 = sbr.rel (%p245) target = $region28
        $region27: #{pyramid_forward.5} parent=11 // pred_region
          _
        $region28: #{pyramid_forward.5} parent=11 // pred_fallthru
          _
        // Predicated region
        $region29: #{pyramid_forward.5} parent=11 // pred_check
          %p248 = pneg %p174
        $region30: #{pyramid_forward.5} parent=11 // pred_check_branch
          %250 = sbr.rel (%p248) target = $region32
        $region31: #{pyramid_forward.5} parent=11 // pred_region
          _
        $region32: #{pyramid_forward.5} parent=11 // pred_fallthru
          _
        // Predicated region
        $region33: #{pyramid_forward.5} parent=11 // pred_check
          %p251 = pneg %p195
        $region34: #{pyramid_forward.5} parent=11 // pred_check_branch
          %253 = sbr.rel (%p251) target = $region36
        $region35: #{pyramid_forward.5} parent=11 // pred_region
          _
        $region36: #{pyramid_forward.5} parent=11 // pred_fallthru
          _
      $region12: #{pyramid_forward.5} parent=5 // pred_fallthru
        _
      %p254 = scmp.lt.s32.totalorder %s17, 2
      // Predicated region
      $region37: #{pyramid_forward.5} parent=5 // pred_check
        %p255 = pneg %p254
      $region38: #{pyramid_forward.5} parent=5 // pred_check_branch
        %257 = sbr.rel (%p255) target = $region40
      $region39: #{pyramid_forward.5} parent=5 // pred_region
        // Predicated region
        $region41: #{pyramid_forward.5} parent=39 // pred_check
          %p258 = pneg %p37
        $region42: #{pyramid_forward.5} parent=39 // pred_check_branch
          %260 = sbr.rel (%p258) target = $region44
        $region43: #{pyramid_forward.5} parent=39 // pred_region
          %p261 = scmp.lt.s32.totalorder %s17, 1
          %s262 = scalar_select %p261, %s17, 1
          %s263 = smul.addr %s262, 32
          %s264 = smul.addr %s263, 8
          %s265 = scalar_lea.vmem %s0, %s264
        $region44: #{pyramid_forward.5} parent=39 // pred_fallthru
          _
        // Predicated region
        $region45: #{pyramid_forward.5} parent=39 // pred_check
          %p266 = pneg %p63
        $region46: #{pyramid_forward.5} parent=39 // pred_check_branch
          %268 = sbr.rel (%p266) target = $region48
        $region47: #{pyramid_forward.5} parent=39 // pred_region
          %p269 = scmp.lt.s32.totalorder %s17, 1
          %s270 = scalar_select %p269, %s17, 1
          %s271 = smul.addr %s270, 32
          %s272 = smul.addr %s271, 4
          %s273 = scalar_lea.vmem %s1, %s272
        $region48: #{pyramid_forward.5} parent=39 // pred_fallthru
          _
      $region40: #{pyramid_forward.5} parent=5 // pred_fallthru
        _
      %p274 = scmp.le.s32.totalorder 1, %s17
      %p275 = scmp.lt.s32.totalorder %s17, 3
      %p276 = pnand %p274, %p275
      %p277 = pneg %p276
      // Predicated region
      $region49: #{pyramid_forward.5} parent=5 // pred_check
        _
      $region50: #{pyramid_forward.5} parent=5 // pred_check_branch
        %279 = sbr.rel (%p276) target = $region52
      $region51: #{pyramid_forward.5} parent=5 // pred_region
        %s280 = ssub.s32 %s17, 1
        %p281 = scmp.lt.s32.totalorder %s22, 1
        %s282 = scalar_select %p281, %s22, 1
        %s283 = smul.addr %s282, 32
        %s284 = smul.addr %s283, 8
        %s285 = scalar_lea.vmem %s0, %s284
        %p286 = pneg %p43
        %p287 = pneg %p40
        %p288 = scmp.lt.s32.totalorder %s22, 1
        %s289 = scalar_select %p288, %s22, 1
        %s290 = smul.addr %s289, 32
        %s291 = smul.addr %s290, 4
        %s292 = scalar_lea.vmem %s1, %s291
        %p293 = pneg %p69
        %p294 = pneg %p66
        %p295 = pneg %p90
        %p296 = pneg %p87
        %p297 = pneg %p111
        %p298 = pneg %p108
        %p299 = pneg %p132
        %p300 = pneg %p129
        %p301 = pneg %p153
        %p302 = pneg %p150
        %p303 = pneg %p174
        %p304 = pneg %p171
        %p305 = pneg %p195
        %p306 = pneg %p192
        %p307 = pneg %p221
        %p308 = pneg %p218
        %s309 = sand.u32 %s208, 1
        %s310 = scalar_lea.sflag [#allocation3], %s309
        %s311 = sand.u32 %s208, 1
        %s312 = smul.addr %s311, 256
        %s313 = scalar_lea.vmem [#allocation2], %s312
        %p314 = scmp.lt.s32.totalorder %s22, 1
        %s315 = scalar_select %p314, %s22, 1
        %s316 = smul.addr %s315, 32
        %s317 = smul.addr %s316, 8
        %s318 = scalar_lea.vmem %s0, %s317
        %p319 = scmp.lt.s32.totalorder %s22, 1
        %s320 = scalar_select %p319, %s22, 1
        %s321 = smul.addr %s320, 32
        %s322 = smul.addr %s321, 4
        %s323 = scalar_lea.vmem %s1, %s322
        %v327 = vlaneseq
        %v328 = vshrl.u32 %v327, 7
        %v329 = vadd.s32 %v328, 8
        %v330 = vadd.s32 %v328, 16
        %v331 = vadd.s32 %v328, 24
        %v332 = vadd.s32 %v328, 32
        %v333 = vadd.s32 %v328, 40
        %v334 = vadd.s32 %v328, 48
        %v335 = vadd.s32 %v328, 56
        %v336 = vadd.s32 %v328, 64
        %v337 = vadd.s32 %v328, 72
        %v338 = vadd.s32 %v328, 80
        %v339 = vadd.s32 %v328, 88
        %v340 = vadd.s32 %v328, 96
        %v341 = vadd.s32 %v328, 104
        %v342 = vadd.s32 %v328, 112
        %v343 = vadd.s32 %v328, 120
        %v344 = vadd.s32 %v328, 128
        %v345 = vadd.s32 %v328, 136
        %v346 = vadd.s32 %v328, 144
        %v347 = vadd.s32 %v328, 152
        %v348 = vadd.s32 %v328, 160
        %v349 = vadd.s32 %v328, 168
        %v350 = vadd.s32 %v328, 176
        %v351 = vadd.s32 %v328, 184
        %v352 = vadd.s32 %v328, 192
        %v353 = vadd.s32 %v328, 200
        %v354 = vadd.s32 %v328, 208
        %v355 = vadd.s32 %v328, 216
        %v356 = vadd.s32 %v328, 224
        %v357 = vadd.s32 %v328, 232
        %v358 = vadd.s32 %v328, 240
        %v359 = vadd.s32 %v328, 248
        %v360 = vand.u32 %v328, 15
        %v361 = vand.u32 %v329, 15
        %v362 = vand.u32 %v330, 15
        %v363 = vand.u32 %v331, 15
        %v364 = vand.u32 %v332, 15
        %v365 = vand.u32 %v333, 15
        %v366 = vand.u32 %v334, 15
        %v367 = vand.u32 %v335, 15
        %v368 = vand.u32 %v336, 15
        %v369 = vand.u32 %v337, 15
        %v370 = vand.u32 %v338, 15
        %v371 = vand.u32 %v339, 15
        %v372 = vand.u32 %v340, 15
        %v373 = vand.u32 %v341, 15
        %v374 = vand.u32 %v342, 15
        %v375 = vand.u32 %v343, 15
        %v376 = vand.u32 %v344, 15
        %v377 = vand.u32 %v345, 15
        %v378 = vand.u32 %v346, 15
        %v379 = vand.u32 %v347, 15
        %v380 = vand.u32 %v348, 15
        %v381 = vand.u32 %v349, 15
        %v382 = vand.u32 %v350, 15
        %v383 = vand.u32 %v351, 15
        %v384 = vand.u32 %v352, 15
        %v385 = vand.u32 %v353, 15
        %v386 = vand.u32 %v354, 15
        %v387 = vand.u32 %v355, 15
        %v388 = vand.u32 %v356, 15
        %v389 = vand.u32 %v357, 15
        %v390 = vand.u32 %v358, 15
        %v391 = vand.u32 %v359, 15
        %vm392 = vcmp.ne.s32.totalorder %v360, 15
        %vm393 = vcmp.ne.s32.totalorder %v361, 15
        %vm394 = vcmp.ne.s32.totalorder %v362, 15
        %vm395 = vcmp.ne.s32.totalorder %v363, 15
        %vm396 = vcmp.ne.s32.totalorder %v364, 15
        %vm397 = vcmp.ne.s32.totalorder %v365, 15
        %vm398 = vcmp.ne.s32.totalorder %v366, 15
        %vm399 = vcmp.ne.s32.totalorder %v367, 15
        %vm400 = vcmp.ne.s32.totalorder %v368, 15
        %vm401 = vcmp.ne.s32.totalorder %v369, 15
        %vm402 = vcmp.ne.s32.totalorder %v370, 15
        %vm403 = vcmp.ne.s32.totalorder %v371, 15
        %vm404 = vcmp.ne.s32.totalorder %v372, 15
        %vm405 = vcmp.ne.s32.totalorder %v373, 15
        %vm406 = vcmp.ne.s32.totalorder %v374, 15
        %vm407 = vcmp.ne.s32.totalorder %v375, 15
        %vm408 = vcmp.ne.s32.totalorder %v376, 15
        %vm409 = vcmp.ne.s32.totalorder %v377, 15
        %vm410 = vcmp.ne.s32.totalorder %v378, 15
        %vm411 = vcmp.ne.s32.totalorder %v379, 15
        %vm412 = vcmp.ne.s32.totalorder %v380, 15
        %vm413 = vcmp.ne.s32.totalorder %v381, 15
        %vm414 = vcmp.ne.s32.totalorder %v382, 15
        %vm415 = vcmp.ne.s32.totalorder %v383, 15
        %vm416 = vcmp.ne.s32.totalorder %v384, 15
        %vm417 = vcmp.ne.s32.totalorder %v385, 15
        %vm418 = vcmp.ne.s32.totalorder %v386, 15
        %vm419 = vcmp.ne.s32.totalorder %v387, 15
        %vm420 = vcmp.ne.s32.totalorder %v388, 15
        %vm421 = vcmp.ne.s32.totalorder %v389, 15
        %vm422 = vcmp.ne.s32.totalorder %v390, 15
        %vm423 = vcmp.ne.s32.totalorder %v391, 15
        %vm424 = vcmp.ne.s32.totalorder %v360, 0
        %vm425 = vcmp.ne.s32.totalorder %v361, 0
        %vm426 = vcmp.ne.s32.totalorder %v362, 0
        %vm427 = vcmp.ne.s32.totalorder %v363, 0
        %vm428 = vcmp.ne.s32.totalorder %v364, 0
        %vm429 = vcmp.ne.s32.totalorder %v365, 0
        %vm430 = vcmp.ne.s32.totalorder %v366, 0
        %vm431 = vcmp.ne.s32.totalorder %v367, 0
        %vm432 = vcmp.ne.s32.totalorder %v368, 0
        %vm433 = vcmp.ne.s32.totalorder %v369, 0
        %vm434 = vcmp.ne.s32.totalorder %v370, 0
        %vm435 = vcmp.ne.s32.totalorder %v371, 0
        %vm436 = vcmp.ne.s32.totalorder %v372, 0
        %vm437 = vcmp.ne.s32.totalorder %v373, 0
        %vm438 = vcmp.ne.s32.totalorder %v374, 0
        %vm439 = vcmp.ne.s32.totalorder %v375, 0
        %vm440 = vcmp.ne.s32.totalorder %v376, 0
        %vm441 = vcmp.ne.s32.totalorder %v377, 0
        %vm442 = vcmp.ne.s32.totalorder %v378, 0
        %vm443 = vcmp.ne.s32.totalorder %v379, 0
        %vm444 = vcmp.ne.s32.totalorder %v380, 0
        %vm445 = vcmp.ne.s32.totalorder %v381, 0
        %vm446 = vcmp.ne.s32.totalorder %v382, 0
        %vm447 = vcmp.ne.s32.totalorder %v383, 0
        %vm448 = vcmp.ne.s32.totalorder %v384, 0
        %vm449 = vcmp.ne.s32.totalorder %v385, 0
        %vm450 = vcmp.ne.s32.totalorder %v386, 0
        %vm451 = vcmp.ne.s32.totalorder %v387, 0
        %vm452 = vcmp.ne.s32.totalorder %v388, 0
        %vm453 = vcmp.ne.s32.totalorder %v389, 0
        %vm454 = vcmp.ne.s32.totalorder %v390, 0
        %vm455 = vcmp.ne.s32.totalorder %v391, 0
        %v456 = vld [vmem:[%s318] sm:$0xff]
        %v457 = vld [vmem:[%s318 + $0x8] sm:$0xff]
        %v458 = vld [vmem:[%s318 + $0x10] sm:$0xff]
        %v459 = vld [vmem:[%s318 + $0x18] sm:$0xff]
        %v460 = vld [vmem:[%s318 + $0x20] sm:$0xff]
        %v461 = vld [vmem:[%s318 + $0x28] sm:$0xff]
        %v462 = vld [vmem:[%s318 + $0x30] sm:$0xff]
        %v463 = vld [vmem:[%s318 + $0x38] sm:$0xff]
        %v464 = vld [vmem:[%s318 + $0x40] sm:$0xff]
        %v465 = vld [vmem:[%s318 + $0x48] sm:$0xff]
        %v466 = vld [vmem:[%s318 + $0x50] sm:$0xff]
        %v467 = vld [vmem:[%s318 + $0x58] sm:$0xff]
        %v468 = vld [vmem:[%s318 + $0x60] sm:$0xff]
        %v469 = vld [vmem:[%s318 + $0x68] sm:$0xff]
        %v470 = vld [vmem:[%s318 + $0x70] sm:$0xff]
        %v471 = vld [vmem:[%s318 + $0x78] sm:$0xff]
        %v472 = vld [vmem:[%s318 + $0x80] sm:$0xff]
        %v473 = vld [vmem:[%s318 + $0x88] sm:$0xff]
        %v474 = vld [vmem:[%s318 + $0x90] sm:$0xff]
        %v475 = vld [vmem:[%s318 + $0x98] sm:$0xff]
        %v476 = vld [vmem:[%s318 + $0xa0] sm:$0xff]
        %v477 = vld [vmem:[%s318 + $0xa8] sm:$0xff]
        %v478 = vld [vmem:[%s318 + $0xb0] sm:$0xff]
        %v479 = vld [vmem:[%s318 + $0xb8] sm:$0xff]
        %v480 = vld [vmem:[%s318 + $0xc0] sm:$0xff]
        %v481 = vld [vmem:[%s318 + $0xc8] sm:$0xff]
        %v482 = vld [vmem:[%s318 + $0xd0] sm:$0xff]
        %v483 = vld [vmem:[%s318 + $0xd8] sm:$0xff]
        %v484 = vld [vmem:[%s318 + $0xe0] sm:$0xff]
        %v485 = vld [vmem:[%s318 + $0xe8] sm:$0xff]
        %v486 = vld [vmem:[%s318 + $0xf0] sm:$0xff]
        %v487 = vld [vmem:[%s318 + $0xf8] sm:$0xff]
        %v488 = vpack.c.bf16 %v457, %v456
        %v489 = vpack.c.bf16 %v459, %v458
        %v490 = vpack.c.bf16 %v461, %v460
        %v491 = vpack.c.bf16 %v463, %v462
        %v492 = vpack.c.bf16 %v465, %v464
        %v493 = vpack.c.bf16 %v467, %v466
        %v494 = vpack.c.bf16 %v469, %v468
        %v495 = vpack.c.bf16 %v471, %v470
        %v496 = vpack.c.bf16 %v473, %v472
        %v497 = vpack.c.bf16 %v475, %v474
        %v498 = vpack.c.bf16 %v477, %v476
        %v499 = vpack.c.bf16 %v479, %v478
        %v500 = vpack.c.bf16 %v481, %v480
        %v501 = vpack.c.bf16 %v483, %v482
        %v502 = vpack.c.bf16 %v485, %v484
        %v503 = vpack.c.bf16 %v487, %v486
        %v504 = vsel %vm392, 1, 0
        %v505 = vsel %vm393, 1, 0
        %v506 = vsel %vm394, 1, 0
        %v507 = vsel %vm395, 1, 0
        %v508 = vsel %vm396, 1, 0
        %v509 = vsel %vm397, 1, 0
        %v510 = vsel %vm398, 1, 0
        %v511 = vsel %vm399, 1, 0
        %v512 = vsel %vm400, 1, 0
        %v513 = vsel %vm401, 1, 0
        %v514 = vsel %vm402, 1, 0
        %v515 = vsel %vm403, 1, 0
        %v516 = vsel %vm404, 1, 0
        %v517 = vsel %vm405, 1, 0
        %v518 = vsel %vm406, 1, 0
        %v519 = vsel %vm407, 1, 0
        %v520 = vsel %vm408, 1, 0
        %v521 = vsel %vm409, 1, 0
        %v522 = vsel %vm410, 1, 0
        %v523 = vsel %vm411, 1, 0
        %v524 = vsel %vm412, 1, 0
        %v525 = vsel %vm413, 1, 0
        %v526 = vsel %vm414, 1, 0
        %v527 = vsel %vm415, 1, 0
        %v528 = vsel %vm416, 1, 0
        %v529 = vsel %vm417, 1, 0
        %v530 = vsel %vm418, 1, 0
        %v531 = vsel %vm419, 1, 0
        %v532 = vsel %vm420, 1, 0
        %v533 = vsel %vm421, 1, 0
        %v534 = vsel %vm422, 1, 0
        %v535 = vsel %vm423, 1, 0
        %vm536 = vcmp.eq.s32.totalorder %v504, 1
        %vm537 = vcmp.eq.s32.totalorder %v505, 1
        %vm538 = vcmp.eq.s32.totalorder %v506, 1
        %vm539 = vcmp.eq.s32.totalorder %v507, 1
        %vm540 = vcmp.eq.s32.totalorder %v508, 1
        %vm541 = vcmp.eq.s32.totalorder %v509, 1
        %vm542 = vcmp.eq.s32.totalorder %v510, 1
        %vm543 = vcmp.eq.s32.totalorder %v511, 1
        %vm544 = vcmp.eq.s32.totalorder %v512, 1
        %vm545 = vcmp.eq.s32.totalorder %v513, 1
        %vm546 = vcmp.eq.s32.totalorder %v514, 1
        %vm547 = vcmp.eq.s32.totalorder %v515, 1
        %vm548 = vcmp.eq.s32.totalorder %v516, 1
        %vm549 = vcmp.eq.s32.totalorder %v517, 1
        %vm550 = vcmp.eq.s32.totalorder %v518, 1
        %vm551 = vcmp.eq.s32.totalorder %v519, 1
        %vm552 = vcmp.eq.s32.totalorder %v520, 1
        %vm553 = vcmp.eq.s32.totalorder %v521, 1
        %vm554 = vcmp.eq.s32.totalorder %v522, 1
        %vm555 = vcmp.eq.s32.totalorder %v523, 1
        %vm556 = vcmp.eq.s32.totalorder %v524, 1
        %vm557 = vcmp.eq.s32.totalorder %v525, 1
        %vm558 = vcmp.eq.s32.totalorder %v526, 1
        %vm559 = vcmp.eq.s32.totalorder %v527, 1
        %vm560 = vcmp.eq.s32.totalorder %v528, 1
        %vm561 = vcmp.eq.s32.totalorder %v529, 1
        %vm562 = vcmp.eq.s32.totalorder %v530, 1
        %vm563 = vcmp.eq.s32.totalorder %v531, 1
        %vm564 = vcmp.eq.s32.totalorder %v532, 1
        %vm565 = vcmp.eq.s32.totalorder %v533, 1
        %vm566 = vcmp.eq.s32.totalorder %v534, 1
        %vm567 = vcmp.eq.s32.totalorder %v535, 1
        %vm568 = vmpackc.low %vm536, %vm536
        %vm569 = vmpackc.low %vm537, %vm537
        %vm570 = vmpackc.low %vm538, %vm538
        %vm571 = vmpackc.low %vm539, %vm539
        %vm572 = vmpackc.low %vm540, %vm540
        %vm573 = vmpackc.low %vm541, %vm541
        %vm574 = vmpackc.low %vm542, %vm542
        %vm575 = vmpackc.low %vm543, %vm543
        %vm576 = vmpackc.low %vm544, %vm544
        %vm577 = vmpackc.low %vm545, %vm545
        %vm578 = vmpackc.low %vm546, %vm546
        %vm579 = vmpackc.low %vm547, %vm547
        %vm580 = vmpackc.low %vm548, %vm548
        %vm581 = vmpackc.low %vm549, %vm549
        %vm582 = vmpackc.low %vm550, %vm550
        %vm583 = vmpackc.low %vm551, %vm551
        %vm584 = vmpackc.low %vm552, %vm552
        %vm585 = vmpackc.low %vm553, %vm553
        %vm586 = vmpackc.low %vm554, %vm554
        %vm587 = vmpackc.low %vm555, %vm555
        %vm588 = vmpackc.low %vm556, %vm556
        %vm589 = vmpackc.low %vm557, %vm557
        %vm590 = vmpackc.low %vm558, %vm558
        %vm591 = vmpackc.low %vm559, %vm559
        %vm592 = vmpackc.low %vm560, %vm560
        %vm593 = vmpackc.low %vm561, %vm561
        %vm594 = vmpackc.low %vm562, %vm562
        %vm595 = vmpackc.low %vm563, %vm563
        %vm596 = vmpackc.low %vm564, %vm564
        %vm597 = vmpackc.low %vm565, %vm565
        %vm598 = vmpackc.low %vm566, %vm566
        %vm599 = vmpackc.low %vm567, %vm567
        %v600 = vsel %vm568, 65537, 0
        %v601 = vsel %vm569, 65537, 0
        %v602 = vsel %vm570, 65537, 0
        %v603 = vsel %vm571, 65537, 0
        %v604 = vsel %vm572, 65537, 0
        %v605 = vsel %vm573, 65537, 0
        %v606 = vsel %vm574, 65537, 0
        %v607 = vsel %vm575, 65537, 0
        %v608 = vsel %vm576, 65537, 0
        %v609 = vsel %vm577, 65537, 0
        %v610 = vsel %vm578, 65537, 0
        %v611 = vsel %vm579, 65537, 0
        %v612 = vsel %vm580, 65537, 0
        %v613 = vsel %vm581, 65537, 0
        %v614 = vsel %vm582, 65537, 0
        %v615 = vsel %vm583, 65537, 0
        %v616 = vsel %vm584, 65537, 0
        %v617 = vsel %vm585, 65537, 0
        %v618 = vsel %vm586, 65537, 0
        %v619 = vsel %vm587, 65537, 0
        %v620 = vsel %vm588, 65537, 0
        %v621 = vsel %vm589, 65537, 0
        %v622 = vsel %vm590, 65537, 0
        %v623 = vsel %vm591, 65537, 0
        %v624 = vsel %vm592, 65537, 0
        %v625 = vsel %vm593, 65537, 0
        %v626 = vsel %vm594, 65537, 0
        %v627 = vsel %vm595, 65537, 0
        %v628 = vsel %vm596, 65537, 0
        %v629 = vsel %vm597, 65537, 0
        %v630 = vsel %vm598, 65537, 0
        %v631 = vsel %vm599, 65537, 0
        %v632 = vunpack.c.l.b16 %v600
        %v633 = vunpack.c.l.b16 %v601
        %v634 = vunpack.c.l.b16 %v602
        %v635 = vunpack.c.l.b16 %v603
        %v636 = vunpack.c.l.b16 %v604
        %v637 = vunpack.c.l.b16 %v605
        %v638 = vunpack.c.l.b16 %v606
        %v639 = vunpack.c.l.b16 %v607
        %v640 = vunpack.c.l.b16 %v608
        %v641 = vunpack.c.l.b16 %v609
        %v642 = vunpack.c.l.b16 %v610
        %v643 = vunpack.c.l.b16 %v611
        %v644 = vunpack.c.l.b16 %v612
        %v645 = vunpack.c.l.b16 %v613
        %v646 = vunpack.c.l.b16 %v614
        %v647 = vunpack.c.l.b16 %v615
        %v648 = vunpack.c.l.b16 %v616
        %v649 = vunpack.c.l.b16 %v617
        %v650 = vunpack.c.l.b16 %v618
        %v651 = vunpack.c.l.b16 %v619
        %v652 = vunpack.c.l.b16 %v620
        %v653 = vunpack.c.l.b16 %v621
        %v654 = vunpack.c.l.b16 %v622
        %v655 = vunpack.c.l.b16 %v623
        %v656 = vunpack.c.l.b16 %v624
        %v657 = vunpack.c.l.b16 %v625
        %v658 = vunpack.c.l.b16 %v626
        %v659 = vunpack.c.l.b16 %v627
        %v660 = vunpack.c.l.b16 %v628
        %v661 = vunpack.c.l.b16 %v629
        %v662 = vunpack.c.l.b16 %v630
        %v663 = vunpack.c.l.b16 %v631
        %v664 = vpack.c.b16 %v633, %v632
        %v665 = vpack.c.b16 %v635, %v634
        %v666 = vpack.c.b16 %v637, %v636
        %v667 = vpack.c.b16 %v639, %v638
        %v668 = vpack.c.b16 %v641, %v640
        %v669 = vpack.c.b16 %v643, %v642
        %v670 = vpack.c.b16 %v645, %v644
        %v671 = vpack.c.b16 %v647, %v646
        %v672 = vpack.c.b16 %v649, %v648
        %v673 = vpack.c.b16 %v651, %v650
        %v674 = vpack.c.b16 %v653, %v652
        %v675 = vpack.c.b16 %v655, %v654
        %v676 = vpack.c.b16 %v657, %v656
        %v677 = vpack.c.b16 %v659, %v658
        %v678 = vpack.c.b16 %v661, %v660
        %v679 = vpack.c.b16 %v663, %v662
        %vm680 = vcmp.ne.s16.totalorder %v664, 0
        %vm681 = vcmp.ne.s16.totalorder %v665, 0
        %vm682 = vcmp.ne.s16.totalorder %v666, 0
        %vm683 = vcmp.ne.s16.totalorder %v667, 0
        %vm684 = vcmp.ne.s16.totalorder %v668, 0
        %vm685 = vcmp.ne.s16.totalorder %v669, 0
        %vm686 = vcmp.ne.s16.totalorder %v670, 0
        %vm687 = vcmp.ne.s16.totalorder %v671, 0
        %vm688 = vcmp.ne.s16.totalorder %v672, 0
        %vm689 = vcmp.ne.s16.totalorder %v673, 0
        %vm690 = vcmp.ne.s16.totalorder %v674, 0
        %vm691 = vcmp.ne.s16.totalorder %v675, 0
        %vm692 = vcmp.ne.s16.totalorder %v676, 0
        %vm693 = vcmp.ne.s16.totalorder %v677, 0
        %vm694 = vcmp.ne.s16.totalorder %v678, 0
        %vm695 = vcmp.ne.s16.totalorder %v679, 0
        %v696 = vsel %vm680, %v488, 0
        %v697 = vsel %vm681, %v489, 0
        %v698 = vsel %vm682, %v490, 0
        %v699 = vsel %vm683, %v491, 0
        %v700 = vsel %vm684, %v492, 0
        %v701 = vsel %vm685, %v493, 0
        %v702 = vsel %vm686, %v494, 0
        %v703 = vsel %vm687, %v495, 0
        %v704 = vsel %vm688, %v496, 0
        %v705 = vsel %vm689, %v497, 0
        %v706 = vsel %vm690, %v498, 0
        %v707 = vsel %vm691, %v499, 0
        %v708 = vsel %vm692, %v500, 0
        %v709 = vsel %vm693, %v501, 0
        %v710 = vsel %vm694, %v502, 0
        %v711 = vsel %vm695, %v503, 0
        %v712 = vsel %vm424, 1, 0
        %v713 = vsel %vm425, 1, 0
        %v714 = vsel %vm426, 1, 0
        %v715 = vsel %vm427, 1, 0
        %v716 = vsel %vm428, 1, 0
        %v717 = vsel %vm429, 1, 0
        %v718 = vsel %vm430, 1, 0
        %v719 = vsel %vm431, 1, 0
        %v720 = vsel %vm432, 1, 0
        %v721 = vsel %vm433, 1, 0
        %v722 = vsel %vm434, 1, 0
        %v723 = vsel %vm435, 1, 0
        %v724 = vsel %vm436, 1, 0
        %v725 = vsel %vm437, 1, 0
        %v726 = vsel %vm438, 1, 0
        %v727 = vsel %vm439, 1, 0
        %v728 = vsel %vm440, 1, 0
        %v729 = vsel %vm441, 1, 0
        %v730 = vsel %vm442, 1, 0
        %v731 = vsel %vm443, 1, 0
        %v732 = vsel %vm444, 1, 0
        %v733 = vsel %vm445, 1, 0
        %v734 = vsel %vm446, 1, 0
        %v735 = vsel %vm447, 1, 0
        %v736 = vsel %vm448, 1, 0
        %v737 = vsel %vm449, 1, 0
        %v738 = vsel %vm450, 1, 0
        %v739 = vsel %vm451, 1, 0
        %v740 = vsel %vm452, 1, 0
        %v741 = vsel %vm453, 1, 0
        %v742 = vsel %vm454, 1, 0
        %v743 = vsel %vm455, 1, 0
        %vm744 = vcmp.eq.s32.totalorder %v712, 1
        %vm745 = vcmp.eq.s32.totalorder %v713, 1
        %vm746 = vcmp.eq.s32.totalorder %v714, 1
        %vm747 = vcmp.eq.s32.totalorder %v715, 1
        %vm748 = vcmp.eq.s32.totalorder %v716, 1
        %vm749 = vcmp.eq.s32.totalorder %v717, 1
        %vm750 = vcmp.eq.s32.totalorder %v718, 1
        %vm751 = vcmp.eq.s32.totalorder %v719, 1
        %vm752 = vcmp.eq.s32.totalorder %v720, 1
        %vm753 = vcmp.eq.s32.totalorder %v721, 1
        %vm754 = vcmp.eq.s32.totalorder %v722, 1
        %vm755 = vcmp.eq.s32.totalorder %v723, 1
        %vm756 = vcmp.eq.s32.totalorder %v724, 1
        %vm757 = vcmp.eq.s32.totalorder %v725, 1
        %vm758 = vcmp.eq.s32.totalorder %v726, 1
        %vm759 = vcmp.eq.s32.totalorder %v727, 1
        %vm760 = vcmp.eq.s32.totalorder %v728, 1
        %vm761 = vcmp.eq.s32.totalorder %v729, 1
        %vm762 = vcmp.eq.s32.totalorder %v730, 1
        %vm763 = vcmp.eq.s32.totalorder %v731, 1
        %vm764 = vcmp.eq.s32.totalorder %v732, 1
        %vm765 = vcmp.eq.s32.totalorder %v733, 1
        %vm766 = vcmp.eq.s32.totalorder %v734, 1
        %vm767 = vcmp.eq.s32.totalorder %v735, 1
        %vm768 = vcmp.eq.s32.totalorder %v736, 1
        %vm769 = vcmp.eq.s32.totalorder %v737, 1
        %vm770 = vcmp.eq.s32.totalorder %v738, 1
        %vm771 = vcmp.eq.s32.totalorder %v739, 1
        %vm772 = vcmp.eq.s32.totalorder %v740, 1
        %vm773 = vcmp.eq.s32.totalorder %v741, 1
        %vm774 = vcmp.eq.s32.totalorder %v742, 1
        %vm775 = vcmp.eq.s32.totalorder %v743, 1
        %vm776 = vmpackc.low %vm744, %vm744
        %vm777 = vmpackc.low %vm745, %vm745
        %vm778 = vmpackc.low %vm746, %vm746
        %vm779 = vmpackc.low %vm747, %vm747
        %vm780 = vmpackc.low %vm748, %vm748
        %vm781 = vmpackc.low %vm749, %vm749
        %vm782 = vmpackc.low %vm750, %vm750
        %vm783 = vmpackc.low %vm751, %vm751
        %vm784 = vmpackc.low %vm752, %vm752
        %vm785 = vmpackc.low %vm753, %vm753
        %vm786 = vmpackc.low %vm754, %vm754
        %vm787 = vmpackc.low %vm755, %vm755
        %vm788 = vmpackc.low %vm756, %vm756
        %vm789 = vmpackc.low %vm757, %vm757
        %vm790 = vmpackc.low %vm758, %vm758
        %vm791 = vmpackc.low %vm759, %vm759
        %vm792 = vmpackc.low %vm760, %vm760
        %vm793 = vmpackc.low %vm761, %vm761
        %vm794 = vmpackc.low %vm762, %vm762
        %vm795 = vmpackc.low %vm763, %vm763
        %vm796 = vmpackc.low %vm764, %vm764
        %vm797 = vmpackc.low %vm765, %vm765
        %vm798 = vmpackc.low %vm766, %vm766
        %vm799 = vmpackc.low %vm767, %vm767
        %vm800 = vmpackc.low %vm768, %vm768
        %vm801 = vmpackc.low %vm769, %vm769
        %vm802 = vmpackc.low %vm770, %vm770
        %vm803 = vmpackc.low %vm771, %vm771
        %vm804 = vmpackc.low %vm772, %vm772
        %vm805 = vmpackc.low %vm773, %vm773
        %vm806 = vmpackc.low %vm774, %vm774
        %vm807 = vmpackc.low %vm775, %vm775
        %v808 = vsel %vm776, 65537, 0
        %v809 = vsel %vm777, 65537, 0
        %v810 = vsel %vm778, 65537, 0
        %v811 = vsel %vm779, 65537, 0
        %v812 = vsel %vm780, 65537, 0
        %v813 = vsel %vm781, 65537, 0
        %v814 = vsel %vm782, 65537, 0
        %v815 = vsel %vm783, 65537, 0
        %v816 = vsel %vm784, 65537, 0
        %v817 = vsel %vm785, 65537, 0
        %v818 = vsel %vm786, 65537, 0
        %v819 = vsel %vm787, 65537, 0
        %v820 = vsel %vm788, 65537, 0
        %v821 = vsel %vm789, 65537, 0
        %v822 = vsel %vm790, 65537, 0
        %v823 = vsel %vm791, 65537, 0
        %v824 = vsel %vm792, 65537, 0
        %v825 = vsel %vm793, 65537, 0
        %v826 = vsel %vm794, 65537, 0
        %v827 = vsel %vm795, 65537, 0
        %v828 = vsel %vm796, 65537, 0
        %v829 = vsel %vm797, 65537, 0
        %v830 = vsel %vm798, 65537, 0
        %v831 = vsel %vm799, 65537, 0
        %v832 = vsel %vm800, 65537, 0
        %v833 = vsel %vm801, 65537, 0
        %v834 = vsel %vm802, 65537, 0
        %v835 = vsel %vm803, 65537, 0
        %v836 = vsel %vm804, 65537, 0
        %v837 = vsel %vm805, 65537, 0
        %v838 = vsel %vm806, 65537, 0
        %v839 = vsel %vm807, 65537, 0
        %v840 = vunpack.c.l.b16 %v808
        %v841 = vunpack.c.l.b16 %v809
        %v842 = vunpack.c.l.b16 %v810
        %v843 = vunpack.c.l.b16 %v811
        %v844 = vunpack.c.l.b16 %v812
        %v845 = vunpack.c.l.b16 %v813
        %v846 = vunpack.c.l.b16 %v814
        %v847 = vunpack.c.l.b16 %v815
        %v848 = vunpack.c.l.b16 %v816
        %v849 = vunpack.c.l.b16 %v817
        %v850 = vunpack.c.l.b16 %v818
        %v851 = vunpack.c.l.b16 %v819
        %v852 = vunpack.c.l.b16 %v820
        %v853 = vunpack.c.l.b16 %v821
        %v854 = vunpack.c.l.b16 %v822
        %v855 = vunpack.c.l.b16 %v823
        %v856 = vunpack.c.l.b16 %v824
        %v857 = vunpack.c.l.b16 %v825
        %v858 = vunpack.c.l.b16 %v826
        %v859 = vunpack.c.l.b16 %v827
        %v860 = vunpack.c.l.b16 %v828
        %v861 = vunpack.c.l.b16 %v829
        %v862 = vunpack.c.l.b16 %v830
        %v863 = vunpack.c.l.b16 %v831
        %v864 = vunpack.c.l.b16 %v832
        %v865 = vunpack.c.l.b16 %v833
        %v866 = vunpack.c.l.b16 %v834
        %v867 = vunpack.c.l.b16 %v835
        %v868 = vunpack.c.l.b16 %v836
        %v869 = vunpack.c.l.b16 %v837
        %v870 = vunpack.c.l.b16 %v838
        %v871 = vunpack.c.l.b16 %v839
        %v872 = vpack.c.b16 %v841, %v840
        %v873 = vpack.c.b16 %v843, %v842
        %v874 = vpack.c.b16 %v845, %v844
        %v875 = vpack.c.b16 %v847, %v846
        %v876 = vpack.c.b16 %v849, %v848
        %v877 = vpack.c.b16 %v851, %v850
        %v878 = vpack.c.b16 %v853, %v852
        %v879 = vpack.c.b16 %v855, %v854
        %v880 = vpack.c.b16 %v857, %v856
        %v881 = vpack.c.b16 %v859, %v858
        %v882 = vpack.c.b16 %v861, %v860
        %v883 = vpack.c.b16 %v863, %v862
        %v884 = vpack.c.b16 %v865, %v864
        %v885 = vpack.c.b16 %v867, %v866
        %v886 = vpack.c.b16 %v869, %v868
        %v887 = vpack.c.b16 %v871, %v870
        %vm888 = vcmp.ne.s16.totalorder %v872, 0
        %vm889 = vcmp.ne.s16.totalorder %v873, 0
        %vm890 = vcmp.ne.s16.totalorder %v874, 0
        %vm891 = vcmp.ne.s16.totalorder %v875, 0
        %vm892 = vcmp.ne.s16.totalorder %v876, 0
        %vm893 = vcmp.ne.s16.totalorder %v877, 0
        %vm894 = vcmp.ne.s16.totalorder %v878, 0
        %vm895 = vcmp.ne.s16.totalorder %v879, 0
        %vm896 = vcmp.ne.s16.totalorder %v880, 0
        %vm897 = vcmp.ne.s16.totalorder %v881, 0
        %vm898 = vcmp.ne.s16.totalorder %v882, 0
        %vm899 = vcmp.ne.s16.totalorder %v883, 0
        %vm900 = vcmp.ne.s16.totalorder %v884, 0
        %vm901 = vcmp.ne.s16.totalorder %v885, 0
        %vm902 = vcmp.ne.s16.totalorder %v886, 0
        %vm903 = vcmp.ne.s16.totalorder %v887, 0
        %v904 = vsel %vm888, %v488, 0
        %v905 = vsel %vm889, %v489, 0
        %v906 = vsel %vm890, %v490, 0
        %v907 = vsel %vm891, %v491, 0
        %v908 = vsel %vm892, %v492, 0
        %v909 = vsel %vm893, %v493, 0
        %v910 = vsel %vm894, %v494, 0
        %v911 = vsel %vm895, %v495, 0
        %v912 = vsel %vm896, %v496, 0
        %v913 = vsel %vm897, %v497, 0
        %v914 = vsel %vm898, %v498, 0
        %v915 = vsel %vm899, %v499, 0
        %v916 = vsel %vm900, %v500, 0
        %v917 = vsel %vm901, %v501, 0
        %v918 = vsel %vm902, %v502, 0
        %v919 = vsel %vm903, %v503, 0
        %vm920 = vsmask.f32 256
        %v922 = vshrl.u32 %v488, 16
        %v924 = vrot.slane %v922, 7
        %v925 = vshll.u32 %v488, 16
        %v927 = vor.u32 %v924, %v925
        %v929 = vshrl.u32 %v489, 16
        %v931 = vrot.slane %v929, 7
        %v932 = vshll.u32 %v489, 16
        %v934 = vor.u32 %v931, %v932
        %v935 = vsel %vm920, %v924, %v934
        %v937 = vshrl.u32 %v490, 16
        %v939 = vrot.slane %v937, 7
        %v940 = vshll.u32 %v490, 16
        %v942 = vor.u32 %v939, %v940
        %v943 = vsel %vm920, %v931, %v942
        %v945 = vshrl.u32 %v491, 16
        %v947 = vrot.slane %v945, 7
        %v948 = vshll.u32 %v491, 16
        %v950 = vor.u32 %v947, %v948
        %v951 = vsel %vm920, %v939, %v950
        %v953 = vshrl.u32 %v492, 16
        %v955 = vrot.slane %v953, 7
        %v956 = vshll.u32 %v492, 16
        %v958 = vor.u32 %v955, %v956
        %v959 = vsel %vm920, %v947, %v958
        %v961 = vshrl.u32 %v493, 16
        %v963 = vrot.slane %v961, 7
        %v964 = vshll.u32 %v493, 16
        %v966 = vor.u32 %v963, %v964
        %v967 = vsel %vm920, %v955, %v966
        %v969 = vshrl.u32 %v494, 16
        %v971 = vrot.slane %v969, 7
        %v972 = vshll.u32 %v494, 16
        %v974 = vor.u32 %v971, %v972
        %v975 = vsel %vm920, %v963, %v974
        %v977 = vshrl.u32 %v495, 16
        %v979 = vrot.slane %v977, 7
        %v980 = vshll.u32 %v495, 16
        %v982 = vor.u32 %v979, %v980
        %v983 = vsel %vm920, %v971, %v982
        %v985 = vshrl.u32 %v496, 16
        %v987 = vrot.slane %v985, 7
        %v988 = vshll.u32 %v496, 16
        %v990 = vor.u32 %v987, %v988
        %v991 = vsel %vm920, %v979, %v990
        %v993 = vshrl.u32 %v497, 16
        %v995 = vrot.slane %v993, 7
        %v996 = vshll.u32 %v497, 16
        %v998 = vor.u32 %v995, %v996
        %v999 = vsel %vm920, %v987, %v998
        %v1001 = vshrl.u32 %v498, 16
        %v1003 = vrot.slane %v1001, 7
        %v1004 = vshll.u32 %v498, 16
        %v1006 = vor.u32 %v1003, %v1004
        %v1007 = vsel %vm920, %v995, %v1006
        %v1009 = vshrl.u32 %v499, 16
        %v1011 = vrot.slane %v1009, 7
        %v1012 = vshll.u32 %v499, 16
        %v1014 = vor.u32 %v1011, %v1012
        %v1015 = vsel %vm920, %v1003, %v1014
        %v1017 = vshrl.u32 %v500, 16
        %v1019 = vrot.slane %v1017, 7
        %v1020 = vshll.u32 %v500, 16
        %v1022 = vor.u32 %v1019, %v1020
        %v1023 = vsel %vm920, %v1011, %v1022
        %v1025 = vshrl.u32 %v501, 16
        %v1027 = vrot.slane %v1025, 7
        %v1028 = vshll.u32 %v501, 16
        %v1030 = vor.u32 %v1027, %v1028
        %v1031 = vsel %vm920, %v1019, %v1030
        %v1033 = vshrl.u32 %v502, 16
        %v1035 = vrot.slane %v1033, 7
        %v1036 = vshll.u32 %v502, 16
        %v1038 = vor.u32 %v1035, %v1036
        %v1039 = vsel %vm920, %v1027, %v1038
        %v1041 = vshrl.u32 %v503, 16
        %v1043 = vrot.slane %v1041, 7
        %v1044 = vshll.u32 %v503, 16
        %v1046 = vor.u32 %v1043, %v1044
        %v1047 = vsel %vm920, %v1035, %v1046
        %vm1050 = vcmask 1040384
        %vm1051 = vmand %vm1050, %vm920
        %v1052 = vsel %vm1051, 0, %v927
        %v1053 = vsel %vm1051, %v1043, 0
        %v1055 = vshrl.u32 %v696, 16
        %v1057 = vrot.slane %v1055, 7
        %v1058 = vshll.u32 %v696, 16
        %v1060 = vor.u32 %v1057, %v1058
        %v1062 = vshrl.u32 %v697, 16
        %v1064 = vrot.slane %v1062, 7
        %v1065 = vshll.u32 %v697, 16
        %v1067 = vor.u32 %v1064, %v1065
        %v1068 = vsel %vm920, %v1057, %v1067
        %v1070 = vshrl.u32 %v698, 16
        %v1072 = vrot.slane %v1070, 7
        %v1073 = vshll.u32 %v698, 16
        %v1075 = vor.u32 %v1072, %v1073
        %v1076 = vsel %vm920, %v1064, %v1075
        %v1078 = vshrl.u32 %v699, 16
        %v1080 = vrot.slane %v1078, 7
        %v1081 = vshll.u32 %v699, 16
        %v1083 = vor.u32 %v1080, %v1081
        %v1084 = vsel %vm920, %v1072, %v1083
        %v1086 = vshrl.u32 %v700, 16
        %v1088 = vrot.slane %v1086, 7
        %v1089 = vshll.u32 %v700, 16
        %v1091 = vor.u32 %v1088, %v1089
        %v1092 = vsel %vm920, %v1080, %v1091
        %v1094 = vshrl.u32 %v701, 16
        %v1096 = vrot.slane %v1094, 7
        %v1097 = vshll.u32 %v701, 16
        %v1099 = vor.u32 %v1096, %v1097
        %v1100 = vsel %vm920, %v1088, %v1099
        %v1102 = vshrl.u32 %v702, 16
        %v1104 = vrot.slane %v1102, 7
        %v1105 = vshll.u32 %v702, 16
        %v1107 = vor.u32 %v1104, %v1105
        %v1108 = vsel %vm920, %v1096, %v1107
        %v1110 = vshrl.u32 %v703, 16
        %v1112 = vrot.slane %v1110, 7
        %v1113 = vshll.u32 %v703, 16
        %v1115 = vor.u32 %v1112, %v1113
        %v1116 = vsel %vm920, %v1104, %v1115
        %v1118 = vshrl.u32 %v704, 16
        %v1120 = vrot.slane %v1118, 7
        %v1121 = vshll.u32 %v704, 16
        %v1123 = vor.u32 %v1120, %v1121
        %v1124 = vsel %vm920, %v1112, %v1123
        %v1126 = vshrl.u32 %v705, 16
        %v1128 = vrot.slane %v1126, 7
        %v1129 = vshll.u32 %v705, 16
        %v1131 = vor.u32 %v1128, %v1129
        %v1132 = vsel %vm920, %v1120, %v1131
        %v1134 = vshrl.u32 %v706, 16
        %v1136 = vrot.slane %v1134, 7
        %v1137 = vshll.u32 %v706, 16
        %v1139 = vor.u32 %v1136, %v1137
        %v1140 = vsel %vm920, %v1128, %v1139
        %v1142 = vshrl.u32 %v707, 16
        %v1144 = vrot.slane %v1142, 7
        %v1145 = vshll.u32 %v707, 16
        %v1147 = vor.u32 %v1144, %v1145
        %v1148 = vsel %vm920, %v1136, %v1147
        %v1150 = vshrl.u32 %v708, 16
        %v1152 = vrot.slane %v1150, 7
        %v1153 = vshll.u32 %v708, 16
        %v1155 = vor.u32 %v1152, %v1153
        %v1156 = vsel %vm920, %v1144, %v1155
        %v1158 = vshrl.u32 %v709, 16
        %v1160 = vrot.slane %v1158, 7
        %v1161 = vshll.u32 %v709, 16
        %v1163 = vor.u32 %v1160, %v1161
        %v1164 = vsel %vm920, %v1152, %v1163
        %v1166 = vshrl.u32 %v710, 16
        %v1168 = vrot.slane %v1166, 7
        %v1169 = vshll.u32 %v710, 16
        %v1171 = vor.u32 %v1168, %v1169
        %v1172 = vsel %vm920, %v1160, %v1171
        %v1174 = vshrl.u32 %v711, 16
        %v1176 = vrot.slane %v1174, 7
        %v1177 = vshll.u32 %v711, 16
        %v1179 = vor.u32 %v1176, %v1177
        %v1180 = vsel %vm920, %v1168, %v1179
        %v1183 = vsel %vm1051, 0, %v1060
        %v1184 = vsel %vm1051, %v1176, 0
        %v1186 = vshrl.u32 %v904, 16
        %v1188 = vrot.slane %v1186, 7
        %v1189 = vshll.u32 %v904, 16
        %v1191 = vor.u32 %v1188, %v1189
        %v1193 = vshrl.u32 %v905, 16
        %v1195 = vrot.slane %v1193, 7
        %v1196 = vshll.u32 %v905, 16
        %v1198 = vor.u32 %v1195, %v1196
        %v1199 = vsel %vm920, %v1188, %v1198
        %v1201 = vshrl.u32 %v906, 16
        %v1203 = vrot.slane %v1201, 7
        %v1204 = vshll.u32 %v906, 16
        %v1206 = vor.u32 %v1203, %v1204
        %v1207 = vsel %vm920, %v1195, %v1206
        %v1209 = vshrl.u32 %v907, 16
        %v1211 = vrot.slane %v1209, 7
        %v1212 = vshll.u32 %v907, 16
        %v1214 = vor.u32 %v1211, %v1212
        %v1215 = vsel %vm920, %v1203, %v1214
        %v1217 = vshrl.u32 %v908, 16
        %v1219 = vrot.slane %v1217, 7
        %v1220 = vshll.u32 %v908, 16
        %v1222 = vor.u32 %v1219, %v1220
        %v1223 = vsel %vm920, %v1211, %v1222
        %v1225 = vshrl.u32 %v909, 16
        %v1227 = vrot.slane %v1225, 7
        %v1228 = vshll.u32 %v909, 16
        %v1230 = vor.u32 %v1227, %v1228
        %v1231 = vsel %vm920, %v1219, %v1230
        %v1233 = vshrl.u32 %v910, 16
        %v1235 = vrot.slane %v1233, 7
        %v1236 = vshll.u32 %v910, 16
        %v1238 = vor.u32 %v1235, %v1236
        %v1239 = vsel %vm920, %v1227, %v1238
        %v1241 = vshrl.u32 %v911, 16
        %v1243 = vrot.slane %v1241, 7
        %v1244 = vshll.u32 %v911, 16
        %v1246 = vor.u32 %v1243, %v1244
        %v1247 = vsel %vm920, %v1235, %v1246
        %v1249 = vshrl.u32 %v912, 16
        %v1251 = vrot.slane %v1249, 7
        %v1252 = vshll.u32 %v912, 16
        %v1254 = vor.u32 %v1251, %v1252
        %v1255 = vsel %vm920, %v1243, %v1254
        %v1257 = vshrl.u32 %v913, 16
        %v1259 = vrot.slane %v1257, 7
        %v1260 = vshll.u32 %v913, 16
        %v1262 = vor.u32 %v1259, %v1260
        %v1263 = vsel %vm920, %v1251, %v1262
        %v1265 = vshrl.u32 %v914, 16
        %v1267 = vrot.slane %v1265, 7
        %v1268 = vshll.u32 %v914, 16
        %v1270 = vor.u32 %v1267, %v1268
        %v1271 = vsel %vm920, %v1259, %v1270
        %v1273 = vshrl.u32 %v915, 16
        %v1275 = vrot.slane %v1273, 7
        %v1276 = vshll.u32 %v915, 16
        %v1278 = vor.u32 %v1275, %v1276
        %v1279 = vsel %vm920, %v1267, %v1278
        %v1281 = vshrl.u32 %v916, 16
        %v1283 = vrot.slane %v1281, 7
        %v1284 = vshll.u32 %v916, 16
        %v1286 = vor.u32 %v1283, %v1284
        %v1287 = vsel %vm920, %v1275, %v1286
        %v1289 = vshrl.u32 %v917, 16
        %v1291 = vrot.slane %v1289, 7
        %v1292 = vshll.u32 %v917, 16
        %v1294 = vor.u32 %v1291, %v1292
        %v1295 = vsel %vm920, %v1283, %v1294
        %v1297 = vshrl.u32 %v918, 16
        %v1299 = vrot.slane %v1297, 7
        %v1300 = vshll.u32 %v918, 16
        %v1302 = vor.u32 %v1299, %v1300
        %v1303 = vsel %vm920, %v1291, %v1302
        %v1305 = vshrl.u32 %v919, 16
        %v1307 = vrot.slane %v1305, 7
        %v1308 = vshll.u32 %v919, 16
        %v1310 = vor.u32 %v1307, %v1308
        %v1311 = vsel %vm920, %v1299, %v1310
        %v1314 = vsel %vm1051, 0, %v1191
        %v1315 = vsel %vm1051, %v1307, 0
        %vm1316 = vsmask.f32 7424
        %v1318 = vshrl.u32 0, 16
        %v1320 = vshll.u32 0, 16
        %v1322 = vrot.slane %v1320, 1
        %v1323 = vor.u32 %v1318, %v1322
        %v1325 = vshll.u32 %v1052, 16
        %v1327 = vrot.slane %v1325, 1
        %v1328 = vsel %vm1316, %v1323, %v1327
        %v1329 = vshrl.u32 %v1052, 16
        %v1331 = vor.u32 %v1329, %v1327
        %v1333 = vshll.u32 %v935, 16
        %v1335 = vrot.slane %v1333, 1
        %v1336 = vsel %vm1316, %v1331, %v1335
        %v1337 = vshrl.u32 %v935, 16
        %v1339 = vor.u32 %v1337, %v1335
        %v1341 = vshll.u32 %v943, 16
        %v1343 = vrot.slane %v1341, 1
        %v1344 = vsel %vm1316, %v1339, %v1343
        %v1345 = vshrl.u32 %v943, 16
        %v1347 = vor.u32 %v1345, %v1343
        %v1349 = vshll.u32 %v951, 16
        %v1351 = vrot.slane %v1349, 1
        %v1352 = vsel %vm1316, %v1347, %v1351
        %v1353 = vshrl.u32 %v951, 16
        %v1355 = vor.u32 %v1353, %v1351
        %v1357 = vshll.u32 %v959, 16
        %v1359 = vrot.slane %v1357, 1
        %v1360 = vsel %vm1316, %v1355, %v1359
        %v1361 = vshrl.u32 %v959, 16
        %v1363 = vor.u32 %v1361, %v1359
        %v1365 = vshll.u32 %v967, 16
        %v1367 = vrot.slane %v1365, 1
        %v1368 = vsel %vm1316, %v1363, %v1367
        %v1369 = vshrl.u32 %v967, 16
        %v1371 = vor.u32 %v1369, %v1367
        %v1373 = vshll.u32 %v975, 16
        %v1375 = vrot.slane %v1373, 1
        %v1376 = vsel %vm1316, %v1371, %v1375
        %v1377 = vshrl.u32 %v975, 16
        %v1379 = vor.u32 %v1377, %v1375
        %v1381 = vshll.u32 %v983, 16
        %v1383 = vrot.slane %v1381, 1
        %v1384 = vsel %vm1316, %v1379, %v1383
        %v1385 = vshrl.u32 %v983, 16
        %v1387 = vor.u32 %v1385, %v1383
        %v1389 = vshll.u32 %v991, 16
        %v1391 = vrot.slane %v1389, 1
        %v1392 = vsel %vm1316, %v1387, %v1391
        %v1393 = vshrl.u32 %v991, 16
        %v1395 = vor.u32 %v1393, %v1391
        %v1397 = vshll.u32 %v999, 16
        %v1399 = vrot.slane %v1397, 1
        %v1400 = vsel %vm1316, %v1395, %v1399
        %v1401 = vshrl.u32 %v999, 16
        %v1403 = vor.u32 %v1401, %v1399
        %v1405 = vshll.u32 %v1007, 16
        %v1407 = vrot.slane %v1405, 1
        %v1408 = vsel %vm1316, %v1403, %v1407
        %v1409 = vshrl.u32 %v1007, 16
        %v1411 = vor.u32 %v1409, %v1407
        %v1413 = vshll.u32 %v1015, 16
        %v1415 = vrot.slane %v1413, 1
        %v1416 = vsel %vm1316, %v1411, %v1415
        %v1417 = vshrl.u32 %v1015, 16
        %v1419 = vor.u32 %v1417, %v1415
        %v1421 = vshll.u32 %v1023, 16
        %v1423 = vrot.slane %v1421, 1
        %v1424 = vsel %vm1316, %v1419, %v1423
        %v1425 = vshrl.u32 %v1023, 16
        %v1427 = vor.u32 %v1425, %v1423
        %v1429 = vshll.u32 %v1031, 16
        %v1431 = vrot.slane %v1429, 1
        %v1432 = vsel %vm1316, %v1427, %v1431
        %v1433 = vshrl.u32 %v1031, 16
        %v1435 = vor.u32 %v1433, %v1431
        %v1437 = vshll.u32 %v1039, 16
        %v1439 = vrot.slane %v1437, 1
        %v1440 = vsel %vm1316, %v1435, %v1439
        %v1441 = vshrl.u32 %v1039, 16
        %v1443 = vor.u32 %v1441, %v1439
        %v1445 = vshll.u32 %v1047, 16
        %v1447 = vrot.slane %v1445, 1
        %v1448 = vsel %vm1316, %v1443, %v1447
        %1449 = vrot.lane.b32.xlu0 %v1328, 8
        %v1450 = vpop.permute.xlu0 %1449
        %1451 = vrot.lane.b32.xlu0 %v1336, 8
        %v1452 = vpop.permute.xlu0 %1451
        %1453 = vrot.lane.b32.xlu0 %v1344, 8
        %v1454 = vpop.permute.xlu0 %1453
        %1455 = vrot.lane.b32.xlu0 %v1352, 8
        %v1456 = vpop.permute.xlu0 %1455
        %1457 = vrot.lane.b32.xlu0 %v1360, 8
        %v1458 = vpop.permute.xlu0 %1457
        %1459 = vrot.lane.b32.xlu0 %v1368, 8
        %v1460 = vpop.permute.xlu0 %1459
        %1461 = vrot.lane.b32.xlu0 %v1376, 8
        %v1462 = vpop.permute.xlu0 %1461
        %1463 = vrot.lane.b32.xlu0 %v1384, 8
        %v1464 = vpop.permute.xlu0 %1463
        %1465 = vrot.lane.b32.xlu0 %v1392, 8
        %v1466 = vpop.permute.xlu0 %1465
        %1467 = vrot.lane.b32.xlu0 %v1400, 8
        %v1468 = vpop.permute.xlu0 %1467
        %1469 = vrot.lane.b32.xlu0 %v1408, 8
        %v1470 = vpop.permute.xlu0 %1469
        %1471 = vrot.lane.b32.xlu0 %v1416, 8
        %v1472 = vpop.permute.xlu0 %1471
        %1473 = vrot.lane.b32.xlu0 %v1424, 8
        %v1474 = vpop.permute.xlu0 %1473
        %1475 = vrot.lane.b32.xlu0 %v1432, 8
        %v1476 = vpop.permute.xlu0 %1475
        %1477 = vrot.lane.b32.xlu0 %v1440, 8
        %v1478 = vpop.permute.xlu0 %1477
        %1479 = vrot.lane.b32.xlu0 %v1448, 8
        %v1480 = vpop.permute.xlu0 %1479
        %vm1483 = vcmask 1046528
        %v1484 = vrot.slane 0, 1
        %v1485 = vrot.slane %v1314, 1
        %v1486 = vsel %vm1483, %v1484, %v1485
        %v1487 = vrot.slane %v1199, 1
        %v1488 = vsel %vm1483, %v1485, %v1487
        %v1489 = vrot.slane %v1207, 1
        %v1490 = vsel %vm1483, %v1487, %v1489
        %v1491 = vrot.slane %v1215, 1
        %v1492 = vsel %vm1483, %v1489, %v1491
        %v1493 = vrot.slane %v1223, 1
        %v1494 = vsel %vm1483, %v1491, %v1493
        %v1495 = vrot.slane %v1231, 1
        %v1496 = vsel %vm1483, %v1493, %v1495
        %v1497 = vrot.slane %v1239, 1
        %v1498 = vsel %vm1483, %v1495, %v1497
        %v1499 = vrot.slane %v1247, 1
        %v1500 = vsel %vm1483, %v1497, %v1499
        %v1501 = vrot.slane %v1255, 1
        %v1502 = vsel %vm1483, %v1499, %v1501
        %v1503 = vrot.slane %v1263, 1
        %v1504 = vsel %vm1483, %v1501, %v1503
        %v1505 = vrot.slane %v1271, 1
        %v1506 = vsel %vm1483, %v1503, %v1505
        %v1507 = vrot.slane %v1279, 1
        %v1508 = vsel %vm1483, %v1505, %v1507
        %v1509 = vrot.slane %v1287, 1
        %v1510 = vsel %vm1483, %v1507, %v1509
        %v1511 = vrot.slane %v1295, 1
        %v1512 = vsel %vm1483, %v1509, %v1511
        %v1513 = vrot.slane %v1303, 1
        %v1514 = vsel %vm1483, %v1511, %v1513
        %v1515 = vrot.slane %v1311, 1
        %v1516 = vsel %vm1483, %v1513, %v1515
        %1517 = vrot.lane.b32.xlu0 %v1486, 16
        %v1518 = vpop.permute.xlu0 %1517
        %1519 = vrot.lane.b32.xlu0 %v1488, 16
        %v1520 = vpop.permute.xlu0 %1519
        %1521 = vrot.lane.b32.xlu0 %v1490, 16
        %v1522 = vpop.permute.xlu0 %1521
        %1523 = vrot.lane.b32.xlu0 %v1492, 16
        %v1524 = vpop.permute.xlu0 %1523
        %1525 = vrot.lane.b32.xlu0 %v1494, 16
        %v1526 = vpop.permute.xlu0 %1525
        %1527 = vrot.lane.b32.xlu0 %v1496, 16
        %v1528 = vpop.permute.xlu0 %1527
        %1529 = vrot.lane.b32.xlu0 %v1498, 16
        %v1530 = vpop.permute.xlu0 %1529
        %1531 = vrot.lane.b32.xlu0 %v1500, 16
        %v1532 = vpop.permute.xlu0 %1531
        %1533 = vrot.lane.b32.xlu0 %v1502, 16
        %v1534 = vpop.permute.xlu0 %1533
        %1535 = vrot.lane.b32.xlu0 %v1504, 16
        %v1536 = vpop.permute.xlu0 %1535
        %1537 = vrot.lane.b32.xlu0 %v1506, 16
        %v1538 = vpop.permute.xlu0 %1537
        %1539 = vrot.lane.b32.xlu0 %v1508, 16
        %v1540 = vpop.permute.xlu0 %1539
        %1541 = vrot.lane.b32.xlu0 %v1510, 16
        %v1542 = vpop.permute.xlu0 %1541
        %1543 = vrot.lane.b32.xlu0 %v1512, 16
        %v1544 = vpop.permute.xlu0 %1543
        %1545 = vrot.lane.b32.xlu0 %v1514, 16
        %v1546 = vpop.permute.xlu0 %1545
        %1547 = vrot.lane.b32.xlu0 %v1516, 16
        %v1548 = vpop.permute.xlu0 %1547
        %1550 = vrot.lane.b32.xlu0 %v1183, 24
        %v1551 = vpop.permute.xlu0 %1550
        %1552 = vrot.lane.b32.xlu0 %v1068, 24
        %v1553 = vpop.permute.xlu0 %1552
        %1554 = vrot.lane.b32.xlu0 %v1076, 24
        %v1555 = vpop.permute.xlu0 %1554
        %1556 = vrot.lane.b32.xlu0 %v1084, 24
        %v1557 = vpop.permute.xlu0 %1556
        %1558 = vrot.lane.b32.xlu0 %v1092, 24
        %v1559 = vpop.permute.xlu0 %1558
        %1560 = vrot.lane.b32.xlu0 %v1100, 24
        %v1561 = vpop.permute.xlu0 %1560
        %1562 = vrot.lane.b32.xlu0 %v1108, 24
        %v1563 = vpop.permute.xlu0 %1562
        %1564 = vrot.lane.b32.xlu0 %v1116, 24
        %v1565 = vpop.permute.xlu0 %1564
        %1566 = vrot.lane.b32.xlu0 %v1124, 24
        %v1567 = vpop.permute.xlu0 %1566
        %1568 = vrot.lane.b32.xlu0 %v1132, 24
        %v1569 = vpop.permute.xlu0 %1568
        %1570 = vrot.lane.b32.xlu0 %v1140, 24
        %v1571 = vpop.permute.xlu0 %1570
        %1572 = vrot.lane.b32.xlu0 %v1148, 24
        %v1573 = vpop.permute.xlu0 %1572
        %1574 = vrot.lane.b32.xlu0 %v1156, 24
        %v1575 = vpop.permute.xlu0 %1574
        %1576 = vrot.lane.b32.xlu0 %v1164, 24
        %v1577 = vpop.permute.xlu0 %1576
        %1578 = vrot.lane.b32.xlu0 %v1172, 24
        %v1579 = vpop.permute.xlu0 %1578
        %1580 = vrot.lane.b32.xlu0 %v1180, 24
        %v1581 = vpop.permute.xlu0 %1580
        %v1582 = vshrl.u32 %v1047, 16
        %v1584 = vor.u32 %v1582, %v1447
        %v1586 = vshll.u32 %v1053, 16
        %v1588 = vrot.slane %v1586, 1
        %v1589 = vsel %vm1316, %v1584, %v1588
        %1590 = vrot.lane.b32.xlu0 %v1336, 32
        %v1591 = vpop.permute.xlu0 %1590
        %1592 = vrot.lane.b32.xlu0 %v1344, 32
        %v1593 = vpop.permute.xlu0 %1592
        %1594 = vrot.lane.b32.xlu0 %v1352, 32
        %v1595 = vpop.permute.xlu0 %1594
        %1596 = vrot.lane.b32.xlu0 %v1360, 32
        %v1597 = vpop.permute.xlu0 %1596
        %1598 = vrot.lane.b32.xlu0 %v1368, 32
        %v1599 = vpop.permute.xlu0 %1598
        %1600 = vrot.lane.b32.xlu0 %v1376, 32
        %v1601 = vpop.permute.xlu0 %1600
        %1602 = vrot.lane.b32.xlu0 %v1384, 32
        %v1603 = vpop.permute.xlu0 %1602
        %1604 = vrot.lane.b32.xlu0 %v1392, 32
        %v1605 = vpop.permute.xlu0 %1604
        %1606 = vrot.lane.b32.xlu0 %v1400, 32
        %v1607 = vpop.permute.xlu0 %1606
        %1608 = vrot.lane.b32.xlu0 %v1408, 32
        %v1609 = vpop.permute.xlu0 %1608
        %1610 = vrot.lane.b32.xlu0 %v1416, 32
        %v1611 = vpop.permute.xlu0 %1610
        %1612 = vrot.lane.b32.xlu0 %v1424, 32
        %v1613 = vpop.permute.xlu0 %1612
        %1614 = vrot.lane.b32.xlu0 %v1432, 32
        %v1615 = vpop.permute.xlu0 %1614
        %1616 = vrot.lane.b32.xlu0 %v1440, 32
        %v1617 = vpop.permute.xlu0 %1616
        %1618 = vrot.lane.b32.xlu0 %v1448, 32
        %v1619 = vpop.permute.xlu0 %1618
        %1620 = vrot.lane.b32.xlu0 %v1589, 32
        %v1621 = vpop.permute.xlu0 %1620
        %v1623 = vrot.slane %v1315, 1
        %v1624 = vsel %vm1483, %v1515, %v1623
        %1625 = vrot.lane.b32.xlu0 %v1488, 40
        %v1626 = vpop.permute.xlu0 %1625
        %1627 = vrot.lane.b32.xlu0 %v1490, 40
        %v1628 = vpop.permute.xlu0 %1627
        %1629 = vrot.lane.b32.xlu0 %v1492, 40
        %v1630 = vpop.permute.xlu0 %1629
        %1631 = vrot.lane.b32.xlu0 %v1494, 40
        %v1632 = vpop.permute.xlu0 %1631
        %1633 = vrot.lane.b32.xlu0 %v1496, 40
        %v1634 = vpop.permute.xlu0 %1633
        %1635 = vrot.lane.b32.xlu0 %v1498, 40
        %v1636 = vpop.permute.xlu0 %1635
        %1637 = vrot.lane.b32.xlu0 %v1500, 40
        %v1638 = vpop.permute.xlu0 %1637
        %1639 = vrot.lane.b32.xlu0 %v1502, 40
        %v1640 = vpop.permute.xlu0 %1639
        %1641 = vrot.lane.b32.xlu0 %v1504, 40
        %v1642 = vpop.permute.xlu0 %1641
        %1643 = vrot.lane.b32.xlu0 %v1506, 40
        %v1644 = vpop.permute.xlu0 %1643
        %1645 = vrot.lane.b32.xlu0 %v1508, 40
        %v1646 = vpop.permute.xlu0 %1645
        %1647 = vrot.lane.b32.xlu0 %v1510, 40
        %v1648 = vpop.permute.xlu0 %1647
        %1649 = vrot.lane.b32.xlu0 %v1512, 40
        %v1650 = vpop.permute.xlu0 %1649
        %1651 = vrot.lane.b32.xlu0 %v1514, 40
        %v1652 = vpop.permute.xlu0 %1651
        %1653 = vrot.lane.b32.xlu0 %v1516, 40
        %v1654 = vpop.permute.xlu0 %1653
        %1655 = vrot.lane.b32.xlu0 %v1624, 40
        %v1656 = vpop.permute.xlu0 %1655
        %1658 = vrot.lane.b32.xlu0 %v1068, 48
        %v1659 = vpop.permute.xlu0 %1658
        %1660 = vrot.lane.b32.xlu0 %v1076, 48
        %v1661 = vpop.permute.xlu0 %1660
        %1662 = vrot.lane.b32.xlu0 %v1084, 48
        %v1663 = vpop.permute.xlu0 %1662
        %1664 = vrot.lane.b32.xlu0 %v1092, 48
        %v1665 = vpop.permute.xlu0 %1664
        %1666 = vrot.lane.b32.xlu0 %v1100, 48
        %v1667 = vpop.permute.xlu0 %1666
        %1668 = vrot.lane.b32.xlu0 %v1108, 48
        %v1669 = vpop.permute.xlu0 %1668
        %1670 = vrot.lane.b32.xlu0 %v1116, 48
        %v1671 = vpop.permute.xlu0 %1670
        %1672 = vrot.lane.b32.xlu0 %v1124, 48
        %v1673 = vpop.permute.xlu0 %1672
        %1674 = vrot.lane.b32.xlu0 %v1132, 48
        %v1675 = vpop.permute.xlu0 %1674
        %1676 = vrot.lane.b32.xlu0 %v1140, 48
        %v1677 = vpop.permute.xlu0 %1676
        %1678 = vrot.lane.b32.xlu0 %v1148, 48
        %v1679 = vpop.permute.xlu0 %1678
        %1680 = vrot.lane.b32.xlu0 %v1156, 48
        %v1681 = vpop.permute.xlu0 %1680
        %1682 = vrot.lane.b32.xlu0 %v1164, 48
        %v1683 = vpop.permute.xlu0 %1682
        %1684 = vrot.lane.b32.xlu0 %v1172, 48
        %v1685 = vpop.permute.xlu0 %1684
        %1686 = vrot.lane.b32.xlu0 %v1180, 48
        %v1687 = vpop.permute.xlu0 %1686
        %1688 = vrot.lane.b32.xlu0 %v1184, 48
        %v1689 = vpop.permute.xlu0 %1688
        %v1690 = vshrl.u32 %v1053, 16
        %v1692 = vor.u32 %v1690, %v1588
        %v1693 = vsel %vm1316, %v1692, %v1322
        %1694 = vrot.lane.b32.xlu0 %v1344, 56
        %v1695 = vpop.permute.xlu0 %1694
        %1696 = vrot.lane.b32.xlu0 %v1352, 56
        %v1697 = vpop.permute.xlu0 %1696
        %1698 = vrot.lane.b32.xlu0 %v1360, 56
        %v1699 = vpop.permute.xlu0 %1698
        %1700 = vrot.lane.b32.xlu0 %v1368, 56
        %v1701 = vpop.permute.xlu0 %1700
        %1702 = vrot.lane.b32.xlu0 %v1376, 56
        %v1703 = vpop.permute.xlu0 %1702
        %1704 = vrot.lane.b32.xlu0 %v1384, 56
        %v1705 = vpop.permute.xlu0 %1704
        %1706 = vrot.lane.b32.xlu0 %v1392, 56
        %v1707 = vpop.permute.xlu0 %1706
        %1708 = vrot.lane.b32.xlu0 %v1400, 56
        %v1709 = vpop.permute.xlu0 %1708
        %1710 = vrot.lane.b32.xlu0 %v1408, 56
        %v1711 = vpop.permute.xlu0 %1710
        %1712 = vrot.lane.b32.xlu0 %v1416, 56
        %v1713 = vpop.permute.xlu0 %1712
        %1714 = vrot.lane.b32.xlu0 %v1424, 56
        %v1715 = vpop.permute.xlu0 %1714
        %1716 = vrot.lane.b32.xlu0 %v1432, 56
        %v1717 = vpop.permute.xlu0 %1716
        %1718 = vrot.lane.b32.xlu0 %v1440, 56
        %v1719 = vpop.permute.xlu0 %1718
        %1720 = vrot.lane.b32.xlu0 %v1448, 56
        %v1721 = vpop.permute.xlu0 %1720
        %1722 = vrot.lane.b32.xlu0 %v1589, 56
        %v1723 = vpop.permute.xlu0 %1722
        %1724 = vrot.lane.b32.xlu0 %v1693, 56
        %v1725 = vpop.permute.xlu0 %1724
        %v1726 = vsel %vm1483, %v1623, %v1484
        %1727 = vrot.lane.b32.xlu0 %v1490, 64
        %v1728 = vpop.permute.xlu0 %1727
        %1729 = vrot.lane.b32.xlu0 %v1492, 64
        %v1730 = vpop.permute.xlu0 %1729
        %1731 = vrot.lane.b32.xlu0 %v1494, 64
        %v1732 = vpop.permute.xlu0 %1731
        %1733 = vrot.lane.b32.xlu0 %v1496, 64
        %v1734 = vpop.permute.xlu0 %1733
        %1735 = vrot.lane.b32.xlu0 %v1498, 64
        %v1736 = vpop.permute.xlu0 %1735
        %1737 = vrot.lane.b32.xlu0 %v1500, 64
        %v1738 = vpop.permute.xlu0 %1737
        %1739 = vrot.lane.b32.xlu0 %v1502, 64
        %v1740 = vpop.permute.xlu0 %1739
        %1741 = vrot.lane.b32.xlu0 %v1504, 64
        %v1742 = vpop.permute.xlu0 %1741
        %1743 = vrot.lane.b32.xlu0 %v1506, 64
        %v1744 = vpop.permute.xlu0 %1743
        %1745 = vrot.lane.b32.xlu0 %v1508, 64
        %v1746 = vpop.permute.xlu0 %1745
        %1747 = vrot.lane.b32.xlu0 %v1510, 64
        %v1748 = vpop.permute.xlu0 %1747
        %1749 = vrot.lane.b32.xlu0 %v1512, 64
        %v1750 = vpop.permute.xlu0 %1749
        %1751 = vrot.lane.b32.xlu0 %v1514, 64
        %v1752 = vpop.permute.xlu0 %1751
        %1753 = vrot.lane.b32.xlu0 %v1516, 64
        %v1754 = vpop.permute.xlu0 %1753
        %1755 = vrot.lane.b32.xlu0 %v1624, 64
        %v1756 = vpop.permute.xlu0 %1755
        %1757 = vrot.lane.b32.xlu0 %v1726, 64
        %v1758 = vpop.permute.xlu0 %1757
        %vm1759 = vcmask 64512
        %v1761 = vsel %vm1759, 0, %v1450
        %v1764 = vsel %vm1759, %v1183, %v1452
        %v1767 = vsel %vm1759, %v1068, %v1454
        %v1770 = vsel %vm1759, %v1076, %v1456
        %v1773 = vsel %vm1759, %v1084, %v1458
        %v1776 = vsel %vm1759, %v1092, %v1460
        %v1779 = vsel %vm1759, %v1100, %v1462
        %v1782 = vsel %vm1759, %v1108, %v1464
        %v1785 = vsel %vm1759, %v1116, %v1466
        %v1788 = vsel %vm1759, %v1124, %v1468
        %v1791 = vsel %vm1759, %v1132, %v1470
        %v1794 = vsel %vm1759, %v1140, %v1472
        %v1797 = vsel %vm1759, %v1148, %v1474
        %v1800 = vsel %vm1759, %v1156, %v1476
        %v1803 = vsel %vm1759, %v1164, %v1478
        %v1806 = vsel %vm1759, %v1172, %v1480
        %vm1807 = vcmask 130048
        %v1809 = vsel %vm1807, %v1761, %v1518
        %v1811 = vsel %vm1807, %v1764, %v1520
        %v1813 = vsel %vm1807, %v1767, %v1522
        %v1815 = vsel %vm1807, %v1770, %v1524
        %v1817 = vsel %vm1807, %v1773, %v1526
        %v1819 = vsel %vm1807, %v1776, %v1528
        %v1821 = vsel %vm1807, %v1779, %v1530
        %v1823 = vsel %vm1807, %v1782, %v1532
        %v1825 = vsel %vm1807, %v1785, %v1534
        %v1827 = vsel %vm1807, %v1788, %v1536
        %v1829 = vsel %vm1807, %v1791, %v1538
        %v1831 = vsel %vm1807, %v1794, %v1540
        %v1833 = vsel %vm1807, %v1797, %v1542
        %v1835 = vsel %vm1807, %v1800, %v1544
        %v1837 = vsel %vm1807, %v1803, %v1546
        %v1839 = vsel %vm1807, %v1806, %v1548
        %vm1840 = vcmask 195584
        %v1842 = vsel %vm1840, %v1809, %v1551
        %v1844 = vsel %vm1840, %v1811, %v1553
        %v1846 = vsel %vm1840, %v1813, %v1555
        %v1848 = vsel %vm1840, %v1815, %v1557
        %v1850 = vsel %vm1840, %v1817, %v1559
        %v1852 = vsel %vm1840, %v1819, %v1561
        %v1854 = vsel %vm1840, %v1821, %v1563
        %v1856 = vsel %vm1840, %v1823, %v1565
        %v1858 = vsel %vm1840, %v1825, %v1567
        %v1860 = vsel %vm1840, %v1827, %v1569
        %v1862 = vsel %vm1840, %v1829, %v1571
        %v1864 = vsel %vm1840, %v1831, %v1573
        %v1866 = vsel %vm1840, %v1833, %v1575
        %v1868 = vsel %vm1840, %v1835, %v1577
        %v1870 = vsel %vm1840, %v1837, %v1579
        %v1872 = vsel %vm1840, %v1839, %v1581
        %vm1873 = vcmask 261120
        %v1875 = vsel %vm1873, %v1842, %v1591
        %v1877 = vsel %vm1873, %v1844, %v1593
        %v1879 = vsel %vm1873, %v1846, %v1595
        %v1881 = vsel %vm1873, %v1848, %v1597
        %v1883 = vsel %vm1873, %v1850, %v1599
        %v1885 = vsel %vm1873, %v1852, %v1601
        %v1887 = vsel %vm1873, %v1854, %v1603
        %v1889 = vsel %vm1873, %v1856, %v1605
        %v1891 = vsel %vm1873, %v1858, %v1607
        %v1893 = vsel %vm1873, %v1860, %v1609
        %v1895 = vsel %vm1873, %v1862, %v1611
        %v1897 = vsel %vm1873, %v1864, %v1613
        %v1899 = vsel %vm1873, %v1866, %v1615
        %v1901 = vsel %vm1873, %v1868, %v1617
        %v1903 = vsel %vm1873, %v1870, %v1619
        %v1905 = vsel %vm1873, %v1872, %v1621
        %vm1906 = vcmask 326656
        %v1908 = vsel %vm1906, %v1875, %v1626
        %v1910 = vsel %vm1906, %v1877, %v1628
        %v1912 = vsel %vm1906, %v1879, %v1630
        %v1914 = vsel %vm1906, %v1881, %v1632
        %v1916 = vsel %vm1906, %v1883, %v1634
        %v1918 = vsel %vm1906, %v1885, %v1636
        %v1920 = vsel %vm1906, %v1887, %v1638
        %v1922 = vsel %vm1906, %v1889, %v1640
        %v1924 = vsel %vm1906, %v1891, %v1642
        %v1926 = vsel %vm1906, %v1893, %v1644
        %v1928 = vsel %vm1906, %v1895, %v1646
        %v1930 = vsel %vm1906, %v1897, %v1648
        %v1932 = vsel %vm1906, %v1899, %v1650
        %v1934 = vsel %vm1906, %v1901, %v1652
        %v1936 = vsel %vm1906, %v1903, %v1654
        %v1938 = vsel %vm1906, %v1905, %v1656
        %vm1939 = vcmask 392192
        %v1941 = vsel %vm1939, %v1908, %v1659
        %v1943 = vsel %vm1939, %v1910, %v1661
        %v1945 = vsel %vm1939, %v1912, %v1663
        %v1947 = vsel %vm1939, %v1914, %v1665
        %v1949 = vsel %vm1939, %v1916, %v1667
        %v1951 = vsel %vm1939, %v1918, %v1669
        %v1953 = vsel %vm1939, %v1920, %v1671
        %v1955 = vsel %vm1939, %v1922, %v1673
        %v1957 = vsel %vm1939, %v1924, %v1675
        %v1959 = vsel %vm1939, %v1926, %v1677
        %v1961 = vsel %vm1939, %v1928, %v1679
        %v1963 = vsel %vm1939, %v1930, %v1681
        %v1965 = vsel %vm1939, %v1932, %v1683
        %v1967 = vsel %vm1939, %v1934, %v1685
        %v1969 = vsel %vm1939, %v1936, %v1687
        %v1971 = vsel %vm1939, %v1938, %v1689
        %vm1972 = vcmask 457728
        %v1974 = vsel %vm1972, %v1941, %v1695
        %v1976 = vsel %vm1972, %v1943, %v1697
        %v1978 = vsel %vm1972, %v1945, %v1699
        %v1980 = vsel %vm1972, %v1947, %v1701
        %v1982 = vsel %vm1972, %v1949, %v1703
        %v1984 = vsel %vm1972, %v1951, %v1705
        %v1986 = vsel %vm1972, %v1953, %v1707
        %v1988 = vsel %vm1972, %v1955, %v1709
        %v1990 = vsel %vm1972, %v1957, %v1711
        %v1992 = vsel %vm1972, %v1959, %v1713
        %v1994 = vsel %vm1972, %v1961, %v1715
        %v1996 = vsel %vm1972, %v1963, %v1717
        %v1998 = vsel %vm1972, %v1965, %v1719
        %v2000 = vsel %vm1972, %v1967, %v1721
        %v2002 = vsel %vm1972, %v1969, %v1723
        %v2004 = vsel %vm1972, %v1971, %v1725
        %vm2005 = vcmask 523264
        %v2007 = vsel %vm2005, %v1974, %v1728
        %v2009 = vsel %vm2005, %v1976, %v1730
        %v2011 = vsel %vm2005, %v1978, %v1732
        %v2013 = vsel %vm2005, %v1980, %v1734
        %v2015 = vsel %vm2005, %v1982, %v1736
        %v2017 = vsel %vm2005, %v1984, %v1738
        %v2019 = vsel %vm2005, %v1986, %v1740
        %v2021 = vsel %vm2005, %v1988, %v1742
        %v2023 = vsel %vm2005, %v1990, %v1744
        %v2025 = vsel %vm2005, %v1992, %v1746
        %v2027 = vsel %vm2005, %v1994, %v1748
        %v2029 = vsel %vm2005, %v1996, %v1750
        %v2031 = vsel %vm2005, %v1998, %v1752
        %v2033 = vsel %vm2005, %v2000, %v1754
        %v2035 = vsel %vm2005, %v2002, %v1756
        %v2037 = vsel %vm2005, %v2004, %v1758
        %v2038 = vld [vmem:[%s2] sm:$0xf]
        %v2039 = vld [vmem:[%s2 + $0x4] sm:$0xf]
        %v2040 = vld [vmem:[%s2 + $0x8] sm:$0xf]
        %v2041 = vld [vmem:[%s2 + $0xc] sm:$0xf]
        %v2042 = vld [vmem:[%s2 + $0x10] sm:$0xf]
        %v2043 = vld [vmem:[%s2 + $0x14] sm:$0xf]
        %v2044 = vld [vmem:[%s2 + $0x18] sm:$0xf]
        %v2045 = vld [vmem:[%s2 + $0x1c] sm:$0xf]
        %v2046 = vld [vmem:[%s2 + $0x20] sm:$0xf]
        %v2056 = vunpack.c.l.b16 %v2038
        %v2057 = vunpack.c.l.b16 %v2039
        %v2058 = vunpack.c.l.b16 %v2040
        %v2059 = vunpack.c.l.b16 %v2041
        %v2060 = vunpack.c.l.b16 %v2042
        %v2061 = vunpack.c.l.b16 %v2043
        %v2062 = vunpack.c.l.b16 %v2044
        %v2063 = vunpack.c.l.b16 %v2045
        %v2064 = vunpack.c.l.b16 %v2046
        %v2065 = vpack.c.b16 %v2057, %v2056
        %v2066 = vpack.c.b16 %v2059, %v2058
        %v2067 = vpack.c.b16 %v2061, %v2060
        %v2068 = vpack.c.b16 %v2063, %v2062
        %v2069 = vpack.c.b16 %v2064, %v2064
        %vm2074 = vcmask 588800
        %v2075 = vsel %vm2074, %v2007, 0
        %v2077 = vsel %vm2074, %v2009, 0
        %v2079 = vsel %vm2074, %v2011, 0
        %v2081 = vsel %vm2074, %v2013, 0
        %v2083 = vsel %vm2074, %v2015, 0
        %v2085 = vsel %vm2074, %v2017, 0
        %v2087 = vsel %vm2074, %v2019, 0
        %v2089 = vsel %vm2074, %v2021, 0
        %v2091 = vsel %vm2074, %v2023, 0
        %v2093 = vsel %vm2074, %v2025, 0
        %v2095 = vsel %vm2074, %v2027, 0
        %v2097 = vsel %vm2074, %v2029, 0
        %v2099 = vsel %vm2074, %v2031, 0
        %v2101 = vsel %vm2074, %v2033, 0
        %v2103 = vsel %vm2074, %v2035, 0
        %v2105 = vsel %vm2074, %v2037, 0
        %vm2107 = vcmask 1043456
        %v2109 = vsel %vm2107, %v2069, 0
        %2111 = vmatprep.subr.bf16.mxu0 0
        %2112 = vmatpush1.bf16.msra.mxu0 0
        %2113 = vmatprep.subr.bf16.mxu0 0
        %2114 = vmatpush1.bf16.msra.mxu0 0
        %2115 = vmatprep.subr.bf16.mxu0 0
        %2116 = vmatpush1.bf16.msra.mxu0 0
        %2117 = vmatprep.subr.bf16.mxu0 0
        %2118 = vmatpush1.bf16.msra.mxu0 %v2109
        %2119 = vmatprep.subr.bf16.mxu0 0
        %2120 = vmatpush1.bf16.msra.mxu0 %v2068
        %2121 = vmatprep.subr.bf16.mxu0 0
        %2122 = vmatpush1.bf16.msra.mxu0 %v2067
        %2123 = vmatprep.subr.bf16.mxu0 0
        %2124 = vmatpush1.bf16.msra.mxu0 %v2066
        %2125 = vmatprep.subr.bf16.mxu0 0
        %2126 = vmatpush1.bf16.msra.mxu0 %v2065
        %2127 = vmatprep.subr.bf16.mxu0 0
        %2128 = vmatpush2.bf16.msra.mxu0 0
        %2129 = vmatprep.subr.bf16.mxu0 0
        %2130 = vmatpush2.bf16.msra.mxu0 0
        %2131 = vmatprep.subr.bf16.mxu0 0
        %2132 = vmatpush2.bf16.msra.mxu0 0
        %2133 = vmatprep.subr.bf16.mxu0 0
        %2134 = vmatpush2.bf16.msra.mxu0 0
        %2135 = vmatprep.subr.bf16.mxu0 0
        %2136 = vmatpush2.bf16.msra.mxu0 0
        %2137 = vmatprep.subr.bf16.mxu0 0
        %2138 = vmatpush2.bf16.msra.mxu0 0
        %2139 = vmatprep.subr.bf16.mxu0 0
        %2140 = vmatpush2.bf16.msra.mxu0 0
        %2141 = vmatprep.subr.bf16.mxu0 0
        %2142 = vmatpush2.bf16.msra.mxu0 0
        %2143 = vmatprep.mubr.bf16.mxu0 0
        %2144 = vmatmul.mubr.bf16.gmra.mxu0 %v2075
        %v2145 = vpop.f32.mrf.mxu0
        %v2146 = vadd.f32 0.0, %v2145
        %v2147 = vpop.f32.mrf.mxu0
        %v2148 = vpop.f32.mrf.mxu0
        %v2149 = vadd.f32 0.0, %v2148
        %v2150 = vpop.f32.mrf.mxu0
        %2151 = vmatprep.mubr.bf16.mxu0 0
        %2152 = vmatmul.mubr.bf16.gmra.mxu0 %v2077
        %v2153 = vpop.f32.mrf.mxu0
        %v2154 = vadd.f32 0.0, %v2153
        %v2155 = vpop.f32.mrf.mxu0
        %v2156 = vpop.f32.mrf.mxu0
        %v2157 = vadd.f32 0.0, %v2156
        %v2158 = vpop.f32.mrf.mxu0
        %2159 = vmatprep.mubr.bf16.mxu0 0
        %2160 = vmatmul.mubr.bf16.gmra.mxu0 %v2079
        %v2161 = vpop.f32.mrf.mxu0
        %v2162 = vadd.f32 0.0, %v2161
        %v2163 = vpop.f32.mrf.mxu0
        %v2164 = vpop.f32.mrf.mxu0
        %v2165 = vadd.f32 0.0, %v2164
        %v2166 = vpop.f32.mrf.mxu0
        %2167 = vmatprep.mubr.bf16.mxu0 0
        %2168 = vmatmul.mubr.bf16.gmra.mxu0 %v2081
        %v2169 = vpop.f32.mrf.mxu0
        %v2170 = vadd.f32 0.0, %v2169
        %v2171 = vpop.f32.mrf.mxu0
        %v2172 = vpop.f32.mrf.mxu0
        %v2173 = vadd.f32 0.0, %v2172
        %v2174 = vpop.f32.mrf.mxu0
        %2175 = vmatprep.mubr.bf16.mxu0 0
        %2176 = vmatmul.mubr.bf16.gmra.mxu0 %v2083
        %v2177 = vpop.f32.mrf.mxu0
        %v2178 = vadd.f32 0.0, %v2177
        %v2179 = vpop.f32.mrf.mxu0
        %v2180 = vpop.f32.mrf.mxu0
        %v2181 = vadd.f32 0.0, %v2180
        %v2182 = vpop.f32.mrf.mxu0
        %2183 = vmatprep.mubr.bf16.mxu0 0
        %2184 = vmatmul.mubr.bf16.gmra.mxu0 %v2085
        %v2185 = vpop.f32.mrf.mxu0
        %v2186 = vadd.f32 0.0, %v2185
        %v2187 = vpop.f32.mrf.mxu0
        %v2188 = vpop.f32.mrf.mxu0
        %v2189 = vadd.f32 0.0, %v2188
        %v2190 = vpop.f32.mrf.mxu0
        %2191 = vmatprep.mubr.bf16.mxu0 0
        %2192 = vmatmul.mubr.bf16.gmra.mxu0 %v2087
        %v2193 = vpop.f32.mrf.mxu0
        %v2194 = vadd.f32 0.0, %v2193
        %v2195 = vpop.f32.mrf.mxu0
        %v2196 = vpop.f32.mrf.mxu0
        %v2197 = vadd.f32 0.0, %v2196
        %v2198 = vpop.f32.mrf.mxu0
        %2199 = vmatprep.mubr.bf16.mxu0 0
        %2200 = vmatmul.mubr.bf16.gmra.mxu0 %v2089
        %v2201 = vpop.f32.mrf.mxu0
        %v2202 = vadd.f32 0.0, %v2201
        %v2203 = vpop.f32.mrf.mxu0
        %v2204 = vpop.f32.mrf.mxu0
        %v2205 = vadd.f32 0.0, %v2204
        %v2206 = vpop.f32.mrf.mxu0
        %2207 = vmatprep.mubr.bf16.mxu0 0
        %2208 = vmatmul.mubr.bf16.gmra.mxu0 %v2091
        %v2209 = vpop.f32.mrf.mxu0
        %v2210 = vadd.f32 0.0, %v2209
        %v2211 = vpop.f32.mrf.mxu0
        %v2212 = vpop.f32.mrf.mxu0
        %v2213 = vadd.f32 0.0, %v2212
        %v2214 = vpop.f32.mrf.mxu0
        %2215 = vmatprep.mubr.bf16.mxu0 0
        %2216 = vmatmul.mubr.bf16.gmra.mxu0 %v2093
        %v2217 = vpop.f32.mrf.mxu0
        %v2218 = vadd.f32 0.0, %v2217
        %v2219 = vpop.f32.mrf.mxu0
        %v2220 = vpop.f32.mrf.mxu0
        %v2221 = vadd.f32 0.0, %v2220
        %v2222 = vpop.f32.mrf.mxu0
        %2223 = vmatprep.mubr.bf16.mxu0 0
        %2224 = vmatmul.mubr.bf16.gmra.mxu0 %v2095
        %v2225 = vpop.f32.mrf.mxu0
        %v2226 = vadd.f32 0.0, %v2225
        %v2227 = vpop.f32.mrf.mxu0
        %v2228 = vpop.f32.mrf.mxu0
        %v2229 = vadd.f32 0.0, %v2228
        %v2230 = vpop.f32.mrf.mxu0
        %2231 = vmatprep.mubr.bf16.mxu0 0
        %2232 = vmatmul.mubr.bf16.gmra.mxu0 %v2097
        %v2233 = vpop.f32.mrf.mxu0
        %v2234 = vadd.f32 0.0, %v2233
        %v2235 = vpop.f32.mrf.mxu0
        %v2236 = vpop.f32.mrf.mxu0
        %v2237 = vadd.f32 0.0, %v2236
        %v2238 = vpop.f32.mrf.mxu0
        %2239 = vmatprep.mubr.bf16.mxu0 0
        %2240 = vmatmul.mubr.bf16.gmra.mxu0 %v2099
        %v2241 = vpop.f32.mrf.mxu0
        %v2242 = vadd.f32 0.0, %v2241
        %v2243 = vpop.f32.mrf.mxu0
        %v2244 = vpop.f32.mrf.mxu0
        %v2245 = vadd.f32 0.0, %v2244
        %v2246 = vpop.f32.mrf.mxu0
        %2247 = vmatprep.mubr.bf16.mxu0 0
        %2248 = vmatmul.mubr.bf16.gmra.mxu0 %v2101
        %v2249 = vpop.f32.mrf.mxu0
        %v2250 = vadd.f32 0.0, %v2249
        %v2251 = vpop.f32.mrf.mxu0
        %v2252 = vpop.f32.mrf.mxu0
        %v2253 = vadd.f32 0.0, %v2252
        %v2254 = vpop.f32.mrf.mxu0
        %2255 = vmatprep.mubr.bf16.mxu0 0
        %2256 = vmatmul.mubr.bf16.gmra.mxu0 %v2103
        %v2257 = vpop.f32.mrf.mxu0
        %v2258 = vadd.f32 0.0, %v2257
        %v2259 = vpop.f32.mrf.mxu0
        %v2260 = vpop.f32.mrf.mxu0
        %v2261 = vadd.f32 0.0, %v2260
        %v2262 = vpop.f32.mrf.mxu0
        %2263 = vmatprep.mubr.bf16.mxu0 0
        %2264 = vmatmul.mubr.bf16.gmra.mxu0 %v2105
        %v2265 = vpop.f32.mrf.mxu0
        %v2266 = vadd.f32 0.0, %v2265
        %v2267 = vpop.f32.mrf.mxu0
        %v2268 = vpop.f32.mrf.mxu0
        %v2269 = vadd.f32 0.0, %v2268
        %v2270 = vpop.f32.mrf.mxu0
        %2271 = vdwg.mxu0
        %v2272 = vld [vmem:[%s3] sm:$0x1]
        %v2274 = vlaneseq
        %v2275 = vshrl.u32 %v2274, 7
        %v2276 = vsub.s32 0, %v2275
        %v2277 = vrot.slane %v2272, %v2276
        %v2279 = vmul.f32 %v2146, %v2277
        %v2280 = vmul.f32 %v2149, %v2277
        %v2281 = vmul.f32 %v2154, %v2277
        %v2282 = vmul.f32 %v2157, %v2277
        %v2283 = vmul.f32 %v2162, %v2277
        %v2284 = vmul.f32 %v2165, %v2277
        %v2285 = vmul.f32 %v2170, %v2277
        %v2286 = vmul.f32 %v2173, %v2277
        %v2287 = vmul.f32 %v2178, %v2277
        %v2288 = vmul.f32 %v2181, %v2277
        %v2289 = vmul.f32 %v2186, %v2277
        %v2290 = vmul.f32 %v2189, %v2277
        %v2291 = vmul.f32 %v2194, %v2277
        %v2292 = vmul.f32 %v2197, %v2277
        %v2293 = vmul.f32 %v2202, %v2277
        %v2294 = vmul.f32 %v2205, %v2277
        %v2295 = vmul.f32 %v2210, %v2277
        %v2296 = vmul.f32 %v2213, %v2277
        %v2297 = vmul.f32 %v2218, %v2277
        %v2298 = vmul.f32 %v2221, %v2277
        %v2299 = vmul.f32 %v2226, %v2277
        %v2300 = vmul.f32 %v2229, %v2277
        %v2301 = vmul.f32 %v2234, %v2277
        %v2302 = vmul.f32 %v2237, %v2277
        %v2303 = vmul.f32 %v2242, %v2277
        %v2304 = vmul.f32 %v2245, %v2277
        %v2305 = vmul.f32 %v2250, %v2277
        %v2306 = vmul.f32 %v2253, %v2277
        %v2307 = vmul.f32 %v2258, %v2277
        %v2308 = vmul.f32 %v2261, %v2277
        %v2309 = vmul.f32 %v2266, %v2277
        %v2310 = vmul.f32 %v2269, %v2277
        %v2311 = vld [vmem:[%s4] sm:$0x1]
        %v2313 = vlaneseq
        %v2314 = vshrl.u32 %v2313, 7
        %v2315 = vsub.s32 0, %v2314
        %v2316 = vrot.slane %v2311, %v2315
        %v2318 = vadd.f32 %v2279, %v2316
        %v2319 = vadd.f32 %v2280, %v2316
        %v2320 = vadd.f32 %v2281, %v2316
        %v2321 = vadd.f32 %v2282, %v2316
        %v2322 = vadd.f32 %v2283, %v2316
        %v2323 = vadd.f32 %v2284, %v2316
        %v2324 = vadd.f32 %v2285, %v2316
        %v2325 = vadd.f32 %v2286, %v2316
        %v2326 = vadd.f32 %v2287, %v2316
        %v2327 = vadd.f32 %v2288, %v2316
        %v2328 = vadd.f32 %v2289, %v2316
        %v2329 = vadd.f32 %v2290, %v2316
        %v2330 = vadd.f32 %v2291, %v2316
        %v2331 = vadd.f32 %v2292, %v2316
        %v2332 = vadd.f32 %v2293, %v2316
        %v2333 = vadd.f32 %v2294, %v2316
        %v2334 = vadd.f32 %v2295, %v2316
        %v2335 = vadd.f32 %v2296, %v2316
        %v2336 = vadd.f32 %v2297, %v2316
        %v2337 = vadd.f32 %v2298, %v2316
        %v2338 = vadd.f32 %v2299, %v2316
        %v2339 = vadd.f32 %v2300, %v2316
        %v2340 = vadd.f32 %v2301, %v2316
        %v2341 = vadd.f32 %v2302, %v2316
        %v2342 = vadd.f32 %v2303, %v2316
        %v2343 = vadd.f32 %v2304, %v2316
        %v2344 = vadd.f32 %v2305, %v2316
        %v2345 = vadd.f32 %v2306, %v2316
        %v2346 = vadd.f32 %v2307, %v2316
        %v2347 = vadd.f32 %v2308, %v2316
        %v2348 = vadd.f32 %v2309, %v2316
        %v2349 = vadd.f32 %v2310, %v2316
        %v2350 = vmax.f32 %v2318, 0.0
        %v2351 = vmax.f32 %v2319, 0.0
        %v2352 = vmax.f32 %v2320, 0.0
        %v2353 = vmax.f32 %v2321, 0.0
        %v2354 = vmax.f32 %v2322, 0.0
        %v2355 = vmax.f32 %v2323, 0.0
        %v2356 = vmax.f32 %v2324, 0.0
        %v2357 = vmax.f32 %v2325, 0.0
        %v2358 = vmax.f32 %v2326, 0.0
        %v2359 = vmax.f32 %v2327, 0.0
        %v2360 = vmax.f32 %v2328, 0.0
        %v2361 = vmax.f32 %v2329, 0.0
        %v2362 = vmax.f32 %v2330, 0.0
        %v2363 = vmax.f32 %v2331, 0.0
        %v2364 = vmax.f32 %v2332, 0.0
        %v2365 = vmax.f32 %v2333, 0.0
        %v2366 = vmax.f32 %v2334, 0.0
        %v2367 = vmax.f32 %v2335, 0.0
        %v2368 = vmax.f32 %v2336, 0.0
        %v2369 = vmax.f32 %v2337, 0.0
        %v2370 = vmax.f32 %v2338, 0.0
        %v2371 = vmax.f32 %v2339, 0.0
        %v2372 = vmax.f32 %v2340, 0.0
        %v2373 = vmax.f32 %v2341, 0.0
        %v2374 = vmax.f32 %v2342, 0.0
        %v2375 = vmax.f32 %v2343, 0.0
        %v2376 = vmax.f32 %v2344, 0.0
        %v2377 = vmax.f32 %v2345, 0.0
        %v2378 = vmax.f32 %v2346, 0.0
        %v2379 = vmax.f32 %v2347, 0.0
        %v2380 = vmax.f32 %v2348, 0.0
        %v2381 = vmax.f32 %v2349, 0.0
        %v2382 = vld [vmem:[%s323] sm:$0xf]
        %v2383 = vld [vmem:[%s323 + $0x4] sm:$0xf]
        %v2384 = vld [vmem:[%s323 + $0x8] sm:$0xf]
        %v2385 = vld [vmem:[%s323 + $0xc] sm:$0xf]
        %v2386 = vld [vmem:[%s323 + $0x10] sm:$0xf]
        %v2387 = vld [vmem:[%s323 + $0x14] sm:$0xf]
        %v2388 = vld [vmem:[%s323 + $0x18] sm:$0xf]
        %v2389 = vld [vmem:[%s323 + $0x1c] sm:$0xf]
        %v2390 = vld [vmem:[%s323 + $0x20] sm:$0xf]
        %v2391 = vld [vmem:[%s323 + $0x24] sm:$0xf]
        %v2392 = vld [vmem:[%s323 + $0x28] sm:$0xf]
        %v2393 = vld [vmem:[%s323 + $0x2c] sm:$0xf]
        %v2394 = vld [vmem:[%s323 + $0x30] sm:$0xf]
        %v2395 = vld [vmem:[%s323 + $0x34] sm:$0xf]
        %v2396 = vld [vmem:[%s323 + $0x38] sm:$0xf]
        %v2397 = vld [vmem:[%s323 + $0x3c] sm:$0xf]
        %v2398 = vld [vmem:[%s323 + $0x40] sm:$0xf]
        %v2399 = vld [vmem:[%s323 + $0x44] sm:$0xf]
        %v2400 = vld [vmem:[%s323 + $0x48] sm:$0xf]
        %v2401 = vld [vmem:[%s323 + $0x4c] sm:$0xf]
        %v2402 = vld [vmem:[%s323 + $0x50] sm:$0xf]
        %v2403 = vld [vmem:[%s323 + $0x54] sm:$0xf]
        %v2404 = vld [vmem:[%s323 + $0x58] sm:$0xf]
        %v2405 = vld [vmem:[%s323 + $0x5c] sm:$0xf]
        %v2406 = vld [vmem:[%s323 + $0x60] sm:$0xf]
        %v2407 = vld [vmem:[%s323 + $0x64] sm:$0xf]
        %v2408 = vld [vmem:[%s323 + $0x68] sm:$0xf]
        %v2409 = vld [vmem:[%s323 + $0x6c] sm:$0xf]
        %v2410 = vld [vmem:[%s323 + $0x70] sm:$0xf]
        %v2411 = vld [vmem:[%s323 + $0x74] sm:$0xf]
        %v2412 = vld [vmem:[%s323 + $0x78] sm:$0xf]
        %v2413 = vld [vmem:[%s323 + $0x7c] sm:$0xf]
        %v2414 = vunpack.c.l.bf16 %v2382
        %v2415 = vunpack.c.l.bf16 %v2383
        %v2416 = vunpack.c.l.bf16 %v2384
        %v2417 = vunpack.c.l.bf16 %v2385
        %v2418 = vunpack.c.l.bf16 %v2386
        %v2419 = vunpack.c.l.bf16 %v2387
        %v2420 = vunpack.c.l.bf16 %v2388
        %v2421 = vunpack.c.l.bf16 %v2389
        %v2422 = vunpack.c.l.bf16 %v2390
        %v2423 = vunpack.c.l.bf16 %v2391
        %v2424 = vunpack.c.l.bf16 %v2392
        %v2425 = vunpack.c.l.bf16 %v2393
        %v2426 = vunpack.c.l.bf16 %v2394
        %v2427 = vunpack.c.l.bf16 %v2395
        %v2428 = vunpack.c.l.bf16 %v2396
        %v2429 = vunpack.c.l.bf16 %v2397
        %v2430 = vunpack.c.l.bf16 %v2398
        %v2431 = vunpack.c.l.bf16 %v2399
        %v2432 = vunpack.c.l.bf16 %v2400
        %v2433 = vunpack.c.l.bf16 %v2401
        %v2434 = vunpack.c.l.bf16 %v2402
        %v2435 = vunpack.c.l.bf16 %v2403
        %v2436 = vunpack.c.l.bf16 %v2404
        %v2437 = vunpack.c.l.bf16 %v2405
        %v2438 = vunpack.c.l.bf16 %v2406
        %v2439 = vunpack.c.l.bf16 %v2407
        %v2440 = vunpack.c.l.bf16 %v2408
        %v2441 = vunpack.c.l.bf16 %v2409
        %v2442 = vunpack.c.l.bf16 %v2410
        %v2443 = vunpack.c.l.bf16 %v2411
        %v2444 = vunpack.c.l.bf16 %v2412
        %v2445 = vunpack.c.l.bf16 %v2413
        %v2446 = vadd.f32 %v2350, %v2414
        %v2447 = vadd.f32 %v2351, %v2415
        %v2448 = vadd.f32 %v2352, %v2416
        %v2449 = vadd.f32 %v2353, %v2417
        %v2450 = vadd.f32 %v2354, %v2418
        %v2451 = vadd.f32 %v2355, %v2419
        %v2452 = vadd.f32 %v2356, %v2420
        %v2453 = vadd.f32 %v2357, %v2421
        %v2454 = vadd.f32 %v2358, %v2422
        %v2455 = vadd.f32 %v2359, %v2423
        %v2456 = vadd.f32 %v2360, %v2424
        %v2457 = vadd.f32 %v2361, %v2425
        %v2458 = vadd.f32 %v2362, %v2426
        %v2459 = vadd.f32 %v2363, %v2427
        %v2460 = vadd.f32 %v2364, %v2428
        %v2461 = vadd.f32 %v2365, %v2429
        %v2462 = vadd.f32 %v2366, %v2430
        %v2463 = vadd.f32 %v2367, %v2431
        %v2464 = vadd.f32 %v2368, %v2432
        %v2465 = vadd.f32 %v2369, %v2433
        %v2466 = vadd.f32 %v2370, %v2434
        %v2467 = vadd.f32 %v2371, %v2435
        %v2468 = vadd.f32 %v2372, %v2436
        %v2469 = vadd.f32 %v2373, %v2437
        %v2470 = vadd.f32 %v2374, %v2438
        %v2471 = vadd.f32 %v2375, %v2439
        %v2472 = vadd.f32 %v2376, %v2440
        %v2473 = vadd.f32 %v2377, %v2441
        %v2474 = vadd.f32 %v2378, %v2442
        %v2475 = vadd.f32 %v2379, %v2443
        %v2476 = vadd.f32 %v2380, %v2444
        %v2477 = vadd.f32 %v2381, %v2445
        %v2478 = vpack.c.bf16 %v2447, %v2446
        %v2479 = vpack.c.bf16 %v2449, %v2448
        %v2480 = vpack.c.bf16 %v2451, %v2450
        %v2481 = vpack.c.bf16 %v2453, %v2452
        %v2482 = vpack.c.bf16 %v2455, %v2454
        %v2483 = vpack.c.bf16 %v2457, %v2456
        %v2484 = vpack.c.bf16 %v2459, %v2458
        %v2485 = vpack.c.bf16 %v2461, %v2460
        %v2486 = vpack.c.bf16 %v2463, %v2462
        %v2487 = vpack.c.bf16 %v2465, %v2464
        %v2488 = vpack.c.bf16 %v2467, %v2466
        %v2489 = vpack.c.bf16 %v2469, %v2468
        %v2490 = vpack.c.bf16 %v2471, %v2470
        %v2491 = vpack.c.bf16 %v2473, %v2472
        %v2492 = vpack.c.bf16 %v2475, %v2474
        %v2493 = vpack.c.bf16 %v2477, %v2476
        %v2494 = vsel %vm680, %v2478, 0
        %v2495 = vsel %vm681, %v2479, 0
        %v2496 = vsel %vm682, %v2480, 0
        %v2497 = vsel %vm683, %v2481, 0
        %v2498 = vsel %vm684, %v2482, 0
        %v2499 = vsel %vm685, %v2483, 0
        %v2500 = vsel %vm686, %v2484, 0
        %v2501 = vsel %vm687, %v2485, 0
        %v2502 = vsel %vm688, %v2486, 0
        %v2503 = vsel %vm689, %v2487, 0
        %v2504 = vsel %vm690, %v2488, 0
        %v2505 = vsel %vm691, %v2489, 0
        %v2506 = vsel %vm692, %v2490, 0
        %v2507 = vsel %vm693, %v2491, 0
        %v2508 = vsel %vm694, %v2492, 0
        %v2509 = vsel %vm695, %v2493, 0
        %v2510 = vsel %vm888, %v2478, 0
        %v2511 = vsel %vm889, %v2479, 0
        %v2512 = vsel %vm890, %v2480, 0
        %v2513 = vsel %vm891, %v2481, 0
        %v2514 = vsel %vm892, %v2482, 0
        %v2515 = vsel %vm893, %v2483, 0
        %v2516 = vsel %vm894, %v2484, 0
        %v2517 = vsel %vm895, %v2485, 0
        %v2518 = vsel %vm896, %v2486, 0
        %v2519 = vsel %vm897, %v2487, 0
        %v2520 = vsel %vm898, %v2488, 0
        %v2521 = vsel %vm899, %v2489, 0
        %v2522 = vsel %vm900, %v2490, 0
        %v2523 = vsel %vm901, %v2491, 0
        %v2524 = vsel %vm902, %v2492, 0
        %v2525 = vsel %vm903, %v2493, 0
        %v2527 = vshrl.u32 %v2478, 16
        %v2529 = vrot.slane %v2527, 7
        %v2530 = vshll.u32 %v2478, 16
        %v2532 = vor.u32 %v2529, %v2530
        %v2534 = vshrl.u32 %v2479, 16
        %v2536 = vrot.slane %v2534, 7
        %v2537 = vshll.u32 %v2479, 16
        %v2539 = vor.u32 %v2536, %v2537
        %v2540 = vsel %vm920, %v2529, %v2539
        %v2542 = vshrl.u32 %v2480, 16
        %v2544 = vrot.slane %v2542, 7
        %v2545 = vshll.u32 %v2480, 16
        %v2547 = vor.u32 %v2544, %v2545
        %v2548 = vsel %vm920, %v2536, %v2547
        %v2550 = vshrl.u32 %v2481, 16
        %v2552 = vrot.slane %v2550, 7
        %v2553 = vshll.u32 %v2481, 16
        %v2555 = vor.u32 %v2552, %v2553
        %v2556 = vsel %vm920, %v2544, %v2555
        %v2558 = vshrl.u32 %v2482, 16
        %v2560 = vrot.slane %v2558, 7
        %v2561 = vshll.u32 %v2482, 16
        %v2563 = vor.u32 %v2560, %v2561
        %v2564 = vsel %vm920, %v2552, %v2563
        %v2566 = vshrl.u32 %v2483, 16
        %v2568 = vrot.slane %v2566, 7
        %v2569 = vshll.u32 %v2483, 16
        %v2571 = vor.u32 %v2568, %v2569
        %v2572 = vsel %vm920, %v2560, %v2571
        %v2574 = vshrl.u32 %v2484, 16
        %v2576 = vrot.slane %v2574, 7
        %v2577 = vshll.u32 %v2484, 16
        %v2579 = vor.u32 %v2576, %v2577
        %v2580 = vsel %vm920, %v2568, %v2579
        %v2582 = vshrl.u32 %v2485, 16
        %v2584 = vrot.slane %v2582, 7
        %v2585 = vshll.u32 %v2485, 16
        %v2587 = vor.u32 %v2584, %v2585
        %v2588 = vsel %vm920, %v2576, %v2587
        %v2590 = vshrl.u32 %v2486, 16
        %v2592 = vrot.slane %v2590, 7
        %v2593 = vshll.u32 %v2486, 16
        %v2595 = vor.u32 %v2592, %v2593
        %v2596 = vsel %vm920, %v2584, %v2595
        %v2598 = vshrl.u32 %v2487, 16
        %v2600 = vrot.slane %v2598, 7
        %v2601 = vshll.u32 %v2487, 16
        %v2603 = vor.u32 %v2600, %v2601
        %v2604 = vsel %vm920, %v2592, %v2603
        %v2606 = vshrl.u32 %v2488, 16
        %v2608 = vrot.slane %v2606, 7
        %v2609 = vshll.u32 %v2488, 16
        %v2611 = vor.u32 %v2608, %v2609
        %v2612 = vsel %vm920, %v2600, %v2611
        %v2614 = vshrl.u32 %v2489, 16
        %v2616 = vrot.slane %v2614, 7
        %v2617 = vshll.u32 %v2489, 16
        %v2619 = vor.u32 %v2616, %v2617
        %v2620 = vsel %vm920, %v2608, %v2619
        %v2622 = vshrl.u32 %v2490, 16
        %v2624 = vrot.slane %v2622, 7
        %v2625 = vshll.u32 %v2490, 16
        %v2627 = vor.u32 %v2624, %v2625
        %v2628 = vsel %vm920, %v2616, %v2627
        %v2630 = vshrl.u32 %v2491, 16
        %v2632 = vrot.slane %v2630, 7
        %v2633 = vshll.u32 %v2491, 16
        %v2635 = vor.u32 %v2632, %v2633
        %v2636 = vsel %vm920, %v2624, %v2635
        %v2638 = vshrl.u32 %v2492, 16
        %v2640 = vrot.slane %v2638, 7
        %v2641 = vshll.u32 %v2492, 16
        %v2643 = vor.u32 %v2640, %v2641
        %v2644 = vsel %vm920, %v2632, %v2643
        %v2646 = vshrl.u32 %v2493, 16
        %v2648 = vrot.slane %v2646, 7
        %v2649 = vshll.u32 %v2493, 16
        %v2651 = vor.u32 %v2648, %v2649
        %v2652 = vsel %vm920, %v2640, %v2651
        %v2655 = vsel %vm1051, 0, %v2532
        %v2656 = vsel %vm1051, %v2648, 0
        %v2658 = vshrl.u32 %v2494, 16
        %v2660 = vrot.slane %v2658, 7
        %v2661 = vshll.u32 %v2494, 16
        %v2663 = vor.u32 %v2660, %v2661
        %v2665 = vshrl.u32 %v2495, 16
        %v2667 = vrot.slane %v2665, 7
        %v2668 = vshll.u32 %v2495, 16
        %v2670 = vor.u32 %v2667, %v2668
        %v2671 = vsel %vm920, %v2660, %v2670
        %v2673 = vshrl.u32 %v2496, 16
        %v2675 = vrot.slane %v2673, 7
        %v2676 = vshll.u32 %v2496, 16
        %v2678 = vor.u32 %v2675, %v2676
        %v2679 = vsel %vm920, %v2667, %v2678
        %v2681 = vshrl.u32 %v2497, 16
        %v2683 = vrot.slane %v2681, 7
        %v2684 = vshll.u32 %v2497, 16
        %v2686 = vor.u32 %v2683, %v2684
        %v2687 = vsel %vm920, %v2675, %v2686
        %v2689 = vshrl.u32 %v2498, 16
        %v2691 = vrot.slane %v2689, 7
        %v2692 = vshll.u32 %v2498, 16
        %v2694 = vor.u32 %v2691, %v2692
        %v2695 = vsel %vm920, %v2683, %v2694
        %v2697 = vshrl.u32 %v2499, 16
        %v2699 = vrot.slane %v2697, 7
        %v2700 = vshll.u32 %v2499, 16
        %v2702 = vor.u32 %v2699, %v2700
        %v2703 = vsel %vm920, %v2691, %v2702
        %v2705 = vshrl.u32 %v2500, 16
        %v2707 = vrot.slane %v2705, 7
        %v2708 = vshll.u32 %v2500, 16
        %v2710 = vor.u32 %v2707, %v2708
        %v2711 = vsel %vm920, %v2699, %v2710
        %v2713 = vshrl.u32 %v2501, 16
        %v2715 = vrot.slane %v2713, 7
        %v2716 = vshll.u32 %v2501, 16
        %v2718 = vor.u32 %v2715, %v2716
        %v2719 = vsel %vm920, %v2707, %v2718
        %v2721 = vshrl.u32 %v2502, 16
        %v2723 = vrot.slane %v2721, 7
        %v2724 = vshll.u32 %v2502, 16
        %v2726 = vor.u32 %v2723, %v2724
        %v2727 = vsel %vm920, %v2715, %v2726
        %v2729 = vshrl.u32 %v2503, 16
        %v2731 = vrot.slane %v2729, 7
        %v2732 = vshll.u32 %v2503, 16
        %v2734 = vor.u32 %v2731, %v2732
        %v2735 = vsel %vm920, %v2723, %v2734
        %v2737 = vshrl.u32 %v2504, 16
        %v2739 = vrot.slane %v2737, 7
        %v2740 = vshll.u32 %v2504, 16
        %v2742 = vor.u32 %v2739, %v2740
        %v2743 = vsel %vm920, %v2731, %v2742
        %v2745 = vshrl.u32 %v2505, 16
        %v2747 = vrot.slane %v2745, 7
        %v2748 = vshll.u32 %v2505, 16
        %v2750 = vor.u32 %v2747, %v2748
        %v2751 = vsel %vm920, %v2739, %v2750
        %v2753 = vshrl.u32 %v2506, 16
        %v2755 = vrot.slane %v2753, 7
        %v2756 = vshll.u32 %v2506, 16
        %v2758 = vor.u32 %v2755, %v2756
        %v2759 = vsel %vm920, %v2747, %v2758
        %v2761 = vshrl.u32 %v2507, 16
        %v2763 = vrot.slane %v2761, 7
        %v2764 = vshll.u32 %v2507, 16
        %v2766 = vor.u32 %v2763, %v2764
        %v2767 = vsel %vm920, %v2755, %v2766
        %v2769 = vshrl.u32 %v2508, 16
        %v2771 = vrot.slane %v2769, 7
        %v2772 = vshll.u32 %v2508, 16
        %v2774 = vor.u32 %v2771, %v2772
        %v2775 = vsel %vm920, %v2763, %v2774
        %v2777 = vshrl.u32 %v2509, 16
        %v2779 = vrot.slane %v2777, 7
        %v2780 = vshll.u32 %v2509, 16
        %v2782 = vor.u32 %v2779, %v2780
        %v2783 = vsel %vm920, %v2771, %v2782
        %v2786 = vsel %vm1051, 0, %v2663
        %v2787 = vsel %vm1051, %v2779, 0
        %v2789 = vshrl.u32 %v2510, 16
        %v2791 = vrot.slane %v2789, 7
        %v2792 = vshll.u32 %v2510, 16
        %v2794 = vor.u32 %v2791, %v2792
        %v2796 = vshrl.u32 %v2511, 16
        %v2798 = vrot.slane %v2796, 7
        %v2799 = vshll.u32 %v2511, 16
        %v2801 = vor.u32 %v2798, %v2799
        %v2802 = vsel %vm920, %v2791, %v2801
        %v2804 = vshrl.u32 %v2512, 16
        %v2806 = vrot.slane %v2804, 7
        %v2807 = vshll.u32 %v2512, 16
        %v2809 = vor.u32 %v2806, %v2807
        %v2810 = vsel %vm920, %v2798, %v2809
        %v2812 = vshrl.u32 %v2513, 16
        %v2814 = vrot.slane %v2812, 7
        %v2815 = vshll.u32 %v2513, 16
        %v2817 = vor.u32 %v2814, %v2815
        %v2818 = vsel %vm920, %v2806, %v2817
        %v2820 = vshrl.u32 %v2514, 16
        %v2822 = vrot.slane %v2820, 7
        %v2823 = vshll.u32 %v2514, 16
        %v2825 = vor.u32 %v2822, %v2823
        %v2826 = vsel %vm920, %v2814, %v2825
        %v2828 = vshrl.u32 %v2515, 16
        %v2830 = vrot.slane %v2828, 7
        %v2831 = vshll.u32 %v2515, 16
        %v2833 = vor.u32 %v2830, %v2831
        %v2834 = vsel %vm920, %v2822, %v2833
        %v2836 = vshrl.u32 %v2516, 16
        %v2838 = vrot.slane %v2836, 7
        %v2839 = vshll.u32 %v2516, 16
        %v2841 = vor.u32 %v2838, %v2839
        %v2842 = vsel %vm920, %v2830, %v2841
        %v2844 = vshrl.u32 %v2517, 16
        %v2846 = vrot.slane %v2844, 7
        %v2847 = vshll.u32 %v2517, 16
        %v2849 = vor.u32 %v2846, %v2847
        %v2850 = vsel %vm920, %v2838, %v2849
        %v2852 = vshrl.u32 %v2518, 16
        %v2854 = vrot.slane %v2852, 7
        %v2855 = vshll.u32 %v2518, 16
        %v2857 = vor.u32 %v2854, %v2855
        %v2858 = vsel %vm920, %v2846, %v2857
        %v2860 = vshrl.u32 %v2519, 16
        %v2862 = vrot.slane %v2860, 7
        %v2863 = vshll.u32 %v2519, 16
        %v2865 = vor.u32 %v2862, %v2863
        %v2866 = vsel %vm920, %v2854, %v2865
        %v2868 = vshrl.u32 %v2520, 16
        %v2870 = vrot.slane %v2868, 7
        %v2871 = vshll.u32 %v2520, 16
        %v2873 = vor.u32 %v2870, %v2871
        %v2874 = vsel %vm920, %v2862, %v2873
        %v2876 = vshrl.u32 %v2521, 16
        %v2878 = vrot.slane %v2876, 7
        %v2879 = vshll.u32 %v2521, 16
        %v2881 = vor.u32 %v2878, %v2879
        %v2882 = vsel %vm920, %v2870, %v2881
        %v2884 = vshrl.u32 %v2522, 16
        %v2886 = vrot.slane %v2884, 7
        %v2887 = vshll.u32 %v2522, 16
        %v2889 = vor.u32 %v2886, %v2887
        %v2890 = vsel %vm920, %v2878, %v2889
        %v2892 = vshrl.u32 %v2523, 16
        %v2894 = vrot.slane %v2892, 7
        %v2895 = vshll.u32 %v2523, 16
        %v2897 = vor.u32 %v2894, %v2895
        %v2898 = vsel %vm920, %v2886, %v2897
        %v2900 = vshrl.u32 %v2524, 16
        %v2902 = vrot.slane %v2900, 7
        %v2903 = vshll.u32 %v2524, 16
        %v2905 = vor.u32 %v2902, %v2903
        %v2906 = vsel %vm920, %v2894, %v2905
        %v2908 = vshrl.u32 %v2525, 16
        %v2910 = vrot.slane %v2908, 7
        %v2911 = vshll.u32 %v2525, 16
        %v2913 = vor.u32 %v2910, %v2911
        %v2914 = vsel %vm920, %v2902, %v2913
        %v2917 = vsel %vm1051, 0, %v2794
        %v2918 = vsel %vm1051, %v2910, 0
        %v2920 = vshll.u32 %v2655, 16
        %v2922 = vrot.slane %v2920, 1
        %v2923 = vsel %vm1316, %v1323, %v2922
        %v2924 = vshrl.u32 %v2655, 16
        %v2926 = vor.u32 %v2924, %v2922
        %v2928 = vshll.u32 %v2540, 16
        %v2930 = vrot.slane %v2928, 1
        %v2931 = vsel %vm1316, %v2926, %v2930
        %v2932 = vshrl.u32 %v2540, 16
        %v2934 = vor.u32 %v2932, %v2930
        %v2936 = vshll.u32 %v2548, 16
        %v2938 = vrot.slane %v2936, 1
        %v2939 = vsel %vm1316, %v2934, %v2938
        %v2940 = vshrl.u32 %v2548, 16
        %v2942 = vor.u32 %v2940, %v2938
        %v2944 = vshll.u32 %v2556, 16
        %v2946 = vrot.slane %v2944, 1
        %v2947 = vsel %vm1316, %v2942, %v2946
        %v2948 = vshrl.u32 %v2556, 16
        %v2950 = vor.u32 %v2948, %v2946
        %v2952 = vshll.u32 %v2564, 16
        %v2954 = vrot.slane %v2952, 1
        %v2955 = vsel %vm1316, %v2950, %v2954
        %v2956 = vshrl.u32 %v2564, 16
        %v2958 = vor.u32 %v2956, %v2954
        %v2960 = vshll.u32 %v2572, 16
        %v2962 = vrot.slane %v2960, 1
        %v2963 = vsel %vm1316, %v2958, %v2962
        %v2964 = vshrl.u32 %v2572, 16
        %v2966 = vor.u32 %v2964, %v2962
        %v2968 = vshll.u32 %v2580, 16
        %v2970 = vrot.slane %v2968, 1
        %v2971 = vsel %vm1316, %v2966, %v2970
        %v2972 = vshrl.u32 %v2580, 16
        %v2974 = vor.u32 %v2972, %v2970
        %v2976 = vshll.u32 %v2588, 16
        %v2978 = vrot.slane %v2976, 1
        %v2979 = vsel %vm1316, %v2974, %v2978
        %v2980 = vshrl.u32 %v2588, 16
        %v2982 = vor.u32 %v2980, %v2978
        %v2984 = vshll.u32 %v2596, 16
        %v2986 = vrot.slane %v2984, 1
        %v2987 = vsel %vm1316, %v2982, %v2986
        %v2988 = vshrl.u32 %v2596, 16
        %v2990 = vor.u32 %v2988, %v2986
        %v2992 = vshll.u32 %v2604, 16
        %v2994 = vrot.slane %v2992, 1
        %v2995 = vsel %vm1316, %v2990, %v2994
        %v2996 = vshrl.u32 %v2604, 16
        %v2998 = vor.u32 %v2996, %v2994
        %v3000 = vshll.u32 %v2612, 16
        %v3002 = vrot.slane %v3000, 1
        %v3003 = vsel %vm1316, %v2998, %v3002
        %v3004 = vshrl.u32 %v2612, 16
        %v3006 = vor.u32 %v3004, %v3002
        %v3008 = vshll.u32 %v2620, 16
        %v3010 = vrot.slane %v3008, 1
        %v3011 = vsel %vm1316, %v3006, %v3010
        %v3012 = vshrl.u32 %v2620, 16
        %v3014 = vor.u32 %v3012, %v3010
        %v3016 = vshll.u32 %v2628, 16
        %v3018 = vrot.slane %v3016, 1
        %v3019 = vsel %vm1316, %v3014, %v3018
        %v3020 = vshrl.u32 %v2628, 16
        %v3022 = vor.u32 %v3020, %v3018
        %v3024 = vshll.u32 %v2636, 16
        %v3026 = vrot.slane %v3024, 1
        %v3027 = vsel %vm1316, %v3022, %v3026
        %v3028 = vshrl.u32 %v2636, 16
        %v3030 = vor.u32 %v3028, %v3026
        %v3032 = vshll.u32 %v2644, 16
        %v3034 = vrot.slane %v3032, 1
        %v3035 = vsel %vm1316, %v3030, %v3034
        %v3036 = vshrl.u32 %v2644, 16
        %v3038 = vor.u32 %v3036, %v3034
        %v3040 = vshll.u32 %v2652, 16
        %v3042 = vrot.slane %v3040, 1
        %v3043 = vsel %vm1316, %v3038, %v3042
        %3044 = vrot.lane.b32.xlu0 %v2923, 32
        %v3045 = vpop.permute.xlu0 %3044
        %3046 = vrot.lane.b32.xlu0 %v2931, 32
        %v3047 = vpop.permute.xlu0 %3046
        %3048 = vrot.lane.b32.xlu0 %v2939, 32
        %v3049 = vpop.permute.xlu0 %3048
        %3050 = vrot.lane.b32.xlu0 %v2947, 32
        %v3051 = vpop.permute.xlu0 %3050
        %3052 = vrot.lane.b32.xlu0 %v2955, 32
        %v3053 = vpop.permute.xlu0 %3052
        %3054 = vrot.lane.b32.xlu0 %v2963, 32
        %v3055 = vpop.permute.xlu0 %3054
        %3056 = vrot.lane.b32.xlu0 %v2971, 32
        %v3057 = vpop.permute.xlu0 %3056
        %3058 = vrot.lane.b32.xlu0 %v2979, 32
        %v3059 = vpop.permute.xlu0 %3058
        %3060 = vrot.lane.b32.xlu0 %v2987, 32
        %v3061 = vpop.permute.xlu0 %3060
        %3062 = vrot.lane.b32.xlu0 %v2995, 32
        %v3063 = vpop.permute.xlu0 %3062
        %3064 = vrot.lane.b32.xlu0 %v3003, 32
        %v3065 = vpop.permute.xlu0 %3064
        %3066 = vrot.lane.b32.xlu0 %v3011, 32
        %v3067 = vpop.permute.xlu0 %3066
        %3068 = vrot.lane.b32.xlu0 %v3019, 32
        %v3069 = vpop.permute.xlu0 %3068
        %3070 = vrot.lane.b32.xlu0 %v3027, 32
        %v3071 = vpop.permute.xlu0 %3070
        %3072 = vrot.lane.b32.xlu0 %v3035, 32
        %v3073 = vpop.permute.xlu0 %3072
        %3074 = vrot.lane.b32.xlu0 %v3043, 32
        %v3075 = vpop.permute.xlu0 %3074
        %v3077 = vrot.slane %v2917, 1
        %v3078 = vsel %vm1483, %v1484, %v3077
        %v3079 = vrot.slane %v2802, 1
        %v3080 = vsel %vm1483, %v3077, %v3079
        %v3081 = vrot.slane %v2810, 1
        %v3082 = vsel %vm1483, %v3079, %v3081
        %v3083 = vrot.slane %v2818, 1
        %v3084 = vsel %vm1483, %v3081, %v3083
        %v3085 = vrot.slane %v2826, 1
        %v3086 = vsel %vm1483, %v3083, %v3085
        %v3087 = vrot.slane %v2834, 1
        %v3088 = vsel %vm1483, %v3085, %v3087
        %v3089 = vrot.slane %v2842, 1
        %v3090 = vsel %vm1483, %v3087, %v3089
        %v3091 = vrot.slane %v2850, 1
        %v3092 = vsel %vm1483, %v3089, %v3091
        %v3093 = vrot.slane %v2858, 1
        %v3094 = vsel %vm1483, %v3091, %v3093
        %v3095 = vrot.slane %v2866, 1
        %v3096 = vsel %vm1483, %v3093, %v3095
        %v3097 = vrot.slane %v2874, 1
        %v3098 = vsel %vm1483, %v3095, %v3097
        %v3099 = vrot.slane %v2882, 1
        %v3100 = vsel %vm1483, %v3097, %v3099
        %v3101 = vrot.slane %v2890, 1
        %v3102 = vsel %vm1483, %v3099, %v3101
        %v3103 = vrot.slane %v2898, 1
        %v3104 = vsel %vm1483, %v3101, %v3103
        %v3105 = vrot.slane %v2906, 1
        %v3106 = vsel %vm1483, %v3103, %v3105
        %v3107 = vrot.slane %v2914, 1
        %v3108 = vsel %vm1483, %v3105, %v3107
        %3109 = vrot.lane.b32.xlu0 %v3078, 64
        %v3110 = vpop.permute.xlu0 %3109
        %3111 = vrot.lane.b32.xlu0 %v3080, 64
        %v3112 = vpop.permute.xlu0 %3111
        %3113 = vrot.lane.b32.xlu0 %v3082, 64
        %v3114 = vpop.permute.xlu0 %3113
        %3115 = vrot.lane.b32.xlu0 %v3084, 64
        %v3116 = vpop.permute.xlu0 %3115
        %3117 = vrot.lane.b32.xlu0 %v3086, 64
        %v3118 = vpop.permute.xlu0 %3117
        %3119 = vrot.lane.b32.xlu0 %v3088, 64
        %v3120 = vpop.permute.xlu0 %3119
        %3121 = vrot.lane.b32.xlu0 %v3090, 64
        %v3122 = vpop.permute.xlu0 %3121
        %3123 = vrot.lane.b32.xlu0 %v3092, 64
        %v3124 = vpop.permute.xlu0 %3123
        %3125 = vrot.lane.b32.xlu0 %v3094, 64
        %v3126 = vpop.permute.xlu0 %3125
        %3127 = vrot.lane.b32.xlu0 %v3096, 64
        %v3128 = vpop.permute.xlu0 %3127
        %3129 = vrot.lane.b32.xlu0 %v3098, 64
        %v3130 = vpop.permute.xlu0 %3129
        %3131 = vrot.lane.b32.xlu0 %v3100, 64
        %v3132 = vpop.permute.xlu0 %3131
        %3133 = vrot.lane.b32.xlu0 %v3102, 64
        %v3134 = vpop.permute.xlu0 %3133
        %3135 = vrot.lane.b32.xlu0 %v3104, 64
        %v3136 = vpop.permute.xlu0 %3135
        %3137 = vrot.lane.b32.xlu0 %v3106, 64
        %v3138 = vpop.permute.xlu0 %3137
        %3139 = vrot.lane.b32.xlu0 %v3108, 64
        %v3140 = vpop.permute.xlu0 %3139
        %3142 = vrot.lane.b32.xlu0 %v2786, 96
        %v3143 = vpop.permute.xlu0 %3142
        %3144 = vrot.lane.b32.xlu0 %v2671, 96
        %v3145 = vpop.permute.xlu0 %3144
        %3146 = vrot.lane.b32.xlu0 %v2679, 96
        %v3147 = vpop.permute.xlu0 %3146
        %3148 = vrot.lane.b32.xlu0 %v2687, 96
        %v3149 = vpop.permute.xlu0 %3148
        %3150 = vrot.lane.b32.xlu0 %v2695, 96
        %v3151 = vpop.permute.xlu0 %3150
        %3152 = vrot.lane.b32.xlu0 %v2703, 96
        %v3153 = vpop.permute.xlu0 %3152
        %3154 = vrot.lane.b32.xlu0 %v2711, 96
        %v3155 = vpop.permute.xlu0 %3154
        %3156 = vrot.lane.b32.xlu0 %v2719, 96
        %v3157 = vpop.permute.xlu0 %3156
        %3158 = vrot.lane.b32.xlu0 %v2727, 96
        %v3159 = vpop.permute.xlu0 %3158
        %3160 = vrot.lane.b32.xlu0 %v2735, 96
        %v3161 = vpop.permute.xlu0 %3160
        %3162 = vrot.lane.b32.xlu0 %v2743, 96
        %v3163 = vpop.permute.xlu0 %3162
        %3164 = vrot.lane.b32.xlu0 %v2751, 96
        %v3165 = vpop.permute.xlu0 %3164
        %3166 = vrot.lane.b32.xlu0 %v2759, 96
        %v3167 = vpop.permute.xlu0 %3166
        %3168 = vrot.lane.b32.xlu0 %v2767, 96
        %v3169 = vpop.permute.xlu0 %3168
        %3170 = vrot.lane.b32.xlu0 %v2775, 96
        %v3171 = vpop.permute.xlu0 %3170
        %3172 = vrot.lane.b32.xlu0 %v2783, 96
        %v3173 = vpop.permute.xlu0 %3172
        %v3174 = vshrl.u32 %v2652, 16
        %v3176 = vor.u32 %v3174, %v3042
        %v3178 = vshll.u32 %v2656, 16
        %v3180 = vrot.slane %v3178, 1
        %v3181 = vsel %vm1316, %v3176, %v3180
        %v3183 = vrot.slane %v2918, 1
        %v3184 = vsel %vm1483, %v3107, %v3183
        %3185 = vrot.lane.b32.xlu0 %v3080, 32
        %v3186 = vpop.permute.xlu0 %3185
        %3187 = vrot.lane.b32.xlu0 %v3082, 32
        %v3188 = vpop.permute.xlu0 %3187
        %3189 = vrot.lane.b32.xlu0 %v3084, 32
        %v3190 = vpop.permute.xlu0 %3189
        %3191 = vrot.lane.b32.xlu0 %v3086, 32
        %v3192 = vpop.permute.xlu0 %3191
        %3193 = vrot.lane.b32.xlu0 %v3088, 32
        %v3194 = vpop.permute.xlu0 %3193
        %3195 = vrot.lane.b32.xlu0 %v3090, 32
        %v3196 = vpop.permute.xlu0 %3195
        %3197 = vrot.lane.b32.xlu0 %v3092, 32
        %v3198 = vpop.permute.xlu0 %3197
        %3199 = vrot.lane.b32.xlu0 %v3094, 32
        %v3200 = vpop.permute.xlu0 %3199
        %3201 = vrot.lane.b32.xlu0 %v3096, 32
        %v3202 = vpop.permute.xlu0 %3201
        %3203 = vrot.lane.b32.xlu0 %v3098, 32
        %v3204 = vpop.permute.xlu0 %3203
        %3205 = vrot.lane.b32.xlu0 %v3100, 32
        %v3206 = vpop.permute.xlu0 %3205
        %3207 = vrot.lane.b32.xlu0 %v3102, 32
        %v3208 = vpop.permute.xlu0 %3207
        %3209 = vrot.lane.b32.xlu0 %v3104, 32
        %v3210 = vpop.permute.xlu0 %3209
        %3211 = vrot.lane.b32.xlu0 %v3106, 32
        %v3212 = vpop.permute.xlu0 %3211
        %3213 = vrot.lane.b32.xlu0 %v3108, 32
        %v3214 = vpop.permute.xlu0 %3213
        %3215 = vrot.lane.b32.xlu0 %v3184, 32
        %v3216 = vpop.permute.xlu0 %3215
        %3218 = vrot.lane.b32.xlu0 %v2671, 64
        %v3219 = vpop.permute.xlu0 %3218
        %3220 = vrot.lane.b32.xlu0 %v2679, 64
        %v3221 = vpop.permute.xlu0 %3220
        %3222 = vrot.lane.b32.xlu0 %v2687, 64
        %v3223 = vpop.permute.xlu0 %3222
        %3224 = vrot.lane.b32.xlu0 %v2695, 64
        %v3225 = vpop.permute.xlu0 %3224
        %3226 = vrot.lane.b32.xlu0 %v2703, 64
        %v3227 = vpop.permute.xlu0 %3226
        %3228 = vrot.lane.b32.xlu0 %v2711, 64
        %v3229 = vpop.permute.xlu0 %3228
        %3230 = vrot.lane.b32.xlu0 %v2719, 64
        %v3231 = vpop.permute.xlu0 %3230
        %3232 = vrot.lane.b32.xlu0 %v2727, 64
        %v3233 = vpop.permute.xlu0 %3232
        %3234 = vrot.lane.b32.xlu0 %v2735, 64
        %v3235 = vpop.permute.xlu0 %3234
        %3236 = vrot.lane.b32.xlu0 %v2743, 64
        %v3237 = vpop.permute.xlu0 %3236
        %3238 = vrot.lane.b32.xlu0 %v2751, 64
        %v3239 = vpop.permute.xlu0 %3238
        %3240 = vrot.lane.b32.xlu0 %v2759, 64
        %v3241 = vpop.permute.xlu0 %3240
        %3242 = vrot.lane.b32.xlu0 %v2767, 64
        %v3243 = vpop.permute.xlu0 %3242
        %3244 = vrot.lane.b32.xlu0 %v2775, 64
        %v3245 = vpop.permute.xlu0 %3244
        %3246 = vrot.lane.b32.xlu0 %v2783, 64
        %v3247 = vpop.permute.xlu0 %3246
        %3248 = vrot.lane.b32.xlu0 %v2787, 64
        %v3249 = vpop.permute.xlu0 %3248
        %v3250 = vshrl.u32 %v2656, 16
        %v3252 = vor.u32 %v3250, %v3180
        %v3253 = vsel %vm1316, %v3252, %v1322
        %3254 = vrot.lane.b32.xlu0 %v2939, 96
        %v3255 = vpop.permute.xlu0 %3254
        %3256 = vrot.lane.b32.xlu0 %v2947, 96
        %v3257 = vpop.permute.xlu0 %3256
        %3258 = vrot.lane.b32.xlu0 %v2955, 96
        %v3259 = vpop.permute.xlu0 %3258
        %3260 = vrot.lane.b32.xlu0 %v2963, 96
        %v3261 = vpop.permute.xlu0 %3260
        %3262 = vrot.lane.b32.xlu0 %v2971, 96
        %v3263 = vpop.permute.xlu0 %3262
        %3264 = vrot.lane.b32.xlu0 %v2979, 96
        %v3265 = vpop.permute.xlu0 %3264
        %3266 = vrot.lane.b32.xlu0 %v2987, 96
        %v3267 = vpop.permute.xlu0 %3266
        %3268 = vrot.lane.b32.xlu0 %v2995, 96
        %v3269 = vpop.permute.xlu0 %3268
        %3270 = vrot.lane.b32.xlu0 %v3003, 96
        %v3271 = vpop.permute.xlu0 %3270
        %3272 = vrot.lane.b32.xlu0 %v3011, 96
        %v3273 = vpop.permute.xlu0 %3272
        %3274 = vrot.lane.b32.xlu0 %v3019, 96
        %v3275 = vpop.permute.xlu0 %3274
        %3276 = vrot.lane.b32.xlu0 %v3027, 96
        %v3277 = vpop.permute.xlu0 %3276
        %3278 = vrot.lane.b32.xlu0 %v3035, 96
        %v3279 = vpop.permute.xlu0 %3278
        %3280 = vrot.lane.b32.xlu0 %v3043, 96
        %v3281 = vpop.permute.xlu0 %3280
        %3282 = vrot.lane.b32.xlu0 %v3181, 96
        %v3283 = vpop.permute.xlu0 %3282
        %3284 = vrot.lane.b32.xlu0 %v3253, 96
        %v3285 = vpop.permute.xlu0 %3284
        %v3286 = vsel %vm1483, %v3183, %v1484
        %v3288 = vsel %vm1873, 0, %v3045
        %v3291 = vsel %vm1873, %v2786, %v3047
        %v3294 = vsel %vm1873, %v2671, %v3049
        %v3297 = vsel %vm1873, %v2679, %v3051
        %v3300 = vsel %vm1873, %v2687, %v3053
        %v3303 = vsel %vm1873, %v2695, %v3055
        %v3306 = vsel %vm1873, %v2703, %v3057
        %v3309 = vsel %vm1873, %v2711, %v3059
        %v3312 = vsel %vm1873, %v2719, %v3061
        %v3315 = vsel %vm1873, %v2727, %v3063
        %v3318 = vsel %vm1873, %v2735, %v3065
        %v3321 = vsel %vm1873, %v2743, %v3067
        %v3324 = vsel %vm1873, %v2751, %v3069
        %v3327 = vsel %vm1873, %v2759, %v3071
        %v3330 = vsel %vm1873, %v2767, %v3073
        %v3333 = vsel %vm1873, %v2775, %v3075
        %v3335 = vsel %vm2005, %v3288, %v3110
        %v3337 = vsel %vm2005, %v3291, %v3112
        %v3339 = vsel %vm2005, %v3294, %v3114
        %v3341 = vsel %vm2005, %v3297, %v3116
        %v3343 = vsel %vm2005, %v3300, %v3118
        %v3345 = vsel %vm2005, %v3303, %v3120
        %v3347 = vsel %vm2005, %v3306, %v3122
        %v3349 = vsel %vm2005, %v3309, %v3124
        %v3351 = vsel %vm2005, %v3312, %v3126
        %v3353 = vsel %vm2005, %v3315, %v3128
        %v3355 = vsel %vm2005, %v3318, %v3130
        %v3357 = vsel %vm2005, %v3321, %v3132
        %v3359 = vsel %vm2005, %v3324, %v3134
        %v3361 = vsel %vm2005, %v3327, %v3136
        %v3363 = vsel %vm2005, %v3330, %v3138
        %v3365 = vsel %vm2005, %v3333, %v3140
        %vm3366 = vcmask 785408
        %v3368 = vsel %vm3366, %v3335, %v3143
        %v3371 = vsel %vm3366, %v3337, %v3145
        %v3374 = vsel %vm3366, %v3339, %v3147
        %v3377 = vsel %vm3366, %v3341, %v3149
        %v3380 = vsel %vm3366, %v3343, %v3151
        %v3383 = vsel %vm3366, %v3345, %v3153
        %v3386 = vsel %vm3366, %v3347, %v3155
        %v3389 = vsel %vm3366, %v3349, %v3157
        %v3392 = vsel %vm3366, %v3351, %v3159
        %v3395 = vsel %vm3366, %v3353, %v3161
        %v3398 = vsel %vm3366, %v3355, %v3163
        %v3401 = vsel %vm3366, %v3357, %v3165
        %v3404 = vsel %vm3366, %v3359, %v3167
        %v3407 = vsel %vm3366, %v3361, %v3169
        %v3410 = vsel %vm3366, %v3363, %v3171
        %v3413 = vsel %vm3366, %v3365, %v3173
        %v3417 = vsel %vm1873, %v2931, %v3186
        %v3420 = vsel %vm1873, %v2939, %v3188
        %v3423 = vsel %vm1873, %v2947, %v3190
        %v3426 = vsel %vm1873, %v2955, %v3192
        %v3429 = vsel %vm1873, %v2963, %v3194
        %v3432 = vsel %vm1873, %v2971, %v3196
        %v3435 = vsel %vm1873, %v2979, %v3198
        %v3438 = vsel %vm1873, %v2987, %v3200
        %v3441 = vsel %vm1873, %v2995, %v3202
        %v3444 = vsel %vm1873, %v3003, %v3204
        %v3447 = vsel %vm1873, %v3011, %v3206
        %v3450 = vsel %vm1873, %v3019, %v3208
        %v3453 = vsel %vm1873, %v3027, %v3210
        %v3456 = vsel %vm1873, %v3035, %v3212
        %v3459 = vsel %vm1873, %v3043, %v3214
        %v3462 = vsel %vm1873, %v3181, %v3216
        %v3464 = vsel %vm2005, %v3417, %v3219
        %v3466 = vsel %vm2005, %v3420, %v3221
        %v3468 = vsel %vm2005, %v3423, %v3223
        %v3470 = vsel %vm2005, %v3426, %v3225
        %v3472 = vsel %vm2005, %v3429, %v3227
        %v3474 = vsel %vm2005, %v3432, %v3229
        %v3476 = vsel %vm2005, %v3435, %v3231
        %v3478 = vsel %vm2005, %v3438, %v3233
        %v3480 = vsel %vm2005, %v3441, %v3235
        %v3482 = vsel %vm2005, %v3444, %v3237
        %v3484 = vsel %vm2005, %v3447, %v3239
        %v3486 = vsel %vm2005, %v3450, %v3241
        %v3488 = vsel %vm2005, %v3453, %v3243
        %v3490 = vsel %vm2005, %v3456, %v3245
        %v3492 = vsel %vm2005, %v3459, %v3247
        %v3494 = vsel %vm2005, %v3462, %v3249
        %v3496 = vsel %vm3366, %v3464, %v3255
        %v3499 = vsel %vm3366, %v3466, %v3257
        %v3502 = vsel %vm3366, %v3468, %v3259
        %v3505 = vsel %vm3366, %v3470, %v3261
        %v3508 = vsel %vm3366, %v3472, %v3263
        %v3511 = vsel %vm3366, %v3474, %v3265
        %v3514 = vsel %vm3366, %v3476, %v3267
        %v3517 = vsel %vm3366, %v3478, %v3269
        %v3520 = vsel %vm3366, %v3480, %v3271
        %v3523 = vsel %vm3366, %v3482, %v3273
        %v3526 = vsel %vm3366, %v3484, %v3275
        %v3529 = vsel %vm3366, %v3486, %v3277
        %v3532 = vsel %vm3366, %v3488, %v3279
        %v3535 = vsel %vm3366, %v3490, %v3281
        %v3538 = vsel %vm3366, %v3492, %v3283
        %v3541 = vsel %vm3366, %v3494, %v3285
        %v3543 = vld [vmem:[%s5] sm:$0xf]
        %v3544 = vld [vmem:[%s5 + $0x4] sm:$0xf]
        %v3545 = vld [vmem:[%s5 + $0x8] sm:$0xf]
        %v3546 = vld [vmem:[%s5 + $0xc] sm:$0xf]
        %v3547 = vld [vmem:[%s5 + $0x10] sm:$0xf]
        %v3548 = vld [vmem:[%s5 + $0x14] sm:$0xf]
        %v3549 = vld [vmem:[%s5 + $0x18] sm:$0xf]
        %v3550 = vld [vmem:[%s5 + $0x1c] sm:$0xf]
        %v3551 = vld [vmem:[%s5 + $0x20] sm:$0xf]
        %v3552 = vld [vmem:[%s5 + $0x24] sm:$0xf]
        %v3553 = vld [vmem:[%s5 + $0x28] sm:$0xf]
        %v3554 = vld [vmem:[%s5 + $0x2c] sm:$0xf]
        %v3555 = vld [vmem:[%s5 + $0x30] sm:$0xf]
        %v3556 = vld [vmem:[%s5 + $0x34] sm:$0xf]
        %v3557 = vld [vmem:[%s5 + $0x38] sm:$0xf]
        %v3558 = vld [vmem:[%s5 + $0x3c] sm:$0xf]
        %v3559 = vld [vmem:[%s5 + $0x40] sm:$0xf]
        %v3560 = vld [vmem:[%s5 + $0x44] sm:$0xf]
        %v3561 = vld [vmem:[%s5 + $0x48] sm:$0xf]
        %v3562 = vld [vmem:[%s5 + $0x4c] sm:$0xf]
        %v3563 = vld [vmem:[%s5 + $0x50] sm:$0xf]
        %v3564 = vld [vmem:[%s5 + $0x54] sm:$0xf]
        %v3565 = vld [vmem:[%s5 + $0x58] sm:$0xf]
        %v3566 = vld [vmem:[%s5 + $0x5c] sm:$0xf]
        %v3567 = vld [vmem:[%s5 + $0x60] sm:$0xf]
        %v3568 = vld [vmem:[%s5 + $0x64] sm:$0xf]
        %v3569 = vld [vmem:[%s5 + $0x68] sm:$0xf]
        %v3570 = vld [vmem:[%s5 + $0x6c] sm:$0xf]
        %v3571 = vld [vmem:[%s5 + $0x70] sm:$0xf]
        %v3572 = vld [vmem:[%s5 + $0x74] sm:$0xf]
        %v3573 = vld [vmem:[%s5 + $0x78] sm:$0xf]
        %v3574 = vld [vmem:[%s5 + $0x7c] sm:$0xf]
        %v3575 = vld [vmem:[%s5 + $0x80] sm:$0xf]
        %v3576 = vld [vmem:[%s5 + $0x84] sm:$0xf]
        %v3577 = vld [vmem:[%s5 + $0x88] sm:$0xf]
        %v3578 = vld [vmem:[%s5 + $0x8c] sm:$0xf]
        %v3615 = vunpack.c.l.b16 %v3543
        %v3616 = vunpack.c.l.b16 %v3544
        %v3617 = vunpack.c.l.b16 %v3545
        %v3618 = vunpack.c.l.b16 %v3546
        %v3619 = vunpack.c.l.b16 %v3547
        %v3620 = vunpack.c.l.b16 %v3548
        %v3621 = vunpack.c.l.b16 %v3549
        %v3622 = vunpack.c.l.b16 %v3550
        %v3623 = vunpack.c.l.b16 %v3551
        %v3624 = vunpack.c.l.b16 %v3552
        %v3625 = vunpack.c.l.b16 %v3553
        %v3626 = vunpack.c.l.b16 %v3554
        %v3627 = vunpack.c.l.b16 %v3555
        %v3628 = vunpack.c.l.b16 %v3556
        %v3629 = vunpack.c.l.b16 %v3557
        %v3630 = vunpack.c.l.b16 %v3558
        %v3631 = vunpack.c.l.b16 %v3559
        %v3632 = vunpack.c.l.b16 %v3560
        %v3633 = vunpack.c.l.b16 %v3561
        %v3634 = vunpack.c.l.b16 %v3562
        %v3635 = vunpack.c.l.b16 %v3563
        %v3636 = vunpack.c.l.b16 %v3564
        %v3637 = vunpack.c.l.b16 %v3565
        %v3638 = vunpack.c.l.b16 %v3566
        %v3639 = vunpack.c.l.b16 %v3567
        %v3640 = vunpack.c.l.b16 %v3568
        %v3641 = vunpack.c.l.b16 %v3569
        %v3642 = vunpack.c.l.b16 %v3570
        %v3643 = vunpack.c.l.b16 %v3571
        %v3644 = vunpack.c.l.b16 %v3572
        %v3645 = vunpack.c.l.b16 %v3573
        %v3646 = vunpack.c.l.b16 %v3574
        %v3647 = vunpack.c.l.b16 %v3575
        %v3648 = vunpack.c.l.b16 %v3576
        %v3649 = vunpack.c.l.b16 %v3577
        %v3650 = vunpack.c.l.b16 %v3578
        %v3651 = vpack.c.b16 %v3616, %v3615
        %v3652 = vpack.c.b16 %v3618, %v3617
        %v3653 = vpack.c.b16 %v3620, %v3619
        %v3654 = vpack.c.b16 %v3622, %v3621
        %v3655 = vpack.c.b16 %v3624, %v3623
        %v3656 = vpack.c.b16 %v3626, %v3625
        %v3657 = vpack.c.b16 %v3628, %v3627
        %v3658 = vpack.c.b16 %v3630, %v3629
        %v3659 = vpack.c.b16 %v3632, %v3631
        %v3660 = vpack.c.b16 %v3634, %v3633
        %v3661 = vpack.c.b16 %v3636, %v3635
        %v3662 = vpack.c.b16 %v3638, %v3637
        %v3663 = vpack.c.b16 %v3640, %v3639
        %v3664 = vpack.c.b16 %v3642, %v3641
        %v3665 = vpack.c.b16 %v3644, %v3643
        %v3666 = vpack.c.b16 %v3646, %v3645
        %v3667 = vpack.c.b16 %v3648, %v3647
        %v3668 = vpack.c.b16 %v3650, %v3649
        %v3688 = vsel %vm1873, %v3082, 0
        %v3691 = vsel %vm1873, %v3084, 0
        %v3694 = vsel %vm1873, %v3086, 0
        %v3697 = vsel %vm1873, %v3088, 0
        %v3700 = vsel %vm1873, %v3090, 0
        %v3703 = vsel %vm1873, %v3092, 0
        %v3706 = vsel %vm1873, %v3094, 0
        %v3709 = vsel %vm1873, %v3096, 0
        %v3712 = vsel %vm1873, %v3098, 0
        %v3715 = vsel %vm1873, %v3100, 0
        %v3718 = vsel %vm1873, %v3102, 0
        %v3721 = vsel %vm1873, %v3104, 0
        %v3724 = vsel %vm1873, %v3106, 0
        %v3727 = vsel %vm1873, %v3108, 0
        %v3730 = vsel %vm1873, %v3184, 0
        %v3733 = vsel %vm1873, %v3286, 0
        %3735 = vmatprep.subr.bf16.mxu0 0
        %3736 = vmatpush1.bf16.msra.mxu0 %v3658
        %3737 = vmatprep.subr.bf16.mxu0 0
        %3738 = vmatpush1.bf16.msra.mxu0 %v3657
        %3739 = vmatprep.subr.bf16.mxu0 0
        %3740 = vmatpush1.bf16.msra.mxu0 %v3656
        %3741 = vmatprep.subr.bf16.mxu0 0
        %3742 = vmatpush1.bf16.msra.mxu0 %v3655
        %3743 = vmatprep.subr.bf16.mxu0 0
        %3744 = vmatpush1.bf16.msra.mxu0 %v3654
        %3745 = vmatprep.subr.bf16.mxu0 0
        %3746 = vmatpush1.bf16.msra.mxu0 %v3653
        %3747 = vmatprep.subr.bf16.mxu0 0
        %3748 = vmatpush1.bf16.msra.mxu0 %v3652
        %3749 = vmatprep.subr.bf16.mxu0 0
        %3750 = vmatpush1.bf16.msra.mxu0 %v3651
        %3751 = vmatprep.subr.bf16.mxu0 0
        %3752 = vmatpush2.bf16.msra.mxu0 %v3666
        %3753 = vmatprep.subr.bf16.mxu0 0
        %3754 = vmatpush2.bf16.msra.mxu0 %v3665
        %3755 = vmatprep.subr.bf16.mxu0 0
        %3756 = vmatpush2.bf16.msra.mxu0 %v3664
        %3757 = vmatprep.subr.bf16.mxu0 0
        %3758 = vmatpush2.bf16.msra.mxu0 %v3663
        %3759 = vmatprep.subr.bf16.mxu0 0
        %3760 = vmatpush2.bf16.msra.mxu0 %v3662
        %3761 = vmatprep.subr.bf16.mxu0 0
        %3762 = vmatpush2.bf16.msra.mxu0 %v3661
        %3763 = vmatprep.subr.bf16.mxu0 0
        %3764 = vmatpush2.bf16.msra.mxu0 %v3660
        %3765 = vmatprep.subr.bf16.mxu0 0
        %3766 = vmatpush2.bf16.msra.mxu0 %v3659
        %3767 = vmatprep.mubr.bf16.mxu0 %v3496
        %3768 = vmatmul.mubr.bf16.gmra.mxu0 %v3368
        %v3769 = vpop.f32.mrf.mxu0
        %v3770 = vadd.f32 0.0, %v3769
        %v3771 = vpop.f32.mrf.mxu0
        %v3772 = vpop.f32.mrf.mxu0
        %v3773 = vadd.f32 0.0, %v3772
        %v3774 = vpop.f32.mrf.mxu0
        %3775 = vmatprep.mubr.bf16.mxu0 %v3499
        %3776 = vmatmul.mubr.bf16.gmra.mxu0 %v3371
        %v3777 = vpop.f32.mrf.mxu0
        %v3778 = vadd.f32 0.0, %v3777
        %v3779 = vpop.f32.mrf.mxu0
        %v3780 = vpop.f32.mrf.mxu0
        %v3781 = vadd.f32 0.0, %v3780
        %v3782 = vpop.f32.mrf.mxu0
        %3783 = vmatprep.mubr.bf16.mxu0 %v3502
        %3784 = vmatmul.mubr.bf16.gmra.mxu0 %v3374
        %v3785 = vpop.f32.mrf.mxu0
        %v3786 = vadd.f32 0.0, %v3785
        %v3787 = vpop.f32.mrf.mxu0
        %v3788 = vpop.f32.mrf.mxu0
        %v3789 = vadd.f32 0.0, %v3788
        %v3790 = vpop.f32.mrf.mxu0
        %3791 = vmatprep.mubr.bf16.mxu0 %v3505
        %3792 = vmatmul.mubr.bf16.gmra.mxu0 %v3377
        %v3793 = vpop.f32.mrf.mxu0
        %v3794 = vadd.f32 0.0, %v3793
        %v3795 = vpop.f32.mrf.mxu0
        %v3796 = vpop.f32.mrf.mxu0
        %v3797 = vadd.f32 0.0, %v3796
        %v3798 = vpop.f32.mrf.mxu0
        %3799 = vmatprep.mubr.bf16.mxu0 %v3508
        %3800 = vmatmul.mubr.bf16.gmra.mxu0 %v3380
        %v3801 = vpop.f32.mrf.mxu0
        %v3802 = vadd.f32 0.0, %v3801
        %v3803 = vpop.f32.mrf.mxu0
        %v3804 = vpop.f32.mrf.mxu0
        %v3805 = vadd.f32 0.0, %v3804
        %v3806 = vpop.f32.mrf.mxu0
        %3807 = vmatprep.mubr.bf16.mxu0 %v3511
        %3808 = vmatmul.mubr.bf16.gmra.mxu0 %v3383
        %v3809 = vpop.f32.mrf.mxu0
        %v3810 = vadd.f32 0.0, %v3809
        %v3811 = vpop.f32.mrf.mxu0
        %v3812 = vpop.f32.mrf.mxu0
        %v3813 = vadd.f32 0.0, %v3812
        %v3814 = vpop.f32.mrf.mxu0
        %3815 = vmatprep.mubr.bf16.mxu0 %v3514
        %3816 = vmatmul.mubr.bf16.gmra.mxu0 %v3386
        %v3817 = vpop.f32.mrf.mxu0
        %v3818 = vadd.f32 0.0, %v3817
        %v3819 = vpop.f32.mrf.mxu0
        %v3820 = vpop.f32.mrf.mxu0
        %v3821 = vadd.f32 0.0, %v3820
        %v3822 = vpop.f32.mrf.mxu0
        %3823 = vmatprep.mubr.bf16.mxu0 %v3517
        %3824 = vmatmul.mubr.bf16.gmra.mxu0 %v3389
        %v3825 = vpop.f32.mrf.mxu0
        %v3826 = vadd.f32 0.0, %v3825
        %v3827 = vpop.f32.mrf.mxu0
        %v3828 = vpop.f32.mrf.mxu0
        %v3829 = vadd.f32 0.0, %v3828
        %v3830 = vpop.f32.mrf.mxu0
        %3831 = vmatprep.mubr.bf16.mxu0 %v3520
        %3832 = vmatmul.mubr.bf16.gmra.mxu0 %v3392
        %v3833 = vpop.f32.mrf.mxu0
        %v3834 = vadd.f32 0.0, %v3833
        %v3835 = vpop.f32.mrf.mxu0
        %v3836 = vpop.f32.mrf.mxu0
        %v3837 = vadd.f32 0.0, %v3836
        %v3838 = vpop.f32.mrf.mxu0
        %3839 = vmatprep.mubr.bf16.mxu0 %v3523
        %3840 = vmatmul.mubr.bf16.gmra.mxu0 %v3395
        %v3841 = vpop.f32.mrf.mxu0
        %v3842 = vadd.f32 0.0, %v3841
        %v3843 = vpop.f32.mrf.mxu0
        %v3844 = vpop.f32.mrf.mxu0
        %v3845 = vadd.f32 0.0, %v3844
        %v3846 = vpop.f32.mrf.mxu0
        %3847 = vmatprep.mubr.bf16.mxu0 %v3526
        %3848 = vmatmul.mubr.bf16.gmra.mxu0 %v3398
        %v3849 = vpop.f32.mrf.mxu0
        %v3850 = vadd.f32 0.0, %v3849
        %v3851 = vpop.f32.mrf.mxu0
        %v3852 = vpop.f32.mrf.mxu0
        %v3853 = vadd.f32 0.0, %v3852
        %v3854 = vpop.f32.mrf.mxu0
        %3855 = vmatprep.mubr.bf16.mxu0 %v3529
        %3856 = vmatmul.mubr.bf16.gmra.mxu0 %v3401
        %v3857 = vpop.f32.mrf.mxu0
        %v3858 = vadd.f32 0.0, %v3857
        %v3859 = vpop.f32.mrf.mxu0
        %v3860 = vpop.f32.mrf.mxu0
        %v3861 = vadd.f32 0.0, %v3860
        %v3862 = vpop.f32.mrf.mxu0
        %3863 = vmatprep.mubr.bf16.mxu0 %v3532
        %3864 = vmatmul.mubr.bf16.gmra.mxu0 %v3404
        %v3865 = vpop.f32.mrf.mxu0
        %v3866 = vadd.f32 0.0, %v3865
        %v3867 = vpop.f32.mrf.mxu0
        %v3868 = vpop.f32.mrf.mxu0
        %v3869 = vadd.f32 0.0, %v3868
        %v3870 = vpop.f32.mrf.mxu0
        %3871 = vmatprep.mubr.bf16.mxu0 %v3535
        %3872 = vmatmul.mubr.bf16.gmra.mxu0 %v3407
        %v3873 = vpop.f32.mrf.mxu0
        %v3874 = vadd.f32 0.0, %v3873
        %v3875 = vpop.f32.mrf.mxu0
        %v3876 = vpop.f32.mrf.mxu0
        %v3877 = vadd.f32 0.0, %v3876
        %v3878 = vpop.f32.mrf.mxu0
        %3879 = vmatprep.mubr.bf16.mxu0 %v3538
        %3880 = vmatmul.mubr.bf16.gmra.mxu0 %v3410
        %v3881 = vpop.f32.mrf.mxu0
        %v3882 = vadd.f32 0.0, %v3881
        %v3883 = vpop.f32.mrf.mxu0
        %v3884 = vpop.f32.mrf.mxu0
        %v3885 = vadd.f32 0.0, %v3884
        %v3886 = vpop.f32.mrf.mxu0
        %3887 = vmatprep.mubr.bf16.mxu0 %v3541
        %3888 = vmatmul.mubr.bf16.gmra.mxu0 %v3413
        %v3889 = vpop.f32.mrf.mxu0
        %v3890 = vadd.f32 0.0, %v3889
        %v3891 = vpop.f32.mrf.mxu0
        %v3892 = vpop.f32.mrf.mxu0
        %v3893 = vadd.f32 0.0, %v3892
        %v3894 = vpop.f32.mrf.mxu0
        %3895 = vdwg.mxu0
        %3896 = vmatprep.subr.bf16.mxu0 0
        %3897 = vmatpush1.bf16.msra.mxu0 0
        %3898 = vmatprep.subr.bf16.mxu0 0
        %3899 = vmatpush1.bf16.msra.mxu0 0
        %3900 = vmatprep.subr.bf16.mxu0 0
        %3901 = vmatpush1.bf16.msra.mxu0 0
        %3902 = vmatprep.subr.bf16.mxu0 0
        %3903 = vmatpush1.bf16.msra.mxu0 0
        %3904 = vmatprep.subr.bf16.mxu0 0
        %3905 = vmatpush1.bf16.msra.mxu0 0
        %3906 = vmatprep.subr.bf16.mxu0 0
        %3907 = vmatpush1.bf16.msra.mxu0 0
        %3908 = vmatprep.subr.bf16.mxu0 0
        %3909 = vmatpush1.bf16.msra.mxu0 %v3668
        %3910 = vmatprep.subr.bf16.mxu0 0
        %3911 = vmatpush1.bf16.msra.mxu0 %v3667
        %3912 = vmatprep.subr.bf16.mxu0 0
        %3913 = vmatpush2.bf16.msra.mxu0 0
        %3914 = vmatprep.subr.bf16.mxu0 0
        %3915 = vmatpush2.bf16.msra.mxu0 0
        %3916 = vmatprep.subr.bf16.mxu0 0
        %3917 = vmatpush2.bf16.msra.mxu0 0
        %3918 = vmatprep.subr.bf16.mxu0 0
        %3919 = vmatpush2.bf16.msra.mxu0 0
        %3920 = vmatprep.subr.bf16.mxu0 0
        %3921 = vmatpush2.bf16.msra.mxu0 0
        %3922 = vmatprep.subr.bf16.mxu0 0
        %3923 = vmatpush2.bf16.msra.mxu0 0
        %3924 = vmatprep.subr.bf16.mxu0 0
        %3925 = vmatpush2.bf16.msra.mxu0 0
        %3926 = vmatprep.subr.bf16.mxu0 0
        %3927 = vmatpush2.bf16.msra.mxu0 0
        %3928 = vmatprep.mubr.bf16.mxu0 0
        %3929 = vmatmul.mubr.bf16.gmra.mxu0 %v3688
        %v3930 = vpop.f32.mrf.mxu0
        %v3931 = vadd.f32 %v3770, %v3930
        %v3932 = vpop.f32.mrf.mxu0
        %v3933 = vpop.f32.mrf.mxu0
        %v3934 = vadd.f32 %v3773, %v3933
        %v3935 = vpop.f32.mrf.mxu0
        %3936 = vmatprep.mubr.bf16.mxu0 0
        %3937 = vmatmul.mubr.bf16.gmra.mxu0 %v3691
        %v3938 = vpop.f32.mrf.mxu0
        %v3939 = vadd.f32 %v3778, %v3938
        %v3940 = vpop.f32.mrf.mxu0
        %v3941 = vpop.f32.mrf.mxu0
        %v3942 = vadd.f32 %v3781, %v3941
        %v3943 = vpop.f32.mrf.mxu0
        %3944 = vmatprep.mubr.bf16.mxu0 0
        %3945 = vmatmul.mubr.bf16.gmra.mxu0 %v3694
        %v3946 = vpop.f32.mrf.mxu0
        %v3947 = vadd.f32 %v3786, %v3946
        %v3948 = vpop.f32.mrf.mxu0
        %v3949 = vpop.f32.mrf.mxu0
        %v3950 = vadd.f32 %v3789, %v3949
        %v3951 = vpop.f32.mrf.mxu0
        %3952 = vmatprep.mubr.bf16.mxu0 0
        %3953 = vmatmul.mubr.bf16.gmra.mxu0 %v3697
        %v3954 = vpop.f32.mrf.mxu0
        %v3955 = vadd.f32 %v3794, %v3954
        %v3956 = vpop.f32.mrf.mxu0
        %v3957 = vpop.f32.mrf.mxu0
        %v3958 = vadd.f32 %v3797, %v3957
        %v3959 = vpop.f32.mrf.mxu0
        %3960 = vmatprep.mubr.bf16.mxu0 0
        %3961 = vmatmul.mubr.bf16.gmra.mxu0 %v3700
        %v3962 = vpop.f32.mrf.mxu0
        %v3963 = vadd.f32 %v3802, %v3962
        %v3964 = vpop.f32.mrf.mxu0
        %v3965 = vpop.f32.mrf.mxu0
        %v3966 = vadd.f32 %v3805, %v3965
        %v3967 = vpop.f32.mrf.mxu0
        %3968 = vmatprep.mubr.bf16.mxu0 0
        %3969 = vmatmul.mubr.bf16.gmra.mxu0 %v3703
        %v3970 = vpop.f32.mrf.mxu0
        %v3971 = vadd.f32 %v3810, %v3970
        %v3972 = vpop.f32.mrf.mxu0
        %v3973 = vpop.f32.mrf.mxu0
        %v3974 = vadd.f32 %v3813, %v3973
        %v3975 = vpop.f32.mrf.mxu0
        %3976 = vmatprep.mubr.bf16.mxu0 0
        %3977 = vmatmul.mubr.bf16.gmra.mxu0 %v3706
        %v3978 = vpop.f32.mrf.mxu0
        %v3979 = vadd.f32 %v3818, %v3978
        %v3980 = vpop.f32.mrf.mxu0
        %v3981 = vpop.f32.mrf.mxu0
        %v3982 = vadd.f32 %v3821, %v3981
        %v3983 = vpop.f32.mrf.mxu0
        %3984 = vmatprep.mubr.bf16.mxu0 0
        %3985 = vmatmul.mubr.bf16.gmra.mxu0 %v3709
        %v3986 = vpop.f32.mrf.mxu0
        %v3987 = vadd.f32 %v3826, %v3986
        %v3988 = vpop.f32.mrf.mxu0
        %v3989 = vpop.f32.mrf.mxu0
        %v3990 = vadd.f32 %v3829, %v3989
        %v3991 = vpop.f32.mrf.mxu0
        %3992 = vmatprep.mubr.bf16.mxu0 0
        %3993 = vmatmul.mubr.bf16.gmra.mxu0 %v3712
        %v3994 = vpop.f32.mrf.mxu0
        %v3995 = vadd.f32 %v3834, %v3994
        %v3996 = vpop.f32.mrf.mxu0
        %v3997 = vpop.f32.mrf.mxu0
        %v3998 = vadd.f32 %v3837, %v3997
        %v3999 = vpop.f32.mrf.mxu0
        %4000 = vmatprep.mubr.bf16.mxu0 0
        %4001 = vmatmul.mubr.bf16.gmra.mxu0 %v3715
        %v4002 = vpop.f32.mrf.mxu0
        %v4003 = vadd.f32 %v3842, %v4002
        %v4004 = vpop.f32.mrf.mxu0
        %v4005 = vpop.f32.mrf.mxu0
        %v4006 = vadd.f32 %v3845, %v4005
        %v4007 = vpop.f32.mrf.mxu0
        %4008 = vmatprep.mubr.bf16.mxu0 0
        %4009 = vmatmul.mubr.bf16.gmra.mxu0 %v3718
        %v4010 = vpop.f32.mrf.mxu0
        %v4011 = vadd.f32 %v3850, %v4010
        %v4012 = vpop.f32.mrf.mxu0
        %v4013 = vpop.f32.mrf.mxu0
        %v4014 = vadd.f32 %v3853, %v4013
        %v4015 = vpop.f32.mrf.mxu0
        %4016 = vmatprep.mubr.bf16.mxu0 0
        %4017 = vmatmul.mubr.bf16.gmra.mxu0 %v3721
        %v4018 = vpop.f32.mrf.mxu0
        %v4019 = vadd.f32 %v3858, %v4018
        %v4020 = vpop.f32.mrf.mxu0
        %v4021 = vpop.f32.mrf.mxu0
        %v4022 = vadd.f32 %v3861, %v4021
        %v4023 = vpop.f32.mrf.mxu0
        %4024 = vmatprep.mubr.bf16.mxu0 0
        %4025 = vmatmul.mubr.bf16.gmra.mxu0 %v3724
        %v4026 = vpop.f32.mrf.mxu0
        %v4027 = vadd.f32 %v3866, %v4026
        %v4028 = vpop.f32.mrf.mxu0
        %v4029 = vpop.f32.mrf.mxu0
        %v4030 = vadd.f32 %v3869, %v4029
        %v4031 = vpop.f32.mrf.mxu0
        %4032 = vmatprep.mubr.bf16.mxu0 0
        %4033 = vmatmul.mubr.bf16.gmra.mxu0 %v3727
        %v4034 = vpop.f32.mrf.mxu0
        %v4035 = vadd.f32 %v3874, %v4034
        %v4036 = vpop.f32.mrf.mxu0
        %v4037 = vpop.f32.mrf.mxu0
        %v4038 = vadd.f32 %v3877, %v4037
        %v4039 = vpop.f32.mrf.mxu0
        %4040 = vmatprep.mubr.bf16.mxu0 0
        %4041 = vmatmul.mubr.bf16.gmra.mxu0 %v3730
        %v4042 = vpop.f32.mrf.mxu0
        %v4043 = vadd.f32 %v3882, %v4042
        %v4044 = vpop.f32.mrf.mxu0
        %v4045 = vpop.f32.mrf.mxu0
        %v4046 = vadd.f32 %v3885, %v4045
        %v4047 = vpop.f32.mrf.mxu0
        %4048 = vmatprep.mubr.bf16.mxu0 0
        %4049 = vmatmul.mubr.bf16.gmra.mxu0 %v3733
        %v4050 = vpop.f32.mrf.mxu0
        %v4051 = vadd.f32 %v3890, %v4050
        %v4052 = vpop.f32.mrf.mxu0
        %v4053 = vpop.f32.mrf.mxu0
        %v4054 = vadd.f32 %v3893, %v4053
        %v4055 = vpop.f32.mrf.mxu0
        %4056 = vdwg.mxu0
        %v4057 = vld [vmem:[%s6] sm:$0x1]
        %v4059 = vlaneseq
        %v4060 = vshrl.u32 %v4059, 7
        %v4061 = vsub.s32 0, %v4060
        %v4062 = vrot.slane %v4057, %v4061
        %v4064 = vmul.f32 %v3931, %v4062
        %v4065 = vmul.f32 %v3934, %v4062
        %v4066 = vmul.f32 %v3939, %v4062
        %v4067 = vmul.f32 %v3942, %v4062
        %v4068 = vmul.f32 %v3947, %v4062
        %v4069 = vmul.f32 %v3950, %v4062
        %v4070 = vmul.f32 %v3955, %v4062
        %v4071 = vmul.f32 %v3958, %v4062
        %v4072 = vmul.f32 %v3963, %v4062
        %v4073 = vmul.f32 %v3966, %v4062
        %v4074 = vmul.f32 %v3971, %v4062
        %v4075 = vmul.f32 %v3974, %v4062
        %v4076 = vmul.f32 %v3979, %v4062
        %v4077 = vmul.f32 %v3982, %v4062
        %v4078 = vmul.f32 %v3987, %v4062
        %v4079 = vmul.f32 %v3990, %v4062
        %v4080 = vmul.f32 %v3995, %v4062
        %v4081 = vmul.f32 %v3998, %v4062
        %v4082 = vmul.f32 %v4003, %v4062
        %v4083 = vmul.f32 %v4006, %v4062
        %v4084 = vmul.f32 %v4011, %v4062
        %v4085 = vmul.f32 %v4014, %v4062
        %v4086 = vmul.f32 %v4019, %v4062
        %v4087 = vmul.f32 %v4022, %v4062
        %v4088 = vmul.f32 %v4027, %v4062
        %v4089 = vmul.f32 %v4030, %v4062
        %v4090 = vmul.f32 %v4035, %v4062
        %v4091 = vmul.f32 %v4038, %v4062
        %v4092 = vmul.f32 %v4043, %v4062
        %v4093 = vmul.f32 %v4046, %v4062
        %v4094 = vmul.f32 %v4051, %v4062
        %v4095 = vmul.f32 %v4054, %v4062
        %v4096 = vld [vmem:[%s7] sm:$0x1]
        %v4098 = vlaneseq
        %v4099 = vshrl.u32 %v4098, 7
        %v4100 = vsub.s32 0, %v4099
        %v4101 = vrot.slane %v4096, %v4100
        %v4103 = vadd.f32 %v4064, %v4101
        %v4104 = vadd.f32 %v4065, %v4101
        %v4105 = vadd.f32 %v4066, %v4101
        %v4106 = vadd.f32 %v4067, %v4101
        %v4107 = vadd.f32 %v4068, %v4101
        %v4108 = vadd.f32 %v4069, %v4101
        %v4109 = vadd.f32 %v4070, %v4101
        %v4110 = vadd.f32 %v4071, %v4101
        %v4111 = vadd.f32 %v4072, %v4101
        %v4112 = vadd.f32 %v4073, %v4101
        %v4113 = vadd.f32 %v4074, %v4101
        %v4114 = vadd.f32 %v4075, %v4101
        %v4115 = vadd.f32 %v4076, %v4101
        %v4116 = vadd.f32 %v4077, %v4101
        %v4117 = vadd.f32 %v4078, %v4101
        %v4118 = vadd.f32 %v4079, %v4101
        %v4119 = vadd.f32 %v4080, %v4101
        %v4120 = vadd.f32 %v4081, %v4101
        %v4121 = vadd.f32 %v4082, %v4101
        %v4122 = vadd.f32 %v4083, %v4101
        %v4123 = vadd.f32 %v4084, %v4101
        %v4124 = vadd.f32 %v4085, %v4101
        %v4125 = vadd.f32 %v4086, %v4101
        %v4126 = vadd.f32 %v4087, %v4101
        %v4127 = vadd.f32 %v4088, %v4101
        %v4128 = vadd.f32 %v4089, %v4101
        %v4129 = vadd.f32 %v4090, %v4101
        %v4130 = vadd.f32 %v4091, %v4101
        %v4131 = vadd.f32 %v4092, %v4101
        %v4132 = vadd.f32 %v4093, %v4101
        %v4133 = vadd.f32 %v4094, %v4101
        %v4134 = vadd.f32 %v4095, %v4101
        %v4135 = vmax.f32 %v4103, 0.0
        %v4136 = vmax.f32 %v4104, 0.0
        %v4137 = vmax.f32 %v4105, 0.0
        %v4138 = vmax.f32 %v4106, 0.0
        %v4139 = vmax.f32 %v4107, 0.0
        %v4140 = vmax.f32 %v4108, 0.0
        %v4141 = vmax.f32 %v4109, 0.0
        %v4142 = vmax.f32 %v4110, 0.0
        %v4143 = vmax.f32 %v4111, 0.0
        %v4144 = vmax.f32 %v4112, 0.0
        %v4145 = vmax.f32 %v4113, 0.0
        %v4146 = vmax.f32 %v4114, 0.0
        %v4147 = vmax.f32 %v4115, 0.0
        %v4148 = vmax.f32 %v4116, 0.0
        %v4149 = vmax.f32 %v4117, 0.0
        %v4150 = vmax.f32 %v4118, 0.0
        %v4151 = vmax.f32 %v4119, 0.0
        %v4152 = vmax.f32 %v4120, 0.0
        %v4153 = vmax.f32 %v4121, 0.0
        %v4154 = vmax.f32 %v4122, 0.0
        %v4155 = vmax.f32 %v4123, 0.0
        %v4156 = vmax.f32 %v4124, 0.0
        %v4157 = vmax.f32 %v4125, 0.0
        %v4158 = vmax.f32 %v4126, 0.0
        %v4159 = vmax.f32 %v4127, 0.0
        %v4160 = vmax.f32 %v4128, 0.0
        %v4161 = vmax.f32 %v4129, 0.0
        %v4162 = vmax.f32 %v4130, 0.0
        %v4163 = vmax.f32 %v4131, 0.0
        %v4164 = vmax.f32 %v4132, 0.0
        %v4165 = vmax.f32 %v4133, 0.0
        %v4166 = vmax.f32 %v4134, 0.0
        %4167 = vst.msk [vmem:[%s313] sm:$0xff] %vm1873, %v4135
        %4168 = vst.msk [vmem:[%s313 + $0x8] sm:$0xff] %vm1873, %v4136
        %4169 = vst.msk [vmem:[%s313 + $0x10] sm:$0xff] %vm1873, %v4137
        %4170 = vst.msk [vmem:[%s313 + $0x18] sm:$0xff] %vm1873, %v4138
        %4171 = vst.msk [vmem:[%s313 + $0x20] sm:$0xff] %vm1873, %v4139
        %4172 = vst.msk [vmem:[%s313 + $0x28] sm:$0xff] %vm1873, %v4140
        %4173 = vst.msk [vmem:[%s313 + $0x30] sm:$0xff] %vm1873, %v4141
        %4174 = vst.msk [vmem:[%s313 + $0x38] sm:$0xff] %vm1873, %v4142
        %4175 = vst.msk [vmem:[%s313 + $0x40] sm:$0xff] %vm1873, %v4143
        %4176 = vst.msk [vmem:[%s313 + $0x48] sm:$0xff] %vm1873, %v4144
        %4177 = vst.msk [vmem:[%s313 + $0x50] sm:$0xff] %vm1873, %v4145
        %4178 = vst.msk [vmem:[%s313 + $0x58] sm:$0xff] %vm1873, %v4146
        %4179 = vst.msk [vmem:[%s313 + $0x60] sm:$0xff] %vm1873, %v4147
        %4180 = vst.msk [vmem:[%s313 + $0x68] sm:$0xff] %vm1873, %v4148
        %4181 = vst.msk [vmem:[%s313 + $0x70] sm:$0xff] %vm1873, %v4149
        %4182 = vst.msk [vmem:[%s313 + $0x78] sm:$0xff] %vm1873, %v4150
        %4183 = vst.msk [vmem:[%s313 + $0x80] sm:$0xff] %vm1873, %v4151
        %4184 = vst.msk [vmem:[%s313 + $0x88] sm:$0xff] %vm1873, %v4152
        %4185 = vst.msk [vmem:[%s313 + $0x90] sm:$0xff] %vm1873, %v4153
        %4186 = vst.msk [vmem:[%s313 + $0x98] sm:$0xff] %vm1873, %v4154
        %4187 = vst.msk [vmem:[%s313 + $0xa0] sm:$0xff] %vm1873, %v4155
        %4188 = vst.msk [vmem:[%s313 + $0xa8] sm:$0xff] %vm1873, %v4156
        %4189 = vst.msk [vmem:[%s313 + $0xb0] sm:$0xff] %vm1873, %v4157
        %4190 = vst.msk [vmem:[%s313 + $0xb8] sm:$0xff] %vm1873, %v4158
        %4191 = vst.msk [vmem:[%s313 + $0xc0] sm:$0xff] %vm1873, %v4159
        %4192 = vst.msk [vmem:[%s313 + $0xc8] sm:$0xff] %vm1873, %v4160
        %4193 = vst.msk [vmem:[%s313 + $0xd0] sm:$0xff] %vm1873, %v4161
        %4194 = vst.msk [vmem:[%s313 + $0xd8] sm:$0xff] %vm1873, %v4162
        %4195 = vst.msk [vmem:[%s313 + $0xe0] sm:$0xff] %vm1873, %v4163
        %4196 = vst.msk [vmem:[%s313 + $0xe8] sm:$0xff] %vm1873, %v4164
        %4197 = vst.msk [vmem:[%s313 + $0xf0] sm:$0xff] %vm1873, %v4165
        %4198 = vst.msk [vmem:[%s313 + $0xf8] sm:$0xff] %vm1873, %v4166
        %s4199 = sand.u32 %s208, 1
        %s4200 = scalar_lea.sflag [#allocation3], %s4199
        %s4201 = sand.u32 %s208, 1
        %s4202 = smul.addr %s4201, 256
        %s4203 = scalar_lea.vmem [#allocation2], %s4202
        // Predicated region
        $region53: #{pyramid_forward.5} parent=51 // pred_check
          %p4204 = pneg %p218
        $region54: #{pyramid_forward.5} parent=51 // pred_check_branch
          %4206 = sbr.rel (%p4204) target = $region56
        $region55: #{pyramid_forward.5} parent=51 // pred_region
          %s4208 = ssub.s32 4096, 4096
          %4209 = vsyncadd %s4200, %s4208
          %s4210 = smul.addr %s22, 32
          %s4211 = smul.addr %s4210, 128
          %s4212 = scalar_lea.hbm %s8, %s4211
          %s4213 = sshll.u32 %s4203, 4
          %s4214 = int_to_ptr.vmem [resolvable:$true] %s4213
          %4219 = dma.vmem_to_hbm [thread:$0]  %s4214, 4096, %s4212, %s4200, 128, 128, 8
        $region56: #{pyramid_forward.5} parent=51 // pred_fallthru
          _
      $region52: #{pyramid_forward.5} parent=5 // pred_fallthru
        _
      %p4220 = scmp.le.s32.totalorder 2, %s17
      // Predicated region
      $region57: #{pyramid_forward.5} parent=5 // pred_check
        %p4221 = pneg %p4220
      $region58: #{pyramid_forward.5} parent=5 // pred_check_branch
        %4223 = sbr.rel (%p4221) target = $region60
      $region59: #{pyramid_forward.5} parent=5 // pred_region
        %s4224 = ssub.s32 %s17, 2
        // Predicated region
        $region61: #{pyramid_forward.5} parent=59 // pred_check
          %p4225 = pneg %p224
        $region62: #{pyramid_forward.5} parent=59 // pred_check_branch
          %4227 = sbr.rel (%p4225) target = $region64
        $region63: #{pyramid_forward.5} parent=59 // pred_region
          %s4228 = sand.u32 %s209, 1
          %s4229 = scalar_lea.sflag [#allocation3], %s4228
          %s4230 = sand.u32 %s209, 1
          %s4231 = smul.addr %s4230, 256
          %s4232 = scalar_lea.vmem [#allocation2], %s4231
          %4233 = dma.done %s4229, 4096
        $region64: #{pyramid_forward.5} parent=59 // pred_fallthru
          _
      $region60: #{pyramid_forward.5} parent=5 // pred_fallthru
        _
    $region6: #{pyramid_forward.5} parent=1 // loop_footer
      %s21 = sadd.s32 1, %s17
    $region7: #{pyramid_forward.5} parent=1 // loop_footer_branch
      %16 = sbr.rel target = $region3
    $region8: #{pyramid_forward.5} parent=1 // loop_exit
      _
    %4234 = vsyncpa [#allocation3], 1
    %s4235 = scalar_lea.sflag [#allocation3], 1
    %4236 = vsyncpa %s4235, 1

</llo_original>
